<compile_context>
chip_gen: v7x
topology: tpu7x:2x2x1
jax: 0.10.0
libtpu: 0.0.40
codegen_flags: <defaults>
</compile_context>

<pallas_src>
import numpy as np
import jax
import jax.numpy as jnp
from jax.experimental import pallas as pl
from jax.experimental.pallas import tpu as pltpu


# ----------------------------------------------------------------------------
# Model configuration (DecoderCRNN with d_dim=2, x_dim=y_dim=64, batch=2,
# hidden=32: six stride-2 convs collapse 64x64 -> 1x1 so the flattened feature
# is exactly channel_size = 128, matching the GRU input size in the module).
# ----------------------------------------------------------------------------
N_BATCH = 2
D_DIM = 2
XY_DIM = 64
HIDDEN = 32
N_LAYERS = 1
CHANS = (D_DIM, 4, 8, 16, 32, 64, 128)          # conv_dim=4, doubling
INPUT_SIZE = XY_DIM * XY_DIM * D_DIM            # 8192
CHANNEL_SIZE = CHANS[-1]                        # 128 (GRU input size)
BN_EPS = 1e-5


# ----------------------------------------------------------------------------
# Fused Pallas kernel
# ----------------------------------------------------------------------------
def fused_decoder_kernel(x_ref, h0_ref,
                         l0, l1, l2, l3, l4, l5,
                         m_ref, bconv_ref, gam_ref, bet_ref,
                         wih_ref, whh_ref, bi_ref, bh_ref,
                         fcw_hbm_ref, fcb_ref,
                         out_ref, hout_ref,
                         fcw_vmem, fcw_sem):
    """Whole forward in VMEM.  Activation layout for layer i: (N*H_i, C_i*W_i)
    with row = n*H + h, col = c*W + w; C_i*W_i == 128 for every layer."""
    l_refs = (l0, l1, l2, l3, l4, l5)

    # Prefetch the big, late-used fc2 weight; overlaps with the conv chain.
    fcw_copy = pltpu.make_async_copy(fcw_hbm_ref, fcw_vmem, fcw_sem)
    fcw_copy.start()

    # lane index for the segmented BN lane-reduce (hoisted out of the loop)
    lane = jax.lax.broadcasted_iota(jnp.int32, (2, 128), 1)

    act_b = x_ref[...]                                  # (128, 128) bf16
    for i in range(6):
        h_in = XY_DIM >> i
        oh = h_in // 2
        ow = oh
        r_out = N_BATCH * oh

        # ---- Conv2d(k=4, s=2, p=1): two MXU matmuls --------------------------
        # 1) exact row gather for the 4 kh taps (L is 0/1, one nonzero per row)
        g = jnp.dot(l_refs[i][...], act_b,
                    preferred_element_type=jnp.float32)          # (4*r_out, 128)
        g_b = g.astype(jnp.bfloat16)                             # lossless
        # 2) kh-blocks side by side along lanes -> one K=512 conv matmul
        t = jnp.concatenate([g_b[0 * r_out:1 * r_out],
                             g_b[1 * r_out:2 * r_out],
                             g_b[2 * r_out:3 * r_out],
                             g_b[3 * r_out:4 * r_out]], axis=1)  # (r_out, 512)
        y = jnp.dot(t, m_ref[i],
                    preferred_element_type=jnp.float32) + bconv_ref[i]

        # ---- training-mode BatchNorm2d (no MXU work) -------------------------
        if i < 5:
            cnt = float(r_out * ow)                      # N * OH * OW
            s1 = jnp.sum(y, axis=0, keepdims=True)       # (1, 128)
            s2 = jnp.sum(y * y, axis=0, keepdims=True)
            s = jnp.concatenate([s1, s2], axis=0)        # (2, 128)
            # segmented all-reduce over aligned lane groups of size ow:
            # after log2(ow) butterfly stages every lane holds its channel sum.
            k = 1
            while k < ow:
                fwd = jnp.roll(s, -k, axis=1)            # s[l + k]
                bwd = jnp.roll(s, k, axis=1)             # s[l - k]
                s = s + jnp.where((lane & k) == 0, fwd, bwd)
                k *= 2
            mean = s[0:1] / cnt
            var = jnp.maximum(s[1:2] / cnt - mean * mean, 0.0)   # clamp
            inv = jax.lax.rsqrt(var + BN_EPS)
            scale = gam_ref[i] * inv                     # (1, 128) lane-wise
            shift = bet_ref[i] - mean * scale
            y = y * scale + shift

        act_b = y.astype(jnp.bfloat16)

    # act_b is now (N, 128) = flattened cnn_enc features (c-major, h=w=1).

    # ---- GRU cell (PyTorch gate order r, z, n), fused gate matmuls ----------
    h0 = h0_ref[...]                                     # (N, HIDDEN) f32
    gi = jnp.dot(act_b, wih_ref[...],
                 preferred_element_type=jnp.float32) + bi_ref[...]   # (N, 96)
    gh = jnp.dot(h0.astype(jnp.bfloat16), whh_ref[...],
                 preferred_element_type=jnp.float32) + bh_ref[...]   # (N, 96)
    hd = HIDDEN
    r = jax.nn.sigmoid(gi[:, :hd] + gh[:, :hd])
    z = jax.nn.sigmoid(gi[:, hd:2 * hd] + gh[:, hd:2 * hd])
    n_gate = jnp.tanh(gi[:, 2 * hd:] + r * gh[:, 2 * hd:])
    h_new = (1.0 - z) * n_gate + z * h0
    hout_ref[...] = h_new

    # ---- fc2 (weights were prefetched at kernel entry) -----------------------
    fcw_copy.wait()
    out_ref[...] = (jnp.dot(h_new.astype(jnp.bfloat16), fcw_vmem[...],
                            preferred_element_type=jnp.float32)
                    + fcb_ref[...])


def decoder_crnn_pallas(x, h, operands):
    """x: (N, d_dim, 64, 64) NCHW f32;  h: (1, N, HIDDEN) f32."""
    n_b = x.shape[0]
    # one-time layout glue: NCHW -> (N*H, C*W) bf16
    x2 = jnp.transpose(x, (0, 2, 1, 3)).reshape(n_b * XY_DIM, D_DIM * XY_DIM)
    x2 = x2.astype(jnp.bfloat16)
    h0 = h[0]

    vmem = pl.BlockSpec(memory_space=pltpu.MemorySpace.VMEM)
    anyspec = pl.BlockSpec(memory_space=pl.ANY)
    in_specs = ([vmem, vmem]            # x, h0
                + [vmem] * 6            # L0..L5
                + [vmem] * 4            # M, bconv, gam, bet
                + [vmem] * 4            # wih, whh, bi, bh
                + [anyspec, vmem])      # fcw (HBM, manually prefetched), fcb

    out_flat, h_new = pl.pallas_call(
        fused_decoder_kernel,
        out_shape=(jax.ShapeDtypeStruct((n_b, INPUT_SIZE), jnp.float32),
                   jax.ShapeDtypeStruct((n_b, HIDDEN), jnp.float32)),
        in_specs=in_specs,
        out_specs=(vmem, vmem),
        scratch_shapes=[pltpu.VMEM((HIDDEN, INPUT_SIZE), jnp.bfloat16),
                        pltpu.SemaphoreType.DMA(())],
    )(x2, h0, *operands["L"],
      operands["M"], operands["bconv"], operands["gam"], operands["bet"],
      operands["wih"], operands["whh"], operands["bi"], operands["bh"],
      operands["fcw"], operands["fcb"])

    out = out_flat.reshape(n_b, D_DIM, XY_DIM, XY_DIM)
    return out, h_new[None, :, :]


# ----------------------------------------------------------------------------
# Parameter construction (deterministic, synthetic) + host-side operand build
# ----------------------------------------------------------------------------
def make_params(key):
    params = {"convs": []}
    for i in range(6):
        c_in, c_out = CHANS[i], CHANS[i + 1]
        key, k1, k2, k3, k4 = jax.random.split(key, 5)
        layer = {
            "w": 0.1 * jax.random.normal(k1, (c_out, c_in, 4, 4), jnp.float32),
            "b": 0.1 * jax.random.normal(k2, (c_out,), jnp.float32),
        }
        if i < 5:  # BatchNorm follows the first 5 convs
            layer["gamma"] = 1.0 + 0.05 * jax.random.normal(k3, (c_out,), jnp.float32)
            layer["beta"] = 0.05 * jax.random.normal(k4, (c_out,), jnp.float32)
        params["convs"].append(layer)

    key, k1, k2, k3, k4 = jax.random.split(key, 5)
    params["gru"] = {
        "wih": 0.1 * jax.random.normal(k1, (3 * HIDDEN, CHANNEL_SIZE), jnp.float32),
        "whh": 0.1 * jax.random.normal(k2, (3 * HIDDEN, HIDDEN), jnp.float32),
        "bih": 0.1 * jax.random.normal(k3, (3 * HIDDEN,), jnp.float32),
        "bhh": 0.1 * jax.random.normal(k4, (3 * HIDDEN,), jnp.float32),
    }
    key, k1, k2 = jax.random.split(key, 3)
    params["fc2"] = {
        "w": 0.1 * jax.random.normal(k1, (INPUT_SIZE, HIDDEN), jnp.float32),
        "b": 0.1 * jax.random.normal(k2, (INPUT_SIZE,), jnp.float32),
    }
    return params


def build_operands(params):
    """Build per-layer L_stack / M_stack and repacked GRU / fc2 weights."""
    n_b = N_BATCH
    l_list = []
    m_all = np.zeros((6, 512, 128), np.float32)     # vstack of the 4 M_kh
    bconv = np.zeros((6, 1, 128), np.float32)
    gam = np.zeros((5, 1, 128), np.float32)
    bet = np.zeros((5, 1, 128), np.float32)

    for i in range(6):
        h_dim = XY_DIM >> i
        w_dim = h_dim
        oh, ow = h_dim // 2, w_dim // 2
        c_in, c_out = CHANS[i], CHANS[i + 1]
        r_in, r_out = n_b * h_dim, n_b * oh
        w = np.asarray(params["convs"][i]["w"])      # (c_out, c_in, 4, 4)
        b = np.asarray(params["convs"][i]["b"])

        # L_stack: 4 row-selection blocks stacked vertically (exact shape).
        l_stack = np.zeros((4 * r_out, r_in), np.float32)
        for kh in range(4):
            for n in range(n_b):
                for r in range(oh):
                    hh = 2 * r + kh - 1
                    if 0 <= hh < h_dim:
                        l_stack[kh * r_out + n * oh + r, n * h_dim + hh] = 1.0
            # M_stack rows: kh*128 + (c_in*W + wcol); cols: c_out*OW + ow
            for kw in range(4):
                for c in range(ow):
                    wcol = 2 * c + kw - 1
                    if 0 <= wcol < w_dim:
                        rows = kh * 128 + np.arange(c_in) * w_dim + wcol
                        cols = np.arange(c_out) * ow + c
                        m_all[i][np.ix_(rows, cols)] = w[:, :, kh, kw].T
        l_list.append(jnp.asarray(l_stack, jnp.bfloat16))

        bconv[i, 0, :] = np.repeat(b, ow)            # c_out*ow == 128 always
        if i < 5:
            gam[i, 0, :] = np.repeat(np.asarray(params["convs"][i]["gamma"]), ow)
            bet[i, 0, :] = np.repeat(np.asarray(params["convs"][i]["beta"]), ow)

    g = params["gru"]
    wih = np.asarray(g["wih"])                       # (3H, 128), rows r|z|n
    whh = np.asarray(g["whh"])                       # (3H, H)
    wih_cat = wih.T                                  # (128, 96)
    whh_cat = whh.T                                  # (32, 96)
    bi = np.asarray(g["bih"]).reshape(1, 3 * HIDDEN)
    bh = np.asarray(g["bhh"]).reshape(1, 3 * HIDDEN)

    fcw = np.asarray(params["fc2"]["w"]).T           # (HIDDEN, 8192)
    fcb = np.asarray(params["fc2"]["b"]).reshape(1, -1)

    return {
        "L": tuple(l_list),
        "M": jnp.asarray(m_all, jnp.bfloat16),
        "bconv": jnp.asarray(bconv, jnp.float32),
        "gam": jnp.asarray(gam, jnp.float32),
        "bet": jnp.asarray(bet, jnp.float32),
        "wih": jnp.asarray(wih_cat, jnp.bfloat16),
        "whh": jnp.asarray(whh_cat, jnp.bfloat16),
        "bi": jnp.asarray(bi, jnp.float32),
        "bh": jnp.asarray(bh, jnp.float32),
        "fcw": jnp.asarray(fcw, jnp.bfloat16),
        "fcb": jnp.asarray(fcb, jnp.float32),
    }


# ----------------------------------------------------------------------------
# Pure-JAX reference (independent im2col conv implementation; same bf16
# quantization points so the comparison is tight).
# ----------------------------------------------------------------------------
def im2col(x_nchw, k=4, s=2, p=1):
    n, c, h, w = x_nchw.shape
    xp = jnp.pad(x_nchw, ((0, 0), (0, 0), (p, p), (p, p)))
    oh = (h + 2 * p - k) // s + 1
    ow = (w + 2 * p - k) // s + 1
    cols = []
    for kh in range(k):
        for kw in range(k):
            cols.append(xp[:, :, kh:kh + s * oh:s, kw:kw + s * ow:s])
    cols = jnp.stack(cols, axis=0).reshape(k, k, n, c, oh, ow)
    cols = cols.transpose(2, 4, 5, 3, 0, 1).reshape(n * oh * ow, c * k * k)
    return cols, oh, ow


def reference_forward(params, x, h):
    n_b = x.shape[0]
    cur = x
    for i in range(6):
        patches, oh, ow = im2col(cur)
        w = params["convs"][i]["w"]
        wt = w.reshape(w.shape[0], -1).T
        y = jnp.dot(patches.astype(jnp.bfloat16), wt.astype(jnp.bfloat16),
                    preferred_element_type=jnp.float32) + params["convs"][i]["b"][None, :]
        if i < 5:
            mean = jnp.mean(y, axis=0, keepdims=True)
            var = jnp.mean((y - mean) ** 2, axis=0, keepdims=True)
            y = (y - mean) * jax.lax.rsqrt(var + BN_EPS)
            y = y * params["convs"][i]["gamma"][None, :] + params["convs"][i]["beta"][None, :]
        cur = y.reshape(n_b, oh, ow, -1).transpose(0, 3, 1, 2)

    feat = cur.reshape(n_b, -1)                        # (N, 128)
    g = params["gru"]
    h0 = h[0]
    gi = jnp.dot(feat.astype(jnp.bfloat16), g["wih"].T.astype(jnp.bfloat16),
                 preferred_element_type=jnp.float32) + g["bih"][None, :]
    gh = jnp.dot(h0.astype(jnp.bfloat16), g["whh"].T.astype(jnp.bfloat16),
                 preferred_element_type=jnp.float32) + g["bhh"][None, :]
    hh = HIDDEN
    r = jax.nn.sigmoid(gi[:, :hh] + gh[:, :hh])
    z = jax.nn.sigmoid(gi[:, hh:2 * hh] + gh[:, hh:2 * hh])
    n_gate = jnp.tanh(gi[:, 2 * hh:] + r * gh[:, 2 * hh:])
    h_new = (1.0 - z) * n_gate + z * h0

    f = params["fc2"]
    out = jnp.dot(h_new.astype(jnp.bfloat16), f["w"].T.astype(jnp.bfloat16),
                  preferred_element_type=jnp.float32) + f["b"][None, :]
    return out.reshape(n_b, D_DIM, XY_DIM, XY_DIM), h_new[None, :, :]


# ----------------------------------------------------------------------------
# Main
# ----------------------------------------------------------------------------
if __name__ == "__main__":
    key = jax.random.PRNGKey(0)
    key, kx = jax.random.split(key)
    params = make_params(key)
    operands = build_operands(params)

    # input NCHW; 64x64 spatial so the 6x stride-2 encoder collapses to 1x1
    x = jax.random.normal(kx, (N_BATCH, D_DIM, XY_DIM, XY_DIM), jnp.float32)
    h = jnp.zeros((N_LAYERS, N_BATCH, HIDDEN), jnp.float32)   # initHidden()

    fwd = jax.jit(decoder_crnn_pallas)
    out, h_out = fwd(x, h, operands)
    out = jax.block_until_ready(out)
    h_out = jax.block_until_ready(h_out)

    ref_out, ref_h = reference_forward(params, x, h)
    np.testing.assert_allclose(np.asarray(out), np.asarray(ref_out),
                               rtol=2e-2, atol=2e-2)
    np.testing.assert_allclose(np.asarray(h_out), np.asarray(ref_h),
                               rtol=2e-2, atol=2e-2)
    assert out.shape == (N_BATCH, D_DIM, XY_DIM, XY_DIM)
    assert h_out.shape == (N_LAYERS, N_BATCH, HIDDEN)

    print("KERNEL_OK")
</pallas_src>

<mosaic_0001>
module attributes {stable_mosaic.version = 11 : i64} {
  func.func @fused_decoder_kernel(%arg0: memref<128x128xbf16, #tpu.memory_space<vmem>>, %arg1: memref<2x32xf32, #tpu.memory_space<vmem>>, %arg2: memref<256x128xbf16, #tpu.memory_space<vmem>>, %arg3: memref<128x64xbf16, #tpu.memory_space<vmem>>, %arg4: memref<64x32xbf16, #tpu.memory_space<vmem>>, %arg5: memref<32x16xbf16, #tpu.memory_space<vmem>>, %arg6: memref<16x8xbf16, #tpu.memory_space<vmem>>, %arg7: memref<8x4xbf16, #tpu.memory_space<vmem>>, %arg8: memref<6x512x128xbf16, #tpu.memory_space<vmem>>, %arg9: memref<6x1x128xf32, #tpu.memory_space<vmem>>, %arg10: memref<5x1x128xf32, #tpu.memory_space<vmem>>, %arg11: memref<5x1x128xf32, #tpu.memory_space<vmem>>, %arg12: memref<128x96xbf16, #tpu.memory_space<vmem>>, %arg13: memref<32x96xbf16, #tpu.memory_space<vmem>>, %arg14: memref<1x96xf32, #tpu.memory_space<vmem>>, %arg15: memref<1x96xf32, #tpu.memory_space<vmem>>, %arg16: memref<32x8192xbf16, #tpu.memory_space<any>>, %arg17: memref<1x8192xf32, #tpu.memory_space<vmem>>, %arg18: memref<2x8192xf32, #tpu.memory_space<vmem>>, %arg19: memref<2x32xf32, #tpu.memory_space<vmem>>, %arg20: memref<32x8192xbf16, #tpu.memory_space<vmem>>, %arg21: memref<!tpu.dma_semaphore, #tpu.memory_space<semaphore_mem>>) attributes {dimension_semantics = [], scalar_prefetch = 0 : i64, scratch_operands = 2 : i64, tpu.core_type = #tpu.core_type<tc>} {
    tpu.enqueue_dma source(%arg16 : memref<32x8192xbf16, #tpu.memory_space<any>>) target(%arg20 : memref<32x8192xbf16, #tpu.memory_space<vmem>>) target_semaphore(%arg21 : memref<!tpu.dma_semaphore, #tpu.memory_space<semaphore_mem>>)
    %0 = tpu.iota {dimensions = array<i32: 1>} : vector<2x128xi32>
    %c0 = arith.constant 0 : index
    %c0_0 = arith.constant 0 : index
    %1 = vector.load %arg0[%c0, %c0_0] : memref<128x128xbf16, #tpu.memory_space<vmem>>, vector<128x128xbf16>
    %c0_1 = arith.constant 0 : index
    %c0_2 = arith.constant 0 : index
    %2 = vector.load %arg2[%c0_1, %c0_2] : memref<256x128xbf16, #tpu.memory_space<vmem>>, vector<256x128xbf16>
    %cst = arith.constant dense<0.000000e+00> : vector<256x128xf32>
    %3 = tpu.matmul %2, %1, %cst {dimension_numbers = #tpu.dot_dimension_numbers<[1], [0], [0], [1], [0, 0, 1, 1], [], []>} : vector<256x128xbf16>, vector<128x128xbf16>, vector<256x128xf32> -> vector<256x128xf32>
    %4 = arith.truncf %3 : vector<256x128xf32> to vector<256x128xbf16>
    %5 = vector.extract_strided_slice %4 {offsets = [0, 0], sizes = [64, 128], strides = [1, 1]} : vector<256x128xbf16> to vector<64x128xbf16>
    %6 = vector.extract_strided_slice %4 {offsets = [64, 0], sizes = [64, 128], strides = [1, 1]} : vector<256x128xbf16> to vector<64x128xbf16>
    %7 = vector.extract_strided_slice %4 {offsets = [128, 0], sizes = [64, 128], strides = [1, 1]} : vector<256x128xbf16> to vector<64x128xbf16>
    %8 = vector.extract_strided_slice %4 {offsets = [192, 0], sizes = [64, 128], strides = [1, 1]} : vector<256x128xbf16> to vector<64x128xbf16>
    %9 = tpu.concatenate %5, %6, %7, %8 in 1 : vector<64x128xbf16>, vector<64x128xbf16>, vector<64x128xbf16>, vector<64x128xbf16> -> vector<64x512xbf16>
    %c0_3 = arith.constant 0 : index
    %c0_4 = arith.constant 0 : index
    %c0_5 = arith.constant 0 : index
    %10 = vector.load %arg8[%c0_3, %c0_4, %c0_5] : memref<6x512x128xbf16, #tpu.memory_space<vmem>>, vector<1x512x128xbf16>
    %11 = vector.shape_cast %10 : vector<1x512x128xbf16> to vector<512x128xbf16>
    %cst_6 = arith.constant dense<0.000000e+00> : vector<64x128xf32>
    %12 = tpu.matmul %9, %11, %cst_6 {dimension_numbers = #tpu.dot_dimension_numbers<[1], [0], [0], [1], [0, 0, 1, 1], [], []>} : vector<64x512xbf16>, vector<512x128xbf16>, vector<64x128xf32> -> vector<64x128xf32>
    %c0_7 = arith.constant 0 : index
    %c0_8 = arith.constant 0 : index
    %c0_9 = arith.constant 0 : index
    %13 = vector.load %arg9[%c0_7, %c0_8, %c0_9] : memref<6x1x128xf32, #tpu.memory_space<vmem>>, vector<1x1x128xf32>
    %14 = vector.shape_cast %13 : vector<1x1x128xf32> to vector<1x128xf32>
    %15 = vector.broadcast %14 : vector<1x128xf32> to vector<64x128xf32>
    %16 = arith.addf %12, %15 : vector<64x128xf32>
    %cst_10 = arith.constant dense<0.000000e+00> : vector<128xf32>
    %17 = vector.multi_reduction <add>, %16, %cst_10 [0] : vector<64x128xf32> to vector<128xf32>
    %18 = vector.shape_cast %17 : vector<128xf32> to vector<1x128xf32>
    %19 = arith.mulf %16, %16 : vector<64x128xf32>
    %cst_11 = arith.constant dense<0.000000e+00> : vector<128xf32>
    %20 = vector.multi_reduction <add>, %19, %cst_11 [0] : vector<64x128xf32> to vector<128xf32>
    %21 = vector.shape_cast %20 : vector<128xf32> to vector<1x128xf32>
    %22 = tpu.concatenate %18, %21 in 0 : vector<1x128xf32>, vector<1x128xf32> -> vector<2x128xf32>
    %23 = vector.extract_strided_slice %22 {offsets = [0, 1], sizes = [2, 127], strides = [1, 1]} : vector<2x128xf32> to vector<2x127xf32>
    %24 = vector.extract_strided_slice %22 {offsets = [0, 0], sizes = [2, 1], strides = [1, 1]} : vector<2x128xf32> to vector<2x1xf32>
    %25 = tpu.concatenate %23, %24 in 1 : vector<2x127xf32>, vector<2x1xf32> -> vector<2x128xf32>
    %26 = vector.extract_strided_slice %22 {offsets = [0, 127], sizes = [2, 1], strides = [1, 1]} : vector<2x128xf32> to vector<2x1xf32>
    %27 = vector.extract_strided_slice %22 {offsets = [0, 0], sizes = [2, 127], strides = [1, 1]} : vector<2x128xf32> to vector<2x127xf32>
    %28 = tpu.concatenate %26, %27 in 1 : vector<2x1xf32>, vector<2x127xf32> -> vector<2x128xf32>
    %c1_i32 = arith.constant 1 : i32
    %29 = vector.broadcast %c1_i32 : i32 to vector<2x128xi32>
    %30 = arith.andi %0, %29 : vector<2x128xi32>
    %c0_i32 = arith.constant 0 : i32
    %31 = vector.broadcast %c0_i32 : i32 to vector<2x128xi32>
    %32 = arith.cmpi eq, %30, %31 : vector<2x128xi32>
    %33 = arith.select %32, %25, %28 : vector<2x128xi1>, vector<2x128xf32>
    %34 = arith.addf %22, %33 : vector<2x128xf32>
    %35 = vector.extract_strided_slice %34 {offsets = [0, 2], sizes = [2, 126], strides = [1, 1]} : vector<2x128xf32> to vector<2x126xf32>
    %36 = vector.extract_strided_slice %34 {offsets = [0, 0], sizes = [2, 2], strides = [1, 1]} : vector<2x128xf32> to vector<2x2xf32>
    %37 = tpu.concatenate %35, %36 in 1 : vector<2x126xf32>, vector<2x2xf32> -> vector<2x128xf32>
    %38 = vector.extract_strided_slice %34 {offsets = [0, 126], sizes = [2, 2], strides = [1, 1]} : vector<2x128xf32> to vector<2x2xf32>
    %39 = vector.extract_strided_slice %34 {offsets = [0, 0], sizes = [2, 126], strides = [1, 1]} : vector<2x128xf32> to vector<2x126xf32>
    %40 = tpu.concatenate %38, %39 in 1 : vector<2x2xf32>, vector<2x126xf32> -> vector<2x128xf32>
    %c2_i32 = arith.constant 2 : i32
    %41 = vector.broadcast %c2_i32 : i32 to vector<2x128xi32>
    %42 = arith.andi %0, %41 : vector<2x128xi32>
    %c0_i32_12 = arith.constant 0 : i32
    %43 = vector.broadcast %c0_i32_12 : i32 to vector<2x128xi32>
    %44 = arith.cmpi eq, %42, %43 : vector<2x128xi32>
    %45 = arith.select %44, %37, %40 : vector<2x128xi1>, vector<2x128xf32>
    %46 = arith.addf %34, %45 : vector<2x128xf32>
    %47 = vector.extract_strided_slice %46 {offsets = [0, 4], sizes = [2, 124], strides = [1, 1]} : vector<2x128xf32> to vector<2x124xf32>
    %48 = vector.extract_strided_slice %46 {offsets = [0, 0], sizes = [2, 4], strides = [1, 1]} : vector<2x128xf32> to vector<2x4xf32>
    %49 = tpu.concatenate %47, %48 in 1 : vector<2x124xf32>, vector<2x4xf32> -> vector<2x128xf32>
    %50 = vector.extract_strided_slice %46 {offsets = [0, 124], sizes = [2, 4], strides = [1, 1]} : vector<2x128xf32> to vector<2x4xf32>
    %51 = vector.extract_strided_slice %46 {offsets = [0, 0], sizes = [2, 124], strides = [1, 1]} : vector<2x128xf32> to vector<2x124xf32>
    %52 = tpu.concatenate %50, %51 in 1 : vector<2x4xf32>, vector<2x124xf32> -> vector<2x128xf32>
    %c4_i32 = arith.constant 4 : i32
    %53 = vector.broadcast %c4_i32 : i32 to vector<2x128xi32>
    %54 = arith.andi %0, %53 : vector<2x128xi32>
    %c0_i32_13 = arith.constant 0 : i32
    %55 = vector.broadcast %c0_i32_13 : i32 to vector<2x128xi32>
    %56 = arith.cmpi eq, %54, %55 : vector<2x128xi32>
    %57 = arith.select %56, %49, %52 : vector<2x128xi1>, vector<2x128xf32>
    %58 = arith.addf %46, %57 : vector<2x128xf32>
    %59 = vector.extract_strided_slice %58 {offsets = [0, 8], sizes = [2, 120], strides = [1, 1]} : vector<2x128xf32> to vector<2x120xf32>
    %60 = vector.extract_strided_slice %58 {offsets = [0, 0], sizes = [2, 8], strides = [1, 1]} : vector<2x128xf32> to vector<2x8xf32>
    %61 = tpu.concatenate %59, %60 in 1 : vector<2x120xf32>, vector<2x8xf32> -> vector<2x128xf32>
    %62 = vector.extract_strided_slice %58 {offsets = [0, 120], sizes = [2, 8], strides = [1, 1]} : vector<2x128xf32> to vector<2x8xf32>
    %63 = vector.extract_strided_slice %58 {offsets = [0, 0], sizes = [2, 120], strides = [1, 1]} : vector<2x128xf32> to vector<2x120xf32>
    %64 = tpu.concatenate %62, %63 in 1 : vector<2x8xf32>, vector<2x120xf32> -> vector<2x128xf32>
    %c8_i32 = arith.constant 8 : i32
    %65 = vector.broadcast %c8_i32 : i32 to vector<2x128xi32>
    %66 = arith.andi %0, %65 : vector<2x128xi32>
    %c0_i32_14 = arith.constant 0 : i32
    %67 = vector.broadcast %c0_i32_14 : i32 to vector<2x128xi32>
    %68 = arith.cmpi eq, %66, %67 : vector<2x128xi32>
    %69 = arith.select %68, %61, %64 : vector<2x128xi1>, vector<2x128xf32>
    %70 = arith.addf %58, %69 : vector<2x128xf32>
    %71 = vector.extract_strided_slice %70 {offsets = [0, 16], sizes = [2, 112], strides = [1, 1]} : vector<2x128xf32> to vector<2x112xf32>
    %72 = vector.extract_strided_slice %70 {offsets = [0, 0], sizes = [2, 16], strides = [1, 1]} : vector<2x128xf32> to vector<2x16xf32>
    %73 = tpu.concatenate %71, %72 in 1 : vector<2x112xf32>, vector<2x16xf32> -> vector<2x128xf32>
    %74 = vector.extract_strided_slice %70 {offsets = [0, 112], sizes = [2, 16], strides = [1, 1]} : vector<2x128xf32> to vector<2x16xf32>
    %75 = vector.extract_strided_slice %70 {offsets = [0, 0], sizes = [2, 112], strides = [1, 1]} : vector<2x128xf32> to vector<2x112xf32>
    %76 = tpu.concatenate %74, %75 in 1 : vector<2x16xf32>, vector<2x112xf32> -> vector<2x128xf32>
    %c16_i32 = arith.constant 16 : i32
    %77 = vector.broadcast %c16_i32 : i32 to vector<2x128xi32>
    %78 = arith.andi %0, %77 : vector<2x128xi32>
    %c0_i32_15 = arith.constant 0 : i32
    %79 = vector.broadcast %c0_i32_15 : i32 to vector<2x128xi32>
    %80 = arith.cmpi eq, %78, %79 : vector<2x128xi32>
    %81 = arith.select %80, %73, %76 : vector<2x128xi1>, vector<2x128xf32>
    %82 = arith.addf %70, %81 : vector<2x128xf32>
    %83 = vector.extract_strided_slice %82 {offsets = [0, 0], sizes = [1, 128], strides = [1, 1]} : vector<2x128xf32> to vector<1x128xf32>
    %cst_16 = arith.constant 2.048000e+03 : f32
    %84 = vector.broadcast %cst_16 : f32 to vector<1x128xf32>
    %85 = arith.divf %83, %84 : vector<1x128xf32>
    %86 = vector.extract_strided_slice %82 {offsets = [1, 0], sizes = [1, 128], strides = [1, 1]} : vector<2x128xf32> to vector<1x128xf32>
    %cst_17 = arith.constant 2.048000e+03 : f32
    %87 = vector.broadcast %cst_17 : f32 to vector<1x128xf32>
    %88 = arith.divf %86, %87 : vector<1x128xf32>
    %89 = arith.mulf %85, %85 : vector<1x128xf32>
    %90 = arith.subf %88, %89 : vector<1x128xf32>
    %cst_18 = arith.constant 0.000000e+00 : f32
    %91 = vector.broadcast %cst_18 : f32 to vector<1x128xf32>
    %92 = arith.maximumf %90, %91 : vector<1x128xf32>
    %cst_19 = arith.constant 9.99999974E-6 : f32
    %93 = vector.broadcast %cst_19 : f32 to vector<1x128xf32>
    %94 = arith.addf %92, %93 : vector<1x128xf32>
    %95 = math.rsqrt %94 : vector<1x128xf32>
    %c0_20 = arith.constant 0 : index
    %c0_21 = arith.constant 0 : index
    %c0_22 = arith.constant 0 : index
    %96 = vector.load %arg10[%c0_20, %c0_21, %c0_22] : memref<5x1x128xf32, #tpu.memory_space<vmem>>, vector<1x1x128xf32>
    %97 = vector.shape_cast %96 : vector<1x1x128xf32> to vector<1x128xf32>
    %98 = arith.mulf %97, %95 : vector<1x128xf32>
    %c0_23 = arith.constant 0 : index
    %c0_24 = arith.constant 0 : index
    %c0_25 = arith.constant 0 : index
    %99 = vector.load %arg11[%c0_23, %c0_24, %c0_25] : memref<5x1x128xf32, #tpu.memory_space<vmem>>, vector<1x1x128xf32>
    %100 = vector.shape_cast %99 : vector<1x1x128xf32> to vector<1x128xf32>
    %101 = arith.mulf %85, %98 : vector<1x128xf32>
    %102 = arith.subf %100, %101 : vector<1x128xf32>
    %103 = vector.broadcast %98 : vector<1x128xf32> to vector<64x128xf32>
    %104 = arith.mulf %16, %103 : vector<64x128xf32>
    %105 = vector.broadcast %102 : vector<1x128xf32> to vector<64x128xf32>
    %106 = arith.addf %104, %105 : vector<64x128xf32>
    %107 = arith.truncf %106 : vector<64x128xf32> to vector<64x128xbf16>
    %c0_26 = arith.constant 0 : index
    %c0_27 = arith.constant 0 : index
    %108 = vector.load %arg3[%c0_26, %c0_27] : memref<128x64xbf16, #tpu.memory_space<vmem>>, vector<128x64xbf16>
    %cst_28 = arith.constant dense<0.000000e+00> : vector<128x128xf32>
    %109 = tpu.matmul %108, %107, %cst_28 {dimension_numbers = #tpu.dot_dimension_numbers<[1], [0], [0], [1], [0, 0, 1, 1], [], []>} : vector<128x64xbf16>, vector<64x128xbf16>, vector<128x128xf32> -> vector<128x128xf32>
    %110 = arith.truncf %109 : vector<128x128xf32> to vector<128x128xbf16>
    %111 = vector.extract_strided_slice %110 {offsets = [0, 0], sizes = [32, 128], strides = [1, 1]} : vector<128x128xbf16> to vector<32x128xbf16>
    %112 = vector.extract_strided_slice %110 {offsets = [32, 0], sizes = [32, 128], strides = [1, 1]} : vector<128x128xbf16> to vector<32x128xbf16>
    %113 = vector.extract_strided_slice %110 {offsets = [64, 0], sizes = [32, 128], strides = [1, 1]} : vector<128x128xbf16> to vector<32x128xbf16>
    %114 = vector.extract_strided_slice %110 {offsets = [96, 0], sizes = [32, 128], strides = [1, 1]} : vector<128x128xbf16> to vector<32x128xbf16>
    %115 = tpu.concatenate %111, %112, %113, %114 in 1 : vector<32x128xbf16>, vector<32x128xbf16>, vector<32x128xbf16>, vector<32x128xbf16> -> vector<32x512xbf16>
    %c1 = arith.constant 1 : index
    %c0_29 = arith.constant 0 : index
    %c0_30 = arith.constant 0 : index
    %116 = vector.load %arg8[%c1, %c0_29, %c0_30] : memref<6x512x128xbf16, #tpu.memory_space<vmem>>, vector<1x512x128xbf16>
    %117 = vector.shape_cast %116 : vector<1x512x128xbf16> to vector<512x128xbf16>
    %cst_31 = arith.constant dense<0.000000e+00> : vector<32x128xf32>
    %118 = tpu.matmul %115, %117, %cst_31 {dimension_numbers = #tpu.dot_dimension_numbers<[1], [0], [0], [1], [0, 0, 1, 1], [], []>} : vector<32x512xbf16>, vector<512x128xbf16>, vector<32x128xf32> -> vector<32x128xf32>
    %c1_32 = arith.constant 1 : index
    %c0_33 = arith.constant 0 : index
    %c0_34 = arith.constant 0 : index
    %119 = vector.load %arg9[%c1_32, %c0_33, %c0_34] : memref<6x1x128xf32, #tpu.memory_space<vmem>>, vector<1x1x128xf32>
    %120 = vector.shape_cast %119 : vector<1x1x128xf32> to vector<1x128xf32>
    %121 = vector.broadcast %120 : vector<1x128xf32> to vector<32x128xf32>
    %122 = arith.addf %118, %121 : vector<32x128xf32>
    %cst_35 = arith.constant dense<0.000000e+00> : vector<128xf32>
    %123 = vector.multi_reduction <add>, %122, %cst_35 [0] : vector<32x128xf32> to vector<128xf32>
    %124 = vector.shape_cast %123 : vector<128xf32> to vector<1x128xf32>
    %125 = arith.mulf %122, %122 : vector<32x128xf32>
    %cst_36 = arith.constant dense<0.000000e+00> : vector<128xf32>
    %126 = vector.multi_reduction <add>, %125, %cst_36 [0] : vector<32x128xf32> to vector<128xf32>
    %127 = vector.shape_cast %126 : vector<128xf32> to vector<1x128xf32>
    %128 = tpu.concatenate %124, %127 in 0 : vector<1x128xf32>, vector<1x128xf32> -> vector<2x128xf32>
    %129 = vector.extract_strided_slice %128 {offsets = [0, 1], sizes = [2, 127], strides = [1, 1]} : vector<2x128xf32> to vector<2x127xf32>
    %130 = vector.extract_strided_slice %128 {offsets = [0, 0], sizes = [2, 1], strides = [1, 1]} : vector<2x128xf32> to vector<2x1xf32>
    %131 = tpu.concatenate %129, %130 in 1 : vector<2x127xf32>, vector<2x1xf32> -> vector<2x128xf32>
    %132 = vector.extract_strided_slice %128 {offsets = [0, 127], sizes = [2, 1], strides = [1, 1]} : vector<2x128xf32> to vector<2x1xf32>
    %133 = vector.extract_strided_slice %128 {offsets = [0, 0], sizes = [2, 127], strides = [1, 1]} : vector<2x128xf32> to vector<2x127xf32>
    %134 = tpu.concatenate %132, %133 in 1 : vector<2x1xf32>, vector<2x127xf32> -> vector<2x128xf32>
    %c1_i32_37 = arith.constant 1 : i32
    %135 = vector.broadcast %c1_i32_37 : i32 to vector<2x128xi32>
    %136 = arith.andi %0, %135 : vector<2x128xi32>
    %c0_i32_38 = arith.constant 0 : i32
    %137 = vector.broadcast %c0_i32_38 : i32 to vector<2x128xi32>
    %138 = arith.cmpi eq, %136, %137 : vector<2x128xi32>
    %139 = arith.select %138, %131, %134 : vector<2x128xi1>, vector<2x128xf32>
    %140 = arith.addf %128, %139 : vector<2x128xf32>
    %141 = vector.extract_strided_slice %140 {offsets = [0, 2], sizes = [2, 126], strides = [1, 1]} : vector<2x128xf32> to vector<2x126xf32>
    %142 = vector.extract_strided_slice %140 {offsets = [0, 0], sizes = [2, 2], strides = [1, 1]} : vector<2x128xf32> to vector<2x2xf32>
    %143 = tpu.concatenate %141, %142 in 1 : vector<2x126xf32>, vector<2x2xf32> -> vector<2x128xf32>
    %144 = vector.extract_strided_slice %140 {offsets = [0, 126], sizes = [2, 2], strides = [1, 1]} : vector<2x128xf32> to vector<2x2xf32>
    %145 = vector.extract_strided_slice %140 {offsets = [0, 0], sizes = [2, 126], strides = [1, 1]} : vector<2x128xf32> to vector<2x126xf32>
    %146 = tpu.concatenate %144, %145 in 1 : vector<2x2xf32>, vector<2x126xf32> -> vector<2x128xf32>
    %c2_i32_39 = arith.constant 2 : i32
    %147 = vector.broadcast %c2_i32_39 : i32 to vector<2x128xi32>
    %148 = arith.andi %0, %147 : vector<2x128xi32>
    %c0_i32_40 = arith.constant 0 : i32
    %149 = vector.broadcast %c0_i32_40 : i32 to vector<2x128xi32>
    %150 = arith.cmpi eq, %148, %149 : vector<2x128xi32>
    %151 = arith.select %150, %143, %146 : vector<2x128xi1>, vector<2x128xf32>
    %152 = arith.addf %140, %151 : vector<2x128xf32>
    %153 = vector.extract_strided_slice %152 {offsets = [0, 4], sizes = [2, 124], strides = [1, 1]} : vector<2x128xf32> to vector<2x124xf32>
    %154 = vector.extract_strided_slice %152 {offsets = [0, 0], sizes = [2, 4], strides = [1, 1]} : vector<2x128xf32> to vector<2x4xf32>
    %155 = tpu.concatenate %153, %154 in 1 : vector<2x124xf32>, vector<2x4xf32> -> vector<2x128xf32>
    %156 = vector.extract_strided_slice %152 {offsets = [0, 124], sizes = [2, 4], strides = [1, 1]} : vector<2x128xf32> to vector<2x4xf32>
    %157 = vector.extract_strided_slice %152 {offsets = [0, 0], sizes = [2, 124], strides = [1, 1]} : vector<2x128xf32> to vector<2x124xf32>
    %158 = tpu.concatenate %156, %157 in 1 : vector<2x4xf32>, vector<2x124xf32> -> vector<2x128xf32>
    %c4_i32_41 = arith.constant 4 : i32
    %159 = vector.broadcast %c4_i32_41 : i32 to vector<2x128xi32>
    %160 = arith.andi %0, %159 : vector<2x128xi32>
    %c0_i32_42 = arith.constant 0 : i32
    %161 = vector.broadcast %c0_i32_42 : i32 to vector<2x128xi32>
    %162 = arith.cmpi eq, %160, %161 : vector<2x128xi32>
    %163 = arith.select %162, %155, %158 : vector<2x128xi1>, vector<2x128xf32>
    %164 = arith.addf %152, %163 : vector<2x128xf32>
    %165 = vector.extract_strided_slice %164 {offsets = [0, 8], sizes = [2, 120], strides = [1, 1]} : vector<2x128xf32> to vector<2x120xf32>
    %166 = vector.extract_strided_slice %164 {offsets = [0, 0], sizes = [2, 8], strides = [1, 1]} : vector<2x128xf32> to vector<2x8xf32>
    %167 = tpu.concatenate %165, %166 in 1 : vector<2x120xf32>, vector<2x8xf32> -> vector<2x128xf32>
    %168 = vector.extract_strided_slice %164 {offsets = [0, 120], sizes = [2, 8], strides = [1, 1]} : vector<2x128xf32> to vector<2x8xf32>
    %169 = vector.extract_strided_slice %164 {offsets = [0, 0], sizes = [2, 120], strides = [1, 1]} : vector<2x128xf32> to vector<2x120xf32>
    %170 = tpu.concatenate %168, %169 in 1 : vector<2x8xf32>, vector<2x120xf32> -> vector<2x128xf32>
    %c8_i32_43 = arith.constant 8 : i32
    %171 = vector.broadcast %c8_i32_43 : i32 to vector<2x128xi32>
    %172 = arith.andi %0, %171 : vector<2x128xi32>
    %c0_i32_44 = arith.constant 0 : i32
    %173 = vector.broadcast %c0_i32_44 : i32 to vector<2x128xi32>
    %174 = arith.cmpi eq, %172, %173 : vector<2x128xi32>
    %175 = arith.select %174, %167, %170 : vector<2x128xi1>, vector<2x128xf32>
    %176 = arith.addf %164, %175 : vector<2x128xf32>
    %177 = vector.extract_strided_slice %176 {offsets = [0, 0], sizes = [1, 128], strides = [1, 1]} : vector<2x128xf32> to vector<1x128xf32>
    %cst_45 = arith.constant 5.120000e+02 : f32
    %178 = vector.broadcast %cst_45 : f32 to vector<1x128xf32>
    %179 = arith.divf %177, %178 : vector<1x128xf32>
    %180 = vector.extract_strided_slice %176 {offsets = [1, 0], sizes = [1, 128], strides = [1, 1]} : vector<2x128xf32> to vector<1x128xf32>
    %cst_46 = arith.constant 5.120000e+02 : f32
    %181 = vector.broadcast %cst_46 : f32 to vector<1x128xf32>
    %182 = arith.divf %180, %181 : vector<1x128xf32>
    %183 = arith.mulf %179, %179 : vector<1x128xf32>
    %184 = arith.subf %182, %183 : vector<1x128xf32>
    %cst_47 = arith.constant 0.000000e+00 : f32
    %185 = vector.broadcast %cst_47 : f32 to vector<1x128xf32>
    %186 = arith.maximumf %184, %185 : vector<1x128xf32>
    %cst_48 = arith.constant 9.99999974E-6 : f32
    %187 = vector.broadcast %cst_48 : f32 to vector<1x128xf32>
    %188 = arith.addf %186, %187 : vector<1x128xf32>
    %189 = math.rsqrt %188 : vector<1x128xf32>
    %c1_49 = arith.constant 1 : index
    %c0_50 = arith.constant 0 : index
    %c0_51 = arith.constant 0 : index
    %190 = vector.load %arg10[%c1_49, %c0_50, %c0_51] : memref<5x1x128xf32, #tpu.memory_space<vmem>>, vector<1x1x128xf32>
    %191 = vector.shape_cast %190 : vector<1x1x128xf32> to vector<1x128xf32>
    %192 = arith.mulf %191, %189 : vector<1x128xf32>
    %c1_52 = arith.constant 1 : index
    %c0_53 = arith.constant 0 : index
    %c0_54 = arith.constant 0 : index
    %193 = vector.load %arg11[%c1_52, %c0_53, %c0_54] : memref<5x1x128xf32, #tpu.memory_space<vmem>>, vector<1x1x128xf32>
    %194 = vector.shape_cast %193 : vector<1x1x128xf32> to vector<1x128xf32>
    %195 = arith.mulf %179, %192 : vector<1x128xf32>
    %196 = arith.subf %194, %195 : vector<1x128xf32>
    %197 = vector.broadcast %192 : vector<1x128xf32> to vector<32x128xf32>
    %198 = arith.mulf %122, %197 : vector<32x128xf32>
    %199 = vector.broadcast %196 : vector<1x128xf32> to vector<32x128xf32>
    %200 = arith.addf %198, %199 : vector<32x128xf32>
    %201 = arith.truncf %200 : vector<32x128xf32> to vector<32x128xbf16>
    %c0_55 = arith.constant 0 : index
    %c0_56 = arith.constant 0 : index
    %202 = vector.load %arg4[%c0_55, %c0_56] : memref<64x32xbf16, #tpu.memory_space<vmem>>, vector<64x32xbf16>
    %cst_57 = arith.constant dense<0.000000e+00> : vector<64x128xf32>
    %203 = tpu.matmul %202, %201, %cst_57 {dimension_numbers = #tpu.dot_dimension_numbers<[1], [0], [0], [1], [0, 0, 1, 1], [], []>} : vector<64x32xbf16>, vector<32x128xbf16>, vector<64x128xf32> -> vector<64x128xf32>
    %204 = arith.truncf %203 : vector<64x128xf32> to vector<64x128xbf16>
    %205 = vector.extract_strided_slice %204 {offsets = [0, 0], sizes = [16, 128], strides = [1, 1]} : vector<64x128xbf16> to vector<16x128xbf16>
    %206 = vector.extract_strided_slice %204 {offsets = [16, 0], sizes = [16, 128], strides = [1, 1]} : vector<64x128xbf16> to vector<16x128xbf16>
    %207 = vector.extract_strided_slice %204 {offsets = [32, 0], sizes = [16, 128], strides = [1, 1]} : vector<64x128xbf16> to vector<16x128xbf16>
    %208 = vector.extract_strided_slice %204 {offsets = [48, 0], sizes = [16, 128], strides = [1, 1]} : vector<64x128xbf16> to vector<16x128xbf16>
    %209 = tpu.concatenate %205, %206, %207, %208 in 1 : vector<16x128xbf16>, vector<16x128xbf16>, vector<16x128xbf16>, vector<16x128xbf16> -> vector<16x512xbf16>
    %c2 = arith.constant 2 : index
    %c0_58 = arith.constant 0 : index
    %c0_59 = arith.constant 0 : index
    %210 = vector.load %arg8[%c2, %c0_58, %c0_59] : memref<6x512x128xbf16, #tpu.memory_space<vmem>>, vector<1x512x128xbf16>
    %211 = vector.shape_cast %210 : vector<1x512x128xbf16> to vector<512x128xbf16>
    %cst_60 = arith.constant dense<0.000000e+00> : vector<16x128xf32>
    %212 = tpu.matmul %209, %211, %cst_60 {dimension_numbers = #tpu.dot_dimension_numbers<[1], [0], [0], [1], [0, 0, 1, 1], [], []>} : vector<16x512xbf16>, vector<512x128xbf16>, vector<16x128xf32> -> vector<16x128xf32>
    %c2_61 = arith.constant 2 : index
    %c0_62 = arith.constant 0 : index
    %c0_63 = arith.constant 0 : index
    %213 = vector.load %arg9[%c2_61, %c0_62, %c0_63] : memref<6x1x128xf32, #tpu.memory_space<vmem>>, vector<1x1x128xf32>
    %214 = vector.shape_cast %213 : vector<1x1x128xf32> to vector<1x128xf32>
    %215 = vector.broadcast %214 : vector<1x128xf32> to vector<16x128xf32>
    %216 = arith.addf %212, %215 : vector<16x128xf32>
    %cst_64 = arith.constant dense<0.000000e+00> : vector<128xf32>
    %217 = vector.multi_reduction <add>, %216, %cst_64 [0] : vector<16x128xf32> to vector<128xf32>
    %218 = vector.shape_cast %217 : vector<128xf32> to vector<1x128xf32>
    %219 = arith.mulf %216, %216 : vector<16x128xf32>
    %cst_65 = arith.constant dense<0.000000e+00> : vector<128xf32>
    %220 = vector.multi_reduction <add>, %219, %cst_65 [0] : vector<16x128xf32> to vector<128xf32>
    %221 = vector.shape_cast %220 : vector<128xf32> to vector<1x128xf32>
    %222 = tpu.concatenate %218, %221 in 0 : vector<1x128xf32>, vector<1x128xf32> -> vector<2x128xf32>
    %223 = vector.extract_strided_slice %222 {offsets = [0, 1], sizes = [2, 127], strides = [1, 1]} : vector<2x128xf32> to vector<2x127xf32>
    %224 = vector.extract_strided_slice %222 {offsets = [0, 0], sizes = [2, 1], strides = [1, 1]} : vector<2x128xf32> to vector<2x1xf32>
    %225 = tpu.concatenate %223, %224 in 1 : vector<2x127xf32>, vector<2x1xf32> -> vector<2x128xf32>
    %226 = vector.extract_strided_slice %222 {offsets = [0, 127], sizes = [2, 1], strides = [1, 1]} : vector<2x128xf32> to vector<2x1xf32>
    %227 = vector.extract_strided_slice %222 {offsets = [0, 0], sizes = [2, 127], strides = [1, 1]} : vector<2x128xf32> to vector<2x127xf32>
    %228 = tpu.concatenate %226, %227 in 1 : vector<2x1xf32>, vector<2x127xf32> -> vector<2x128xf32>
    %c1_i32_66 = arith.constant 1 : i32
    %229 = vector.broadcast %c1_i32_66 : i32 to vector<2x128xi32>
    %230 = arith.andi %0, %229 : vector<2x128xi32>
    %c0_i32_67 = arith.constant 0 : i32
    %231 = vector.broadcast %c0_i32_67 : i32 to vector<2x128xi32>
    %232 = arith.cmpi eq, %230, %231 : vector<2x128xi32>
    %233 = arith.select %232, %225, %228 : vector<2x128xi1>, vector<2x128xf32>
    %234 = arith.addf %222, %233 : vector<2x128xf32>
    %235 = vector.extract_strided_slice %234 {offsets = [0, 2], sizes = [2, 126], strides = [1, 1]} : vector<2x128xf32> to vector<2x126xf32>
    %236 = vector.extract_strided_slice %234 {offsets = [0, 0], sizes = [2, 2], strides = [1, 1]} : vector<2x128xf32> to vector<2x2xf32>
    %237 = tpu.concatenate %235, %236 in 1 : vector<2x126xf32>, vector<2x2xf32> -> vector<2x128xf32>
    %238 = vector.extract_strided_slice %234 {offsets = [0, 126], sizes = [2, 2], strides = [1, 1]} : vector<2x128xf32> to vector<2x2xf32>
    %239 = vector.extract_strided_slice %234 {offsets = [0, 0], sizes = [2, 126], strides = [1, 1]} : vector<2x128xf32> to vector<2x126xf32>
    %240 = tpu.concatenate %238, %239 in 1 : vector<2x2xf32>, vector<2x126xf32> -> vector<2x128xf32>
    %c2_i32_68 = arith.constant 2 : i32
    %241 = vector.broadcast %c2_i32_68 : i32 to vector<2x128xi32>
    %242 = arith.andi %0, %241 : vector<2x128xi32>
    %c0_i32_69 = arith.constant 0 : i32
    %243 = vector.broadcast %c0_i32_69 : i32 to vector<2x128xi32>
    %244 = arith.cmpi eq, %242, %243 : vector<2x128xi32>
    %245 = arith.select %244, %237, %240 : vector<2x128xi1>, vector<2x128xf32>
    %246 = arith.addf %234, %245 : vector<2x128xf32>
    %247 = vector.extract_strided_slice %246 {offsets = [0, 4], sizes = [2, 124], strides = [1, 1]} : vector<2x128xf32> to vector<2x124xf32>
    %248 = vector.extract_strided_slice %246 {offsets = [0, 0], sizes = [2, 4], strides = [1, 1]} : vector<2x128xf32> to vector<2x4xf32>
    %249 = tpu.concatenate %247, %248 in 1 : vector<2x124xf32>, vector<2x4xf32> -> vector<2x128xf32>
    %250 = vector.extract_strided_slice %246 {offsets = [0, 124], sizes = [2, 4], strides = [1, 1]} : vector<2x128xf32> to vector<2x4xf32>
    %251 = vector.extract_strided_slice %246 {offsets = [0, 0], sizes = [2, 124], strides = [1, 1]} : vector<2x128xf32> to vector<2x124xf32>
    %252 = tpu.concatenate %250, %251 in 1 : vector<2x4xf32>, vector<2x124xf32> -> vector<2x128xf32>
    %c4_i32_70 = arith.constant 4 : i32
    %253 = vector.broadcast %c4_i32_70 : i32 to vector<2x128xi32>
    %254 = arith.andi %0, %253 : vector<2x128xi32>
    %c0_i32_71 = arith.constant 0 : i32
    %255 = vector.broadcast %c0_i32_71 : i32 to vector<2x128xi32>
    %256 = arith.cmpi eq, %254, %255 : vector<2x128xi32>
    %257 = arith.select %256, %249, %252 : vector<2x128xi1>, vector<2x128xf32>
    %258 = arith.addf %246, %257 : vector<2x128xf32>
    %259 = vector.extract_strided_slice %258 {offsets = [0, 0], sizes = [1, 128], strides = [1, 1]} : vector<2x128xf32> to vector<1x128xf32>
    %cst_72 = arith.constant 1.280000e+02 : f32
    %260 = vector.broadcast %cst_72 : f32 to vector<1x128xf32>
    %261 = arith.divf %259, %260 : vector<1x128xf32>
    %262 = vector.extract_strided_slice %258 {offsets = [1, 0], sizes = [1, 128], strides = [1, 1]} : vector<2x128xf32> to vector<1x128xf32>
    %cst_73 = arith.constant 1.280000e+02 : f32
    %263 = vector.broadcast %cst_73 : f32 to vector<1x128xf32>
    %264 = arith.divf %262, %263 : vector<1x128xf32>
    %265 = arith.mulf %261, %261 : vector<1x128xf32>
    %266 = arith.subf %264, %265 : vector<1x128xf32>
    %cst_74 = arith.constant 0.000000e+00 : f32
    %267 = vector.broadcast %cst_74 : f32 to vector<1x128xf32>
    %268 = arith.maximumf %266, %267 : vector<1x128xf32>
    %cst_75 = arith.constant 9.99999974E-6 : f32
    %269 = vector.broadcast %cst_75 : f32 to vector<1x128xf32>
    %270 = arith.addf %268, %269 : vector<1x128xf32>
    %271 = math.rsqrt %270 : vector<1x128xf32>
    %c2_76 = arith.constant 2 : index
    %c0_77 = arith.constant 0 : index
    %c0_78 = arith.constant 0 : index
    %272 = vector.load %arg10[%c2_76, %c0_77, %c0_78] : memref<5x1x128xf32, #tpu.memory_space<vmem>>, vector<1x1x128xf32>
    %273 = vector.shape_cast %272 : vector<1x1x128xf32> to vector<1x128xf32>
    %274 = arith.mulf %273, %271 : vector<1x128xf32>
    %c2_79 = arith.constant 2 : index
    %c0_80 = arith.constant 0 : index
    %c0_81 = arith.constant 0 : index
    %275 = vector.load %arg11[%c2_79, %c0_80, %c0_81] : memref<5x1x128xf32, #tpu.memory_space<vmem>>, vector<1x1x128xf32>
    %276 = vector.shape_cast %275 : vector<1x1x128xf32> to vector<1x128xf32>
    %277 = arith.mulf %261, %274 : vector<1x128xf32>
    %278 = arith.subf %276, %277 : vector<1x128xf32>
    %279 = vector.broadcast %274 : vector<1x128xf32> to vector<16x128xf32>
    %280 = arith.mulf %216, %279 : vector<16x128xf32>
    %281 = vector.broadcast %278 : vector<1x128xf32> to vector<16x128xf32>
    %282 = arith.addf %280, %281 : vector<16x128xf32>
    %283 = arith.truncf %282 : vector<16x128xf32> to vector<16x128xbf16>
    %c0_82 = arith.constant 0 : index
    %c0_83 = arith.constant 0 : index
    %284 = vector.load %arg5[%c0_82, %c0_83] : memref<32x16xbf16, #tpu.memory_space<vmem>>, vector<32x16xbf16>
    %cst_84 = arith.constant dense<0.000000e+00> : vector<32x128xf32>
    %285 = tpu.matmul %284, %283, %cst_84 {dimension_numbers = #tpu.dot_dimension_numbers<[1], [0], [0], [1], [0, 0, 1, 1], [], []>} : vector<32x16xbf16>, vector<16x128xbf16>, vector<32x128xf32> -> vector<32x128xf32>
    %286 = arith.truncf %285 : vector<32x128xf32> to vector<32x128xbf16>
    %287 = vector.extract_strided_slice %286 {offsets = [0, 0], sizes = [8, 128], strides = [1, 1]} : vector<32x128xbf16> to vector<8x128xbf16>
    %288 = vector.extract_strided_slice %286 {offsets = [8, 0], sizes = [8, 128], strides = [1, 1]} : vector<32x128xbf16> to vector<8x128xbf16>
    %289 = vector.extract_strided_slice %286 {offsets = [16, 0], sizes = [8, 128], strides = [1, 1]} : vector<32x128xbf16> to vector<8x128xbf16>
    %290 = vector.extract_strided_slice %286 {offsets = [24, 0], sizes = [8, 128], strides = [1, 1]} : vector<32x128xbf16> to vector<8x128xbf16>
    %291 = tpu.concatenate %287, %288, %289, %290 in 1 : vector<8x128xbf16>, vector<8x128xbf16>, vector<8x128xbf16>, vector<8x128xbf16> -> vector<8x512xbf16>
    %c3 = arith.constant 3 : index
    %c0_85 = arith.constant 0 : index
    %c0_86 = arith.constant 0 : index
    %292 = vector.load %arg8[%c3, %c0_85, %c0_86] : memref<6x512x128xbf16, #tpu.memory_space<vmem>>, vector<1x512x128xbf16>
    %293 = vector.shape_cast %292 : vector<1x512x128xbf16> to vector<512x128xbf16>
    %cst_87 = arith.constant dense<0.000000e+00> : vector<8x128xf32>
    %294 = tpu.matmul %291, %293, %cst_87 {dimension_numbers = #tpu.dot_dimension_numbers<[1], [0], [0], [1], [0, 0, 1, 1], [], []>} : vector<8x512xbf16>, vector<512x128xbf16>, vector<8x128xf32> -> vector<8x128xf32>
    %c3_88 = arith.constant 3 : index
    %c0_89 = arith.constant 0 : index
    %c0_90 = arith.constant 0 : index
    %295 = vector.load %arg9[%c3_88, %c0_89, %c0_90] : memref<6x1x128xf32, #tpu.memory_space<vmem>>, vector<1x1x128xf32>
    %296 = vector.shape_cast %295 : vector<1x1x128xf32> to vector<1x128xf32>
    %297 = vector.broadcast %296 : vector<1x128xf32> to vector<8x128xf32>
    %298 = arith.addf %294, %297 : vector<8x128xf32>
    %cst_91 = arith.constant dense<0.000000e+00> : vector<128xf32>
    %299 = vector.multi_reduction <add>, %298, %cst_91 [0] : vector<8x128xf32> to vector<128xf32>
    %300 = vector.shape_cast %299 : vector<128xf32> to vector<1x128xf32>
    %301 = arith.mulf %298, %298 : vector<8x128xf32>
    %cst_92 = arith.constant dense<0.000000e+00> : vector<128xf32>
    %302 = vector.multi_reduction <add>, %301, %cst_92 [0] : vector<8x128xf32> to vector<128xf32>
    %303 = vector.shape_cast %302 : vector<128xf32> to vector<1x128xf32>
    %304 = tpu.concatenate %300, %303 in 0 : vector<1x128xf32>, vector<1x128xf32> -> vector<2x128xf32>
    %305 = vector.extract_strided_slice %304 {offsets = [0, 1], sizes = [2, 127], strides = [1, 1]} : vector<2x128xf32> to vector<2x127xf32>
    %306 = vector.extract_strided_slice %304 {offsets = [0, 0], sizes = [2, 1], strides = [1, 1]} : vector<2x128xf32> to vector<2x1xf32>
    %307 = tpu.concatenate %305, %306 in 1 : vector<2x127xf32>, vector<2x1xf32> -> vector<2x128xf32>
    %308 = vector.extract_strided_slice %304 {offsets = [0, 127], sizes = [2, 1], strides = [1, 1]} : vector<2x128xf32> to vector<2x1xf32>
    %309 = vector.extract_strided_slice %304 {offsets = [0, 0], sizes = [2, 127], strides = [1, 1]} : vector<2x128xf32> to vector<2x127xf32>
    %310 = tpu.concatenate %308, %309 in 1 : vector<2x1xf32>, vector<2x127xf32> -> vector<2x128xf32>
    %c1_i32_93 = arith.constant 1 : i32
    %311 = vector.broadcast %c1_i32_93 : i32 to vector<2x128xi32>
    %312 = arith.andi %0, %311 : vector<2x128xi32>
    %c0_i32_94 = arith.constant 0 : i32
    %313 = vector.broadcast %c0_i32_94 : i32 to vector<2x128xi32>
    %314 = arith.cmpi eq, %312, %313 : vector<2x128xi32>
    %315 = arith.select %314, %307, %310 : vector<2x128xi1>, vector<2x128xf32>
    %316 = arith.addf %304, %315 : vector<2x128xf32>
    %317 = vector.extract_strided_slice %316 {offsets = [0, 2], sizes = [2, 126], strides = [1, 1]} : vector<2x128xf32> to vector<2x126xf32>
    %318 = vector.extract_strided_slice %316 {offsets = [0, 0], sizes = [2, 2], strides = [1, 1]} : vector<2x128xf32> to vector<2x2xf32>
    %319 = tpu.concatenate %317, %318 in 1 : vector<2x126xf32>, vector<2x2xf32> -> vector<2x128xf32>
    %320 = vector.extract_strided_slice %316 {offsets = [0, 126], sizes = [2, 2], strides = [1, 1]} : vector<2x128xf32> to vector<2x2xf32>
    %321 = vector.extract_strided_slice %316 {offsets = [0, 0], sizes = [2, 126], strides = [1, 1]} : vector<2x128xf32> to vector<2x126xf32>
    %322 = tpu.concatenate %320, %321 in 1 : vector<2x2xf32>, vector<2x126xf32> -> vector<2x128xf32>
    %c2_i32_95 = arith.constant 2 : i32
    %323 = vector.broadcast %c2_i32_95 : i32 to vector<2x128xi32>
    %324 = arith.andi %0, %323 : vector<2x128xi32>
    %c0_i32_96 = arith.constant 0 : i32
    %325 = vector.broadcast %c0_i32_96 : i32 to vector<2x128xi32>
    %326 = arith.cmpi eq, %324, %325 : vector<2x128xi32>
    %327 = arith.select %326, %319, %322 : vector<2x128xi1>, vector<2x128xf32>
    %328 = arith.addf %316, %327 : vector<2x128xf32>
    %329 = vector.extract_strided_slice %328 {offsets = [0, 0], sizes = [1, 128], strides = [1, 1]} : vector<2x128xf32> to vector<1x128xf32>
    %cst_97 = arith.constant 3.200000e+01 : f32
    %330 = vector.broadcast %cst_97 : f32 to vector<1x128xf32>
    %331 = arith.divf %329, %330 : vector<1x128xf32>
    %332 = vector.extract_strided_slice %328 {offsets = [1, 0], sizes = [1, 128], strides = [1, 1]} : vector<2x128xf32> to vector<1x128xf32>
    %cst_98 = arith.constant 3.200000e+01 : f32
    %333 = vector.broadcast %cst_98 : f32 to vector<1x128xf32>
    %334 = arith.divf %332, %333 : vector<1x128xf32>
    %335 = arith.mulf %331, %331 : vector<1x128xf32>
    %336 = arith.subf %334, %335 : vector<1x128xf32>
    %cst_99 = arith.constant 0.000000e+00 : f32
    %337 = vector.broadcast %cst_99 : f32 to vector<1x128xf32>
    %338 = arith.maximumf %336, %337 : vector<1x128xf32>
    %cst_100 = arith.constant 9.99999974E-6 : f32
    %339 = vector.broadcast %cst_100 : f32 to vector<1x128xf32>
    %340 = arith.addf %338, %339 : vector<1x128xf32>
    %341 = math.rsqrt %340 : vector<1x128xf32>
    %c3_101 = arith.constant 3 : index
    %c0_102 = arith.constant 0 : index
    %c0_103 = arith.constant 0 : index
    %342 = vector.load %arg10[%c3_101, %c0_102, %c0_103] : memref<5x1x128xf32, #tpu.memory_space<vmem>>, vector<1x1x128xf32>
    %343 = vector.shape_cast %342 : vector<1x1x128xf32> to vector<1x128xf32>
    %344 = arith.mulf %343, %341 : vector<1x128xf32>
    %c3_104 = arith.constant 3 : index
    %c0_105 = arith.constant 0 : index
    %c0_106 = arith.constant 0 : index
    %345 = vector.load %arg11[%c3_104, %c0_105, %c0_106] : memref<5x1x128xf32, #tpu.memory_space<vmem>>, vector<1x1x128xf32>
    %346 = vector.shape_cast %345 : vector<1x1x128xf32> to vector<1x128xf32>
    %347 = arith.mulf %331, %344 : vector<1x128xf32>
    %348 = arith.subf %346, %347 : vector<1x128xf32>
    %349 = vector.broadcast %344 : vector<1x128xf32> to vector<8x128xf32>
    %350 = arith.mulf %298, %349 : vector<8x128xf32>
    %351 = vector.broadcast %348 : vector<1x128xf32> to vector<8x128xf32>
    %352 = arith.addf %350, %351 : vector<8x128xf32>
    %353 = arith.truncf %352 : vector<8x128xf32> to vector<8x128xbf16>
    %c0_107 = arith.constant 0 : index
    %c0_108 = arith.constant 0 : index
    %354 = vector.load %arg6[%c0_107, %c0_108] : memref<16x8xbf16, #tpu.memory_space<vmem>>, vector<16x8xbf16>
    %cst_109 = arith.constant dense<0.000000e+00> : vector<16x128xf32>
    %355 = tpu.matmul %354, %353, %cst_109 {dimension_numbers = #tpu.dot_dimension_numbers<[1], [0], [0], [1], [0, 0, 1, 1], [], []>} : vector<16x8xbf16>, vector<8x128xbf16>, vector<16x128xf32> -> vector<16x128xf32>
    %356 = arith.truncf %355 : vector<16x128xf32> to vector<16x128xbf16>
    %357 = vector.extract_strided_slice %356 {offsets = [0, 0], sizes = [4, 128], strides = [1, 1]} : vector<16x128xbf16> to vector<4x128xbf16>
    %358 = vector.extract_strided_slice %356 {offsets = [4, 0], sizes = [4, 128], strides = [1, 1]} : vector<16x128xbf16> to vector<4x128xbf16>
    %359 = vector.extract_strided_slice %356 {offsets = [8, 0], sizes = [4, 128], strides = [1, 1]} : vector<16x128xbf16> to vector<4x128xbf16>
    %360 = vector.extract_strided_slice %356 {offsets = [12, 0], sizes = [4, 128], strides = [1, 1]} : vector<16x128xbf16> to vector<4x128xbf16>
    %361 = tpu.concatenate %357, %358, %359, %360 in 1 : vector<4x128xbf16>, vector<4x128xbf16>, vector<4x128xbf16>, vector<4x128xbf16> -> vector<4x512xbf16>
    %c4 = arith.constant 4 : index
    %c0_110 = arith.constant 0 : index
    %c0_111 = arith.constant 0 : index
    %362 = vector.load %arg8[%c4, %c0_110, %c0_111] : memref<6x512x128xbf16, #tpu.memory_space<vmem>>, vector<1x512x128xbf16>
    %363 = vector.shape_cast %362 : vector<1x512x128xbf16> to vector<512x128xbf16>
    %cst_112 = arith.constant dense<0.000000e+00> : vector<4x128xf32>
    %364 = tpu.matmul %361, %363, %cst_112 {dimension_numbers = #tpu.dot_dimension_numbers<[1], [0], [0], [1], [0, 0, 1, 1], [], []>} : vector<4x512xbf16>, vector<512x128xbf16>, vector<4x128xf32> -> vector<4x128xf32>
    %c4_113 = arith.constant 4 : index
    %c0_114 = arith.constant 0 : index
    %c0_115 = arith.constant 0 : index
    %365 = vector.load %arg9[%c4_113, %c0_114, %c0_115] : memref<6x1x128xf32, #tpu.memory_space<vmem>>, vector<1x1x128xf32>
    %366 = vector.shape_cast %365 : vector<1x1x128xf32> to vector<1x128xf32>
    %367 = vector.broadcast %366 : vector<1x128xf32> to vector<4x128xf32>
    %368 = arith.addf %364, %367 : vector<4x128xf32>
    %cst_116 = arith.constant dense<0.000000e+00> : vector<128xf32>
    %369 = vector.multi_reduction <add>, %368, %cst_116 [0] : vector<4x128xf32> to vector<128xf32>
    %370 = vector.shape_cast %369 : vector<128xf32> to vector<1x128xf32>
    %371 = arith.mulf %368, %368 : vector<4x128xf32>
    %cst_117 = arith.constant dense<0.000000e+00> : vector<128xf32>
    %372 = vector.multi_reduction <add>, %371, %cst_117 [0] : vector<4x128xf32> to vector<128xf32>
    %373 = vector.shape_cast %372 : vector<128xf32> to vector<1x128xf32>
    %374 = tpu.concatenate %370, %373 in 0 : vector<1x128xf32>, vector<1x128xf32> -> vector<2x128xf32>
    %375 = vector.extract_strided_slice %374 {offsets = [0, 1], sizes = [2, 127], strides = [1, 1]} : vector<2x128xf32> to vector<2x127xf32>
    %376 = vector.extract_strided_slice %374 {offsets = [0, 0], sizes = [2, 1], strides = [1, 1]} : vector<2x128xf32> to vector<2x1xf32>
    %377 = tpu.concatenate %375, %376 in 1 : vector<2x127xf32>, vector<2x1xf32> -> vector<2x128xf32>
    %378 = vector.extract_strided_slice %374 {offsets = [0, 127], sizes = [2, 1], strides = [1, 1]} : vector<2x128xf32> to vector<2x1xf32>
    %379 = vector.extract_strided_slice %374 {offsets = [0, 0], sizes = [2, 127], strides = [1, 1]} : vector<2x128xf32> to vector<2x127xf32>
    %380 = tpu.concatenate %378, %379 in 1 : vector<2x1xf32>, vector<2x127xf32> -> vector<2x128xf32>
    %c1_i32_118 = arith.constant 1 : i32
    %381 = vector.broadcast %c1_i32_118 : i32 to vector<2x128xi32>
    %382 = arith.andi %0, %381 : vector<2x128xi32>
    %c0_i32_119 = arith.constant 0 : i32
    %383 = vector.broadcast %c0_i32_119 : i32 to vector<2x128xi32>
    %384 = arith.cmpi eq, %382, %383 : vector<2x128xi32>
    %385 = arith.select %384, %377, %380 : vector<2x128xi1>, vector<2x128xf32>
    %386 = arith.addf %374, %385 : vector<2x128xf32>
    %387 = vector.extract_strided_slice %386 {offsets = [0, 0], sizes = [1, 128], strides = [1, 1]} : vector<2x128xf32> to vector<1x128xf32>
    %cst_120 = arith.constant 8.000000e+00 : f32
    %388 = vector.broadcast %cst_120 : f32 to vector<1x128xf32>
    %389 = arith.divf %387, %388 : vector<1x128xf32>
    %390 = vector.extract_strided_slice %386 {offsets = [1, 0], sizes = [1, 128], strides = [1, 1]} : vector<2x128xf32> to vector<1x128xf32>
    %cst_121 = arith.constant 8.000000e+00 : f32
    %391 = vector.broadcast %cst_121 : f32 to vector<1x128xf32>
    %392 = arith.divf %390, %391 : vector<1x128xf32>
    %393 = arith.mulf %389, %389 : vector<1x128xf32>
    %394 = arith.subf %392, %393 : vector<1x128xf32>
    %cst_122 = arith.constant 0.000000e+00 : f32
    %395 = vector.broadcast %cst_122 : f32 to vector<1x128xf32>
    %396 = arith.maximumf %394, %395 : vector<1x128xf32>
    %cst_123 = arith.constant 9.99999974E-6 : f32
    %397 = vector.broadcast %cst_123 : f32 to vector<1x128xf32>
    %398 = arith.addf %396, %397 : vector<1x128xf32>
    %399 = math.rsqrt %398 : vector<1x128xf32>
    %c4_124 = arith.constant 4 : index
    %c0_125 = arith.constant 0 : index
    %c0_126 = arith.constant 0 : index
    %400 = vector.load %arg10[%c4_124, %c0_125, %c0_126] : memref<5x1x128xf32, #tpu.memory_space<vmem>>, vector<1x1x128xf32>
    %401 = vector.shape_cast %400 : vector<1x1x128xf32> to vector<1x128xf32>
    %402 = arith.mulf %401, %399 : vector<1x128xf32>
    %c4_127 = arith.constant 4 : index
    %c0_128 = arith.constant 0 : index
    %c0_129 = arith.constant 0 : index
    %403 = vector.load %arg11[%c4_127, %c0_128, %c0_129] : memref<5x1x128xf32, #tpu.memory_space<vmem>>, vector<1x1x128xf32>
    %404 = vector.shape_cast %403 : vector<1x1x128xf32> to vector<1x128xf32>
    %405 = arith.mulf %389, %402 : vector<1x128xf32>
    %406 = arith.subf %404, %405 : vector<1x128xf32>
    %407 = vector.broadcast %402 : vector<1x128xf32> to vector<4x128xf32>
    %408 = arith.mulf %368, %407 : vector<4x128xf32>
    %409 = vector.broadcast %406 : vector<1x128xf32> to vector<4x128xf32>
    %410 = arith.addf %408, %409 : vector<4x128xf32>
    %411 = arith.truncf %410 : vector<4x128xf32> to vector<4x128xbf16>
    %c0_130 = arith.constant 0 : index
    %c0_131 = arith.constant 0 : index
    %412 = vector.load %arg7[%c0_130, %c0_131] : memref<8x4xbf16, #tpu.memory_space<vmem>>, vector<8x4xbf16>
    %cst_132 = arith.constant dense<0.000000e+00> : vector<8x128xf32>
    %413 = tpu.matmul %412, %411, %cst_132 {dimension_numbers = #tpu.dot_dimension_numbers<[1], [0], [0], [1], [0, 0, 1, 1], [], []>} : vector<8x4xbf16>, vector<4x128xbf16>, vector<8x128xf32> -> vector<8x128xf32>
    %414 = arith.truncf %413 : vector<8x128xf32> to vector<8x128xbf16>
    %415 = vector.extract_strided_slice %414 {offsets = [0, 0], sizes = [2, 128], strides = [1, 1]} : vector<8x128xbf16> to vector<2x128xbf16>
    %416 = vector.extract_strided_slice %414 {offsets = [2, 0], sizes = [2, 128], strides = [1, 1]} : vector<8x128xbf16> to vector<2x128xbf16>
    %417 = vector.extract_strided_slice %414 {offsets = [4, 0], sizes = [2, 128], strides = [1, 1]} : vector<8x128xbf16> to vector<2x128xbf16>
    %418 = vector.extract_strided_slice %414 {offsets = [6, 0], sizes = [2, 128], strides = [1, 1]} : vector<8x128xbf16> to vector<2x128xbf16>
    %419 = tpu.concatenate %415, %416, %417, %418 in 1 : vector<2x128xbf16>, vector<2x128xbf16>, vector<2x128xbf16>, vector<2x128xbf16> -> vector<2x512xbf16>
    %c5 = arith.constant 5 : index
    %c0_133 = arith.constant 0 : index
    %c0_134 = arith.constant 0 : index
    %420 = vector.load %arg8[%c5, %c0_133, %c0_134] : memref<6x512x128xbf16, #tpu.memory_space<vmem>>, vector<1x512x128xbf16>
    %421 = vector.shape_cast %420 : vector<1x512x128xbf16> to vector<512x128xbf16>
    %cst_135 = arith.constant dense<0.000000e+00> : vector<2x128xf32>
    %422 = tpu.matmul %419, %421, %cst_135 {dimension_numbers = #tpu.dot_dimension_numbers<[1], [0], [0], [1], [0, 0, 1, 1], [], []>} : vector<2x512xbf16>, vector<512x128xbf16>, vector<2x128xf32> -> vector<2x128xf32>
    %c5_136 = arith.constant 5 : index
    %c0_137 = arith.constant 0 : index
    %c0_138 = arith.constant 0 : index
    %423 = vector.load %arg9[%c5_136, %c0_137, %c0_138] : memref<6x1x128xf32, #tpu.memory_space<vmem>>, vector<1x1x128xf32>
    %424 = vector.shape_cast %423 : vector<1x1x128xf32> to vector<1x128xf32>
    %425 = vector.broadcast %424 : vector<1x128xf32> to vector<2x128xf32>
    %426 = arith.addf %422, %425 : vector<2x128xf32>
    %427 = arith.truncf %426 : vector<2x128xf32> to vector<2x128xbf16>
    %c0_139 = arith.constant 0 : index
    %c0_140 = arith.constant 0 : index
    %428 = vector.load %arg1[%c0_139, %c0_140] : memref<2x32xf32, #tpu.memory_space<vmem>>, vector<2x32xf32>
    %c0_141 = arith.constant 0 : index
    %c0_142 = arith.constant 0 : index
    %429 = vector.load %arg12[%c0_141, %c0_142] : memref<128x96xbf16, #tpu.memory_space<vmem>>, vector<128x96xbf16>
    %cst_143 = arith.constant dense<0.000000e+00> : vector<2x96xf32>
    %430 = tpu.matmul %427, %429, %cst_143 {dimension_numbers = #tpu.dot_dimension_numbers<[1], [0], [0], [1], [0, 0, 1, 1], [], []>} : vector<2x128xbf16>, vector<128x96xbf16>, vector<2x96xf32> -> vector<2x96xf32>
    %c0_144 = arith.constant 0 : index
    %c0_145 = arith.constant 0 : index
    %431 = vector.load %arg14[%c0_144, %c0_145] : memref<1x96xf32, #tpu.memory_space<vmem>>, vector<1x96xf32>
    %432 = vector.broadcast %431 : vector<1x96xf32> to vector<2x96xf32>
    %433 = arith.addf %430, %432 : vector<2x96xf32>
    %434 = arith.truncf %428 : vector<2x32xf32> to vector<2x32xbf16>
    %c0_146 = arith.constant 0 : index
    %c0_147 = arith.constant 0 : index
    %435 = vector.load %arg13[%c0_146, %c0_147] : memref<32x96xbf16, #tpu.memory_space<vmem>>, vector<32x96xbf16>
    %cst_148 = arith.constant dense<0.000000e+00> : vector<2x96xf32>
    %436 = tpu.matmul %434, %435, %cst_148 {dimension_numbers = #tpu.dot_dimension_numbers<[1], [0], [0], [1], [0, 0, 1, 1], [], []>} : vector<2x32xbf16>, vector<32x96xbf16>, vector<2x96xf32> -> vector<2x96xf32>
    %c0_149 = arith.constant 0 : index
    %c0_150 = arith.constant 0 : index
    %437 = vector.load %arg15[%c0_149, %c0_150] : memref<1x96xf32, #tpu.memory_space<vmem>>, vector<1x96xf32>
    %438 = vector.broadcast %437 : vector<1x96xf32> to vector<2x96xf32>
    %439 = arith.addf %436, %438 : vector<2x96xf32>
    %440 = vector.extract_strided_slice %433 {offsets = [0, 0], sizes = [2, 32], strides = [1, 1]} : vector<2x96xf32> to vector<2x32xf32>
    %441 = vector.extract_strided_slice %439 {offsets = [0, 0], sizes = [2, 32], strides = [1, 1]} : vector<2x96xf32> to vector<2x32xf32>
    %442 = arith.addf %440, %441 : vector<2x32xf32>
    %443 = arith.negf %442 : vector<2x32xf32>
    %444 = math.exp %443 : vector<2x32xf32>
    %cst_151 = arith.constant 1.000000e+00 : f32
    %445 = vector.broadcast %cst_151 : f32 to vector<2x32xf32>
    %446 = arith.addf %445, %444 : vector<2x32xf32>
    %447 = arith.divf %445, %446 : vector<2x32xf32>
    %448 = vector.extract_strided_slice %433 {offsets = [0, 32], sizes = [2, 32], strides = [1, 1]} : vector<2x96xf32> to vector<2x32xf32>
    %449 = vector.extract_strided_slice %439 {offsets = [0, 32], sizes = [2, 32], strides = [1, 1]} : vector<2x96xf32> to vector<2x32xf32>
    %450 = arith.addf %448, %449 : vector<2x32xf32>
    %451 = arith.negf %450 : vector<2x32xf32>
    %452 = math.exp %451 : vector<2x32xf32>
    %cst_152 = arith.constant 1.000000e+00 : f32
    %453 = vector.broadcast %cst_152 : f32 to vector<2x32xf32>
    %454 = arith.addf %453, %452 : vector<2x32xf32>
    %455 = arith.divf %453, %454 : vector<2x32xf32>
    %456 = vector.extract_strided_slice %433 {offsets = [0, 64], sizes = [2, 32], strides = [1, 1]} : vector<2x96xf32> to vector<2x32xf32>
    %457 = vector.extract_strided_slice %439 {offsets = [0, 64], sizes = [2, 32], strides = [1, 1]} : vector<2x96xf32> to vector<2x32xf32>
    %458 = arith.mulf %447, %457 : vector<2x32xf32>
    %459 = arith.addf %456, %458 : vector<2x32xf32>
    %460 = math.tanh %459 : vector<2x32xf32>
    %cst_153 = arith.constant 1.000000e+00 : f32
    %461 = vector.broadcast %cst_153 : f32 to vector<2x32xf32>
    %462 = arith.subf %461, %455 : vector<2x32xf32>
    %463 = arith.mulf %462, %460 : vector<2x32xf32>
    %464 = arith.mulf %455, %428 : vector<2x32xf32>
    %465 = arith.addf %463, %464 : vector<2x32xf32>
    %c0_154 = arith.constant 0 : index
    %c0_155 = arith.constant 0 : index
    %466 = vector.load %arg19[%c0_154, %c0_155] : memref<2x32xf32, #tpu.memory_space<vmem>>, vector<2x32xf32>
    tpu.vector_store %arg19[%c0_154, %c0_155], %465 {strides = array<i32>} : memref<2x32xf32, #tpu.memory_space<vmem>>, vector<2x32xf32>,
    tpu.wait_dma2 semaphore(%arg21 : memref<!tpu.dma_semaphore, #tpu.memory_space<semaphore_mem>>) src(%arg16 : memref<32x8192xbf16, #tpu.memory_space<any>>) dst(%arg20 : memref<32x8192xbf16, #tpu.memory_space<vmem>>)
    %467 = arith.truncf %465 : vector<2x32xf32> to vector<2x32xbf16>
    %c0_156 = arith.constant 0 : index
    %c0_157 = arith.constant 0 : index
    %468 = vector.load %arg20[%c0_156, %c0_157] : memref<32x8192xbf16, #tpu.memory_space<vmem>>, vector<32x8192xbf16>
    %cst_158 = arith.constant dense<0.000000e+00> : vector<2x8192xf32>
    %469 = tpu.matmul %467, %468, %cst_158 {dimension_numbers = #tpu.dot_dimension_numbers<[1], [0], [0], [1], [0, 0, 1, 1], [], []>} : vector<2x32xbf16>, vector<32x8192xbf16>, vector<2x8192xf32> -> vector<2x8192xf32>
    %c0_159 = arith.constant 0 : index
    %c0_160 = arith.constant 0 : index
    %470 = vector.load %arg17[%c0_159, %c0_160] : memref<1x8192xf32, #tpu.memory_space<vmem>>, vector<1x8192xf32>
    %471 = vector.broadcast %470 : vector<1x8192xf32> to vector<2x8192xf32>
    %472 = arith.addf %469, %471 : vector<2x8192xf32>
    %c0_161 = arith.constant 0 : index
    %c0_162 = arith.constant 0 : index
    %473 = vector.load %arg18[%c0_161, %c0_162] : memref<2x8192xf32, #tpu.memory_space<vmem>>, vector<2x8192xf32>
    tpu.vector_store %arg18[%c0_161, %c0_162], %472 {strides = array<i32>} : memref<2x8192xf32, #tpu.memory_space<vmem>>, vector<2x8192xf32>,
    return
  }
}

</mosaic_0001>

<llo_original>
// kernel: decoder_crnn_pallas.1
$region0: #{decoder_crnn_pallas.1}
  #allocation0 [shape = 'u32[]', space=smem, size = 0x4, offset = 0x4, fixed_abs, tag = 'smem constant byte address 0x4 - core index']
  #allocation1 [shape = 'u32[144,128]{1,0:T(1,128)}', space=vmem, size = 0x12000, scoped, tag = 'internal scratch']
  #allocation2 [shape = 'bf16[32,8192]{1,0:T(16,128)(2,1)}', space=vmem, size = 0x80000, scoped, tag = 'scratch operand']
  #allocation3 [shape = 's32[1]{0}', space=sflag, size = 0x4, scoped, tag = 'scratch operand']
  #allocation19 [shape = 's32[]', space=sflag, size = 0x4, offset = 0, fixed_abs, tag = 'sflag constant byte address 0x0 - dummy sync flag']
  %s0 = inlined_call_operand.vmem [shape: bf16[128,128], index: 0, kind: input, shape index: {}]
  %s1 = inlined_call_operand.hbm [shape: f32[2,32], index: 1, kind: input, shape index: {}]
  %s2 = inlined_call_operand.vmem [shape: bf16[256,128], index: 2, kind: input, shape index: {}]
  %s3 = inlined_call_operand.vmem [shape: bf16[128,64], index: 3, kind: input, shape index: {}]
  %s4 = inlined_call_operand.vmem [shape: bf16[64,32], index: 4, kind: input, shape index: {}]
  %s5 = inlined_call_operand.vmem [shape: bf16[32,16], index: 5, kind: input, shape index: {}]
  %s6 = inlined_call_operand.vmem [shape: bf16[16,8], index: 6, kind: input, shape index: {}]
  %s7 = inlined_call_operand.vmem [shape: bf16[8,4], index: 7, kind: input, shape index: {}]
  %s8 = inlined_call_operand.hbm [shape: bf16[6,512,128], index: 8, kind: input, shape index: {}]
  %s9 = inlined_call_operand.vmem [shape: f32[6,1,128], index: 9, kind: input, shape index: {}]
  %s10 = inlined_call_operand.hbm [shape: f32[5,1,128], index: 10, kind: input, shape index: {}]
  %s11 = inlined_call_operand.hbm [shape: f32[5,1,128], index: 11, kind: input, shape index: {}]
  %s12 = inlined_call_operand.vmem [shape: bf16[128,96], index: 12, kind: input, shape index: {}]
  %s13 = inlined_call_operand.hbm [shape: bf16[32,96], index: 13, kind: input, shape index: {}]
  %s14 = inlined_call_operand.hbm [shape: f32[1,96], index: 14, kind: input, shape index: {}]
  %s15 = inlined_call_operand.hbm [shape: f32[1,96], index: 15, kind: input, shape index: {}]
  %s16 = inlined_call_operand.vmem [shape: bf16[32,8192], index: 16, kind: input, shape index: {}]
  %s17 = inlined_call_operand.hbm [shape: f32[1,8192], index: 17, kind: input, shape index: {}]
  %s18 = inlined_call_operand.vmem [shape: f32[2,8192], index: 18, kind: output, shape index: {0}]
  %s19 = inlined_call_operand.hbm [shape: f32[2,32], index: 19, kind: output, shape index: {1}]
  %20 = xla_tuple %s18, %s19
  %s21 = sld [smem:[#allocation0]]
  $region155: #{decoder_crnn_pallas.1} parent=0
    _
  %s23 = ssub.s32 1, %s21
  %s24 = scalar_select 0, %s23, %s21
  $region1: #{decoder_crnn_pallas.1} parent=0
    #allocation4 [shape = 'u8[1024]{0}', space=vmem, size = 0x400, scoped, tag = 'input window, operand 1, single buffered']
    #allocation5 [shape = 's32[1]{0}', space=sflag, size = 0x4, scoped, tag = 'scoped memory for decoder_crnn_pallas.1']
    #allocation6 [shape = 's32[1]{0}', space=sflag, size = 0x4, scoped, tag = 'scoped memory for decoder_crnn_pallas.1']
    #allocation7 [shape = 'u8[786432]{0}', space=vmem, size = 0xc0000, scoped, tag = 'input window, operand 8, single buffered']
    #allocation8 [shape = 's32[1]{0}', space=sflag, size = 0x4, scoped, tag = 'scoped memory for decoder_crnn_pallas.1']
    #allocation9 [shape = 'u8[2560]{0}', space=vmem, size = 0xc00, scoped, tag = 'input window, operand 10, single buffered']
    #allocation10 [shape = 'u8[2560]{0}', space=vmem, size = 0xc00, scoped, tag = 'input window, operand 11, single buffered']
    #allocation11 [shape = 's32[1]{0}', space=sflag, size = 0x4, scoped, tag = 'scoped memory for decoder_crnn_pallas.1']
    #allocation12 [shape = 'u8[8192]{0}', space=vmem, size = 0x2000, scoped, tag = 'input window, operand 13, single buffered']
    #allocation13 [shape = 'u8[512]{0}', space=vmem, size = 0x400, scoped, tag = 'input window, operand 14, single buffered']
    #allocation14 [shape = 's32[1]{0}', space=sflag, size = 0x4, scoped, tag = 'scoped memory for decoder_crnn_pallas.1']
    #allocation15 [shape = 'u8[512]{0}', space=vmem, size = 0x400, scoped, tag = 'input window, operand 15, single buffered']
    #allocation16 [shape = 'u8[32768]{0}', space=vmem, size = 0x8000, scoped, tag = 'input window, operand 17, single buffered']
    #allocation17 [shape = 's32[1]{0}', space=sflag, size = 0x4, scoped, tag = 'scoped memory for decoder_crnn_pallas.1']
    #allocation18 [shape = 'u8[1024]{0}', space=vmem, size = 0x400, scoped, tag = 'output window, operand 1, single buffered']
    %25 = vsyncpa [#allocation5], 0
    %26 = vsyncpa [#allocation8], 0
    %27 = vsyncpa [#allocation11], 0
    %28 = vsyncpa [#allocation14], 0
    %29 = vsyncpa [#allocation17], 0
    %30 = vsyncpa [#allocation6], 0
    // Predicated region
    $region2: #{decoder_crnn_pallas.1} parent=1 // pred_check
      _
    $region3: #{decoder_crnn_pallas.1} parent=1 // pred_check_branch
      %32 = sbr.rel (0) target = $region5
    $region4: #{decoder_crnn_pallas.1} parent=1 // pred_region
      _
    $region5: #{decoder_crnn_pallas.1} parent=1 // pred_fallthru
      _
    // Predicated region
    $region6: #{decoder_crnn_pallas.1} parent=1 // pred_check
      _
    $region7: #{decoder_crnn_pallas.1} parent=1 // pred_check_branch
      %34 = sbr.rel (0) target = $region9
    $region8: #{decoder_crnn_pallas.1} parent=1 // pred_region
      %s36 = ssub.s32 32, 32
      %37 = vsyncadd [#allocation5], %s36
      %s39 = sshll.u32 [#allocation4], 4
      %s40 = int_to_ptr.vmem [resolvable:$true] %s39
      %42 = dma.hbm_to_vmem [thread:$0]  %s1, 32, %s40, [#allocation5]
    $region9: #{decoder_crnn_pallas.1} parent=1 // pred_fallthru
      _
    // Predicated region
    $region10: #{decoder_crnn_pallas.1} parent=1 // pred_check
      _
    $region11: #{decoder_crnn_pallas.1} parent=1 // pred_check_branch
      %44 = sbr.rel (0) target = $region13
    $region12: #{decoder_crnn_pallas.1} parent=1 // pred_region
      _
    $region13: #{decoder_crnn_pallas.1} parent=1 // pred_fallthru
      _
    // Predicated region
    $region14: #{decoder_crnn_pallas.1} parent=1 // pred_check
      _
    $region15: #{decoder_crnn_pallas.1} parent=1 // pred_check_branch
      %46 = sbr.rel (0) target = $region17
    $region16: #{decoder_crnn_pallas.1} parent=1 // pred_region
      _
    $region17: #{decoder_crnn_pallas.1} parent=1 // pred_fallthru
      _
    // Predicated region
    $region18: #{decoder_crnn_pallas.1} parent=1 // pred_check
      _
    $region19: #{decoder_crnn_pallas.1} parent=1 // pred_check_branch
      %48 = sbr.rel (0) target = $region21
    $region20: #{decoder_crnn_pallas.1} parent=1 // pred_region
      _
    $region21: #{decoder_crnn_pallas.1} parent=1 // pred_fallthru
      _
    // Predicated region
    $region22: #{decoder_crnn_pallas.1} parent=1 // pred_check
      _
    $region23: #{decoder_crnn_pallas.1} parent=1 // pred_check_branch
      %50 = sbr.rel (0) target = $region25
    $region24: #{decoder_crnn_pallas.1} parent=1 // pred_region
      _
    $region25: #{decoder_crnn_pallas.1} parent=1 // pred_fallthru
      _
    // Predicated region
    $region26: #{decoder_crnn_pallas.1} parent=1 // pred_check
      _
    $region27: #{decoder_crnn_pallas.1} parent=1 // pred_check_branch
      %52 = sbr.rel (0) target = $region29
    $region28: #{decoder_crnn_pallas.1} parent=1 // pred_region
      _
    $region29: #{decoder_crnn_pallas.1} parent=1 // pred_fallthru
      _
    // Predicated region
    $region30: #{decoder_crnn_pallas.1} parent=1 // pred_check
      _
    $region31: #{decoder_crnn_pallas.1} parent=1 // pred_check_branch
      %54 = sbr.rel (0) target = $region33
    $region32: #{decoder_crnn_pallas.1} parent=1 // pred_region
      _
    $region33: #{decoder_crnn_pallas.1} parent=1 // pred_fallthru
      _
    // Predicated region
    $region34: #{decoder_crnn_pallas.1} parent=1 // pred_check
      _
    $region35: #{decoder_crnn_pallas.1} parent=1 // pred_check_branch
      %56 = sbr.rel (0) target = $region37
    $region36: #{decoder_crnn_pallas.1} parent=1 // pred_region
      %s58 = ssub.s32 24576, 24576
      %59 = vsyncadd [#allocation8], %s58
      %s60 = sshll.u32 [#allocation7], 4
      %s61 = int_to_ptr.vmem [resolvable:$true] %s60
      %66 = dma.hbm_to_vmem [thread:$0]  %s8, 24576, %s61, [#allocation8], 64, 64, 4
    $region37: #{decoder_crnn_pallas.1} parent=1 // pred_fallthru
      _
    // Predicated region
    $region38: #{decoder_crnn_pallas.1} parent=1 // pred_check
      _
    $region39: #{decoder_crnn_pallas.1} parent=1 // pred_check_branch
      %68 = sbr.rel (0) target = $region41
    $region40: #{decoder_crnn_pallas.1} parent=1 // pred_region
      _
    $region41: #{decoder_crnn_pallas.1} parent=1 // pred_fallthru
      _
    // Predicated region
    $region42: #{decoder_crnn_pallas.1} parent=1 // pred_check
      _
    $region43: #{decoder_crnn_pallas.1} parent=1 // pred_check_branch
      %70 = sbr.rel (0) target = $region45
    $region44: #{decoder_crnn_pallas.1} parent=1 // pred_region
      %s72 = ssub.s32 80, 80
      %73 = vsyncadd [#allocation8], %s72
      %s74 = sshll.u32 [#allocation9], 4
      %s75 = int_to_ptr.vmem [resolvable:$true] %s74
      %80 = dma.hbm_to_vmem [thread:$0]  %s10, 80, %s75, [#allocation8], 16, 16, 1
    $region45: #{decoder_crnn_pallas.1} parent=1 // pred_fallthru
      _
    // Predicated region
    $region46: #{decoder_crnn_pallas.1} parent=1 // pred_check
      _
    $region47: #{decoder_crnn_pallas.1} parent=1 // pred_check_branch
      %82 = sbr.rel (0) target = $region49
    $region48: #{decoder_crnn_pallas.1} parent=1 // pred_region
      %s84 = ssub.s32 80, 80
      %85 = vsyncadd [#allocation11], %s84
      %s86 = sshll.u32 [#allocation10], 4
      %s87 = int_to_ptr.vmem [resolvable:$true] %s86
      %92 = dma.hbm_to_vmem [thread:$0]  %s11, 80, %s87, [#allocation11], 16, 16, 1
    $region49: #{decoder_crnn_pallas.1} parent=1 // pred_fallthru
      _
    // Predicated region
    $region50: #{decoder_crnn_pallas.1} parent=1 // pred_check
      _
    $region51: #{decoder_crnn_pallas.1} parent=1 // pred_check_branch
      %94 = sbr.rel (0) target = $region53
    $region52: #{decoder_crnn_pallas.1} parent=1 // pred_region
      _
    $region53: #{decoder_crnn_pallas.1} parent=1 // pred_fallthru
      _
    // Predicated region
    $region54: #{decoder_crnn_pallas.1} parent=1 // pred_check
      _
    $region55: #{decoder_crnn_pallas.1} parent=1 // pred_check_branch
      %96 = sbr.rel (0) target = $region57
    $region56: #{decoder_crnn_pallas.1} parent=1 // pred_region
      %s98 = ssub.s32 256, 256
      %99 = vsyncadd [#allocation11], %s98
      %s100 = sshll.u32 [#allocation12], 4
      %s101 = int_to_ptr.vmem [resolvable:$true] %s100
      %106 = dma.hbm_to_vmem [thread:$0]  %s13, 256, %s101, [#allocation11], 64, 64, 4
    $region57: #{decoder_crnn_pallas.1} parent=1 // pred_fallthru
      _
    // Predicated region
    $region58: #{decoder_crnn_pallas.1} parent=1 // pred_check
      _
    $region59: #{decoder_crnn_pallas.1} parent=1 // pred_check_branch
      %108 = sbr.rel (0) target = $region61
    $region60: #{decoder_crnn_pallas.1} parent=1 // pred_region
      %s110 = ssub.s32 16, 16
      %111 = vsyncadd [#allocation14], %s110
      %s113 = sshll.u32 [#allocation13], 4
      %s114 = int_to_ptr.vmem [resolvable:$true] %s113
      %116 = dma.hbm_to_vmem [thread:$0]  %s14, 16, %s114, [#allocation14]
    $region61: #{decoder_crnn_pallas.1} parent=1 // pred_fallthru
      _
    // Predicated region
    $region62: #{decoder_crnn_pallas.1} parent=1 // pred_check
      _
    $region63: #{decoder_crnn_pallas.1} parent=1 // pred_check_branch
      %118 = sbr.rel (0) target = $region65
    $region64: #{decoder_crnn_pallas.1} parent=1 // pred_region
      %s120 = ssub.s32 16, 16
      %121 = vsyncadd [#allocation14], %s120
      %s123 = sshll.u32 [#allocation15], 4
      %s124 = int_to_ptr.vmem [resolvable:$true] %s123
      %126 = dma.hbm_to_vmem [thread:$0]  %s15, 16, %s124, [#allocation14]
    $region65: #{decoder_crnn_pallas.1} parent=1 // pred_fallthru
      _
    // Predicated region
    $region66: #{decoder_crnn_pallas.1} parent=1 // pred_check
      _
    $region67: #{decoder_crnn_pallas.1} parent=1 // pred_check_branch
      %128 = sbr.rel (0) target = $region69
    $region68: #{decoder_crnn_pallas.1} parent=1 // pred_region
      %s130 = ssub.s32 1024, 1024
      %131 = vsyncadd [#allocation17], %s130
      %s133 = sshll.u32 [#allocation16], 4
      %s134 = int_to_ptr.vmem [resolvable:$true] %s133
      %136 = dma.hbm_to_vmem [thread:$0]  %s17, 1024, %s134, [#allocation17]
    $region69: #{decoder_crnn_pallas.1} parent=1 // pred_fallthru
      _
    // Predicated region
    $region70: #{decoder_crnn_pallas.1} parent=1 // pred_check
      _
    $region71: #{decoder_crnn_pallas.1} parent=1 // pred_check_branch
      %138 = sbr.rel (0) target = $region73
    $region72: #{decoder_crnn_pallas.1} parent=1 // pred_region
      %139 = dma.done [#allocation5], 32
    $region73: #{decoder_crnn_pallas.1} parent=1 // pred_fallthru
      _
    // Predicated region
    $region74: #{decoder_crnn_pallas.1} parent=1 // pred_check
      _
    $region75: #{decoder_crnn_pallas.1} parent=1 // pred_check_branch
      %141 = sbr.rel (0) target = $region77
    $region76: #{decoder_crnn_pallas.1} parent=1 // pred_region
      %142 = dma.done [#allocation8], 24576
    $region77: #{decoder_crnn_pallas.1} parent=1 // pred_fallthru
      _
    // Predicated region
    $region78: #{decoder_crnn_pallas.1} parent=1 // pred_check
      _
    $region79: #{decoder_crnn_pallas.1} parent=1 // pred_check_branch
      %144 = sbr.rel (0) target = $region81
    $region80: #{decoder_crnn_pallas.1} parent=1 // pred_region
      %145 = dma.done [#allocation8], 80
    $region81: #{decoder_crnn_pallas.1} parent=1 // pred_fallthru
      _
    // Predicated region
    $region82: #{decoder_crnn_pallas.1} parent=1 // pred_check
      _
    $region83: #{decoder_crnn_pallas.1} parent=1 // pred_check_branch
      %147 = sbr.rel (0) target = $region85
    $region84: #{decoder_crnn_pallas.1} parent=1 // pred_region
      %148 = dma.done [#allocation11], 80
    $region85: #{decoder_crnn_pallas.1} parent=1 // pred_fallthru
      _
    // Predicated region
    $region86: #{decoder_crnn_pallas.1} parent=1 // pred_check
      _
    $region87: #{decoder_crnn_pallas.1} parent=1 // pred_check_branch
      %150 = sbr.rel (0) target = $region89
    $region88: #{decoder_crnn_pallas.1} parent=1 // pred_region
      %151 = dma.done [#allocation11], 256
    $region89: #{decoder_crnn_pallas.1} parent=1 // pred_fallthru
      _
    // Predicated region
    $region90: #{decoder_crnn_pallas.1} parent=1 // pred_check
      _
    $region91: #{decoder_crnn_pallas.1} parent=1 // pred_check_branch
      %153 = sbr.rel (0) target = $region93
    $region92: #{decoder_crnn_pallas.1} parent=1 // pred_region
      %154 = dma.done [#allocation14], 16
    $region93: #{decoder_crnn_pallas.1} parent=1 // pred_fallthru
      _
    // Predicated region
    $region94: #{decoder_crnn_pallas.1} parent=1 // pred_check
      _
    $region95: #{decoder_crnn_pallas.1} parent=1 // pred_check_branch
      %156 = sbr.rel (0) target = $region97
    $region96: #{decoder_crnn_pallas.1} parent=1 // pred_region
      %157 = dma.done [#allocation14], 16
    $region97: #{decoder_crnn_pallas.1} parent=1 // pred_fallthru
      _
    // Predicated region
    $region98: #{decoder_crnn_pallas.1} parent=1 // pred_check
      _
    $region99: #{decoder_crnn_pallas.1} parent=1 // pred_check_branch
      %159 = sbr.rel (0) target = $region101
    $region100: #{decoder_crnn_pallas.1} parent=1 // pred_region
      %160 = dma.done [#allocation17], 1024
    $region101: #{decoder_crnn_pallas.1} parent=1 // pred_fallthru
      _
    %p163 = scmp.lt.u32.totalorder 4, 8
    %p164 = pneg %p163
    // Predicated region
    $region102: #{decoder_crnn_pallas.1} parent=1 // pred_check
      _
    $region103: #{decoder_crnn_pallas.1} parent=1 // pred_check_branch
      %166 = sbr.rel (%p163) target = $region105
    $region104: #{decoder_crnn_pallas.1} parent=1 // pred_region
      %s691 = sand.u32 4, 7
      %p692 = scmp.eq.s32.totalorder %s691, 0
      %p693 = pneg %p692
      // Predicated region
      $region117: #{decoder_crnn_pallas.1} parent=104 // pred_check
        _
      $region118: #{decoder_crnn_pallas.1} parent=104 // pred_check_branch
        %695 = sbr.rel (%p692) target = $region120
      $region119: #{decoder_crnn_pallas.1} parent=104 // pred_region
        %s696 = sand.u32 4, 7
        %s697 = ssub.s32 4, %s696
        %s698 = scalar_lea.vmem %s16, %s697
        %s699 = ssub.s32 4, %s696
        %s700 = scalar_lea.vmem [#allocation2], %s699
        loop: start=0, step=1, limit=1
        $region121: #{decoder_crnn_pallas.1} parent=119 // loop_pre_header
          _
        $region122: #{decoder_crnn_pallas.1} parent=119 // loop_header
          %s702 = sphi 0, %s706
          %p703 = scmp.ge.s32.totalorder %s702, 1
          %s707 = sphi %s16, %s16
          %s708 = sphi [#allocation2], [#allocation2]
        $region123: #{decoder_crnn_pallas.1} parent=119 // loop_header_branch
          %705 = sbr.rel (%p703) target = $region127
        $region124: #{decoder_crnn_pallas.1} parent=119 // loop_body
          _
        $region125: #{decoder_crnn_pallas.1} parent=119 // loop_footer
          %s706 = sadd.s32 1, %s702
        $region126: #{decoder_crnn_pallas.1} parent=119 // loop_footer_branch
          %701 = sbr.rel target = $region122
        $region127: #{decoder_crnn_pallas.1} parent=119 // loop_exit
          _
        %s709 = sshllo.u32 0, %s696
        loop: start=0, step=1, limit=1
        $region128: #{decoder_crnn_pallas.1} parent=119 // loop_pre_header
          _
        $region129: #{decoder_crnn_pallas.1} parent=119 // loop_header
          %s711 = sphi 0, %s715
          %p712 = scmp.ge.s32.totalorder %s711, 1
          %s716 = sphi %s698, %s698
          %s717 = sphi %s700, %s700
        $region130: #{decoder_crnn_pallas.1} parent=119 // loop_header_branch
          %714 = sbr.rel (%p712) target = $region134
        $region131: #{decoder_crnn_pallas.1} parent=119 // loop_body
          %v718 = vld [vmem:[%s716] sm:%s709]
          %719 = vst [vmem:[%s717] sm:%s709] %v718
          %v720 = vld [vmem:[%s716 + $0x100] sm:%s709]
          %721 = vst [vmem:[%s717 + $0x4] sm:%s709] %v720
          %v722 = vld [vmem:[%s716 + $0x4] sm:%s709]
          %723 = vst [vmem:[%s717 + $0x8] sm:%s709] %v722
          %v724 = vld [vmem:[%s716 + $0x104] sm:%s709]
          %725 = vst [vmem:[%s717 + $0xc] sm:%s709] %v724
          %v726 = vld [vmem:[%s716 + $0x8] sm:%s709]
          %727 = vst [vmem:[%s717 + $0x10] sm:%s709] %v726
          %v728 = vld [vmem:[%s716 + $0x108] sm:%s709]
          %729 = vst [vmem:[%s717 + $0x14] sm:%s709] %v728
          %v730 = vld [vmem:[%s716 + $0xc] sm:%s709]
          %731 = vst [vmem:[%s717 + $0x18] sm:%s709] %v730
          %v732 = vld [vmem:[%s716 + $0x10c] sm:%s709]
          %733 = vst [vmem:[%s717 + $0x1c] sm:%s709] %v732
          %v734 = vld [vmem:[%s716 + $0x10] sm:%s709]
          %735 = vst [vmem:[%s717 + $0x20] sm:%s709] %v734
          %v736 = vld [vmem:[%s716 + $0x110] sm:%s709]
          %737 = vst [vmem:[%s717 + $0x24] sm:%s709] %v736
          %v738 = vld [vmem:[%s716 + $0x14] sm:%s709]
          %739 = vst [vmem:[%s717 + $0x28] sm:%s709] %v738
          %v740 = vld [vmem:[%s716 + $0x114] sm:%s709]
          %741 = vst [vmem:[%s717 + $0x2c] sm:%s709] %v740
          %v742 = vld [vmem:[%s716 + $0x18] sm:%s709]
          %743 = vst [vmem:[%s717 + $0x30] sm:%s709] %v742
          %v744 = vld [vmem:[%s716 + $0x118] sm:%s709]
          %745 = vst [vmem:[%s717 + $0x34] sm:%s709] %v744
          %v746 = vld [vmem:[%s716 + $0x1c] sm:%s709]
          %747 = vst [vmem:[%s717 + $0x38] sm:%s709] %v746
          %v748 = vld [vmem:[%s716 + $0x11c] sm:%s709]
          %749 = vst [vmem:[%s717 + $0x3c] sm:%s709] %v748
          %v750 = vld [vmem:[%s716 + $0x20] sm:%s709]
          %751 = vst [vmem:[%s717 + $0x40] sm:%s709] %v750
          %v752 = vld [vmem:[%s716 + $0x120] sm:%s709]
          %753 = vst [vmem:[%s717 + $0x44] sm:%s709] %v752
          %v754 = vld [vmem:[%s716 + $0x24] sm:%s709]
          %755 = vst [vmem:[%s717 + $0x48] sm:%s709] %v754
          %v756 = vld [vmem:[%s716 + $0x124] sm:%s709]
          %757 = vst [vmem:[%s717 + $0x4c] sm:%s709] %v756
          %v758 = vld [vmem:[%s716 + $0x28] sm:%s709]
          %759 = vst [vmem:[%s717 + $0x50] sm:%s709] %v758
          %v760 = vld [vmem:[%s716 + $0x128] sm:%s709]
          %761 = vst [vmem:[%s717 + $0x54] sm:%s709] %v760
          %v762 = vld [vmem:[%s716 + $0x2c] sm:%s709]
          %763 = vst [vmem:[%s717 + $0x58] sm:%s709] %v762
          %v764 = vld [vmem:[%s716 + $0x12c] sm:%s709]
          %765 = vst [vmem:[%s717 + $0x5c] sm:%s709] %v764
          %v766 = vld [vmem:[%s716 + $0x30] sm:%s709]
          %767 = vst [vmem:[%s717 + $0x60] sm:%s709] %v766
          %v768 = vld [vmem:[%s716 + $0x130] sm:%s709]
          %769 = vst [vmem:[%s717 + $0x64] sm:%s709] %v768
          %v770 = vld [vmem:[%s716 + $0x34] sm:%s709]
          %771 = vst [vmem:[%s717 + $0x68] sm:%s709] %v770
          %v772 = vld [vmem:[%s716 + $0x134] sm:%s709]
          %773 = vst [vmem:[%s717 + $0x6c] sm:%s709] %v772
          %v774 = vld [vmem:[%s716 + $0x38] sm:%s709]
          %775 = vst [vmem:[%s717 + $0x70] sm:%s709] %v774
          %v776 = vld [vmem:[%s716 + $0x138] sm:%s709]
          %777 = vst [vmem:[%s717 + $0x74] sm:%s709] %v776
          %v778 = vld [vmem:[%s716 + $0x3c] sm:%s709]
          %779 = vst [vmem:[%s717 + $0x78] sm:%s709] %v778
          %v780 = vld [vmem:[%s716 + $0x13c] sm:%s709]
          %781 = vst [vmem:[%s717 + $0x7c] sm:%s709] %v780
          %v782 = vld [vmem:[%s716 + $0x40] sm:%s709]
          %783 = vst [vmem:[%s717 + $0x80] sm:%s709] %v782
          %v784 = vld [vmem:[%s716 + $0x140] sm:%s709]
          %785 = vst [vmem:[%s717 + $0x84] sm:%s709] %v784
          %v786 = vld [vmem:[%s716 + $0x44] sm:%s709]
          %787 = vst [vmem:[%s717 + $0x88] sm:%s709] %v786
          %v788 = vld [vmem:[%s716 + $0x144] sm:%s709]
          %789 = vst [vmem:[%s717 + $0x8c] sm:%s709] %v788
          %v790 = vld [vmem:[%s716 + $0x48] sm:%s709]
          %791 = vst [vmem:[%s717 + $0x90] sm:%s709] %v790
          %v792 = vld [vmem:[%s716 + $0x148] sm:%s709]
          %793 = vst [vmem:[%s717 + $0x94] sm:%s709] %v792
          %v794 = vld [vmem:[%s716 + $0x4c] sm:%s709]
          %795 = vst [vmem:[%s717 + $0x98] sm:%s709] %v794
          %v796 = vld [vmem:[%s716 + $0x14c] sm:%s709]
          %797 = vst [vmem:[%s717 + $0x9c] sm:%s709] %v796
          %v798 = vld [vmem:[%s716 + $0x50] sm:%s709]
          %799 = vst [vmem:[%s717 + $0xa0] sm:%s709] %v798
          %v800 = vld [vmem:[%s716 + $0x150] sm:%s709]
          %801 = vst [vmem:[%s717 + $0xa4] sm:%s709] %v800
          %v802 = vld [vmem:[%s716 + $0x54] sm:%s709]
          %803 = vst [vmem:[%s717 + $0xa8] sm:%s709] %v802
          %v804 = vld [vmem:[%s716 + $0x154] sm:%s709]
          %805 = vst [vmem:[%s717 + $0xac] sm:%s709] %v804
          %v806 = vld [vmem:[%s716 + $0x58] sm:%s709]
          %807 = vst [vmem:[%s717 + $0xb0] sm:%s709] %v806
          %v808 = vld [vmem:[%s716 + $0x158] sm:%s709]
          %809 = vst [vmem:[%s717 + $0xb4] sm:%s709] %v808
          %v810 = vld [vmem:[%s716 + $0x5c] sm:%s709]
          %811 = vst [vmem:[%s717 + $0xb8] sm:%s709] %v810
          %v812 = vld [vmem:[%s716 + $0x15c] sm:%s709]
          %813 = vst [vmem:[%s717 + $0xbc] sm:%s709] %v812
          %v814 = vld [vmem:[%s716 + $0x60] sm:%s709]
          %815 = vst [vmem:[%s717 + $0xc0] sm:%s709] %v814
          %v816 = vld [vmem:[%s716 + $0x160] sm:%s709]
          %817 = vst [vmem:[%s717 + $0xc4] sm:%s709] %v816
          %v818 = vld [vmem:[%s716 + $0x64] sm:%s709]
          %819 = vst [vmem:[%s717 + $0xc8] sm:%s709] %v818
          %v820 = vld [vmem:[%s716 + $0x164] sm:%s709]
          %821 = vst [vmem:[%s717 + $0xcc] sm:%s709] %v820
          %v822 = vld [vmem:[%s716 + $0x68] sm:%s709]
          %823 = vst [vmem:[%s717 + $0xd0] sm:%s709] %v822
          %v824 = vld [vmem:[%s716 + $0x168] sm:%s709]
          %825 = vst [vmem:[%s717 + $0xd4] sm:%s709] %v824
          %v826 = vld [vmem:[%s716 + $0x6c] sm:%s709]
          %827 = vst [vmem:[%s717 + $0xd8] sm:%s709] %v826
          %v828 = vld [vmem:[%s716 + $0x16c] sm:%s709]
          %829 = vst [vmem:[%s717 + $0xdc] sm:%s709] %v828
          %v830 = vld [vmem:[%s716 + $0x70] sm:%s709]
          %831 = vst [vmem:[%s717 + $0xe0] sm:%s709] %v830
          %v832 = vld [vmem:[%s716 + $0x170] sm:%s709]
          %833 = vst [vmem:[%s717 + $0xe4] sm:%s709] %v832
          %v834 = vld [vmem:[%s716 + $0x74] sm:%s709]
          %835 = vst [vmem:[%s717 + $0xe8] sm:%s709] %v834
          %v836 = vld [vmem:[%s716 + $0x174] sm:%s709]
          %837 = vst [vmem:[%s717 + $0xec] sm:%s709] %v836
          %v838 = vld [vmem:[%s716 + $0x78] sm:%s709]
          %839 = vst [vmem:[%s717 + $0xf0] sm:%s709] %v838
          %v840 = vld [vmem:[%s716 + $0x178] sm:%s709]
          %841 = vst [vmem:[%s717 + $0xf4] sm:%s709] %v840
          %v842 = vld [vmem:[%s716 + $0x7c] sm:%s709]
          %843 = vst [vmem:[%s717 + $0xf8] sm:%s709] %v842
          %v844 = vld [vmem:[%s716 + $0x17c] sm:%s709]
          %845 = vst [vmem:[%s717 + $0xfc] sm:%s709] %v844
          %v846 = vld [vmem:[%s716 + $0x80] sm:%s709]
          %847 = vst [vmem:[%s717 + $0x100] sm:%s709] %v846
          %v848 = vld [vmem:[%s716 + $0x180] sm:%s709]
          %849 = vst [vmem:[%s717 + $0x104] sm:%s709] %v848
          %v850 = vld [vmem:[%s716 + $0x84] sm:%s709]
          %851 = vst [vmem:[%s717 + $0x108] sm:%s709] %v850
          %v852 = vld [vmem:[%s716 + $0x184] sm:%s709]
          %853 = vst [vmem:[%s717 + $0x10c] sm:%s709] %v852
          %v854 = vld [vmem:[%s716 + $0x88] sm:%s709]
          %855 = vst [vmem:[%s717 + $0x110] sm:%s709] %v854
          %v856 = vld [vmem:[%s716 + $0x188] sm:%s709]
          %857 = vst [vmem:[%s717 + $0x114] sm:%s709] %v856
          %v858 = vld [vmem:[%s716 + $0x8c] sm:%s709]
          %859 = vst [vmem:[%s717 + $0x118] sm:%s709] %v858
          %v860 = vld [vmem:[%s716 + $0x18c] sm:%s709]
          %861 = vst [vmem:[%s717 + $0x11c] sm:%s709] %v860
          %v862 = vld [vmem:[%s716 + $0x90] sm:%s709]
          %863 = vst [vmem:[%s717 + $0x120] sm:%s709] %v862
          %v864 = vld [vmem:[%s716 + $0x190] sm:%s709]
          %865 = vst [vmem:[%s717 + $0x124] sm:%s709] %v864
          %v866 = vld [vmem:[%s716 + $0x94] sm:%s709]
          %867 = vst [vmem:[%s717 + $0x128] sm:%s709] %v866
          %v868 = vld [vmem:[%s716 + $0x194] sm:%s709]
          %869 = vst [vmem:[%s717 + $0x12c] sm:%s709] %v868
          %v870 = vld [vmem:[%s716 + $0x98] sm:%s709]
          %871 = vst [vmem:[%s717 + $0x130] sm:%s709] %v870
          %v872 = vld [vmem:[%s716 + $0x198] sm:%s709]
          %873 = vst [vmem:[%s717 + $0x134] sm:%s709] %v872
          %v874 = vld [vmem:[%s716 + $0x9c] sm:%s709]
          %875 = vst [vmem:[%s717 + $0x138] sm:%s709] %v874
          %v876 = vld [vmem:[%s716 + $0x19c] sm:%s709]
          %877 = vst [vmem:[%s717 + $0x13c] sm:%s709] %v876
          %v878 = vld [vmem:[%s716 + $0xa0] sm:%s709]
          %879 = vst [vmem:[%s717 + $0x140] sm:%s709] %v878
          %v880 = vld [vmem:[%s716 + $0x1a0] sm:%s709]
          %881 = vst [vmem:[%s717 + $0x144] sm:%s709] %v880
          %v882 = vld [vmem:[%s716 + $0xa4] sm:%s709]
          %883 = vst [vmem:[%s717 + $0x148] sm:%s709] %v882
          %v884 = vld [vmem:[%s716 + $0x1a4] sm:%s709]
          %885 = vst [vmem:[%s717 + $0x14c] sm:%s709] %v884
          %v886 = vld [vmem:[%s716 + $0xa8] sm:%s709]
          %887 = vst [vmem:[%s717 + $0x150] sm:%s709] %v886
          %v888 = vld [vmem:[%s716 + $0x1a8] sm:%s709]
          %889 = vst [vmem:[%s717 + $0x154] sm:%s709] %v888
          %v890 = vld [vmem:[%s716 + $0xac] sm:%s709]
          %891 = vst [vmem:[%s717 + $0x158] sm:%s709] %v890
          %v892 = vld [vmem:[%s716 + $0x1ac] sm:%s709]
          %893 = vst [vmem:[%s717 + $0x15c] sm:%s709] %v892
          %v894 = vld [vmem:[%s716 + $0xb0] sm:%s709]
          %895 = vst [vmem:[%s717 + $0x160] sm:%s709] %v894
          %v896 = vld [vmem:[%s716 + $0x1b0] sm:%s709]
          %897 = vst [vmem:[%s717 + $0x164] sm:%s709] %v896
          %v898 = vld [vmem:[%s716 + $0xb4] sm:%s709]
          %899 = vst [vmem:[%s717 + $0x168] sm:%s709] %v898
          %v900 = vld [vmem:[%s716 + $0x1b4] sm:%s709]
          %901 = vst [vmem:[%s717 + $0x16c] sm:%s709] %v900
          %v902 = vld [vmem:[%s716 + $0xb8] sm:%s709]
          %903 = vst [vmem:[%s717 + $0x170] sm:%s709] %v902
          %v904 = vld [vmem:[%s716 + $0x1b8] sm:%s709]
          %905 = vst [vmem:[%s717 + $0x174] sm:%s709] %v904
          %v906 = vld [vmem:[%s716 + $0xbc] sm:%s709]
          %907 = vst [vmem:[%s717 + $0x178] sm:%s709] %v906
          %v908 = vld [vmem:[%s716 + $0x1bc] sm:%s709]
          %909 = vst [vmem:[%s717 + $0x17c] sm:%s709] %v908
          %v910 = vld [vmem:[%s716 + $0xc0] sm:%s709]
          %911 = vst [vmem:[%s717 + $0x180] sm:%s709] %v910
          %v912 = vld [vmem:[%s716 + $0x1c0] sm:%s709]
          %913 = vst [vmem:[%s717 + $0x184] sm:%s709] %v912
          %v914 = vld [vmem:[%s716 + $0xc4] sm:%s709]
          %915 = vst [vmem:[%s717 + $0x188] sm:%s709] %v914
          %v916 = vld [vmem:[%s716 + $0x1c4] sm:%s709]
          %917 = vst [vmem:[%s717 + $0x18c] sm:%s709] %v916
          %v918 = vld [vmem:[%s716 + $0xc8] sm:%s709]
          %919 = vst [vmem:[%s717 + $0x190] sm:%s709] %v918
          %v920 = vld [vmem:[%s716 + $0x1c8] sm:%s709]
          %921 = vst [vmem:[%s717 + $0x194] sm:%s709] %v920
          %v922 = vld [vmem:[%s716 + $0xcc] sm:%s709]
          %923 = vst [vmem:[%s717 + $0x198] sm:%s709] %v922
          %v924 = vld [vmem:[%s716 + $0x1cc] sm:%s709]
          %925 = vst [vmem:[%s717 + $0x19c] sm:%s709] %v924
          %v926 = vld [vmem:[%s716 + $0xd0] sm:%s709]
          %927 = vst [vmem:[%s717 + $0x1a0] sm:%s709] %v926
          %v928 = vld [vmem:[%s716 + $0x1d0] sm:%s709]
          %929 = vst [vmem:[%s717 + $0x1a4] sm:%s709] %v928
          %v930 = vld [vmem:[%s716 + $0xd4] sm:%s709]
          %931 = vst [vmem:[%s717 + $0x1a8] sm:%s709] %v930
          %v932 = vld [vmem:[%s716 + $0x1d4] sm:%s709]
          %933 = vst [vmem:[%s717 + $0x1ac] sm:%s709] %v932
          %v934 = vld [vmem:[%s716 + $0xd8] sm:%s709]
          %935 = vst [vmem:[%s717 + $0x1b0] sm:%s709] %v934
          %v936 = vld [vmem:[%s716 + $0x1d8] sm:%s709]
          %937 = vst [vmem:[%s717 + $0x1b4] sm:%s709] %v936
          %v938 = vld [vmem:[%s716 + $0xdc] sm:%s709]
          %939 = vst [vmem:[%s717 + $0x1b8] sm:%s709] %v938
          %v940 = vld [vmem:[%s716 + $0x1dc] sm:%s709]
          %941 = vst [vmem:[%s717 + $0x1bc] sm:%s709] %v940
          %v942 = vld [vmem:[%s716 + $0xe0] sm:%s709]
          %943 = vst [vmem:[%s717 + $0x1c0] sm:%s709] %v942
          %v944 = vld [vmem:[%s716 + $0x1e0] sm:%s709]
          %945 = vst [vmem:[%s717 + $0x1c4] sm:%s709] %v944
          %v946 = vld [vmem:[%s716 + $0xe4] sm:%s709]
          %947 = vst [vmem:[%s717 + $0x1c8] sm:%s709] %v946
          %v948 = vld [vmem:[%s716 + $0x1e4] sm:%s709]
          %949 = vst [vmem:[%s717 + $0x1cc] sm:%s709] %v948
          %v950 = vld [vmem:[%s716 + $0xe8] sm:%s709]
          %951 = vst [vmem:[%s717 + $0x1d0] sm:%s709] %v950
          %v952 = vld [vmem:[%s716 + $0x1e8] sm:%s709]
          %953 = vst [vmem:[%s717 + $0x1d4] sm:%s709] %v952
          %v954 = vld [vmem:[%s716 + $0xec] sm:%s709]
          %955 = vst [vmem:[%s717 + $0x1d8] sm:%s709] %v954
          %v956 = vld [vmem:[%s716 + $0x1ec] sm:%s709]
          %957 = vst [vmem:[%s717 + $0x1dc] sm:%s709] %v956
          %v958 = vld [vmem:[%s716 + $0xf0] sm:%s709]
          %959 = vst [vmem:[%s717 + $0x1e0] sm:%s709] %v958
          %v960 = vld [vmem:[%s716 + $0x1f0] sm:%s709]
          %961 = vst [vmem:[%s717 + $0x1e4] sm:%s709] %v960
          %v962 = vld [vmem:[%s716 + $0xf4] sm:%s709]
          %963 = vst [vmem:[%s717 + $0x1e8] sm:%s709] %v962
          %v964 = vld [vmem:[%s716 + $0x1f4] sm:%s709]
          %965 = vst [vmem:[%s717 + $0x1ec] sm:%s709] %v964
          %v966 = vld [vmem:[%s716 + $0xf8] sm:%s709]
          %967 = vst [vmem:[%s717 + $0x1f0] sm:%s709] %v966
          %v968 = vld [vmem:[%s716 + $0x1f8] sm:%s709]
          %969 = vst [vmem:[%s717 + $0x1f4] sm:%s709] %v968
          %v970 = vld [vmem:[%s716 + $0xfc] sm:%s709]
          %971 = vst [vmem:[%s717 + $0x1f8] sm:%s709] %v970
          %v972 = vld [vmem:[%s716 + $0x1fc] sm:%s709]
          %973 = vst [vmem:[%s717 + $0x1fc] sm:%s709] %v972
          %v974 = vld [vmem:[%s716 + $0x200] sm:%s709]
          %975 = vst [vmem:[%s717 + $0x200] sm:%s709] %v974
          %v976 = vld [vmem:[%s716 + $0x300] sm:%s709]
          %977 = vst [vmem:[%s717 + $0x204] sm:%s709] %v976
          %v978 = vld [vmem:[%s716 + $0x204] sm:%s709]
          %979 = vst [vmem:[%s717 + $0x208] sm:%s709] %v978
          %v980 = vld [vmem:[%s716 + $0x304] sm:%s709]
          %981 = vst [vmem:[%s717 + $0x20c] sm:%s709] %v980
          %v982 = vld [vmem:[%s716 + $0x208] sm:%s709]
          %983 = vst [vmem:[%s717 + $0x210] sm:%s709] %v982
          %v984 = vld [vmem:[%s716 + $0x308] sm:%s709]
          %985 = vst [vmem:[%s717 + $0x214] sm:%s709] %v984
          %v986 = vld [vmem:[%s716 + $0x20c] sm:%s709]
          %987 = vst [vmem:[%s717 + $0x218] sm:%s709] %v986
          %v988 = vld [vmem:[%s716 + $0x30c] sm:%s709]
          %989 = vst [vmem:[%s717 + $0x21c] sm:%s709] %v988
          %v990 = vld [vmem:[%s716 + $0x210] sm:%s709]
          %991 = vst [vmem:[%s717 + $0x220] sm:%s709] %v990
          %v992 = vld [vmem:[%s716 + $0x310] sm:%s709]
          %993 = vst [vmem:[%s717 + $0x224] sm:%s709] %v992
          %v994 = vld [vmem:[%s716 + $0x214] sm:%s709]
          %995 = vst [vmem:[%s717 + $0x228] sm:%s709] %v994
          %v996 = vld [vmem:[%s716 + $0x314] sm:%s709]
          %997 = vst [vmem:[%s717 + $0x22c] sm:%s709] %v996
          %v998 = vld [vmem:[%s716 + $0x218] sm:%s709]
          %999 = vst [vmem:[%s717 + $0x230] sm:%s709] %v998
          %v1000 = vld [vmem:[%s716 + $0x318] sm:%s709]
          %1001 = vst [vmem:[%s717 + $0x234] sm:%s709] %v1000
          %v1002 = vld [vmem:[%s716 + $0x21c] sm:%s709]
          %1003 = vst [vmem:[%s717 + $0x238] sm:%s709] %v1002
          %v1004 = vld [vmem:[%s716 + $0x31c] sm:%s709]
          %1005 = vst [vmem:[%s717 + $0x23c] sm:%s709] %v1004
          %v1006 = vld [vmem:[%s716 + $0x220] sm:%s709]
          %1007 = vst [vmem:[%s717 + $0x240] sm:%s709] %v1006
          %v1008 = vld [vmem:[%s716 + $0x320] sm:%s709]
          %1009 = vst [vmem:[%s717 + $0x244] sm:%s709] %v1008
          %v1010 = vld [vmem:[%s716 + $0x224] sm:%s709]
          %1011 = vst [vmem:[%s717 + $0x248] sm:%s709] %v1010
          %v1012 = vld [vmem:[%s716 + $0x324] sm:%s709]
          %1013 = vst [vmem:[%s717 + $0x24c] sm:%s709] %v1012
          %v1014 = vld [vmem:[%s716 + $0x228] sm:%s709]
          %1015 = vst [vmem:[%s717 + $0x250] sm:%s709] %v1014
          %v1016 = vld [vmem:[%s716 + $0x328] sm:%s709]
          %1017 = vst [vmem:[%s717 + $0x254] sm:%s709] %v1016
          %v1018 = vld [vmem:[%s716 + $0x22c] sm:%s709]
          %1019 = vst [vmem:[%s717 + $0x258] sm:%s709] %v1018
          %v1020 = vld [vmem:[%s716 + $0x32c] sm:%s709]
          %1021 = vst [vmem:[%s717 + $0x25c] sm:%s709] %v1020
          %v1022 = vld [vmem:[%s716 + $0x230] sm:%s709]
          %1023 = vst [vmem:[%s717 + $0x260] sm:%s709] %v1022
          %v1024 = vld [vmem:[%s716 + $0x330] sm:%s709]
          %1025 = vst [vmem:[%s717 + $0x264] sm:%s709] %v1024
          %v1026 = vld [vmem:[%s716 + $0x234] sm:%s709]
          %1027 = vst [vmem:[%s717 + $0x268] sm:%s709] %v1026
          %v1028 = vld [vmem:[%s716 + $0x334] sm:%s709]
          %1029 = vst [vmem:[%s717 + $0x26c] sm:%s709] %v1028
          %v1030 = vld [vmem:[%s716 + $0x238] sm:%s709]
          %1031 = vst [vmem:[%s717 + $0x270] sm:%s709] %v1030
          %v1032 = vld [vmem:[%s716 + $0x338] sm:%s709]
          %1033 = vst [vmem:[%s717 + $0x274] sm:%s709] %v1032
          %v1034 = vld [vmem:[%s716 + $0x23c] sm:%s709]
          %1035 = vst [vmem:[%s717 + $0x278] sm:%s709] %v1034
          %v1036 = vld [vmem:[%s716 + $0x33c] sm:%s709]
          %1037 = vst [vmem:[%s717 + $0x27c] sm:%s709] %v1036
          %v1038 = vld [vmem:[%s716 + $0x240] sm:%s709]
          %1039 = vst [vmem:[%s717 + $0x280] sm:%s709] %v1038
          %v1040 = vld [vmem:[%s716 + $0x340] sm:%s709]
          %1041 = vst [vmem:[%s717 + $0x284] sm:%s709] %v1040
          %v1042 = vld [vmem:[%s716 + $0x244] sm:%s709]
          %1043 = vst [vmem:[%s717 + $0x288] sm:%s709] %v1042
          %v1044 = vld [vmem:[%s716 + $0x344] sm:%s709]
          %1045 = vst [vmem:[%s717 + $0x28c] sm:%s709] %v1044
          %v1046 = vld [vmem:[%s716 + $0x248] sm:%s709]
          %1047 = vst [vmem:[%s717 + $0x290] sm:%s709] %v1046
          %v1048 = vld [vmem:[%s716 + $0x348] sm:%s709]
          %1049 = vst [vmem:[%s717 + $0x294] sm:%s709] %v1048
          %v1050 = vld [vmem:[%s716 + $0x24c] sm:%s709]
          %1051 = vst [vmem:[%s717 + $0x298] sm:%s709] %v1050
          %v1052 = vld [vmem:[%s716 + $0x34c] sm:%s709]
          %1053 = vst [vmem:[%s717 + $0x29c] sm:%s709] %v1052
          %v1054 = vld [vmem:[%s716 + $0x250] sm:%s709]
          %1055 = vst [vmem:[%s717 + $0x2a0] sm:%s709] %v1054
          %v1056 = vld [vmem:[%s716 + $0x350] sm:%s709]
          %1057 = vst [vmem:[%s717 + $0x2a4] sm:%s709] %v1056
          %v1058 = vld [vmem:[%s716 + $0x254] sm:%s709]
          %1059 = vst [vmem:[%s717 + $0x2a8] sm:%s709] %v1058
          %v1060 = vld [vmem:[%s716 + $0x354] sm:%s709]
          %1061 = vst [vmem:[%s717 + $0x2ac] sm:%s709] %v1060
          %v1062 = vld [vmem:[%s716 + $0x258] sm:%s709]
          %1063 = vst [vmem:[%s717 + $0x2b0] sm:%s709] %v1062
          %v1064 = vld [vmem:[%s716 + $0x358] sm:%s709]
          %1065 = vst [vmem:[%s717 + $0x2b4] sm:%s709] %v1064
          %v1066 = vld [vmem:[%s716 + $0x25c] sm:%s709]
          %1067 = vst [vmem:[%s717 + $0x2b8] sm:%s709] %v1066
          %v1068 = vld [vmem:[%s716 + $0x35c] sm:%s709]
          %1069 = vst [vmem:[%s717 + $0x2bc] sm:%s709] %v1068
          %v1070 = vld [vmem:[%s716 + $0x260] sm:%s709]
          %1071 = vst [vmem:[%s717 + $0x2c0] sm:%s709] %v1070
          %v1072 = vld [vmem:[%s716 + $0x360] sm:%s709]
          %1073 = vst [vmem:[%s717 + $0x2c4] sm:%s709] %v1072
          %v1074 = vld [vmem:[%s716 + $0x264] sm:%s709]
          %1075 = vst [vmem:[%s717 + $0x2c8] sm:%s709] %v1074
          %v1076 = vld [vmem:[%s716 + $0x364] sm:%s709]
          %1077 = vst [vmem:[%s717 + $0x2cc] sm:%s709] %v1076
          %v1078 = vld [vmem:[%s716 + $0x268] sm:%s709]
          %1079 = vst [vmem:[%s717 + $0x2d0] sm:%s709] %v1078
          %v1080 = vld [vmem:[%s716 + $0x368] sm:%s709]
          %1081 = vst [vmem:[%s717 + $0x2d4] sm:%s709] %v1080
          %v1082 = vld [vmem:[%s716 + $0x26c] sm:%s709]
          %1083 = vst [vmem:[%s717 + $0x2d8] sm:%s709] %v1082
          %v1084 = vld [vmem:[%s716 + $0x36c] sm:%s709]
          %1085 = vst [vmem:[%s717 + $0x2dc] sm:%s709] %v1084
          %v1086 = vld [vmem:[%s716 + $0x270] sm:%s709]
          %1087 = vst [vmem:[%s717 + $0x2e0] sm:%s709] %v1086
          %v1088 = vld [vmem:[%s716 + $0x370] sm:%s709]
          %1089 = vst [vmem:[%s717 + $0x2e4] sm:%s709] %v1088
          %v1090 = vld [vmem:[%s716 + $0x274] sm:%s709]
          %1091 = vst [vmem:[%s717 + $0x2e8] sm:%s709] %v1090
          %v1092 = vld [vmem:[%s716 + $0x374] sm:%s709]
          %1093 = vst [vmem:[%s717 + $0x2ec] sm:%s709] %v1092
          %v1094 = vld [vmem:[%s716 + $0x278] sm:%s709]
          %1095 = vst [vmem:[%s717 + $0x2f0] sm:%s709] %v1094
          %v1096 = vld [vmem:[%s716 + $0x378] sm:%s709]
          %1097 = vst [vmem:[%s717 + $0x2f4] sm:%s709] %v1096
          %v1098 = vld [vmem:[%s716 + $0x27c] sm:%s709]
          %1099 = vst [vmem:[%s717 + $0x2f8] sm:%s709] %v1098
          %v1100 = vld [vmem:[%s716 + $0x37c] sm:%s709]
          %1101 = vst [vmem:[%s717 + $0x2fc] sm:%s709] %v1100
          %v1102 = vld [vmem:[%s716 + $0x280] sm:%s709]
          %1103 = vst [vmem:[%s717 + $0x300] sm:%s709] %v1102
          %v1104 = vld [vmem:[%s716 + $0x380] sm:%s709]
          %1105 = vst [vmem:[%s717 + $0x304] sm:%s709] %v1104
          %v1106 = vld [vmem:[%s716 + $0x284] sm:%s709]
          %1107 = vst [vmem:[%s717 + $0x308] sm:%s709] %v1106
          %v1108 = vld [vmem:[%s716 + $0x384] sm:%s709]
          %1109 = vst [vmem:[%s717 + $0x30c] sm:%s709] %v1108
          %v1110 = vld [vmem:[%s716 + $0x288] sm:%s709]
          %1111 = vst [vmem:[%s717 + $0x310] sm:%s709] %v1110
          %v1112 = vld [vmem:[%s716 + $0x388] sm:%s709]
          %1113 = vst [vmem:[%s717 + $0x314] sm:%s709] %v1112
          %v1114 = vld [vmem:[%s716 + $0x28c] sm:%s709]
          %1115 = vst [vmem:[%s717 + $0x318] sm:%s709] %v1114
          %v1116 = vld [vmem:[%s716 + $0x38c] sm:%s709]
          %1117 = vst [vmem:[%s717 + $0x31c] sm:%s709] %v1116
          %v1118 = vld [vmem:[%s716 + $0x290] sm:%s709]
          %1119 = vst [vmem:[%s717 + $0x320] sm:%s709] %v1118
          %v1120 = vld [vmem:[%s716 + $0x390] sm:%s709]
          %1121 = vst [vmem:[%s717 + $0x324] sm:%s709] %v1120
          %v1122 = vld [vmem:[%s716 + $0x294] sm:%s709]
          %1123 = vst [vmem:[%s717 + $0x328] sm:%s709] %v1122
          %v1124 = vld [vmem:[%s716 + $0x394] sm:%s709]
          %1125 = vst [vmem:[%s717 + $0x32c] sm:%s709] %v1124
          %v1126 = vld [vmem:[%s716 + $0x298] sm:%s709]
          %1127 = vst [vmem:[%s717 + $0x330] sm:%s709] %v1126
          %v1128 = vld [vmem:[%s716 + $0x398] sm:%s709]
          %1129 = vst [vmem:[%s717 + $0x334] sm:%s709] %v1128
          %v1130 = vld [vmem:[%s716 + $0x29c] sm:%s709]
          %1131 = vst [vmem:[%s717 + $0x338] sm:%s709] %v1130
          %v1132 = vld [vmem:[%s716 + $0x39c] sm:%s709]
          %1133 = vst [vmem:[%s717 + $0x33c] sm:%s709] %v1132
          %v1134 = vld [vmem:[%s716 + $0x2a0] sm:%s709]
          %1135 = vst [vmem:[%s717 + $0x340] sm:%s709] %v1134
          %v1136 = vld [vmem:[%s716 + $0x3a0] sm:%s709]
          %1137 = vst [vmem:[%s717 + $0x344] sm:%s709] %v1136
          %v1138 = vld [vmem:[%s716 + $0x2a4] sm:%s709]
          %1139 = vst [vmem:[%s717 + $0x348] sm:%s709] %v1138
          %v1140 = vld [vmem:[%s716 + $0x3a4] sm:%s709]
          %1141 = vst [vmem:[%s717 + $0x34c] sm:%s709] %v1140
          %v1142 = vld [vmem:[%s716 + $0x2a8] sm:%s709]
          %1143 = vst [vmem:[%s717 + $0x350] sm:%s709] %v1142
          %v1144 = vld [vmem:[%s716 + $0x3a8] sm:%s709]
          %1145 = vst [vmem:[%s717 + $0x354] sm:%s709] %v1144
          %v1146 = vld [vmem:[%s716 + $0x2ac] sm:%s709]
          %1147 = vst [vmem:[%s717 + $0x358] sm:%s709] %v1146
          %v1148 = vld [vmem:[%s716 + $0x3ac] sm:%s709]
          %1149 = vst [vmem:[%s717 + $0x35c] sm:%s709] %v1148
          %v1150 = vld [vmem:[%s716 + $0x2b0] sm:%s709]
          %1151 = vst [vmem:[%s717 + $0x360] sm:%s709] %v1150
          %v1152 = vld [vmem:[%s716 + $0x3b0] sm:%s709]
          %1153 = vst [vmem:[%s717 + $0x364] sm:%s709] %v1152
          %v1154 = vld [vmem:[%s716 + $0x2b4] sm:%s709]
          %1155 = vst [vmem:[%s717 + $0x368] sm:%s709] %v1154
          %v1156 = vld [vmem:[%s716 + $0x3b4] sm:%s709]
          %1157 = vst [vmem:[%s717 + $0x36c] sm:%s709] %v1156
          %v1158 = vld [vmem:[%s716 + $0x2b8] sm:%s709]
          %1159 = vst [vmem:[%s717 + $0x370] sm:%s709] %v1158
          %v1160 = vld [vmem:[%s716 + $0x3b8] sm:%s709]
          %1161 = vst [vmem:[%s717 + $0x374] sm:%s709] %v1160
          %v1162 = vld [vmem:[%s716 + $0x2bc] sm:%s709]
          %1163 = vst [vmem:[%s717 + $0x378] sm:%s709] %v1162
          %v1164 = vld [vmem:[%s716 + $0x3bc] sm:%s709]
          %1165 = vst [vmem:[%s717 + $0x37c] sm:%s709] %v1164
          %v1166 = vld [vmem:[%s716 + $0x2c0] sm:%s709]
          %1167 = vst [vmem:[%s717 + $0x380] sm:%s709] %v1166
          %v1168 = vld [vmem:[%s716 + $0x3c0] sm:%s709]
          %1169 = vst [vmem:[%s717 + $0x384] sm:%s709] %v1168
          %v1170 = vld [vmem:[%s716 + $0x2c4] sm:%s709]
          %1171 = vst [vmem:[%s717 + $0x388] sm:%s709] %v1170
          %v1172 = vld [vmem:[%s716 + $0x3c4] sm:%s709]
          %1173 = vst [vmem:[%s717 + $0x38c] sm:%s709] %v1172
          %v1174 = vld [vmem:[%s716 + $0x2c8] sm:%s709]
          %1175 = vst [vmem:[%s717 + $0x390] sm:%s709] %v1174
          %v1176 = vld [vmem:[%s716 + $0x3c8] sm:%s709]
          %1177 = vst [vmem:[%s717 + $0x394] sm:%s709] %v1176
          %v1178 = vld [vmem:[%s716 + $0x2cc] sm:%s709]
          %1179 = vst [vmem:[%s717 + $0x398] sm:%s709] %v1178
          %v1180 = vld [vmem:[%s716 + $0x3cc] sm:%s709]
          %1181 = vst [vmem:[%s717 + $0x39c] sm:%s709] %v1180
          %v1182 = vld [vmem:[%s716 + $0x2d0] sm:%s709]
          %1183 = vst [vmem:[%s717 + $0x3a0] sm:%s709] %v1182
          %v1184 = vld [vmem:[%s716 + $0x3d0] sm:%s709]
          %1185 = vst [vmem:[%s717 + $0x3a4] sm:%s709] %v1184
          %v1186 = vld [vmem:[%s716 + $0x2d4] sm:%s709]
          %1187 = vst [vmem:[%s717 + $0x3a8] sm:%s709] %v1186
          %v1188 = vld [vmem:[%s716 + $0x3d4] sm:%s709]
          %1189 = vst [vmem:[%s717 + $0x3ac] sm:%s709] %v1188
          %v1190 = vld [vmem:[%s716 + $0x2d8] sm:%s709]
          %1191 = vst [vmem:[%s717 + $0x3b0] sm:%s709] %v1190
          %v1192 = vld [vmem:[%s716 + $0x3d8] sm:%s709]
          %1193 = vst [vmem:[%s717 + $0x3b4] sm:%s709] %v1192
          %v1194 = vld [vmem:[%s716 + $0x2dc] sm:%s709]
          %1195 = vst [vmem:[%s717 + $0x3b8] sm:%s709] %v1194
          %v1196 = vld [vmem:[%s716 + $0x3dc] sm:%s709]
          %1197 = vst [vmem:[%s717 + $0x3bc] sm:%s709] %v1196
          %v1198 = vld [vmem:[%s716 + $0x2e0] sm:%s709]
          %1199 = vst [vmem:[%s717 + $0x3c0] sm:%s709] %v1198
          %v1200 = vld [vmem:[%s716 + $0x3e0] sm:%s709]
          %1201 = vst [vmem:[%s717 + $0x3c4] sm:%s709] %v1200
          %v1202 = vld [vmem:[%s716 + $0x2e4] sm:%s709]
          %1203 = vst [vmem:[%s717 + $0x3c8] sm:%s709] %v1202
          %v1204 = vld [vmem:[%s716 + $0x3e4] sm:%s709]
          %1205 = vst [vmem:[%s717 + $0x3cc] sm:%s709] %v1204
          %v1206 = vld [vmem:[%s716 + $0x2e8] sm:%s709]
          %1207 = vst [vmem:[%s717 + $0x3d0] sm:%s709] %v1206
          %v1208 = vld [vmem:[%s716 + $0x3e8] sm:%s709]
          %1209 = vst [vmem:[%s717 + $0x3d4] sm:%s709] %v1208
          %v1210 = vld [vmem:[%s716 + $0x2ec] sm:%s709]
          %1211 = vst [vmem:[%s717 + $0x3d8] sm:%s709] %v1210
          %v1212 = vld [vmem:[%s716 + $0x3ec] sm:%s709]
          %1213 = vst [vmem:[%s717 + $0x3dc] sm:%s709] %v1212
          %v1214 = vld [vmem:[%s716 + $0x2f0] sm:%s709]
          %1215 = vst [vmem:[%s717 + $0x3e0] sm:%s709] %v1214
          %v1216 = vld [vmem:[%s716 + $0x3f0] sm:%s709]
          %1217 = vst [vmem:[%s717 + $0x3e4] sm:%s709] %v1216
          %v1218 = vld [vmem:[%s716 + $0x2f4] sm:%s709]
          %1219 = vst [vmem:[%s717 + $0x3e8] sm:%s709] %v1218
          %v1220 = vld [vmem:[%s716 + $0x3f4] sm:%s709]
          %1221 = vst [vmem:[%s717 + $0x3ec] sm:%s709] %v1220
          %v1222 = vld [vmem:[%s716 + $0x2f8] sm:%s709]
          %1223 = vst [vmem:[%s717 + $0x3f0] sm:%s709] %v1222
          %v1224 = vld [vmem:[%s716 + $0x3f8] sm:%s709]
          %1225 = vst [vmem:[%s717 + $0x3f4] sm:%s709] %v1224
          %v1226 = vld [vmem:[%s716 + $0x2fc] sm:%s709]
          %1227 = vst [vmem:[%s717 + $0x3f8] sm:%s709] %v1226
          %v1228 = vld [vmem:[%s716 + $0x3fc] sm:%s709]
          %1229 = vst [vmem:[%s717 + $0x3fc] sm:%s709] %v1228
        $region132: #{decoder_crnn_pallas.1} parent=119 // loop_footer
          %s715 = sadd.s32 1, %s711
        $region133: #{decoder_crnn_pallas.1} parent=119 // loop_footer_branch
          %710 = sbr.rel target = $region129
        $region134: #{decoder_crnn_pallas.1} parent=119 // loop_exit
          _
      $region120: #{decoder_crnn_pallas.1} parent=104 // pred_fallthru
        _
    $region105: #{decoder_crnn_pallas.1} parent=1 // pred_fallthru
      _
    // Predicated region
    $region106: #{decoder_crnn_pallas.1} parent=1 // pred_check
      %p167 = pneg %p163
    $region107: #{decoder_crnn_pallas.1} parent=1 // pred_check_branch
      %169 = sbr.rel (%p167) target = $region109
    $region108: #{decoder_crnn_pallas.1} parent=1 // pred_region
      %s170 = sshllo.u32 0, 4
      loop: start=0, step=1, limit=1
      $region110: #{decoder_crnn_pallas.1} parent=108 // loop_pre_header
        _
      $region111: #{decoder_crnn_pallas.1} parent=108 // loop_header
        %s172 = sphi 0, %s176
        %p173 = scmp.ge.s32.totalorder %s172, 1
        %s177 = sphi %s16, %s16
        %s178 = sphi [#allocation2], [#allocation2]
      $region112: #{decoder_crnn_pallas.1} parent=108 // loop_header_branch
        %175 = sbr.rel (%p173) target = $region116
      $region113: #{decoder_crnn_pallas.1} parent=108 // loop_body
        %v179 = vld [vmem:[%s177] sm:%s170]
        %180 = vst [vmem:[%s178] sm:%s170] %v179
        %v181 = vld [vmem:[%s177 + $0x100] sm:%s170]
        %182 = vst [vmem:[%s178 + $0x4] sm:%s170] %v181
        %v183 = vld [vmem:[%s177 + $0x4] sm:%s170]
        %184 = vst [vmem:[%s178 + $0x8] sm:%s170] %v183
        %v185 = vld [vmem:[%s177 + $0x104] sm:%s170]
        %186 = vst [vmem:[%s178 + $0xc] sm:%s170] %v185
        %v187 = vld [vmem:[%s177 + $0x8] sm:%s170]
        %188 = vst [vmem:[%s178 + $0x10] sm:%s170] %v187
        %v189 = vld [vmem:[%s177 + $0x108] sm:%s170]
        %190 = vst [vmem:[%s178 + $0x14] sm:%s170] %v189
        %v191 = vld [vmem:[%s177 + $0xc] sm:%s170]
        %192 = vst [vmem:[%s178 + $0x18] sm:%s170] %v191
        %v193 = vld [vmem:[%s177 + $0x10c] sm:%s170]
        %194 = vst [vmem:[%s178 + $0x1c] sm:%s170] %v193
        %v195 = vld [vmem:[%s177 + $0x10] sm:%s170]
        %196 = vst [vmem:[%s178 + $0x20] sm:%s170] %v195
        %v197 = vld [vmem:[%s177 + $0x110] sm:%s170]
        %198 = vst [vmem:[%s178 + $0x24] sm:%s170] %v197
        %v199 = vld [vmem:[%s177 + $0x14] sm:%s170]
        %200 = vst [vmem:[%s178 + $0x28] sm:%s170] %v199
        %v201 = vld [vmem:[%s177 + $0x114] sm:%s170]
        %202 = vst [vmem:[%s178 + $0x2c] sm:%s170] %v201
        %v203 = vld [vmem:[%s177 + $0x18] sm:%s170]
        %204 = vst [vmem:[%s178 + $0x30] sm:%s170] %v203
        %v205 = vld [vmem:[%s177 + $0x118] sm:%s170]
        %206 = vst [vmem:[%s178 + $0x34] sm:%s170] %v205
        %v207 = vld [vmem:[%s177 + $0x1c] sm:%s170]
        %208 = vst [vmem:[%s178 + $0x38] sm:%s170] %v207
        %v209 = vld [vmem:[%s177 + $0x11c] sm:%s170]
        %210 = vst [vmem:[%s178 + $0x3c] sm:%s170] %v209
        %v211 = vld [vmem:[%s177 + $0x20] sm:%s170]
        %212 = vst [vmem:[%s178 + $0x40] sm:%s170] %v211
        %v213 = vld [vmem:[%s177 + $0x120] sm:%s170]
        %214 = vst [vmem:[%s178 + $0x44] sm:%s170] %v213
        %v215 = vld [vmem:[%s177 + $0x24] sm:%s170]
        %216 = vst [vmem:[%s178 + $0x48] sm:%s170] %v215
        %v217 = vld [vmem:[%s177 + $0x124] sm:%s170]
        %218 = vst [vmem:[%s178 + $0x4c] sm:%s170] %v217
        %v219 = vld [vmem:[%s177 + $0x28] sm:%s170]
        %220 = vst [vmem:[%s178 + $0x50] sm:%s170] %v219
        %v221 = vld [vmem:[%s177 + $0x128] sm:%s170]
        %222 = vst [vmem:[%s178 + $0x54] sm:%s170] %v221
        %v223 = vld [vmem:[%s177 + $0x2c] sm:%s170]
        %224 = vst [vmem:[%s178 + $0x58] sm:%s170] %v223
        %v225 = vld [vmem:[%s177 + $0x12c] sm:%s170]
        %226 = vst [vmem:[%s178 + $0x5c] sm:%s170] %v225
        %v227 = vld [vmem:[%s177 + $0x30] sm:%s170]
        %228 = vst [vmem:[%s178 + $0x60] sm:%s170] %v227
        %v229 = vld [vmem:[%s177 + $0x130] sm:%s170]
        %230 = vst [vmem:[%s178 + $0x64] sm:%s170] %v229
        %v231 = vld [vmem:[%s177 + $0x34] sm:%s170]
        %232 = vst [vmem:[%s178 + $0x68] sm:%s170] %v231
        %v233 = vld [vmem:[%s177 + $0x134] sm:%s170]
        %234 = vst [vmem:[%s178 + $0x6c] sm:%s170] %v233
        %v235 = vld [vmem:[%s177 + $0x38] sm:%s170]
        %236 = vst [vmem:[%s178 + $0x70] sm:%s170] %v235
        %v237 = vld [vmem:[%s177 + $0x138] sm:%s170]
        %238 = vst [vmem:[%s178 + $0x74] sm:%s170] %v237
        %v239 = vld [vmem:[%s177 + $0x3c] sm:%s170]
        %240 = vst [vmem:[%s178 + $0x78] sm:%s170] %v239
        %v241 = vld [vmem:[%s177 + $0x13c] sm:%s170]
        %242 = vst [vmem:[%s178 + $0x7c] sm:%s170] %v241
        %v243 = vld [vmem:[%s177 + $0x40] sm:%s170]
        %244 = vst [vmem:[%s178 + $0x80] sm:%s170] %v243
        %v245 = vld [vmem:[%s177 + $0x140] sm:%s170]
        %246 = vst [vmem:[%s178 + $0x84] sm:%s170] %v245
        %v247 = vld [vmem:[%s177 + $0x44] sm:%s170]
        %248 = vst [vmem:[%s178 + $0x88] sm:%s170] %v247
        %v249 = vld [vmem:[%s177 + $0x144] sm:%s170]
        %250 = vst [vmem:[%s178 + $0x8c] sm:%s170] %v249
        %v251 = vld [vmem:[%s177 + $0x48] sm:%s170]
        %252 = vst [vmem:[%s178 + $0x90] sm:%s170] %v251
        %v253 = vld [vmem:[%s177 + $0x148] sm:%s170]
        %254 = vst [vmem:[%s178 + $0x94] sm:%s170] %v253
        %v255 = vld [vmem:[%s177 + $0x4c] sm:%s170]
        %256 = vst [vmem:[%s178 + $0x98] sm:%s170] %v255
        %v257 = vld [vmem:[%s177 + $0x14c] sm:%s170]
        %258 = vst [vmem:[%s178 + $0x9c] sm:%s170] %v257
        %v259 = vld [vmem:[%s177 + $0x50] sm:%s170]
        %260 = vst [vmem:[%s178 + $0xa0] sm:%s170] %v259
        %v261 = vld [vmem:[%s177 + $0x150] sm:%s170]
        %262 = vst [vmem:[%s178 + $0xa4] sm:%s170] %v261
        %v263 = vld [vmem:[%s177 + $0x54] sm:%s170]
        %264 = vst [vmem:[%s178 + $0xa8] sm:%s170] %v263
        %v265 = vld [vmem:[%s177 + $0x154] sm:%s170]
        %266 = vst [vmem:[%s178 + $0xac] sm:%s170] %v265
        %v267 = vld [vmem:[%s177 + $0x58] sm:%s170]
        %268 = vst [vmem:[%s178 + $0xb0] sm:%s170] %v267
        %v269 = vld [vmem:[%s177 + $0x158] sm:%s170]
        %270 = vst [vmem:[%s178 + $0xb4] sm:%s170] %v269
        %v271 = vld [vmem:[%s177 + $0x5c] sm:%s170]
        %272 = vst [vmem:[%s178 + $0xb8] sm:%s170] %v271
        %v273 = vld [vmem:[%s177 + $0x15c] sm:%s170]
        %274 = vst [vmem:[%s178 + $0xbc] sm:%s170] %v273
        %v275 = vld [vmem:[%s177 + $0x60] sm:%s170]
        %276 = vst [vmem:[%s178 + $0xc0] sm:%s170] %v275
        %v277 = vld [vmem:[%s177 + $0x160] sm:%s170]
        %278 = vst [vmem:[%s178 + $0xc4] sm:%s170] %v277
        %v279 = vld [vmem:[%s177 + $0x64] sm:%s170]
        %280 = vst [vmem:[%s178 + $0xc8] sm:%s170] %v279
        %v281 = vld [vmem:[%s177 + $0x164] sm:%s170]
        %282 = vst [vmem:[%s178 + $0xcc] sm:%s170] %v281
        %v283 = vld [vmem:[%s177 + $0x68] sm:%s170]
        %284 = vst [vmem:[%s178 + $0xd0] sm:%s170] %v283
        %v285 = vld [vmem:[%s177 + $0x168] sm:%s170]
        %286 = vst [vmem:[%s178 + $0xd4] sm:%s170] %v285
        %v287 = vld [vmem:[%s177 + $0x6c] sm:%s170]
        %288 = vst [vmem:[%s178 + $0xd8] sm:%s170] %v287
        %v289 = vld [vmem:[%s177 + $0x16c] sm:%s170]
        %290 = vst [vmem:[%s178 + $0xdc] sm:%s170] %v289
        %v291 = vld [vmem:[%s177 + $0x70] sm:%s170]
        %292 = vst [vmem:[%s178 + $0xe0] sm:%s170] %v291
        %v293 = vld [vmem:[%s177 + $0x170] sm:%s170]
        %294 = vst [vmem:[%s178 + $0xe4] sm:%s170] %v293
        %v295 = vld [vmem:[%s177 + $0x74] sm:%s170]
        %296 = vst [vmem:[%s178 + $0xe8] sm:%s170] %v295
        %v297 = vld [vmem:[%s177 + $0x174] sm:%s170]
        %298 = vst [vmem:[%s178 + $0xec] sm:%s170] %v297
        %v299 = vld [vmem:[%s177 + $0x78] sm:%s170]
        %300 = vst [vmem:[%s178 + $0xf0] sm:%s170] %v299
        %v301 = vld [vmem:[%s177 + $0x178] sm:%s170]
        %302 = vst [vmem:[%s178 + $0xf4] sm:%s170] %v301
        %v303 = vld [vmem:[%s177 + $0x7c] sm:%s170]
        %304 = vst [vmem:[%s178 + $0xf8] sm:%s170] %v303
        %v305 = vld [vmem:[%s177 + $0x17c] sm:%s170]
        %306 = vst [vmem:[%s178 + $0xfc] sm:%s170] %v305
        %v307 = vld [vmem:[%s177 + $0x80] sm:%s170]
        %308 = vst [vmem:[%s178 + $0x100] sm:%s170] %v307
        %v309 = vld [vmem:[%s177 + $0x180] sm:%s170]
        %310 = vst [vmem:[%s178 + $0x104] sm:%s170] %v309
        %v311 = vld [vmem:[%s177 + $0x84] sm:%s170]
        %312 = vst [vmem:[%s178 + $0x108] sm:%s170] %v311
        %v313 = vld [vmem:[%s177 + $0x184] sm:%s170]
        %314 = vst [vmem:[%s178 + $0x10c] sm:%s170] %v313
        %v315 = vld [vmem:[%s177 + $0x88] sm:%s170]
        %316 = vst [vmem:[%s178 + $0x110] sm:%s170] %v315
        %v317 = vld [vmem:[%s177 + $0x188] sm:%s170]
        %318 = vst [vmem:[%s178 + $0x114] sm:%s170] %v317
        %v319 = vld [vmem:[%s177 + $0x8c] sm:%s170]
        %320 = vst [vmem:[%s178 + $0x118] sm:%s170] %v319
        %v321 = vld [vmem:[%s177 + $0x18c] sm:%s170]
        %322 = vst [vmem:[%s178 + $0x11c] sm:%s170] %v321
        %v323 = vld [vmem:[%s177 + $0x90] sm:%s170]
        %324 = vst [vmem:[%s178 + $0x120] sm:%s170] %v323
        %v325 = vld [vmem:[%s177 + $0x190] sm:%s170]
        %326 = vst [vmem:[%s178 + $0x124] sm:%s170] %v325
        %v327 = vld [vmem:[%s177 + $0x94] sm:%s170]
        %328 = vst [vmem:[%s178 + $0x128] sm:%s170] %v327
        %v329 = vld [vmem:[%s177 + $0x194] sm:%s170]
        %330 = vst [vmem:[%s178 + $0x12c] sm:%s170] %v329
        %v331 = vld [vmem:[%s177 + $0x98] sm:%s170]
        %332 = vst [vmem:[%s178 + $0x130] sm:%s170] %v331
        %v333 = vld [vmem:[%s177 + $0x198] sm:%s170]
        %334 = vst [vmem:[%s178 + $0x134] sm:%s170] %v333
        %v335 = vld [vmem:[%s177 + $0x9c] sm:%s170]
        %336 = vst [vmem:[%s178 + $0x138] sm:%s170] %v335
        %v337 = vld [vmem:[%s177 + $0x19c] sm:%s170]
        %338 = vst [vmem:[%s178 + $0x13c] sm:%s170] %v337
        %v339 = vld [vmem:[%s177 + $0xa0] sm:%s170]
        %340 = vst [vmem:[%s178 + $0x140] sm:%s170] %v339
        %v341 = vld [vmem:[%s177 + $0x1a0] sm:%s170]
        %342 = vst [vmem:[%s178 + $0x144] sm:%s170] %v341
        %v343 = vld [vmem:[%s177 + $0xa4] sm:%s170]
        %344 = vst [vmem:[%s178 + $0x148] sm:%s170] %v343
        %v345 = vld [vmem:[%s177 + $0x1a4] sm:%s170]
        %346 = vst [vmem:[%s178 + $0x14c] sm:%s170] %v345
        %v347 = vld [vmem:[%s177 + $0xa8] sm:%s170]
        %348 = vst [vmem:[%s178 + $0x150] sm:%s170] %v347
        %v349 = vld [vmem:[%s177 + $0x1a8] sm:%s170]
        %350 = vst [vmem:[%s178 + $0x154] sm:%s170] %v349
        %v351 = vld [vmem:[%s177 + $0xac] sm:%s170]
        %352 = vst [vmem:[%s178 + $0x158] sm:%s170] %v351
        %v353 = vld [vmem:[%s177 + $0x1ac] sm:%s170]
        %354 = vst [vmem:[%s178 + $0x15c] sm:%s170] %v353
        %v355 = vld [vmem:[%s177 + $0xb0] sm:%s170]
        %356 = vst [vmem:[%s178 + $0x160] sm:%s170] %v355
        %v357 = vld [vmem:[%s177 + $0x1b0] sm:%s170]
        %358 = vst [vmem:[%s178 + $0x164] sm:%s170] %v357
        %v359 = vld [vmem:[%s177 + $0xb4] sm:%s170]
        %360 = vst [vmem:[%s178 + $0x168] sm:%s170] %v359
        %v361 = vld [vmem:[%s177 + $0x1b4] sm:%s170]
        %362 = vst [vmem:[%s178 + $0x16c] sm:%s170] %v361
        %v363 = vld [vmem:[%s177 + $0xb8] sm:%s170]
        %364 = vst [vmem:[%s178 + $0x170] sm:%s170] %v363
        %v365 = vld [vmem:[%s177 + $0x1b8] sm:%s170]
        %366 = vst [vmem:[%s178 + $0x174] sm:%s170] %v365
        %v367 = vld [vmem:[%s177 + $0xbc] sm:%s170]
        %368 = vst [vmem:[%s178 + $0x178] sm:%s170] %v367
        %v369 = vld [vmem:[%s177 + $0x1bc] sm:%s170]
        %370 = vst [vmem:[%s178 + $0x17c] sm:%s170] %v369
        %v371 = vld [vmem:[%s177 + $0xc0] sm:%s170]
        %372 = vst [vmem:[%s178 + $0x180] sm:%s170] %v371
        %v373 = vld [vmem:[%s177 + $0x1c0] sm:%s170]
        %374 = vst [vmem:[%s178 + $0x184] sm:%s170] %v373
        %v375 = vld [vmem:[%s177 + $0xc4] sm:%s170]
        %376 = vst [vmem:[%s178 + $0x188] sm:%s170] %v375
        %v377 = vld [vmem:[%s177 + $0x1c4] sm:%s170]
        %378 = vst [vmem:[%s178 + $0x18c] sm:%s170] %v377
        %v379 = vld [vmem:[%s177 + $0xc8] sm:%s170]
        %380 = vst [vmem:[%s178 + $0x190] sm:%s170] %v379
        %v381 = vld [vmem:[%s177 + $0x1c8] sm:%s170]
        %382 = vst [vmem:[%s178 + $0x194] sm:%s170] %v381
        %v383 = vld [vmem:[%s177 + $0xcc] sm:%s170]
        %384 = vst [vmem:[%s178 + $0x198] sm:%s170] %v383
        %v385 = vld [vmem:[%s177 + $0x1cc] sm:%s170]
        %386 = vst [vmem:[%s178 + $0x19c] sm:%s170] %v385
        %v387 = vld [vmem:[%s177 + $0xd0] sm:%s170]
        %388 = vst [vmem:[%s178 + $0x1a0] sm:%s170] %v387
        %v389 = vld [vmem:[%s177 + $0x1d0] sm:%s170]
        %390 = vst [vmem:[%s178 + $0x1a4] sm:%s170] %v389
        %v391 = vld [vmem:[%s177 + $0xd4] sm:%s170]
        %392 = vst [vmem:[%s178 + $0x1a8] sm:%s170] %v391
        %v393 = vld [vmem:[%s177 + $0x1d4] sm:%s170]
        %394 = vst [vmem:[%s178 + $0x1ac] sm:%s170] %v393
        %v395 = vld [vmem:[%s177 + $0xd8] sm:%s170]
        %396 = vst [vmem:[%s178 + $0x1b0] sm:%s170] %v395
        %v397 = vld [vmem:[%s177 + $0x1d8] sm:%s170]
        %398 = vst [vmem:[%s178 + $0x1b4] sm:%s170] %v397
        %v399 = vld [vmem:[%s177 + $0xdc] sm:%s170]
        %400 = vst [vmem:[%s178 + $0x1b8] sm:%s170] %v399
        %v401 = vld [vmem:[%s177 + $0x1dc] sm:%s170]
        %402 = vst [vmem:[%s178 + $0x1bc] sm:%s170] %v401
        %v403 = vld [vmem:[%s177 + $0xe0] sm:%s170]
        %404 = vst [vmem:[%s178 + $0x1c0] sm:%s170] %v403
        %v405 = vld [vmem:[%s177 + $0x1e0] sm:%s170]
        %406 = vst [vmem:[%s178 + $0x1c4] sm:%s170] %v405
        %v407 = vld [vmem:[%s177 + $0xe4] sm:%s170]
        %408 = vst [vmem:[%s178 + $0x1c8] sm:%s170] %v407
        %v409 = vld [vmem:[%s177 + $0x1e4] sm:%s170]
        %410 = vst [vmem:[%s178 + $0x1cc] sm:%s170] %v409
        %v411 = vld [vmem:[%s177 + $0xe8] sm:%s170]
        %412 = vst [vmem:[%s178 + $0x1d0] sm:%s170] %v411
        %v413 = vld [vmem:[%s177 + $0x1e8] sm:%s170]
        %414 = vst [vmem:[%s178 + $0x1d4] sm:%s170] %v413
        %v415 = vld [vmem:[%s177 + $0xec] sm:%s170]
        %416 = vst [vmem:[%s178 + $0x1d8] sm:%s170] %v415
        %v417 = vld [vmem:[%s177 + $0x1ec] sm:%s170]
        %418 = vst [vmem:[%s178 + $0x1dc] sm:%s170] %v417
        %v419 = vld [vmem:[%s177 + $0xf0] sm:%s170]
        %420 = vst [vmem:[%s178 + $0x1e0] sm:%s170] %v419
        %v421 = vld [vmem:[%s177 + $0x1f0] sm:%s170]
        %422 = vst [vmem:[%s178 + $0x1e4] sm:%s170] %v421
        %v423 = vld [vmem:[%s177 + $0xf4] sm:%s170]
        %424 = vst [vmem:[%s178 + $0x1e8] sm:%s170] %v423
        %v425 = vld [vmem:[%s177 + $0x1f4] sm:%s170]
        %426 = vst [vmem:[%s178 + $0x1ec] sm:%s170] %v425
        %v427 = vld [vmem:[%s177 + $0xf8] sm:%s170]
        %428 = vst [vmem:[%s178 + $0x1f0] sm:%s170] %v427
        %v429 = vld [vmem:[%s177 + $0x1f8] sm:%s170]
        %430 = vst [vmem:[%s178 + $0x1f4] sm:%s170] %v429
        %v431 = vld [vmem:[%s177 + $0xfc] sm:%s170]
        %432 = vst [vmem:[%s178 + $0x1f8] sm:%s170] %v431
        %v433 = vld [vmem:[%s177 + $0x1fc] sm:%s170]
        %434 = vst [vmem:[%s178 + $0x1fc] sm:%s170] %v433
        %v435 = vld [vmem:[%s177 + $0x200] sm:%s170]
        %436 = vst [vmem:[%s178 + $0x200] sm:%s170] %v435
        %v437 = vld [vmem:[%s177 + $0x300] sm:%s170]
        %438 = vst [vmem:[%s178 + $0x204] sm:%s170] %v437
        %v439 = vld [vmem:[%s177 + $0x204] sm:%s170]
        %440 = vst [vmem:[%s178 + $0x208] sm:%s170] %v439
        %v441 = vld [vmem:[%s177 + $0x304] sm:%s170]
        %442 = vst [vmem:[%s178 + $0x20c] sm:%s170] %v441
        %v443 = vld [vmem:[%s177 + $0x208] sm:%s170]
        %444 = vst [vmem:[%s178 + $0x210] sm:%s170] %v443
        %v445 = vld [vmem:[%s177 + $0x308] sm:%s170]
        %446 = vst [vmem:[%s178 + $0x214] sm:%s170] %v445
        %v447 = vld [vmem:[%s177 + $0x20c] sm:%s170]
        %448 = vst [vmem:[%s178 + $0x218] sm:%s170] %v447
        %v449 = vld [vmem:[%s177 + $0x30c] sm:%s170]
        %450 = vst [vmem:[%s178 + $0x21c] sm:%s170] %v449
        %v451 = vld [vmem:[%s177 + $0x210] sm:%s170]
        %452 = vst [vmem:[%s178 + $0x220] sm:%s170] %v451
        %v453 = vld [vmem:[%s177 + $0x310] sm:%s170]
        %454 = vst [vmem:[%s178 + $0x224] sm:%s170] %v453
        %v455 = vld [vmem:[%s177 + $0x214] sm:%s170]
        %456 = vst [vmem:[%s178 + $0x228] sm:%s170] %v455
        %v457 = vld [vmem:[%s177 + $0x314] sm:%s170]
        %458 = vst [vmem:[%s178 + $0x22c] sm:%s170] %v457
        %v459 = vld [vmem:[%s177 + $0x218] sm:%s170]
        %460 = vst [vmem:[%s178 + $0x230] sm:%s170] %v459
        %v461 = vld [vmem:[%s177 + $0x318] sm:%s170]
        %462 = vst [vmem:[%s178 + $0x234] sm:%s170] %v461
        %v463 = vld [vmem:[%s177 + $0x21c] sm:%s170]
        %464 = vst [vmem:[%s178 + $0x238] sm:%s170] %v463
        %v465 = vld [vmem:[%s177 + $0x31c] sm:%s170]
        %466 = vst [vmem:[%s178 + $0x23c] sm:%s170] %v465
        %v467 = vld [vmem:[%s177 + $0x220] sm:%s170]
        %468 = vst [vmem:[%s178 + $0x240] sm:%s170] %v467
        %v469 = vld [vmem:[%s177 + $0x320] sm:%s170]
        %470 = vst [vmem:[%s178 + $0x244] sm:%s170] %v469
        %v471 = vld [vmem:[%s177 + $0x224] sm:%s170]
        %472 = vst [vmem:[%s178 + $0x248] sm:%s170] %v471
        %v473 = vld [vmem:[%s177 + $0x324] sm:%s170]
        %474 = vst [vmem:[%s178 + $0x24c] sm:%s170] %v473
        %v475 = vld [vmem:[%s177 + $0x228] sm:%s170]
        %476 = vst [vmem:[%s178 + $0x250] sm:%s170] %v475
        %v477 = vld [vmem:[%s177 + $0x328] sm:%s170]
        %478 = vst [vmem:[%s178 + $0x254] sm:%s170] %v477
        %v479 = vld [vmem:[%s177 + $0x22c] sm:%s170]
        %480 = vst [vmem:[%s178 + $0x258] sm:%s170] %v479
        %v481 = vld [vmem:[%s177 + $0x32c] sm:%s170]
        %482 = vst [vmem:[%s178 + $0x25c] sm:%s170] %v481
        %v483 = vld [vmem:[%s177 + $0x230] sm:%s170]
        %484 = vst [vmem:[%s178 + $0x260] sm:%s170] %v483
        %v485 = vld [vmem:[%s177 + $0x330] sm:%s170]
        %486 = vst [vmem:[%s178 + $0x264] sm:%s170] %v485
        %v487 = vld [vmem:[%s177 + $0x234] sm:%s170]
        %488 = vst [vmem:[%s178 + $0x268] sm:%s170] %v487
        %v489 = vld [vmem:[%s177 + $0x334] sm:%s170]
        %490 = vst [vmem:[%s178 + $0x26c] sm:%s170] %v489
        %v491 = vld [vmem:[%s177 + $0x238] sm:%s170]
        %492 = vst [vmem:[%s178 + $0x270] sm:%s170] %v491
        %v493 = vld [vmem:[%s177 + $0x338] sm:%s170]
        %494 = vst [vmem:[%s178 + $0x274] sm:%s170] %v493
        %v495 = vld [vmem:[%s177 + $0x23c] sm:%s170]
        %496 = vst [vmem:[%s178 + $0x278] sm:%s170] %v495
        %v497 = vld [vmem:[%s177 + $0x33c] sm:%s170]
        %498 = vst [vmem:[%s178 + $0x27c] sm:%s170] %v497
        %v499 = vld [vmem:[%s177 + $0x240] sm:%s170]
        %500 = vst [vmem:[%s178 + $0x280] sm:%s170] %v499
        %v501 = vld [vmem:[%s177 + $0x340] sm:%s170]
        %502 = vst [vmem:[%s178 + $0x284] sm:%s170] %v501
        %v503 = vld [vmem:[%s177 + $0x244] sm:%s170]
        %504 = vst [vmem:[%s178 + $0x288] sm:%s170] %v503
        %v505 = vld [vmem:[%s177 + $0x344] sm:%s170]
        %506 = vst [vmem:[%s178 + $0x28c] sm:%s170] %v505
        %v507 = vld [vmem:[%s177 + $0x248] sm:%s170]
        %508 = vst [vmem:[%s178 + $0x290] sm:%s170] %v507
        %v509 = vld [vmem:[%s177 + $0x348] sm:%s170]
        %510 = vst [vmem:[%s178 + $0x294] sm:%s170] %v509
        %v511 = vld [vmem:[%s177 + $0x24c] sm:%s170]
        %512 = vst [vmem:[%s178 + $0x298] sm:%s170] %v511
        %v513 = vld [vmem:[%s177 + $0x34c] sm:%s170]
        %514 = vst [vmem:[%s178 + $0x29c] sm:%s170] %v513
        %v515 = vld [vmem:[%s177 + $0x250] sm:%s170]
        %516 = vst [vmem:[%s178 + $0x2a0] sm:%s170] %v515
        %v517 = vld [vmem:[%s177 + $0x350] sm:%s170]
        %518 = vst [vmem:[%s178 + $0x2a4] sm:%s170] %v517
        %v519 = vld [vmem:[%s177 + $0x254] sm:%s170]
        %520 = vst [vmem:[%s178 + $0x2a8] sm:%s170] %v519
        %v521 = vld [vmem:[%s177 + $0x354] sm:%s170]
        %522 = vst [vmem:[%s178 + $0x2ac] sm:%s170] %v521
        %v523 = vld [vmem:[%s177 + $0x258] sm:%s170]
        %524 = vst [vmem:[%s178 + $0x2b0] sm:%s170] %v523
        %v525 = vld [vmem:[%s177 + $0x358] sm:%s170]
        %526 = vst [vmem:[%s178 + $0x2b4] sm:%s170] %v525
        %v527 = vld [vmem:[%s177 + $0x25c] sm:%s170]
        %528 = vst [vmem:[%s178 + $0x2b8] sm:%s170] %v527
        %v529 = vld [vmem:[%s177 + $0x35c] sm:%s170]
        %530 = vst [vmem:[%s178 + $0x2bc] sm:%s170] %v529
        %v531 = vld [vmem:[%s177 + $0x260] sm:%s170]
        %532 = vst [vmem:[%s178 + $0x2c0] sm:%s170] %v531
        %v533 = vld [vmem:[%s177 + $0x360] sm:%s170]
        %534 = vst [vmem:[%s178 + $0x2c4] sm:%s170] %v533
        %v535 = vld [vmem:[%s177 + $0x264] sm:%s170]
        %536 = vst [vmem:[%s178 + $0x2c8] sm:%s170] %v535
        %v537 = vld [vmem:[%s177 + $0x364] sm:%s170]
        %538 = vst [vmem:[%s178 + $0x2cc] sm:%s170] %v537
        %v539 = vld [vmem:[%s177 + $0x268] sm:%s170]
        %540 = vst [vmem:[%s178 + $0x2d0] sm:%s170] %v539
        %v541 = vld [vmem:[%s177 + $0x368] sm:%s170]
        %542 = vst [vmem:[%s178 + $0x2d4] sm:%s170] %v541
        %v543 = vld [vmem:[%s177 + $0x26c] sm:%s170]
        %544 = vst [vmem:[%s178 + $0x2d8] sm:%s170] %v543
        %v545 = vld [vmem:[%s177 + $0x36c] sm:%s170]
        %546 = vst [vmem:[%s178 + $0x2dc] sm:%s170] %v545
        %v547 = vld [vmem:[%s177 + $0x270] sm:%s170]
        %548 = vst [vmem:[%s178 + $0x2e0] sm:%s170] %v547
        %v549 = vld [vmem:[%s177 + $0x370] sm:%s170]
        %550 = vst [vmem:[%s178 + $0x2e4] sm:%s170] %v549
        %v551 = vld [vmem:[%s177 + $0x274] sm:%s170]
        %552 = vst [vmem:[%s178 + $0x2e8] sm:%s170] %v551
        %v553 = vld [vmem:[%s177 + $0x374] sm:%s170]
        %554 = vst [vmem:[%s178 + $0x2ec] sm:%s170] %v553
        %v555 = vld [vmem:[%s177 + $0x278] sm:%s170]
        %556 = vst [vmem:[%s178 + $0x2f0] sm:%s170] %v555
        %v557 = vld [vmem:[%s177 + $0x378] sm:%s170]
        %558 = vst [vmem:[%s178 + $0x2f4] sm:%s170] %v557
        %v559 = vld [vmem:[%s177 + $0x27c] sm:%s170]
        %560 = vst [vmem:[%s178 + $0x2f8] sm:%s170] %v559
        %v561 = vld [vmem:[%s177 + $0x37c] sm:%s170]
        %562 = vst [vmem:[%s178 + $0x2fc] sm:%s170] %v561
        %v563 = vld [vmem:[%s177 + $0x280] sm:%s170]
        %564 = vst [vmem:[%s178 + $0x300] sm:%s170] %v563
        %v565 = vld [vmem:[%s177 + $0x380] sm:%s170]
        %566 = vst [vmem:[%s178 + $0x304] sm:%s170] %v565
        %v567 = vld [vmem:[%s177 + $0x284] sm:%s170]
        %568 = vst [vmem:[%s178 + $0x308] sm:%s170] %v567
        %v569 = vld [vmem:[%s177 + $0x384] sm:%s170]
        %570 = vst [vmem:[%s178 + $0x30c] sm:%s170] %v569
        %v571 = vld [vmem:[%s177 + $0x288] sm:%s170]
        %572 = vst [vmem:[%s178 + $0x310] sm:%s170] %v571
        %v573 = vld [vmem:[%s177 + $0x388] sm:%s170]
        %574 = vst [vmem:[%s178 + $0x314] sm:%s170] %v573
        %v575 = vld [vmem:[%s177 + $0x28c] sm:%s170]
        %576 = vst [vmem:[%s178 + $0x318] sm:%s170] %v575
        %v577 = vld [vmem:[%s177 + $0x38c] sm:%s170]
        %578 = vst [vmem:[%s178 + $0x31c] sm:%s170] %v577
        %v579 = vld [vmem:[%s177 + $0x290] sm:%s170]
        %580 = vst [vmem:[%s178 + $0x320] sm:%s170] %v579
        %v581 = vld [vmem:[%s177 + $0x390] sm:%s170]
        %582 = vst [vmem:[%s178 + $0x324] sm:%s170] %v581
        %v583 = vld [vmem:[%s177 + $0x294] sm:%s170]
        %584 = vst [vmem:[%s178 + $0x328] sm:%s170] %v583
        %v585 = vld [vmem:[%s177 + $0x394] sm:%s170]
        %586 = vst [vmem:[%s178 + $0x32c] sm:%s170] %v585
        %v587 = vld [vmem:[%s177 + $0x298] sm:%s170]
        %588 = vst [vmem:[%s178 + $0x330] sm:%s170] %v587
        %v589 = vld [vmem:[%s177 + $0x398] sm:%s170]
        %590 = vst [vmem:[%s178 + $0x334] sm:%s170] %v589
        %v591 = vld [vmem:[%s177 + $0x29c] sm:%s170]
        %592 = vst [vmem:[%s178 + $0x338] sm:%s170] %v591
        %v593 = vld [vmem:[%s177 + $0x39c] sm:%s170]
        %594 = vst [vmem:[%s178 + $0x33c] sm:%s170] %v593
        %v595 = vld [vmem:[%s177 + $0x2a0] sm:%s170]
        %596 = vst [vmem:[%s178 + $0x340] sm:%s170] %v595
        %v597 = vld [vmem:[%s177 + $0x3a0] sm:%s170]
        %598 = vst [vmem:[%s178 + $0x344] sm:%s170] %v597
        %v599 = vld [vmem:[%s177 + $0x2a4] sm:%s170]
        %600 = vst [vmem:[%s178 + $0x348] sm:%s170] %v599
        %v601 = vld [vmem:[%s177 + $0x3a4] sm:%s170]
        %602 = vst [vmem:[%s178 + $0x34c] sm:%s170] %v601
        %v603 = vld [vmem:[%s177 + $0x2a8] sm:%s170]
        %604 = vst [vmem:[%s178 + $0x350] sm:%s170] %v603
        %v605 = vld [vmem:[%s177 + $0x3a8] sm:%s170]
        %606 = vst [vmem:[%s178 + $0x354] sm:%s170] %v605
        %v607 = vld [vmem:[%s177 + $0x2ac] sm:%s170]
        %608 = vst [vmem:[%s178 + $0x358] sm:%s170] %v607
        %v609 = vld [vmem:[%s177 + $0x3ac] sm:%s170]
        %610 = vst [vmem:[%s178 + $0x35c] sm:%s170] %v609
        %v611 = vld [vmem:[%s177 + $0x2b0] sm:%s170]
        %612 = vst [vmem:[%s178 + $0x360] sm:%s170] %v611
        %v613 = vld [vmem:[%s177 + $0x3b0] sm:%s170]
        %614 = vst [vmem:[%s178 + $0x364] sm:%s170] %v613
        %v615 = vld [vmem:[%s177 + $0x2b4] sm:%s170]
        %616 = vst [vmem:[%s178 + $0x368] sm:%s170] %v615
        %v617 = vld [vmem:[%s177 + $0x3b4] sm:%s170]
        %618 = vst [vmem:[%s178 + $0x36c] sm:%s170] %v617
        %v619 = vld [vmem:[%s177 + $0x2b8] sm:%s170]
        %620 = vst [vmem:[%s178 + $0x370] sm:%s170] %v619
        %v621 = vld [vmem:[%s177 + $0x3b8] sm:%s170]
        %622 = vst [vmem:[%s178 + $0x374] sm:%s170] %v621
        %v623 = vld [vmem:[%s177 + $0x2bc] sm:%s170]
        %624 = vst [vmem:[%s178 + $0x378] sm:%s170] %v623
        %v625 = vld [vmem:[%s177 + $0x3bc] sm:%s170]
        %626 = vst [vmem:[%s178 + $0x37c] sm:%s170] %v625
        %v627 = vld [vmem:[%s177 + $0x2c0] sm:%s170]
        %628 = vst [vmem:[%s178 + $0x380] sm:%s170] %v627
        %v629 = vld [vmem:[%s177 + $0x3c0] sm:%s170]
        %630 = vst [vmem:[%s178 + $0x384] sm:%s170] %v629
        %v631 = vld [vmem:[%s177 + $0x2c4] sm:%s170]
        %632 = vst [vmem:[%s178 + $0x388] sm:%s170] %v631
        %v633 = vld [vmem:[%s177 + $0x3c4] sm:%s170]
        %634 = vst [vmem:[%s178 + $0x38c] sm:%s170] %v633
        %v635 = vld [vmem:[%s177 + $0x2c8] sm:%s170]
        %636 = vst [vmem:[%s178 + $0x390] sm:%s170] %v635
        %v637 = vld [vmem:[%s177 + $0x3c8] sm:%s170]
        %638 = vst [vmem:[%s178 + $0x394] sm:%s170] %v637
        %v639 = vld [vmem:[%s177 + $0x2cc] sm:%s170]
        %640 = vst [vmem:[%s178 + $0x398] sm:%s170] %v639
        %v641 = vld [vmem:[%s177 + $0x3cc] sm:%s170]
        %642 = vst [vmem:[%s178 + $0x39c] sm:%s170] %v641
        %v643 = vld [vmem:[%s177 + $0x2d0] sm:%s170]
        %644 = vst [vmem:[%s178 + $0x3a0] sm:%s170] %v643
        %v645 = vld [vmem:[%s177 + $0x3d0] sm:%s170]
        %646 = vst [vmem:[%s178 + $0x3a4] sm:%s170] %v645
        %v647 = vld [vmem:[%s177 + $0x2d4] sm:%s170]
        %648 = vst [vmem:[%s178 + $0x3a8] sm:%s170] %v647
        %v649 = vld [vmem:[%s177 + $0x3d4] sm:%s170]
        %650 = vst [vmem:[%s178 + $0x3ac] sm:%s170] %v649
        %v651 = vld [vmem:[%s177 + $0x2d8] sm:%s170]
        %652 = vst [vmem:[%s178 + $0x3b0] sm:%s170] %v651
        %v653 = vld [vmem:[%s177 + $0x3d8] sm:%s170]
        %654 = vst [vmem:[%s178 + $0x3b4] sm:%s170] %v653
        %v655 = vld [vmem:[%s177 + $0x2dc] sm:%s170]
        %656 = vst [vmem:[%s178 + $0x3b8] sm:%s170] %v655
        %v657 = vld [vmem:[%s177 + $0x3dc] sm:%s170]
        %658 = vst [vmem:[%s178 + $0x3bc] sm:%s170] %v657
        %v659 = vld [vmem:[%s177 + $0x2e0] sm:%s170]
        %660 = vst [vmem:[%s178 + $0x3c0] sm:%s170] %v659
        %v661 = vld [vmem:[%s177 + $0x3e0] sm:%s170]
        %662 = vst [vmem:[%s178 + $0x3c4] sm:%s170] %v661
        %v663 = vld [vmem:[%s177 + $0x2e4] sm:%s170]
        %664 = vst [vmem:[%s178 + $0x3c8] sm:%s170] %v663
        %v665 = vld [vmem:[%s177 + $0x3e4] sm:%s170]
        %666 = vst [vmem:[%s178 + $0x3cc] sm:%s170] %v665
        %v667 = vld [vmem:[%s177 + $0x2e8] sm:%s170]
        %668 = vst [vmem:[%s178 + $0x3d0] sm:%s170] %v667
        %v669 = vld [vmem:[%s177 + $0x3e8] sm:%s170]
        %670 = vst [vmem:[%s178 + $0x3d4] sm:%s170] %v669
        %v671 = vld [vmem:[%s177 + $0x2ec] sm:%s170]
        %672 = vst [vmem:[%s178 + $0x3d8] sm:%s170] %v671
        %v673 = vld [vmem:[%s177 + $0x3ec] sm:%s170]
        %674 = vst [vmem:[%s178 + $0x3dc] sm:%s170] %v673
        %v675 = vld [vmem:[%s177 + $0x2f0] sm:%s170]
        %676 = vst [vmem:[%s178 + $0x3e0] sm:%s170] %v675
        %v677 = vld [vmem:[%s177 + $0x3f0] sm:%s170]
        %678 = vst [vmem:[%s178 + $0x3e4] sm:%s170] %v677
        %v679 = vld [vmem:[%s177 + $0x2f4] sm:%s170]
        %680 = vst [vmem:[%s178 + $0x3e8] sm:%s170] %v679
        %v681 = vld [vmem:[%s177 + $0x3f4] sm:%s170]
        %682 = vst [vmem:[%s178 + $0x3ec] sm:%s170] %v681
        %v683 = vld [vmem:[%s177 + $0x2f8] sm:%s170]
        %684 = vst [vmem:[%s178 + $0x3f0] sm:%s170] %v683
        %v685 = vld [vmem:[%s177 + $0x3f8] sm:%s170]
        %686 = vst [vmem:[%s178 + $0x3f4] sm:%s170] %v685
        %v687 = vld [vmem:[%s177 + $0x2fc] sm:%s170]
        %688 = vst [vmem:[%s178 + $0x3f8] sm:%s170] %v687
        %v689 = vld [vmem:[%s177 + $0x3fc] sm:%s170]
        %690 = vst [vmem:[%s178 + $0x3fc] sm:%s170] %v689
      $region114: #{decoder_crnn_pallas.1} parent=108 // loop_footer
        %s176 = sadd.s32 1, %s172
      $region115: #{decoder_crnn_pallas.1} parent=108 // loop_footer_branch
        %171 = sbr.rel target = $region111
      $region116: #{decoder_crnn_pallas.1} parent=108 // loop_exit
        _
    $region109: #{decoder_crnn_pallas.1} parent=1 // pred_fallthru
      _
    // Predicated region
    $region135: #{decoder_crnn_pallas.1} parent=1 // pred_check
      _
    $region136: #{decoder_crnn_pallas.1} parent=1 // pred_check_branch
      %1232 = sbr.rel (0) target = $region138
    $region137: #{decoder_crnn_pallas.1} parent=1 // pred_region
      %1233 = vsyncadd [#allocation3], 16384
    $region138: #{decoder_crnn_pallas.1} parent=1 // pred_fallthru
      _
    %v1234 = vlaneseq
    %v1235 = vand.u32 %v1234, 127
    %v1236 = vld [vmem:[%s0] sm:$0xf]
    %v1237 = vld [vmem:[%s0 + $0x4] sm:$0xf]
    %v1238 = vld [vmem:[%s0 + $0x8] sm:$0xf]
    %v1239 = vld [vmem:[%s0 + $0xc] sm:$0xf]
    %v1240 = vld [vmem:[%s0 + $0x10] sm:$0xf]
    %v1241 = vld [vmem:[%s0 + $0x14] sm:$0xf]
    %v1242 = vld [vmem:[%s0 + $0x18] sm:$0xf]
    %v1243 = vld [vmem:[%s0 + $0x1c] sm:$0xf]
    %v1244 = vld [vmem:[%s0 + $0x20] sm:$0xf]
    %v1245 = vld [vmem:[%s0 + $0x24] sm:$0xf]
    %v1246 = vld [vmem:[%s0 + $0x28] sm:$0xf]
    %v1247 = vld [vmem:[%s0 + $0x2c] sm:$0xf]
    %v1248 = vld [vmem:[%s0 + $0x30] sm:$0xf]
    %v1249 = vld [vmem:[%s0 + $0x34] sm:$0xf]
    %v1250 = vld [vmem:[%s0 + $0x38] sm:$0xf]
    %v1251 = vld [vmem:[%s0 + $0x3c] sm:$0xf]
    %v1252 = vld [vmem:[%s2] sm:$0xf]
    %v1253 = vld [vmem:[%s2 + $0x4] sm:$0xf]
    %v1254 = vld [vmem:[%s2 + $0x8] sm:$0xf]
    %v1255 = vld [vmem:[%s2 + $0xc] sm:$0xf]
    %v1256 = vld [vmem:[%s2 + $0x10] sm:$0xf]
    %v1257 = vld [vmem:[%s2 + $0x14] sm:$0xf]
    %v1258 = vld [vmem:[%s2 + $0x18] sm:$0xf]
    %v1259 = vld [vmem:[%s2 + $0x1c] sm:$0xf]
    %v1260 = vld [vmem:[%s2 + $0x20] sm:$0xf]
    %v1261 = vld [vmem:[%s2 + $0x24] sm:$0xf]
    %v1262 = vld [vmem:[%s2 + $0x28] sm:$0xf]
    %v1263 = vld [vmem:[%s2 + $0x2c] sm:$0xf]
    %v1264 = vld [vmem:[%s2 + $0x30] sm:$0xf]
    %v1265 = vld [vmem:[%s2 + $0x34] sm:$0xf]
    %v1266 = vld [vmem:[%s2 + $0x38] sm:$0xf]
    %v1267 = vld [vmem:[%s2 + $0x3c] sm:$0xf]
    %v1268 = vld [vmem:[%s2 + $0x40] sm:$0xf]
    %v1269 = vld [vmem:[%s2 + $0x44] sm:$0xf]
    %v1270 = vld [vmem:[%s2 + $0x48] sm:$0xf]
    %v1271 = vld [vmem:[%s2 + $0x4c] sm:$0xf]
    %v1272 = vld [vmem:[%s2 + $0x50] sm:$0xf]
    %v1273 = vld [vmem:[%s2 + $0x54] sm:$0xf]
    %v1274 = vld [vmem:[%s2 + $0x58] sm:$0xf]
    %v1275 = vld [vmem:[%s2 + $0x5c] sm:$0xf]
    %v1276 = vld [vmem:[%s2 + $0x60] sm:$0xf]
    %v1277 = vld [vmem:[%s2 + $0x64] sm:$0xf]
    %v1278 = vld [vmem:[%s2 + $0x68] sm:$0xf]
    %v1279 = vld [vmem:[%s2 + $0x6c] sm:$0xf]
    %v1280 = vld [vmem:[%s2 + $0x70] sm:$0xf]
    %v1281 = vld [vmem:[%s2 + $0x74] sm:$0xf]
    %v1282 = vld [vmem:[%s2 + $0x78] sm:$0xf]
    %v1283 = vld [vmem:[%s2 + $0x7c] sm:$0xf]
    %v1316 = vunpack.c.l.b16 %v1252
    %v1317 = vunpack.c.l.b16 %v1253
    %v1318 = vunpack.c.l.b16 %v1254
    %v1319 = vunpack.c.l.b16 %v1255
    %v1320 = vunpack.c.l.b16 %v1256
    %v1321 = vunpack.c.l.b16 %v1257
    %v1322 = vunpack.c.l.b16 %v1258
    %v1323 = vunpack.c.l.b16 %v1259
    %v1324 = vunpack.c.l.b16 %v1260
    %v1325 = vunpack.c.l.b16 %v1261
    %v1326 = vunpack.c.l.b16 %v1262
    %v1327 = vunpack.c.l.b16 %v1263
    %v1328 = vunpack.c.l.b16 %v1264
    %v1329 = vunpack.c.l.b16 %v1265
    %v1330 = vunpack.c.l.b16 %v1266
    %v1331 = vunpack.c.l.b16 %v1267
    %v1332 = vunpack.c.l.b16 %v1268
    %v1333 = vunpack.c.l.b16 %v1269
    %v1334 = vunpack.c.l.b16 %v1270
    %v1335 = vunpack.c.l.b16 %v1271
    %v1336 = vunpack.c.l.b16 %v1272
    %v1337 = vunpack.c.l.b16 %v1273
    %v1338 = vunpack.c.l.b16 %v1274
    %v1339 = vunpack.c.l.b16 %v1275
    %v1340 = vunpack.c.l.b16 %v1276
    %v1341 = vunpack.c.l.b16 %v1277
    %v1342 = vunpack.c.l.b16 %v1278
    %v1343 = vunpack.c.l.b16 %v1279
    %v1344 = vunpack.c.l.b16 %v1280
    %v1345 = vunpack.c.l.b16 %v1281
    %v1346 = vunpack.c.l.b16 %v1282
    %v1347 = vunpack.c.l.b16 %v1283
    %v1348 = vpack.c.b16 %v1317, %v1316
    %v1349 = vpack.c.b16 %v1319, %v1318
    %v1350 = vpack.c.b16 %v1321, %v1320
    %v1351 = vpack.c.b16 %v1323, %v1322
    %v1352 = vpack.c.b16 %v1325, %v1324
    %v1353 = vpack.c.b16 %v1327, %v1326
    %v1354 = vpack.c.b16 %v1329, %v1328
    %v1355 = vpack.c.b16 %v1331, %v1330
    %v1356 = vpack.c.b16 %v1333, %v1332
    %v1357 = vpack.c.b16 %v1335, %v1334
    %v1358 = vpack.c.b16 %v1337, %v1336
    %v1359 = vpack.c.b16 %v1339, %v1338
    %v1360 = vpack.c.b16 %v1341, %v1340
    %v1361 = vpack.c.b16 %v1343, %v1342
    %v1362 = vpack.c.b16 %v1345, %v1344
    %v1363 = vpack.c.b16 %v1347, %v1346
    %v1396 = vunpack.c.l.b16 %v1236
    %v1397 = vunpack.c.l.b16 %v1237
    %v1398 = vunpack.c.l.b16 %v1238
    %v1399 = vunpack.c.l.b16 %v1239
    %v1400 = vunpack.c.l.b16 %v1240
    %v1401 = vunpack.c.l.b16 %v1241
    %v1402 = vunpack.c.l.b16 %v1242
    %v1403 = vunpack.c.l.b16 %v1243
    %v1404 = vunpack.c.l.b16 %v1244
    %v1405 = vunpack.c.l.b16 %v1245
    %v1406 = vunpack.c.l.b16 %v1246
    %v1407 = vunpack.c.l.b16 %v1247
    %v1408 = vunpack.c.l.b16 %v1248
    %v1409 = vunpack.c.l.b16 %v1249
    %v1410 = vunpack.c.l.b16 %v1250
    %v1411 = vunpack.c.l.b16 %v1251
    %v1412 = vpack.c.b16 %v1397, %v1396
    %v1413 = vpack.c.b16 %v1399, %v1398
    %v1414 = vpack.c.b16 %v1401, %v1400
    %v1415 = vpack.c.b16 %v1403, %v1402
    %v1416 = vpack.c.b16 %v1405, %v1404
    %v1417 = vpack.c.b16 %v1407, %v1406
    %v1418 = vpack.c.b16 %v1409, %v1408
    %v1419 = vpack.c.b16 %v1411, %v1410
    %1428 = vmatprep.subr.bf16.mxu0 0
    %1429 = vmatpush1.bf16.msra.mxu0 %v1412
    %1430 = vmatprep.subr.bf16.mxu0 0
    %1431 = vmatpush1.bf16.msra.mxu0 %v1413
    %1432 = vmatprep.subr.bf16.mxu0 0
    %1433 = vmatpush1.bf16.msra.mxu0 %v1414
    %1434 = vmatprep.subr.bf16.mxu0 0
    %1435 = vmatpush1.bf16.msra.mxu0 %v1415
    %1436 = vmatprep.subr.bf16.mxu0 0
    %1437 = vmatpush1.bf16.msra.mxu0 %v1416
    %1438 = vmatprep.subr.bf16.mxu0 0
    %1439 = vmatpush1.bf16.msra.mxu0 %v1417
    %1440 = vmatprep.subr.bf16.mxu0 0
    %1441 = vmatpush1.bf16.msra.mxu0 %v1418
    %1442 = vmatprep.subr.bf16.mxu0 0
    %1443 = vmatpush1.bf16.msra.mxu0 %v1419
    %1444 = vmatprep.subr.bf16.mxu0 0
    %1445 = vmatpush1.bf16.msra.mxu0 0
    %1446 = vmatprep.subr.bf16.mxu0 0
    %1447 = vmatpush1.bf16.msra.mxu0 0
    %1448 = vmatprep.subr.bf16.mxu0 0
    %1449 = vmatpush1.bf16.msra.mxu0 0
    %1450 = vmatprep.subr.bf16.mxu0 0
    %1451 = vmatpush1.bf16.msra.mxu0 0
    %1452 = vmatprep.subr.bf16.mxu0 0
    %1453 = vmatpush1.bf16.msra.mxu0 0
    %1454 = vmatprep.subr.bf16.mxu0 0
    %1455 = vmatpush1.bf16.msra.mxu0 0
    %1456 = vmatprep.subr.bf16.mxu0 0
    %1457 = vmatpush1.bf16.msra.mxu0 0
    %1458 = vmatprep.subr.bf16.mxu0 0
    %1459 = vmatpush1.bf16.msra.mxu0 0
    %1460 = vmatprep.mubr.bf16.mxu0 0
    %1461 = vmatmul.mubr.bf16.gmra.mrb[0].mxu0 %v1348
    %v1462 = vpop.f32.mrb[0].mxu0
    %v1463 = vadd.f32 0.0, %v1462
    %v1464 = vpop.f32.mrb[0].mxu0
    %v1465 = vpop.f32.mrb[0].mxu0
    %v1466 = vadd.f32 0.0, %v1465
    %v1467 = vpop.f32.mrb[0].mxu0
    %1468 = vmatprep.mubr.bf16.mxu0 0
    %1469 = vmatmul.mubr.bf16.gmra.mrb[0].mxu0 %v1349
    %v1470 = vpop.f32.mrb[0].mxu0
    %v1471 = vadd.f32 0.0, %v1470
    %v1472 = vpop.f32.mrb[0].mxu0
    %v1473 = vpop.f32.mrb[0].mxu0
    %v1474 = vadd.f32 0.0, %v1473
    %v1475 = vpop.f32.mrb[0].mxu0
    %1476 = vmatprep.mubr.bf16.mxu0 0
    %1477 = vmatmul.mubr.bf16.gmra.mrb[0].mxu0 %v1350
    %v1478 = vpop.f32.mrb[0].mxu0
    %v1479 = vadd.f32 0.0, %v1478
    %v1480 = vpop.f32.mrb[0].mxu0
    %v1481 = vpop.f32.mrb[0].mxu0
    %v1482 = vadd.f32 0.0, %v1481
    %v1483 = vpop.f32.mrb[0].mxu0
    %1484 = vmatprep.mubr.bf16.mxu0 0
    %1485 = vmatmul.mubr.bf16.gmra.mrb[0].mxu0 %v1351
    %v1486 = vpop.f32.mrb[0].mxu0
    %v1487 = vadd.f32 0.0, %v1486
    %v1488 = vpop.f32.mrb[0].mxu0
    %v1489 = vpop.f32.mrb[0].mxu0
    %v1490 = vadd.f32 0.0, %v1489
    %v1491 = vpop.f32.mrb[0].mxu0
    %1492 = vmatprep.mubr.bf16.mxu0 0
    %1493 = vmatmul.mubr.bf16.gmra.mrb[0].mxu0 %v1352
    %v1494 = vpop.f32.mrb[0].mxu0
    %v1495 = vadd.f32 0.0, %v1494
    %v1496 = vpop.f32.mrb[0].mxu0
    %v1497 = vpop.f32.mrb[0].mxu0
    %v1498 = vadd.f32 0.0, %v1497
    %v1499 = vpop.f32.mrb[0].mxu0
    %1500 = vmatprep.mubr.bf16.mxu0 0
    %1501 = vmatmul.mubr.bf16.gmra.mrb[0].mxu0 %v1353
    %v1502 = vpop.f32.mrb[0].mxu0
    %v1503 = vadd.f32 0.0, %v1502
    %v1504 = vpop.f32.mrb[0].mxu0
    %v1505 = vpop.f32.mrb[0].mxu0
    %v1506 = vadd.f32 0.0, %v1505
    %v1507 = vpop.f32.mrb[0].mxu0
    %1508 = vmatprep.mubr.bf16.mxu0 0
    %1509 = vmatmul.mubr.bf16.gmra.mrb[0].mxu0 %v1354
    %v1510 = vpop.f32.mrb[0].mxu0
    %v1511 = vadd.f32 0.0, %v1510
    %v1512 = vpop.f32.mrb[0].mxu0
    %v1513 = vpop.f32.mrb[0].mxu0
    %v1514 = vadd.f32 0.0, %v1513
    %v1515 = vpop.f32.mrb[0].mxu0
    %1516 = vmatprep.mubr.bf16.mxu0 0
    %1517 = vmatmul.mubr.bf16.gmra.mrb[0].mxu0 %v1355
    %v1518 = vpop.f32.mrb[0].mxu0
    %v1519 = vadd.f32 0.0, %v1518
    %v1520 = vpop.f32.mrb[0].mxu0
    %v1521 = vpop.f32.mrb[0].mxu0
    %v1522 = vadd.f32 0.0, %v1521
    %v1523 = vpop.f32.mrb[0].mxu0
    %1524 = vmatprep.mubr.bf16.mxu0 0
    %1525 = vmatmul.mubr.bf16.gmra.mrb[0].mxu0 %v1356
    %v1526 = vpop.f32.mrb[0].mxu0
    %v1527 = vadd.f32 0.0, %v1526
    %v1528 = vpop.f32.mrb[0].mxu0
    %v1529 = vpop.f32.mrb[0].mxu0
    %v1530 = vadd.f32 0.0, %v1529
    %v1531 = vpop.f32.mrb[0].mxu0
    %1532 = vmatprep.mubr.bf16.mxu0 0
    %1533 = vmatmul.mubr.bf16.gmra.mrb[0].mxu0 %v1357
    %v1534 = vpop.f32.mrb[0].mxu0
    %v1535 = vadd.f32 0.0, %v1534
    %v1536 = vpop.f32.mrb[0].mxu0
    %v1537 = vpop.f32.mrb[0].mxu0
    %v1538 = vadd.f32 0.0, %v1537
    %v1539 = vpop.f32.mrb[0].mxu0
    %1540 = vmatprep.mubr.bf16.mxu0 0
    %1541 = vmatmul.mubr.bf16.gmra.mrb[0].mxu0 %v1358
    %v1542 = vpop.f32.mrb[0].mxu0
    %v1543 = vadd.f32 0.0, %v1542
    %v1544 = vpop.f32.mrb[0].mxu0
    %v1545 = vpop.f32.mrb[0].mxu0
    %v1546 = vadd.f32 0.0, %v1545
    %v1547 = vpop.f32.mrb[0].mxu0
    %1548 = vmatprep.mubr.bf16.mxu0 0
    %1549 = vmatmul.mubr.bf16.gmra.mrb[0].mxu0 %v1359
    %v1550 = vpop.f32.mrb[0].mxu0
    %v1551 = vadd.f32 0.0, %v1550
    %v1552 = vpop.f32.mrb[0].mxu0
    %v1553 = vpop.f32.mrb[0].mxu0
    %v1554 = vadd.f32 0.0, %v1553
    %v1555 = vpop.f32.mrb[0].mxu0
    %1556 = vmatprep.mubr.bf16.mxu0 0
    %1557 = vmatmul.mubr.bf16.gmra.mrb[0].mxu0 %v1360
    %v1558 = vpop.f32.mrb[0].mxu0
    %v1559 = vadd.f32 0.0, %v1558
    %v1560 = vpop.f32.mrb[0].mxu0
    %v1561 = vpop.f32.mrb[0].mxu0
    %v1562 = vadd.f32 0.0, %v1561
    %v1563 = vpop.f32.mrb[0].mxu0
    %1564 = vmatprep.mubr.bf16.mxu0 0
    %1565 = vmatmul.mubr.bf16.gmra.mrb[0].mxu0 %v1361
    %v1566 = vpop.f32.mrb[0].mxu0
    %v1567 = vadd.f32 0.0, %v1566
    %v1568 = vpop.f32.mrb[0].mxu0
    %v1569 = vpop.f32.mrb[0].mxu0
    %v1570 = vadd.f32 0.0, %v1569
    %v1571 = vpop.f32.mrb[0].mxu0
    %1572 = vmatprep.mubr.bf16.mxu0 0
    %1573 = vmatmul.mubr.bf16.gmra.mrb[0].mxu0 %v1362
    %v1574 = vpop.f32.mrb[0].mxu0
    %v1575 = vadd.f32 0.0, %v1574
    %v1576 = vpop.f32.mrb[0].mxu0
    %v1577 = vpop.f32.mrb[0].mxu0
    %v1578 = vadd.f32 0.0, %v1577
    %v1579 = vpop.f32.mrb[0].mxu0
    %1580 = vmatprep.mubr.bf16.mxu0 0
    %1581 = vmatmul.mubr.bf16.gmra.mrb[0].mxu0 %v1363
    %v1582 = vpop.f32.mrb[0].mxu0
    %v1583 = vadd.f32 0.0, %v1582
    %v1584 = vpop.f32.mrb[0].mxu0
    %v1585 = vpop.f32.mrb[0].mxu0
    %v1586 = vadd.f32 0.0, %v1585
    %v1587 = vpop.f32.mrb[0].mxu0
    %1588 = vdwg.mxu0
    %v1589 = vpack.c.bf16 %v1466, %v1463
    %v1590 = vpack.c.bf16 %v1474, %v1471
    %v1591 = vpack.c.bf16 %v1482, %v1479
    %v1592 = vpack.c.bf16 %v1490, %v1487
    %v1593 = vpack.c.bf16 %v1498, %v1495
    %v1594 = vpack.c.bf16 %v1506, %v1503
    %v1595 = vpack.c.bf16 %v1514, %v1511
    %v1596 = vpack.c.bf16 %v1522, %v1519
    %v1597 = vpack.c.bf16 %v1530, %v1527
    %v1598 = vpack.c.bf16 %v1538, %v1535
    %v1599 = vpack.c.bf16 %v1546, %v1543
    %v1600 = vpack.c.bf16 %v1554, %v1551
    %v1601 = vpack.c.bf16 %v1562, %v1559
    %v1602 = vpack.c.bf16 %v1570, %v1567
    %v1603 = vpack.c.bf16 %v1578, %v1575
    %v1604 = vpack.c.bf16 %v1586, %v1583
    %v1605 = vld [vmem:[#allocation7] sm:$0xf]
    %v1606 = vld [vmem:[#allocation7 + $0x4] sm:$0xf]
    %v1607 = vld [vmem:[#allocation7 + $0x8] sm:$0xf]
    %v1608 = vld [vmem:[#allocation7 + $0xc] sm:$0xf]
    %v1609 = vld [vmem:[#allocation7 + $0x10] sm:$0xf]
    %v1610 = vld [vmem:[#allocation7 + $0x14] sm:$0xf]
    %v1611 = vld [vmem:[#allocation7 + $0x18] sm:$0xf]
    %v1612 = vld [vmem:[#allocation7 + $0x1c] sm:$0xf]
    %v1613 = vld [vmem:[#allocation7 + $0x20] sm:$0xf]
    %v1614 = vld [vmem:[#allocation7 + $0x24] sm:$0xf]
    %v1615 = vld [vmem:[#allocation7 + $0x28] sm:$0xf]
    %v1616 = vld [vmem:[#allocation7 + $0x2c] sm:$0xf]
    %v1617 = vld [vmem:[#allocation7 + $0x30] sm:$0xf]
    %v1618 = vld [vmem:[#allocation7 + $0x34] sm:$0xf]
    %v1619 = vld [vmem:[#allocation7 + $0x38] sm:$0xf]
    %v1620 = vld [vmem:[#allocation7 + $0x3c] sm:$0xf]
    %v1621 = vld [vmem:[#allocation7 + $0x40] sm:$0xf]
    %v1622 = vld [vmem:[#allocation7 + $0x44] sm:$0xf]
    %v1623 = vld [vmem:[#allocation7 + $0x48] sm:$0xf]
    %v1624 = vld [vmem:[#allocation7 + $0x4c] sm:$0xf]
    %v1625 = vld [vmem:[#allocation7 + $0x50] sm:$0xf]
    %v1626 = vld [vmem:[#allocation7 + $0x54] sm:$0xf]
    %v1627 = vld [vmem:[#allocation7 + $0x58] sm:$0xf]
    %v1628 = vld [vmem:[#allocation7 + $0x5c] sm:$0xf]
    %v1629 = vld [vmem:[#allocation7 + $0x60] sm:$0xf]
    %v1630 = vld [vmem:[#allocation7 + $0x64] sm:$0xf]
    %v1631 = vld [vmem:[#allocation7 + $0x68] sm:$0xf]
    %v1632 = vld [vmem:[#allocation7 + $0x6c] sm:$0xf]
    %v1633 = vld [vmem:[#allocation7 + $0x70] sm:$0xf]
    %v1634 = vld [vmem:[#allocation7 + $0x74] sm:$0xf]
    %v1635 = vld [vmem:[#allocation7 + $0x78] sm:$0xf]
    %v1636 = vld [vmem:[#allocation7 + $0x7c] sm:$0xf]
    %v1637 = vld [vmem:[#allocation7 + $0x80] sm:$0xf]
    %v1638 = vld [vmem:[#allocation7 + $0x84] sm:$0xf]
    %v1639 = vld [vmem:[#allocation7 + $0x88] sm:$0xf]
    %v1640 = vld [vmem:[#allocation7 + $0x8c] sm:$0xf]
    %v1641 = vld [vmem:[#allocation7 + $0x90] sm:$0xf]
    %v1642 = vld [vmem:[#allocation7 + $0x94] sm:$0xf]
    %v1643 = vld [vmem:[#allocation7 + $0x98] sm:$0xf]
    %v1644 = vld [vmem:[#allocation7 + $0x9c] sm:$0xf]
    %v1645 = vld [vmem:[#allocation7 + $0xa0] sm:$0xf]
    %v1646 = vld [vmem:[#allocation7 + $0xa4] sm:$0xf]
    %v1647 = vld [vmem:[#allocation7 + $0xa8] sm:$0xf]
    %v1648 = vld [vmem:[#allocation7 + $0xac] sm:$0xf]
    %v1649 = vld [vmem:[#allocation7 + $0xb0] sm:$0xf]
    %v1650 = vld [vmem:[#allocation7 + $0xb4] sm:$0xf]
    %v1651 = vld [vmem:[#allocation7 + $0xb8] sm:$0xf]
    %v1652 = vld [vmem:[#allocation7 + $0xbc] sm:$0xf]
    %v1653 = vld [vmem:[#allocation7 + $0xc0] sm:$0xf]
    %v1654 = vld [vmem:[#allocation7 + $0xc4] sm:$0xf]
    %v1655 = vld [vmem:[#allocation7 + $0xc8] sm:$0xf]
    %v1656 = vld [vmem:[#allocation7 + $0xcc] sm:$0xf]
    %v1657 = vld [vmem:[#allocation7 + $0xd0] sm:$0xf]
    %v1658 = vld [vmem:[#allocation7 + $0xd4] sm:$0xf]
    %v1659 = vld [vmem:[#allocation7 + $0xd8] sm:$0xf]
    %v1660 = vld [vmem:[#allocation7 + $0xdc] sm:$0xf]
    %v1661 = vld [vmem:[#allocation7 + $0xe0] sm:$0xf]
    %v1662 = vld [vmem:[#allocation7 + $0xe4] sm:$0xf]
    %v1663 = vld [vmem:[#allocation7 + $0xe8] sm:$0xf]
    %v1664 = vld [vmem:[#allocation7 + $0xec] sm:$0xf]
    %v1665 = vld [vmem:[#allocation7 + $0xf0] sm:$0xf]
    %v1666 = vld [vmem:[#allocation7 + $0xf4] sm:$0xf]
    %v1667 = vld [vmem:[#allocation7 + $0xf8] sm:$0xf]
    %v1668 = vld [vmem:[#allocation7 + $0xfc] sm:$0xf]
    %v1669 = vld [vmem:[%s9] sm:$0x1]
    %v1671 = vlaneseq
    %v1672 = vshrl.u32 %v1671, 7
    %v1673 = vsub.s32 0, %v1672
    %v1674 = vrot.slane %v1669, %v1673
    %v1740 = vunpack.c.l.b16 %v1605
    %v1741 = vunpack.c.l.b16 %v1606
    %v1742 = vunpack.c.l.b16 %v1607
    %v1743 = vunpack.c.l.b16 %v1608
    %v1744 = vunpack.c.l.b16 %v1609
    %v1745 = vunpack.c.l.b16 %v1610
    %v1746 = vunpack.c.l.b16 %v1611
    %v1747 = vunpack.c.l.b16 %v1612
    %v1748 = vunpack.c.l.b16 %v1613
    %v1749 = vunpack.c.l.b16 %v1614
    %v1750 = vunpack.c.l.b16 %v1615
    %v1751 = vunpack.c.l.b16 %v1616
    %v1752 = vunpack.c.l.b16 %v1617
    %v1753 = vunpack.c.l.b16 %v1618
    %v1754 = vunpack.c.l.b16 %v1619
    %v1755 = vunpack.c.l.b16 %v1620
    %v1756 = vunpack.c.l.b16 %v1621
    %v1757 = vunpack.c.l.b16 %v1622
    %v1758 = vunpack.c.l.b16 %v1623
    %v1759 = vunpack.c.l.b16 %v1624
    %v1760 = vunpack.c.l.b16 %v1625
    %v1761 = vunpack.c.l.b16 %v1626
    %v1762 = vunpack.c.l.b16 %v1627
    %v1763 = vunpack.c.l.b16 %v1628
    %v1764 = vunpack.c.l.b16 %v1629
    %v1765 = vunpack.c.l.b16 %v1630
    %v1766 = vunpack.c.l.b16 %v1631
    %v1767 = vunpack.c.l.b16 %v1632
    %v1768 = vunpack.c.l.b16 %v1633
    %v1769 = vunpack.c.l.b16 %v1634
    %v1770 = vunpack.c.l.b16 %v1635
    %v1771 = vunpack.c.l.b16 %v1636
    %v1772 = vunpack.c.l.b16 %v1637
    %v1773 = vunpack.c.l.b16 %v1638
    %v1774 = vunpack.c.l.b16 %v1639
    %v1775 = vunpack.c.l.b16 %v1640
    %v1776 = vunpack.c.l.b16 %v1641
    %v1777 = vunpack.c.l.b16 %v1642
    %v1778 = vunpack.c.l.b16 %v1643
    %v1779 = vunpack.c.l.b16 %v1644
    %v1780 = vunpack.c.l.b16 %v1645
    %v1781 = vunpack.c.l.b16 %v1646
    %v1782 = vunpack.c.l.b16 %v1647
    %v1783 = vunpack.c.l.b16 %v1648
    %v1784 = vunpack.c.l.b16 %v1649
    %v1785 = vunpack.c.l.b16 %v1650
    %v1786 = vunpack.c.l.b16 %v1651
    %v1787 = vunpack.c.l.b16 %v1652
    %v1788 = vunpack.c.l.b16 %v1653
    %v1789 = vunpack.c.l.b16 %v1654
    %v1790 = vunpack.c.l.b16 %v1655
    %v1791 = vunpack.c.l.b16 %v1656
    %v1792 = vunpack.c.l.b16 %v1657
    %v1793 = vunpack.c.l.b16 %v1658
    %v1794 = vunpack.c.l.b16 %v1659
    %v1795 = vunpack.c.l.b16 %v1660
    %v1796 = vunpack.c.l.b16 %v1661
    %v1797 = vunpack.c.l.b16 %v1662
    %v1798 = vunpack.c.l.b16 %v1663
    %v1799 = vunpack.c.l.b16 %v1664
    %v1800 = vunpack.c.l.b16 %v1665
    %v1801 = vunpack.c.l.b16 %v1666
    %v1802 = vunpack.c.l.b16 %v1667
    %v1803 = vunpack.c.l.b16 %v1668
    %v1804 = vpack.c.b16 %v1741, %v1740
    %v1805 = vpack.c.b16 %v1743, %v1742
    %v1806 = vpack.c.b16 %v1745, %v1744
    %v1807 = vpack.c.b16 %v1747, %v1746
    %v1808 = vpack.c.b16 %v1749, %v1748
    %v1809 = vpack.c.b16 %v1751, %v1750
    %v1810 = vpack.c.b16 %v1753, %v1752
    %v1811 = vpack.c.b16 %v1755, %v1754
    %v1812 = vpack.c.b16 %v1757, %v1756
    %v1813 = vpack.c.b16 %v1759, %v1758
    %v1814 = vpack.c.b16 %v1761, %v1760
    %v1815 = vpack.c.b16 %v1763, %v1762
    %v1816 = vpack.c.b16 %v1765, %v1764
    %v1817 = vpack.c.b16 %v1767, %v1766
    %v1818 = vpack.c.b16 %v1769, %v1768
    %v1819 = vpack.c.b16 %v1771, %v1770
    %v1820 = vpack.c.b16 %v1773, %v1772
    %v1821 = vpack.c.b16 %v1775, %v1774
    %v1822 = vpack.c.b16 %v1777, %v1776
    %v1823 = vpack.c.b16 %v1779, %v1778
    %v1824 = vpack.c.b16 %v1781, %v1780
    %v1825 = vpack.c.b16 %v1783, %v1782
    %v1826 = vpack.c.b16 %v1785, %v1784
    %v1827 = vpack.c.b16 %v1787, %v1786
    %v1828 = vpack.c.b16 %v1789, %v1788
    %v1829 = vpack.c.b16 %v1791, %v1790
    %v1830 = vpack.c.b16 %v1793, %v1792
    %v1831 = vpack.c.b16 %v1795, %v1794
    %v1832 = vpack.c.b16 %v1797, %v1796
    %v1833 = vpack.c.b16 %v1799, %v1798
    %v1834 = vpack.c.b16 %v1801, %v1800
    %v1835 = vpack.c.b16 %v1803, %v1802
    %1868 = vmatprep.subr.bf16.mxu0 0
    %1869 = vmatpush1.bf16.msra.mxu0 %v1804
    %1870 = vmatprep.subr.bf16.mxu0 0
    %1871 = vmatpush1.bf16.msra.mxu0 %v1805
    %1872 = vmatprep.subr.bf16.mxu0 0
    %1873 = vmatpush1.bf16.msra.mxu0 %v1806
    %1874 = vmatprep.subr.bf16.mxu0 0
    %1875 = vmatpush1.bf16.msra.mxu0 %v1807
    %1876 = vmatprep.subr.bf16.mxu0 0
    %1877 = vmatpush1.bf16.msra.mxu0 %v1808
    %1878 = vmatprep.subr.bf16.mxu0 0
    %1879 = vmatpush1.bf16.msra.mxu0 %v1809
    %1880 = vmatprep.subr.bf16.mxu0 0
    %1881 = vmatpush1.bf16.msra.mxu0 %v1810
    %1882 = vmatprep.subr.bf16.mxu0 0
    %1883 = vmatpush1.bf16.msra.mxu0 %v1811
    %1884 = vmatprep.subr.bf16.mxu0 0
    %1885 = vmatpush1.bf16.msra.mxu0 %v1812
    %1886 = vmatprep.subr.bf16.mxu0 0
    %1887 = vmatpush1.bf16.msra.mxu0 %v1813
    %1888 = vmatprep.subr.bf16.mxu0 0
    %1889 = vmatpush1.bf16.msra.mxu0 %v1814
    %1890 = vmatprep.subr.bf16.mxu0 0
    %1891 = vmatpush1.bf16.msra.mxu0 %v1815
    %1892 = vmatprep.subr.bf16.mxu0 0
    %1893 = vmatpush1.bf16.msra.mxu0 %v1816
    %1894 = vmatprep.subr.bf16.mxu0 0
    %1895 = vmatpush1.bf16.msra.mxu0 %v1817
    %1896 = vmatprep.subr.bf16.mxu0 0
    %1897 = vmatpush1.bf16.msra.mxu0 %v1818
    %1898 = vmatprep.subr.bf16.mxu0 0
    %1899 = vmatpush1.bf16.msra.mxu0 %v1819
    %1900 = vmatprep.mubr.bf16.mxu0 %v1593
    %1901 = vmatmul.mubr.bf16.gmra.mrb[0].mxu0 %v1589
    %v1902 = vpop.f32.mrb[0].mxu0
    %v1903 = vadd.f32 %v1674, %v1902
    %v1904 = vpop.f32.mrb[0].mxu0
    %v1905 = vpop.f32.mrb[0].mxu0
    %v1906 = vadd.f32 %v1674, %v1905
    %v1907 = vpop.f32.mrb[0].mxu0
    %1908 = vmatprep.mubr.bf16.mxu0 %v1594
    %1909 = vmatmul.mubr.bf16.gmra.mrb[0].mxu0 %v1590
    %v1910 = vpop.f32.mrb[0].mxu0
    %v1911 = vadd.f32 %v1674, %v1910
    %v1912 = vpop.f32.mrb[0].mxu0
    %v1913 = vpop.f32.mrb[0].mxu0
    %v1914 = vadd.f32 %v1674, %v1913
    %v1915 = vpop.f32.mrb[0].mxu0
    %1916 = vmatprep.mubr.bf16.mxu0 %v1595
    %1917 = vmatmul.mubr.bf16.gmra.mrb[0].mxu0 %v1591
    %v1918 = vpop.f32.mrb[0].mxu0
    %v1919 = vadd.f32 %v1674, %v1918
    %v1920 = vpop.f32.mrb[0].mxu0
    %v1921 = vpop.f32.mrb[0].mxu0
    %v1922 = vadd.f32 %v1674, %v1921
    %v1923 = vpop.f32.mrb[0].mxu0
    %1924 = vmatprep.mubr.bf16.mxu0 %v1596
    %1925 = vmatmul.mubr.bf16.gmra.mrb[0].mxu0 %v1592
    %v1926 = vpop.f32.mrb[0].mxu0
    %v1927 = vadd.f32 %v1674, %v1926
    %v1928 = vpop.f32.mrb[0].mxu0
    %v1929 = vpop.f32.mrb[0].mxu0
    %v1930 = vadd.f32 %v1674, %v1929
    %v1931 = vpop.f32.mrb[0].mxu0
    %1932 = vdwg.mxu0
    %1933 = vmatprep.subr.bf16.mxu0 0
    %1934 = vmatpush1.bf16.msra.mxu0 %v1820
    %1935 = vmatprep.subr.bf16.mxu0 0
    %1936 = vmatpush1.bf16.msra.mxu0 %v1821
    %1937 = vmatprep.subr.bf16.mxu0 0
    %1938 = vmatpush1.bf16.msra.mxu0 %v1822
    %1939 = vmatprep.subr.bf16.mxu0 0
    %1940 = vmatpush1.bf16.msra.mxu0 %v1823
    %1941 = vmatprep.subr.bf16.mxu0 0
    %1942 = vmatpush1.bf16.msra.mxu0 %v1824
    %1943 = vmatprep.subr.bf16.mxu0 0
    %1944 = vmatpush1.bf16.msra.mxu0 %v1825
    %1945 = vmatprep.subr.bf16.mxu0 0
    %1946 = vmatpush1.bf16.msra.mxu0 %v1826
    %1947 = vmatprep.subr.bf16.mxu0 0
    %1948 = vmatpush1.bf16.msra.mxu0 %v1827
    %1949 = vmatprep.subr.bf16.mxu0 0
    %1950 = vmatpush1.bf16.msra.mxu0 %v1828
    %1951 = vmatprep.subr.bf16.mxu0 0
    %1952 = vmatpush1.bf16.msra.mxu0 %v1829
    %1953 = vmatprep.subr.bf16.mxu0 0
    %1954 = vmatpush1.bf16.msra.mxu0 %v1830
    %1955 = vmatprep.subr.bf16.mxu0 0
    %1956 = vmatpush1.bf16.msra.mxu0 %v1831
    %1957 = vmatprep.subr.bf16.mxu0 0
    %1958 = vmatpush1.bf16.msra.mxu0 %v1832
    %1959 = vmatprep.subr.bf16.mxu0 0
    %1960 = vmatpush1.bf16.msra.mxu0 %v1833
    %1961 = vmatprep.subr.bf16.mxu0 0
    %1962 = vmatpush1.bf16.msra.mxu0 %v1834
    %1963 = vmatprep.subr.bf16.mxu0 0
    %1964 = vmatpush1.bf16.msra.mxu0 %v1835
    %1965 = vmatprep.mubr.bf16.mxu0 %v1601
    %1966 = vmatmul.mubr.bf16.gmra.mrb[0].mxu0 %v1597
    %v1967 = vpop.f32.mrb[0].mxu0
    %v1968 = vadd.f32 %v1903, %v1967
    %v1969 = vpop.f32.mrb[0].mxu0
    %v1970 = vpop.f32.mrb[0].mxu0
    %v1971 = vadd.f32 %v1906, %v1970
    %v1972 = vpop.f32.mrb[0].mxu0
    %1973 = vmatprep.mubr.bf16.mxu0 %v1602
    %1974 = vmatmul.mubr.bf16.gmra.mrb[0].mxu0 %v1598
    %v1975 = vpop.f32.mrb[0].mxu0
    %v1976 = vadd.f32 %v1911, %v1975
    %v1977 = vpop.f32.mrb[0].mxu0
    %v1978 = vpop.f32.mrb[0].mxu0
    %v1979 = vadd.f32 %v1914, %v1978
    %v1980 = vpop.f32.mrb[0].mxu0
    %1981 = vmatprep.mubr.bf16.mxu0 %v1603
    %1982 = vmatmul.mubr.bf16.gmra.mrb[0].mxu0 %v1599
    %v1983 = vpop.f32.mrb[0].mxu0
    %v1984 = vadd.f32 %v1919, %v1983
    %v1985 = vpop.f32.mrb[0].mxu0
    %v1986 = vpop.f32.mrb[0].mxu0
    %v1987 = vadd.f32 %v1922, %v1986
    %v1988 = vpop.f32.mrb[0].mxu0
    %1989 = vmatprep.mubr.bf16.mxu0 %v1604
    %1990 = vmatmul.mubr.bf16.gmra.mrb[0].mxu0 %v1600
    %v1991 = vpop.f32.mrb[0].mxu0
    %v1992 = vadd.f32 %v1927, %v1991
    %v1993 = vpop.f32.mrb[0].mxu0
    %v1994 = vpop.f32.mrb[0].mxu0
    %v1995 = vadd.f32 %v1930, %v1994
    %v1996 = vpop.f32.mrb[0].mxu0
    %1997 = vdwg.mxu0
    %v1998 = vadd.f32 %v1968, %v1971
    %v1999 = vadd.f32 %v1998, %v1976
    %v2000 = vadd.f32 %v1999, %v1979
    %v2001 = vadd.f32 %v2000, %v1984
    %v2002 = vadd.f32 %v2001, %v1987
    %v2003 = vadd.f32 %v2002, %v1992
    %v2004 = vadd.f32 %v2003, %v1995
    %v2005 = vrot.slane %v2004, 4
    %v2006 = vadd.f32 %v2004, %v2005
    %v2007 = vrot.slane %v2006, 2
    %v2008 = vadd.f32 %v2006, %v2007
    %v2009 = vrot.slane %v2008, 1
    %v2010 = vadd.f32 %v2008, %v2009
    %v2011 = vmul.f32 %v1968, %v1968
    %v2012 = vmul.f32 %v1971, %v1971
    %v2013 = vmul.f32 %v1976, %v1976
    %v2014 = vmul.f32 %v1979, %v1979
    %v2015 = vmul.f32 %v1984, %v1984
    %v2016 = vmul.f32 %v1987, %v1987
    %v2017 = vmul.f32 %v1992, %v1992
    %v2018 = vmul.f32 %v1995, %v1995
    %v2019 = vadd.f32 %v2011, %v2012
    %v2020 = vadd.f32 %v2019, %v2013
    %v2021 = vadd.f32 %v2020, %v2014
    %v2022 = vadd.f32 %v2021, %v2015
    %v2023 = vadd.f32 %v2022, %v2016
    %v2024 = vadd.f32 %v2023, %v2017
    %v2025 = vadd.f32 %v2024, %v2018
    %v2026 = vrot.slane %v2025, 4
    %v2027 = vadd.f32 %v2025, %v2026
    %v2028 = vrot.slane %v2027, 2
    %v2029 = vadd.f32 %v2027, %v2028
    %v2030 = vrot.slane %v2029, 1
    %v2031 = vadd.f32 %v2029, %v2030
    %vm2032 = vcmask 1040384
    %v2033 = vsel %vm2032, %v2010, %v2031
    %2035 = vrot.lane.b32.xlu0 %v2033, 127
    %v2036 = vpop.permute.xlu0 %2035
    %2038 = vrot.lane.b32.xlu0 %v2033, 1
    %v2039 = vpop.permute.xlu0 %2038
    %v2041 = vand.u32 %v1235, 1
    %vm2042 = vcmp.eq.s32.totalorder %v2041, 0
    %v2043 = vsel %vm2042, %v2036, %v2039
    %v2044 = vadd.f32 %v2033, %v2043
    %2046 = vrot.lane.b32.xlu0 %v2044, 126
    %v2047 = vpop.permute.xlu0 %2046
    %2049 = vrot.lane.b32.xlu0 %v2044, 2
    %v2050 = vpop.permute.xlu0 %2049
    %v2052 = vand.u32 %v1235, 2
    %vm2053 = vcmp.eq.s32.totalorder %v2052, 0
    %v2054 = vsel %vm2053, %v2047, %v2050
    %v2055 = vadd.f32 %v2044, %v2054
    %2057 = vrot.lane.b32.xlu0 %v2055, 124
    %v2058 = vpop.permute.xlu0 %2057
    %2060 = vrot.lane.b32.xlu0 %v2055, 4
    %v2061 = vpop.permute.xlu0 %2060
    %vm2063 = vcmask 31744
    %v2064 = vand.u32 %v1235, 4
    %vm2065 = vcmp.eq.s32.totalorder %v2064, 0
    %v2066 = vsel %vm2065, %v2058, %v2061
    %v2067 = vadd.f32 %v2055, %v2066
    %2069 = vrot.lane.b32.xlu0 %v2067, 120
    %v2070 = vpop.permute.xlu0 %2069
    %2072 = vrot.lane.b32.xlu0 %v2067, 8
    %v2073 = vpop.permute.xlu0 %2072
    %vm2075 = vcmask 64512
    %v2076 = vand.u32 %v1235, 8
    %vm2077 = vcmp.eq.s32.totalorder %v2076, 0
    %v2078 = vsel %vm2077, %v2070, %v2073
    %v2079 = vadd.f32 %v2067, %v2078
    %2081 = vrot.lane.b32.xlu0 %v2079, 112
    %v2082 = vpop.permute.xlu0 %2081
    %2084 = vrot.lane.b32.xlu0 %v2079, 16
    %v2085 = vpop.permute.xlu0 %2084
    %vm2087 = vcmask 130048
    %v2088 = vand.u32 %v1235, 16
    %vm2089 = vcmp.eq.s32.totalorder %v2088, 0
    %v2090 = vsel %vm2089, %v2082, %v2085
    %v2091 = vadd.f32 %v2079, %v2090
    %v2092 = vrcp.pop 2048.0
    %v2093 = vmul.f32 %v2091, %v2092
    %v2094 = vmul.f32 %v2093, %v2093
    %v2096 = vrot.slane %v2094, 7
    %v2098 = vsub.f32 %v2093, %v2096
    %v2099 = vmax.f32 %v2098, 0.0
    %v2100 = vadd.f32 %v2099, 1e-05
    %v2101 = vrsqrt.pop %v2100
    %v2102 = vld [vmem:[#allocation9] sm:$0x1]
    %v2105 = vunpack.c.l.s4 1966171168
    %v2106 = vunpack.c.0.s8 %v2105
    %v2107 = vlaneseq
    %v2108 = vshrl.u32 %v2107, 7
    %v2109 = vsub.s32 %v2106, %v2108
    %v2110 = vrot.slane %v2101, %v2109
    %v2111 = vcombine.high %v2110, %v2110
    %v2113 = vunpack.c.l.s4 1966171168
    %v2114 = vunpack.c.0.s8 %v2113
    %v2115 = vlaneseq
    %v2116 = vshrl.u32 %v2115, 7
    %v2117 = vsub.s32 %v2114, %v2116
    %v2118 = vrot.slane %v2111, %v2117
    %v2120 = vmul.f32 %v2102, %v2118
    %v2121 = vld [vmem:[#allocation10] sm:$0x1]
    %v2122 = vmul.f32 %v2093, %v2120
    %v2123 = vsub.f32 %v2121, %v2122
    %v2125 = vlaneseq
    %v2126 = vshrl.u32 %v2125, 7
    %v2127 = vsub.s32 0, %v2126
    %v2128 = vrot.slane %v2120, %v2127
    %v2130 = vmul.f32 %v1968, %v2128
    %v2131 = vmul.f32 %v1971, %v2128
    %v2132 = vmul.f32 %v1976, %v2128
    %v2133 = vmul.f32 %v1979, %v2128
    %v2134 = vmul.f32 %v1984, %v2128
    %v2135 = vmul.f32 %v1987, %v2128
    %v2136 = vmul.f32 %v1992, %v2128
    %v2137 = vmul.f32 %v1995, %v2128
    %v2139 = vlaneseq
    %v2140 = vshrl.u32 %v2139, 7
    %v2141 = vsub.s32 0, %v2140
    %v2142 = vrot.slane %v2123, %v2141
    %v2144 = vadd.f32 %v2130, %v2142
    %v2145 = vadd.f32 %v2131, %v2142
    %v2146 = vadd.f32 %v2132, %v2142
    %v2147 = vadd.f32 %v2133, %v2142
    %v2148 = vadd.f32 %v2134, %v2142
    %v2149 = vadd.f32 %v2135, %v2142
    %v2150 = vadd.f32 %v2136, %v2142
    %v2151 = vadd.f32 %v2137, %v2142
    %v2152 = vpack.c.bf16 %v2145, %v2144
    %v2153 = vpack.c.bf16 %v2147, %v2146
    %v2154 = vpack.c.bf16 %v2149, %v2148
    %v2155 = vpack.c.bf16 %v2151, %v2150
    %v2156 = vld [vmem:[%s3] sm:$0xf]
    %v2157 = vld [vmem:[%s3 + $0x4] sm:$0xf]
    %v2158 = vld [vmem:[%s3 + $0x8] sm:$0xf]
    %v2159 = vld [vmem:[%s3 + $0xc] sm:$0xf]
    %v2160 = vld [vmem:[%s3 + $0x10] sm:$0xf]
    %v2161 = vld [vmem:[%s3 + $0x14] sm:$0xf]
    %v2162 = vld [vmem:[%s3 + $0x18] sm:$0xf]
    %v2163 = vld [vmem:[%s3 + $0x1c] sm:$0xf]
    %v2164 = vld [vmem:[%s3 + $0x20] sm:$0xf]
    %v2165 = vld [vmem:[%s3 + $0x24] sm:$0xf]
    %v2166 = vld [vmem:[%s3 + $0x28] sm:$0xf]
    %v2167 = vld [vmem:[%s3 + $0x2c] sm:$0xf]
    %v2168 = vld [vmem:[%s3 + $0x30] sm:$0xf]
    %v2169 = vld [vmem:[%s3 + $0x34] sm:$0xf]
    %v2170 = vld [vmem:[%s3 + $0x38] sm:$0xf]
    %v2171 = vld [vmem:[%s3 + $0x3c] sm:$0xf]
    %v2188 = vunpack.c.l.b16 %v2156
    %v2189 = vunpack.c.l.b16 %v2157
    %v2190 = vunpack.c.l.b16 %v2158
    %v2191 = vunpack.c.l.b16 %v2159
    %v2192 = vunpack.c.l.b16 %v2160
    %v2193 = vunpack.c.l.b16 %v2161
    %v2194 = vunpack.c.l.b16 %v2162
    %v2195 = vunpack.c.l.b16 %v2163
    %v2196 = vunpack.c.l.b16 %v2164
    %v2197 = vunpack.c.l.b16 %v2165
    %v2198 = vunpack.c.l.b16 %v2166
    %v2199 = vunpack.c.l.b16 %v2167
    %v2200 = vunpack.c.l.b16 %v2168
    %v2201 = vunpack.c.l.b16 %v2169
    %v2202 = vunpack.c.l.b16 %v2170
    %v2203 = vunpack.c.l.b16 %v2171
    %v2204 = vpack.c.b16 %v2189, %v2188
    %v2205 = vpack.c.b16 %v2191, %v2190
    %v2206 = vpack.c.b16 %v2193, %v2192
    %v2207 = vpack.c.b16 %v2195, %v2194
    %v2208 = vpack.c.b16 %v2197, %v2196
    %v2209 = vpack.c.b16 %v2199, %v2198
    %v2210 = vpack.c.b16 %v2201, %v2200
    %v2211 = vpack.c.b16 %v2203, %v2202
    %vm2212 = vcmask 523264
    %v2214 = vsel %vm2212, %v2204, 0
    %v2217 = vsel %vm2212, %v2205, 0
    %v2220 = vsel %vm2212, %v2206, 0
    %v2223 = vsel %vm2212, %v2207, 0
    %v2226 = vsel %vm2212, %v2208, 0
    %v2229 = vsel %vm2212, %v2209, 0
    %v2232 = vsel %vm2212, %v2210, 0
    %v2235 = vsel %vm2212, %v2211, 0
    %2237 = vmatprep.subr.bf16.mxu0 0
    %2238 = vmatpush1.bf16.msra.mxu0 %v2152
    %2239 = vmatprep.subr.bf16.mxu0 0
    %2240 = vmatpush1.bf16.msra.mxu0 %v2153
    %2241 = vmatprep.subr.bf16.mxu0 0
    %2242 = vmatpush1.bf16.msra.mxu0 %v2154
    %2243 = vmatprep.subr.bf16.mxu0 0
    %2244 = vmatpush1.bf16.msra.mxu0 %v2155
    %2245 = vmatprep.subr.bf16.mxu0 0
    %2246 = vmatpush1.bf16.msra.mxu0 0
    %2247 = vmatprep.subr.bf16.mxu0 0
    %2248 = vmatpush1.bf16.msra.mxu0 0
    %2249 = vmatprep.subr.bf16.mxu0 0
    %2250 = vmatpush1.bf16.msra.mxu0 0
    %2251 = vmatprep.subr.bf16.mxu0 0
    %2252 = vmatpush1.bf16.msra.mxu0 0
    %2253 = vmatprep.subr.bf16.mxu0 0
    %2254 = vmatpush1.bf16.msra.mxu0 0
    %2255 = vmatprep.subr.bf16.mxu0 0
    %2256 = vmatpush1.bf16.msra.mxu0 0
    %2257 = vmatprep.subr.bf16.mxu0 0
    %2258 = vmatpush1.bf16.msra.mxu0 0
    %2259 = vmatprep.subr.bf16.mxu0 0
    %2260 = vmatpush1.bf16.msra.mxu0 0
    %2261 = vmatprep.subr.bf16.mxu0 0
    %2262 = vmatpush1.bf16.msra.mxu0 0
    %2263 = vmatprep.subr.bf16.mxu0 0
    %2264 = vmatpush1.bf16.msra.mxu0 0
    %2265 = vmatprep.subr.bf16.mxu0 0
    %2266 = vmatpush1.bf16.msra.mxu0 0
    %2267 = vmatprep.subr.bf16.mxu0 0
    %2268 = vmatpush1.bf16.msra.mxu0 0
    %2269 = vmatprep.mubr.bf16.mxu0 0
    %2270 = vmatmul.mubr.bf16.gmra.mrb[0].mxu0 %v2214
    %v2271 = vpop.f32.mrb[0].mxu0
    %v2272 = vadd.f32 0.0, %v2271
    %v2273 = vpop.f32.mrb[0].mxu0
    %v2274 = vpop.f32.mrb[0].mxu0
    %v2275 = vadd.f32 0.0, %v2274
    %v2276 = vpop.f32.mrb[0].mxu0
    %2277 = vmatprep.mubr.bf16.mxu0 0
    %2278 = vmatmul.mubr.bf16.gmra.mrb[0].mxu0 %v2217
    %v2279 = vpop.f32.mrb[0].mxu0
    %v2280 = vadd.f32 0.0, %v2279
    %v2281 = vpop.f32.mrb[0].mxu0
    %v2282 = vpop.f32.mrb[0].mxu0
    %v2283 = vadd.f32 0.0, %v2282
    %v2284 = vpop.f32.mrb[0].mxu0
    %2285 = vmatprep.mubr.bf16.mxu0 0
    %2286 = vmatmul.mubr.bf16.gmra.mrb[0].mxu0 %v2220
    %v2287 = vpop.f32.mrb[0].mxu0
    %v2288 = vadd.f32 0.0, %v2287
    %v2289 = vpop.f32.mrb[0].mxu0
    %v2290 = vpop.f32.mrb[0].mxu0
    %v2291 = vadd.f32 0.0, %v2290
    %v2292 = vpop.f32.mrb[0].mxu0
    %2293 = vmatprep.mubr.bf16.mxu0 0
    %2294 = vmatmul.mubr.bf16.gmra.mrb[0].mxu0 %v2223
    %v2295 = vpop.f32.mrb[0].mxu0
    %v2296 = vadd.f32 0.0, %v2295
    %v2297 = vpop.f32.mrb[0].mxu0
    %v2298 = vpop.f32.mrb[0].mxu0
    %v2299 = vadd.f32 0.0, %v2298
    %v2300 = vpop.f32.mrb[0].mxu0
    %2301 = vmatprep.mubr.bf16.mxu0 0
    %2302 = vmatmul.mubr.bf16.gmra.mrb[0].mxu0 %v2226
    %v2303 = vpop.f32.mrb[0].mxu0
    %v2304 = vadd.f32 0.0, %v2303
    %v2305 = vpop.f32.mrb[0].mxu0
    %v2306 = vpop.f32.mrb[0].mxu0
    %v2307 = vadd.f32 0.0, %v2306
    %v2308 = vpop.f32.mrb[0].mxu0
    %2309 = vmatprep.mubr.bf16.mxu0 0
    %2310 = vmatmul.mubr.bf16.gmra.mrb[0].mxu0 %v2229
    %v2311 = vpop.f32.mrb[0].mxu0
    %v2312 = vadd.f32 0.0, %v2311
    %v2313 = vpop.f32.mrb[0].mxu0
    %v2314 = vpop.f32.mrb[0].mxu0
    %v2315 = vadd.f32 0.0, %v2314
    %v2316 = vpop.f32.mrb[0].mxu0
    %2317 = vmatprep.mubr.bf16.mxu0 0
    %2318 = vmatmul.mubr.bf16.gmra.mrb[0].mxu0 %v2232
    %v2319 = vpop.f32.mrb[0].mxu0
    %v2320 = vadd.f32 0.0, %v2319
    %v2321 = vpop.f32.mrb[0].mxu0
    %v2322 = vpop.f32.mrb[0].mxu0
    %v2323 = vadd.f32 0.0, %v2322
    %v2324 = vpop.f32.mrb[0].mxu0
    %2325 = vmatprep.mubr.bf16.mxu0 0
    %2326 = vmatmul.mubr.bf16.gmra.mrb[0].mxu0 %v2235
    %v2327 = vpop.f32.mrb[0].mxu0
    %v2328 = vadd.f32 0.0, %v2327
    %v2329 = vpop.f32.mrb[0].mxu0
    %v2330 = vpop.f32.mrb[0].mxu0
    %v2331 = vadd.f32 0.0, %v2330
    %v2332 = vpop.f32.mrb[0].mxu0
    %2333 = vdwg.mxu0
    %v2334 = vpack.c.bf16 %v2275, %v2272
    %v2335 = vpack.c.bf16 %v2283, %v2280
    %v2336 = vpack.c.bf16 %v2291, %v2288
    %v2337 = vpack.c.bf16 %v2299, %v2296
    %v2338 = vpack.c.bf16 %v2307, %v2304
    %v2339 = vpack.c.bf16 %v2315, %v2312
    %v2340 = vpack.c.bf16 %v2323, %v2320
    %v2341 = vpack.c.bf16 %v2331, %v2328
    %s2342 = scalar_lea.vmem [#allocation7], 256
    %v2343 = vld [vmem:[%s2342] sm:$0xf]
    %v2344 = vld [vmem:[%s2342 + $0x4] sm:$0xf]
    %v2345 = vld [vmem:[%s2342 + $0x8] sm:$0xf]
    %v2346 = vld [vmem:[%s2342 + $0xc] sm:$0xf]
    %v2347 = vld [vmem:[%s2342 + $0x10] sm:$0xf]
    %v2348 = vld [vmem:[%s2342 + $0x14] sm:$0xf]
    %v2349 = vld [vmem:[%s2342 + $0x18] sm:$0xf]
    %v2350 = vld [vmem:[%s2342 + $0x1c] sm:$0xf]
    %v2351 = vld [vmem:[%s2342 + $0x20] sm:$0xf]
    %v2352 = vld [vmem:[%s2342 + $0x24] sm:$0xf]
    %v2353 = vld [vmem:[%s2342 + $0x28] sm:$0xf]
    %v2354 = vld [vmem:[%s2342 + $0x2c] sm:$0xf]
    %v2355 = vld [vmem:[%s2342 + $0x30] sm:$0xf]
    %v2356 = vld [vmem:[%s2342 + $0x34] sm:$0xf]
    %v2357 = vld [vmem:[%s2342 + $0x38] sm:$0xf]
    %v2358 = vld [vmem:[%s2342 + $0x3c] sm:$0xf]
    %v2359 = vld [vmem:[%s2342 + $0x40] sm:$0xf]
    %v2360 = vld [vmem:[%s2342 + $0x44] sm:$0xf]
    %v2361 = vld [vmem:[%s2342 + $0x48] sm:$0xf]
    %v2362 = vld [vmem:[%s2342 + $0x4c] sm:$0xf]
    %v2363 = vld [vmem:[%s2342 + $0x50] sm:$0xf]
    %v2364 = vld [vmem:[%s2342 + $0x54] sm:$0xf]
    %v2365 = vld [vmem:[%s2342 + $0x58] sm:$0xf]
    %v2366 = vld [vmem:[%s2342 + $0x5c] sm:$0xf]
    %v2367 = vld [vmem:[%s2342 + $0x60] sm:$0xf]
    %v2368 = vld [vmem:[%s2342 + $0x64] sm:$0xf]
    %v2369 = vld [vmem:[%s2342 + $0x68] sm:$0xf]
    %v2370 = vld [vmem:[%s2342 + $0x6c] sm:$0xf]
    %v2371 = vld [vmem:[%s2342 + $0x70] sm:$0xf]
    %v2372 = vld [vmem:[%s2342 + $0x74] sm:$0xf]
    %v2373 = vld [vmem:[%s2342 + $0x78] sm:$0xf]
    %v2374 = vld [vmem:[%s2342 + $0x7c] sm:$0xf]
    %v2375 = vld [vmem:[%s2342 + $0x80] sm:$0xf]
    %v2376 = vld [vmem:[%s2342 + $0x84] sm:$0xf]
    %v2377 = vld [vmem:[%s2342 + $0x88] sm:$0xf]
    %v2378 = vld [vmem:[%s2342 + $0x8c] sm:$0xf]
    %v2379 = vld [vmem:[%s2342 + $0x90] sm:$0xf]
    %v2380 = vld [vmem:[%s2342 + $0x94] sm:$0xf]
    %v2381 = vld [vmem:[%s2342 + $0x98] sm:$0xf]
    %v2382 = vld [vmem:[%s2342 + $0x9c] sm:$0xf]
    %v2383 = vld [vmem:[%s2342 + $0xa0] sm:$0xf]
    %v2384 = vld [vmem:[%s2342 + $0xa4] sm:$0xf]
    %v2385 = vld [vmem:[%s2342 + $0xa8] sm:$0xf]
    %v2386 = vld [vmem:[%s2342 + $0xac] sm:$0xf]
    %v2387 = vld [vmem:[%s2342 + $0xb0] sm:$0xf]
    %v2388 = vld [vmem:[%s2342 + $0xb4] sm:$0xf]
    %v2389 = vld [vmem:[%s2342 + $0xb8] sm:$0xf]
    %v2390 = vld [vmem:[%s2342 + $0xbc] sm:$0xf]
    %v2391 = vld [vmem:[%s2342 + $0xc0] sm:$0xf]
    %v2392 = vld [vmem:[%s2342 + $0xc4] sm:$0xf]
    %v2393 = vld [vmem:[%s2342 + $0xc8] sm:$0xf]
    %v2394 = vld [vmem:[%s2342 + $0xcc] sm:$0xf]
    %v2395 = vld [vmem:[%s2342 + $0xd0] sm:$0xf]
    %v2396 = vld [vmem:[%s2342 + $0xd4] sm:$0xf]
    %v2397 = vld [vmem:[%s2342 + $0xd8] sm:$0xf]
    %v2398 = vld [vmem:[%s2342 + $0xdc] sm:$0xf]
    %v2399 = vld [vmem:[%s2342 + $0xe0] sm:$0xf]
    %v2400 = vld [vmem:[%s2342 + $0xe4] sm:$0xf]
    %v2401 = vld [vmem:[%s2342 + $0xe8] sm:$0xf]
    %v2402 = vld [vmem:[%s2342 + $0xec] sm:$0xf]
    %v2403 = vld [vmem:[%s2342 + $0xf0] sm:$0xf]
    %v2404 = vld [vmem:[%s2342 + $0xf4] sm:$0xf]
    %v2405 = vld [vmem:[%s2342 + $0xf8] sm:$0xf]
    %v2406 = vld [vmem:[%s2342 + $0xfc] sm:$0xf]
    %s2407 = scalar_lea.vmem %s9, 1
    %v2408 = vld [vmem:[%s2407] sm:$0x1]
    %v2410 = vlaneseq
    %v2411 = vshrl.u32 %v2410, 7
    %v2412 = vsub.s32 0, %v2411
    %v2413 = vrot.slane %v2408, %v2412
    %v2479 = vunpack.c.l.b16 %v2343
    %v2480 = vunpack.c.l.b16 %v2344
    %v2481 = vunpack.c.l.b16 %v2345
    %v2482 = vunpack.c.l.b16 %v2346
    %v2483 = vunpack.c.l.b16 %v2347
    %v2484 = vunpack.c.l.b16 %v2348
    %v2485 = vunpack.c.l.b16 %v2349
    %v2486 = vunpack.c.l.b16 %v2350
    %v2487 = vunpack.c.l.b16 %v2351
    %v2488 = vunpack.c.l.b16 %v2352
    %v2489 = vunpack.c.l.b16 %v2353
    %v2490 = vunpack.c.l.b16 %v2354
    %v2491 = vunpack.c.l.b16 %v2355
    %v2492 = vunpack.c.l.b16 %v2356
    %v2493 = vunpack.c.l.b16 %v2357
    %v2494 = vunpack.c.l.b16 %v2358
    %v2495 = vunpack.c.l.b16 %v2359
    %v2496 = vunpack.c.l.b16 %v2360
    %v2497 = vunpack.c.l.b16 %v2361
    %v2498 = vunpack.c.l.b16 %v2362
    %v2499 = vunpack.c.l.b16 %v2363
    %v2500 = vunpack.c.l.b16 %v2364
    %v2501 = vunpack.c.l.b16 %v2365
    %v2502 = vunpack.c.l.b16 %v2366
    %v2503 = vunpack.c.l.b16 %v2367
    %v2504 = vunpack.c.l.b16 %v2368
    %v2505 = vunpack.c.l.b16 %v2369
    %v2506 = vunpack.c.l.b16 %v2370
    %v2507 = vunpack.c.l.b16 %v2371
    %v2508 = vunpack.c.l.b16 %v2372
    %v2509 = vunpack.c.l.b16 %v2373
    %v2510 = vunpack.c.l.b16 %v2374
    %v2511 = vunpack.c.l.b16 %v2375
    %v2512 = vunpack.c.l.b16 %v2376
    %v2513 = vunpack.c.l.b16 %v2377
    %v2514 = vunpack.c.l.b16 %v2378
    %v2515 = vunpack.c.l.b16 %v2379
    %v2516 = vunpack.c.l.b16 %v2380
    %v2517 = vunpack.c.l.b16 %v2381
    %v2518 = vunpack.c.l.b16 %v2382
    %v2519 = vunpack.c.l.b16 %v2383
    %v2520 = vunpack.c.l.b16 %v2384
    %v2521 = vunpack.c.l.b16 %v2385
    %v2522 = vunpack.c.l.b16 %v2386
    %v2523 = vunpack.c.l.b16 %v2387
    %v2524 = vunpack.c.l.b16 %v2388
    %v2525 = vunpack.c.l.b16 %v2389
    %v2526 = vunpack.c.l.b16 %v2390
    %v2527 = vunpack.c.l.b16 %v2391
    %v2528 = vunpack.c.l.b16 %v2392
    %v2529 = vunpack.c.l.b16 %v2393
    %v2530 = vunpack.c.l.b16 %v2394
    %v2531 = vunpack.c.l.b16 %v2395
    %v2532 = vunpack.c.l.b16 %v2396
    %v2533 = vunpack.c.l.b16 %v2397
    %v2534 = vunpack.c.l.b16 %v2398
    %v2535 = vunpack.c.l.b16 %v2399
    %v2536 = vunpack.c.l.b16 %v2400
    %v2537 = vunpack.c.l.b16 %v2401
    %v2538 = vunpack.c.l.b16 %v2402
    %v2539 = vunpack.c.l.b16 %v2403
    %v2540 = vunpack.c.l.b16 %v2404
    %v2541 = vunpack.c.l.b16 %v2405
    %v2542 = vunpack.c.l.b16 %v2406
    %v2543 = vpack.c.b16 %v2480, %v2479
    %v2544 = vpack.c.b16 %v2482, %v2481
    %v2545 = vpack.c.b16 %v2484, %v2483
    %v2546 = vpack.c.b16 %v2486, %v2485
    %v2547 = vpack.c.b16 %v2488, %v2487
    %v2548 = vpack.c.b16 %v2490, %v2489
    %v2549 = vpack.c.b16 %v2492, %v2491
    %v2550 = vpack.c.b16 %v2494, %v2493
    %v2551 = vpack.c.b16 %v2496, %v2495
    %v2552 = vpack.c.b16 %v2498, %v2497
    %v2553 = vpack.c.b16 %v2500, %v2499
    %v2554 = vpack.c.b16 %v2502, %v2501
    %v2555 = vpack.c.b16 %v2504, %v2503
    %v2556 = vpack.c.b16 %v2506, %v2505
    %v2557 = vpack.c.b16 %v2508, %v2507
    %v2558 = vpack.c.b16 %v2510, %v2509
    %v2559 = vpack.c.b16 %v2512, %v2511
    %v2560 = vpack.c.b16 %v2514, %v2513
    %v2561 = vpack.c.b16 %v2516, %v2515
    %v2562 = vpack.c.b16 %v2518, %v2517
    %v2563 = vpack.c.b16 %v2520, %v2519
    %v2564 = vpack.c.b16 %v2522, %v2521
    %v2565 = vpack.c.b16 %v2524, %v2523
    %v2566 = vpack.c.b16 %v2526, %v2525
    %v2567 = vpack.c.b16 %v2528, %v2527
    %v2568 = vpack.c.b16 %v2530, %v2529
    %v2569 = vpack.c.b16 %v2532, %v2531
    %v2570 = vpack.c.b16 %v2534, %v2533
    %v2571 = vpack.c.b16 %v2536, %v2535
    %v2572 = vpack.c.b16 %v2538, %v2537
    %v2573 = vpack.c.b16 %v2540, %v2539
    %v2574 = vpack.c.b16 %v2542, %v2541
    %2607 = vmatprep.subr.bf16.mxu0 0
    %2608 = vmatpush1.bf16.msra.mxu0 %v2543
    %2609 = vmatprep.subr.bf16.mxu0 0
    %2610 = vmatpush1.bf16.msra.mxu0 %v2544
    %2611 = vmatprep.subr.bf16.mxu0 0
    %2612 = vmatpush1.bf16.msra.mxu0 %v2545
    %2613 = vmatprep.subr.bf16.mxu0 0
    %2614 = vmatpush1.bf16.msra.mxu0 %v2546
    %2615 = vmatprep.subr.bf16.mxu0 0
    %2616 = vmatpush1.bf16.msra.mxu0 %v2547
    %2617 = vmatprep.subr.bf16.mxu0 0
    %2618 = vmatpush1.bf16.msra.mxu0 %v2548
    %2619 = vmatprep.subr.bf16.mxu0 0
    %2620 = vmatpush1.bf16.msra.mxu0 %v2549
    %2621 = vmatprep.subr.bf16.mxu0 0
    %2622 = vmatpush1.bf16.msra.mxu0 %v2550
    %2623 = vmatprep.subr.bf16.mxu0 0
    %2624 = vmatpush1.bf16.msra.mxu0 %v2551
    %2625 = vmatprep.subr.bf16.mxu0 0
    %2626 = vmatpush1.bf16.msra.mxu0 %v2552
    %2627 = vmatprep.subr.bf16.mxu0 0
    %2628 = vmatpush1.bf16.msra.mxu0 %v2553
    %2629 = vmatprep.subr.bf16.mxu0 0
    %2630 = vmatpush1.bf16.msra.mxu0 %v2554
    %2631 = vmatprep.subr.bf16.mxu0 0
    %2632 = vmatpush1.bf16.msra.mxu0 %v2555
    %2633 = vmatprep.subr.bf16.mxu0 0
    %2634 = vmatpush1.bf16.msra.mxu0 %v2556
    %2635 = vmatprep.subr.bf16.mxu0 0
    %2636 = vmatpush1.bf16.msra.mxu0 %v2557
    %2637 = vmatprep.subr.bf16.mxu0 0
    %2638 = vmatpush1.bf16.msra.mxu0 %v2558
    %2639 = vmatprep.mubr.bf16.mxu0 %v2336
    %2640 = vmatmul.mubr.bf16.gmra.mrb[0].mxu0 %v2334
    %v2641 = vpop.f32.mrb[0].mxu0
    %v2642 = vadd.f32 %v2413, %v2641
    %v2643 = vpop.f32.mrb[0].mxu0
    %v2644 = vpop.f32.mrb[0].mxu0
    %v2645 = vadd.f32 %v2413, %v2644
    %v2646 = vpop.f32.mrb[0].mxu0
    %2647 = vmatprep.mubr.bf16.mxu0 %v2337
    %2648 = vmatmul.mubr.bf16.gmra.mrb[0].mxu0 %v2335
    %v2649 = vpop.f32.mrb[0].mxu0
    %v2650 = vadd.f32 %v2413, %v2649
    %v2651 = vpop.f32.mrb[0].mxu0
    %v2652 = vpop.f32.mrb[0].mxu0
    %v2653 = vadd.f32 %v2413, %v2652
    %v2654 = vpop.f32.mrb[0].mxu0
    %2655 = vdwg.mxu0
    %2656 = vmatprep.subr.bf16.mxu0 0
    %2657 = vmatpush1.bf16.msra.mxu0 %v2559
    %2658 = vmatprep.subr.bf16.mxu0 0
    %2659 = vmatpush1.bf16.msra.mxu0 %v2560
    %2660 = vmatprep.subr.bf16.mxu0 0
    %2661 = vmatpush1.bf16.msra.mxu0 %v2561
    %2662 = vmatprep.subr.bf16.mxu0 0
    %2663 = vmatpush1.bf16.msra.mxu0 %v2562
    %2664 = vmatprep.subr.bf16.mxu0 0
    %2665 = vmatpush1.bf16.msra.mxu0 %v2563
    %2666 = vmatprep.subr.bf16.mxu0 0
    %2667 = vmatpush1.bf16.msra.mxu0 %v2564
    %2668 = vmatprep.subr.bf16.mxu0 0
    %2669 = vmatpush1.bf16.msra.mxu0 %v2565
    %2670 = vmatprep.subr.bf16.mxu0 0
    %2671 = vmatpush1.bf16.msra.mxu0 %v2566
    %2672 = vmatprep.subr.bf16.mxu0 0
    %2673 = vmatpush1.bf16.msra.mxu0 %v2567
    %2674 = vmatprep.subr.bf16.mxu0 0
    %2675 = vmatpush1.bf16.msra.mxu0 %v2568
    %2676 = vmatprep.subr.bf16.mxu0 0
    %2677 = vmatpush1.bf16.msra.mxu0 %v2569
    %2678 = vmatprep.subr.bf16.mxu0 0
    %2679 = vmatpush1.bf16.msra.mxu0 %v2570
    %2680 = vmatprep.subr.bf16.mxu0 0
    %2681 = vmatpush1.bf16.msra.mxu0 %v2571
    %2682 = vmatprep.subr.bf16.mxu0 0
    %2683 = vmatpush1.bf16.msra.mxu0 %v2572
    %2684 = vmatprep.subr.bf16.mxu0 0
    %2685 = vmatpush1.bf16.msra.mxu0 %v2573
    %2686 = vmatprep.subr.bf16.mxu0 0
    %2687 = vmatpush1.bf16.msra.mxu0 %v2574
    %2688 = vmatprep.mubr.bf16.mxu0 %v2340
    %2689 = vmatmul.mubr.bf16.gmra.mrb[0].mxu0 %v2338
    %v2690 = vpop.f32.mrb[0].mxu0
    %v2691 = vadd.f32 %v2642, %v2690
    %v2692 = vpop.f32.mrb[0].mxu0
    %v2693 = vpop.f32.mrb[0].mxu0
    %v2694 = vadd.f32 %v2645, %v2693
    %v2695 = vpop.f32.mrb[0].mxu0
    %2696 = vmatprep.mubr.bf16.mxu0 %v2341
    %2697 = vmatmul.mubr.bf16.gmra.mrb[0].mxu0 %v2339
    %v2698 = vpop.f32.mrb[0].mxu0
    %v2699 = vadd.f32 %v2650, %v2698
    %v2700 = vpop.f32.mrb[0].mxu0
    %v2701 = vpop.f32.mrb[0].mxu0
    %v2702 = vadd.f32 %v2653, %v2701
    %v2703 = vpop.f32.mrb[0].mxu0
    %2704 = vdwg.mxu0
    %v2705 = vadd.f32 %v2691, %v2694
    %v2706 = vadd.f32 %v2705, %v2699
    %v2707 = vadd.f32 %v2706, %v2702
    %v2708 = vrot.slane %v2707, 4
    %v2709 = vadd.f32 %v2707, %v2708
    %v2710 = vrot.slane %v2709, 2
    %v2711 = vadd.f32 %v2709, %v2710
    %v2712 = vrot.slane %v2711, 1
    %v2713 = vadd.f32 %v2711, %v2712
    %v2714 = vmul.f32 %v2691, %v2691
    %v2715 = vmul.f32 %v2694, %v2694
    %v2716 = vmul.f32 %v2699, %v2699
    %v2717 = vmul.f32 %v2702, %v2702
    %v2718 = vadd.f32 %v2714, %v2715
    %v2719 = vadd.f32 %v2718, %v2716
    %v2720 = vadd.f32 %v2719, %v2717
    %v2721 = vrot.slane %v2720, 4
    %v2722 = vadd.f32 %v2720, %v2721
    %v2723 = vrot.slane %v2722, 2
    %v2724 = vadd.f32 %v2722, %v2723
    %v2725 = vrot.slane %v2724, 1
    %v2726 = vadd.f32 %v2724, %v2725
    %v2727 = vsel %vm2032, %v2713, %v2726
    %2729 = vrot.lane.b32.xlu0 %v2727, 127
    %v2730 = vpop.permute.xlu0 %2729
    %2732 = vrot.lane.b32.xlu0 %v2727, 1
    %v2733 = vpop.permute.xlu0 %2732
    %v2735 = vsel %vm2042, %v2730, %v2733
    %v2736 = vadd.f32 %v2727, %v2735
    %2738 = vrot.lane.b32.xlu0 %v2736, 126
    %v2739 = vpop.permute.xlu0 %2738
    %2741 = vrot.lane.b32.xlu0 %v2736, 2
    %v2742 = vpop.permute.xlu0 %2741
    %v2744 = vsel %vm2053, %v2739, %v2742
    %v2745 = vadd.f32 %v2736, %v2744
    %2747 = vrot.lane.b32.xlu0 %v2745, 124
    %v2748 = vpop.permute.xlu0 %2747
    %2750 = vrot.lane.b32.xlu0 %v2745, 4
    %v2751 = vpop.permute.xlu0 %2750
    %v2753 = vsel %vm2065, %v2748, %v2751
    %v2754 = vadd.f32 %v2745, %v2753
    %2756 = vrot.lane.b32.xlu0 %v2754, 120
    %v2757 = vpop.permute.xlu0 %2756
    %2759 = vrot.lane.b32.xlu0 %v2754, 8
    %v2760 = vpop.permute.xlu0 %2759
    %v2762 = vsel %vm2077, %v2757, %v2760
    %v2763 = vadd.f32 %v2754, %v2762
    %v2764 = vrcp.pop 512.0
    %v2765 = vmul.f32 %v2763, %v2764
    %v2766 = vmul.f32 %v2765, %v2765
    %v2768 = vrot.slane %v2766, 7
    %v2770 = vsub.f32 %v2765, %v2768
    %v2771 = vmax.f32 %v2770, 0.0
    %v2772 = vadd.f32 %v2771, 1e-05
    %v2773 = vrsqrt.pop %v2772
    %s2774 = scalar_lea.vmem [#allocation9], 1
    %v2775 = vld [vmem:[%s2774] sm:$0x1]
    %v2778 = vunpack.c.l.s4 1966171168
    %v2779 = vunpack.c.0.s8 %v2778
    %v2780 = vlaneseq
    %v2781 = vshrl.u32 %v2780, 7
    %v2782 = vsub.s32 %v2779, %v2781
    %v2783 = vrot.slane %v2773, %v2782
    %v2784 = vcombine.high %v2783, %v2783
    %v2786 = vunpack.c.l.s4 1966171168
    %v2787 = vunpack.c.0.s8 %v2786
    %v2788 = vlaneseq
    %v2789 = vshrl.u32 %v2788, 7
    %v2790 = vsub.s32 %v2787, %v2789
    %v2791 = vrot.slane %v2784, %v2790
    %v2793 = vmul.f32 %v2775, %v2791
    %s2794 = scalar_lea.vmem [#allocation10], 1
    %v2795 = vld [vmem:[%s2794] sm:$0x1]
    %v2796 = vmul.f32 %v2765, %v2793
    %v2797 = vsub.f32 %v2795, %v2796
    %v2799 = vlaneseq
    %v2800 = vshrl.u32 %v2799, 7
    %v2801 = vsub.s32 0, %v2800
    %v2802 = vrot.slane %v2793, %v2801
    %v2804 = vmul.f32 %v2691, %v2802
    %v2805 = vmul.f32 %v2694, %v2802
    %v2806 = vmul.f32 %v2699, %v2802
    %v2807 = vmul.f32 %v2702, %v2802
    %v2809 = vlaneseq
    %v2810 = vshrl.u32 %v2809, 7
    %v2811 = vsub.s32 0, %v2810
    %v2812 = vrot.slane %v2797, %v2811
    %v2814 = vadd.f32 %v2804, %v2812
    %v2815 = vadd.f32 %v2805, %v2812
    %v2816 = vadd.f32 %v2806, %v2812
    %v2817 = vadd.f32 %v2807, %v2812
    %v2818 = vpack.c.bf16 %v2815, %v2814
    %v2819 = vpack.c.bf16 %v2817, %v2816
    %v2820 = vld [vmem:[%s4] sm:$0xf]
    %v2821 = vld [vmem:[%s4 + $0x4] sm:$0xf]
    %v2822 = vld [vmem:[%s4 + $0x8] sm:$0xf]
    %v2823 = vld [vmem:[%s4 + $0xc] sm:$0xf]
    %v2824 = vld [vmem:[%s4 + $0x10] sm:$0xf]
    %v2825 = vld [vmem:[%s4 + $0x14] sm:$0xf]
    %v2826 = vld [vmem:[%s4 + $0x18] sm:$0xf]
    %v2827 = vld [vmem:[%s4 + $0x1c] sm:$0xf]
    %v2836 = vunpack.c.l.b16 %v2820
    %v2837 = vunpack.c.l.b16 %v2821
    %v2838 = vunpack.c.l.b16 %v2822
    %v2839 = vunpack.c.l.b16 %v2823
    %v2840 = vunpack.c.l.b16 %v2824
    %v2841 = vunpack.c.l.b16 %v2825
    %v2842 = vunpack.c.l.b16 %v2826
    %v2843 = vunpack.c.l.b16 %v2827
    %v2844 = vpack.c.b16 %v2837, %v2836
    %v2845 = vpack.c.b16 %v2839, %v2838
    %v2846 = vpack.c.b16 %v2841, %v2840
    %v2847 = vpack.c.b16 %v2843, %v2842
    %vm2848 = vcmask 261120
    %v2850 = vsel %vm2848, %v2844, 0
    %v2853 = vsel %vm2848, %v2845, 0
    %v2856 = vsel %vm2848, %v2846, 0
    %v2859 = vsel %vm2848, %v2847, 0
    %2861 = vmatprep.subr.bf16.mxu0 0
    %2862 = vmatpush1.bf16.msra.mxu0 %v2818
    %2863 = vmatprep.subr.bf16.mxu0 0
    %2864 = vmatpush1.bf16.msra.mxu0 %v2819
    %2865 = vmatprep.subr.bf16.mxu0 0
    %2866 = vmatpush1.bf16.msra.mxu0 0
    %2867 = vmatprep.subr.bf16.mxu0 0
    %2868 = vmatpush1.bf16.msra.mxu0 0
    %2869 = vmatprep.subr.bf16.mxu0 0
    %2870 = vmatpush1.bf16.msra.mxu0 0
    %2871 = vmatprep.subr.bf16.mxu0 0
    %2872 = vmatpush1.bf16.msra.mxu0 0
    %2873 = vmatprep.subr.bf16.mxu0 0
    %2874 = vmatpush1.bf16.msra.mxu0 0
    %2875 = vmatprep.subr.bf16.mxu0 0
    %2876 = vmatpush1.bf16.msra.mxu0 0
    %2877 = vmatprep.subr.bf16.mxu0 0
    %2878 = vmatpush1.bf16.msra.mxu0 0
    %2879 = vmatprep.subr.bf16.mxu0 0
    %2880 = vmatpush1.bf16.msra.mxu0 0
    %2881 = vmatprep.subr.bf16.mxu0 0
    %2882 = vmatpush1.bf16.msra.mxu0 0
    %2883 = vmatprep.subr.bf16.mxu0 0
    %2884 = vmatpush1.bf16.msra.mxu0 0
    %2885 = vmatprep.subr.bf16.mxu0 0
    %2886 = vmatpush1.bf16.msra.mxu0 0
    %2887 = vmatprep.subr.bf16.mxu0 0
    %2888 = vmatpush1.bf16.msra.mxu0 0
    %2889 = vmatprep.subr.bf16.mxu0 0
    %2890 = vmatpush1.bf16.msra.mxu0 0
    %2891 = vmatprep.subr.bf16.mxu0 0
    %2892 = vmatpush1.bf16.msra.mxu0 0
    %2893 = vmatprep.mubr.bf16.mxu0 0
    %2894 = vmatmul.mubr.bf16.gmra.mrb[0].mxu0 %v2850
    %v2895 = vpop.f32.mrb[0].mxu0
    %v2896 = vadd.f32 0.0, %v2895
    %v2897 = vpop.f32.mrb[0].mxu0
    %v2898 = vpop.f32.mrb[0].mxu0
    %v2899 = vadd.f32 0.0, %v2898
    %v2900 = vpop.f32.mrb[0].mxu0
    %2901 = vmatprep.mubr.bf16.mxu0 0
    %2902 = vmatmul.mubr.bf16.gmra.mrb[0].mxu0 %v2853
    %v2903 = vpop.f32.mrb[0].mxu0
    %v2904 = vadd.f32 0.0, %v2903
    %v2905 = vpop.f32.mrb[0].mxu0
    %v2906 = vpop.f32.mrb[0].mxu0
    %v2907 = vadd.f32 0.0, %v2906
    %v2908 = vpop.f32.mrb[0].mxu0
    %2909 = vmatprep.mubr.bf16.mxu0 0
    %2910 = vmatmul.mubr.bf16.gmra.mrb[0].mxu0 %v2856
    %v2911 = vpop.f32.mrb[0].mxu0
    %v2912 = vadd.f32 0.0, %v2911
    %v2913 = vpop.f32.mrb[0].mxu0
    %v2914 = vpop.f32.mrb[0].mxu0
    %v2915 = vadd.f32 0.0, %v2914
    %v2916 = vpop.f32.mrb[0].mxu0
    %2917 = vmatprep.mubr.bf16.mxu0 0
    %2918 = vmatmul.mubr.bf16.gmra.mrb[0].mxu0 %v2859
    %v2919 = vpop.f32.mrb[0].mxu0
    %v2920 = vadd.f32 0.0, %v2919
    %v2921 = vpop.f32.mrb[0].mxu0
    %v2922 = vpop.f32.mrb[0].mxu0
    %v2923 = vadd.f32 0.0, %v2922
    %v2924 = vpop.f32.mrb[0].mxu0
    %2925 = vdwg.mxu0
    %v2926 = vpack.c.bf16 %v2899, %v2896
    %v2927 = vpack.c.bf16 %v2907, %v2904
    %v2928 = vpack.c.bf16 %v2915, %v2912
    %v2929 = vpack.c.bf16 %v2923, %v2920
    %s2930 = scalar_lea.vmem [#allocation7], 512
    %v2931 = vld [vmem:[%s2930] sm:$0xf]
    %v2932 = vld [vmem:[%s2930 + $0x4] sm:$0xf]
    %v2933 = vld [vmem:[%s2930 + $0x8] sm:$0xf]
    %v2934 = vld [vmem:[%s2930 + $0xc] sm:$0xf]
    %v2935 = vld [vmem:[%s2930 + $0x10] sm:$0xf]
    %v2936 = vld [vmem:[%s2930 + $0x14] sm:$0xf]
    %v2937 = vld [vmem:[%s2930 + $0x18] sm:$0xf]
    %v2938 = vld [vmem:[%s2930 + $0x1c] sm:$0xf]
    %v2939 = vld [vmem:[%s2930 + $0x20] sm:$0xf]
    %v2940 = vld [vmem:[%s2930 + $0x24] sm:$0xf]
    %v2941 = vld [vmem:[%s2930 + $0x28] sm:$0xf]
    %v2942 = vld [vmem:[%s2930 + $0x2c] sm:$0xf]
    %v2943 = vld [vmem:[%s2930 + $0x30] sm:$0xf]
    %v2944 = vld [vmem:[%s2930 + $0x34] sm:$0xf]
    %v2945 = vld [vmem:[%s2930 + $0x38] sm:$0xf]
    %v2946 = vld [vmem:[%s2930 + $0x3c] sm:$0xf]
    %v2947 = vld [vmem:[%s2930 + $0x40] sm:$0xf]
    %v2948 = vld [vmem:[%s2930 + $0x44] sm:$0xf]
    %v2949 = vld [vmem:[%s2930 + $0x48] sm:$0xf]
    %v2950 = vld [vmem:[%s2930 + $0x4c] sm:$0xf]
    %v2951 = vld [vmem:[%s2930 + $0x50] sm:$0xf]
    %v2952 = vld [vmem:[%s2930 + $0x54] sm:$0xf]
    %v2953 = vld [vmem:[%s2930 + $0x58] sm:$0xf]
    %v2954 = vld [vmem:[%s2930 + $0x5c] sm:$0xf]
    %v2955 = vld [vmem:[%s2930 + $0x60] sm:$0xf]
    %v2956 = vld [vmem:[%s2930 + $0x64] sm:$0xf]
    %v2957 = vld [vmem:[%s2930 + $0x68] sm:$0xf]
    %v2958 = vld [vmem:[%s2930 + $0x6c] sm:$0xf]
    %v2959 = vld [vmem:[%s2930 + $0x70] sm:$0xf]
    %v2960 = vld [vmem:[%s2930 + $0x74] sm:$0xf]
    %v2961 = vld [vmem:[%s2930 + $0x78] sm:$0xf]
    %v2962 = vld [vmem:[%s2930 + $0x7c] sm:$0xf]
    %v2963 = vld [vmem:[%s2930 + $0x80] sm:$0xf]
    %v2964 = vld [vmem:[%s2930 + $0x84] sm:$0xf]
    %v2965 = vld [vmem:[%s2930 + $0x88] sm:$0xf]
    %v2966 = vld [vmem:[%s2930 + $0x8c] sm:$0xf]
    %v2967 = vld [vmem:[%s2930 + $0x90] sm:$0xf]
    %v2968 = vld [vmem:[%s2930 + $0x94] sm:$0xf]
    %v2969 = vld [vmem:[%s2930 + $0x98] sm:$0xf]
    %v2970 = vld [vmem:[%s2930 + $0x9c] sm:$0xf]
    %v2971 = vld [vmem:[%s2930 + $0xa0] sm:$0xf]
    %v2972 = vld [vmem:[%s2930 + $0xa4] sm:$0xf]
    %v2973 = vld [vmem:[%s2930 + $0xa8] sm:$0xf]
    %v2974 = vld [vmem:[%s2930 + $0xac] sm:$0xf]
    %v2975 = vld [vmem:[%s2930 + $0xb0] sm:$0xf]
    %v2976 = vld [vmem:[%s2930 + $0xb4] sm:$0xf]
    %v2977 = vld [vmem:[%s2930 + $0xb8] sm:$0xf]
    %v2978 = vld [vmem:[%s2930 + $0xbc] sm:$0xf]
    %v2979 = vld [vmem:[%s2930 + $0xc0] sm:$0xf]
    %v2980 = vld [vmem:[%s2930 + $0xc4] sm:$0xf]
    %v2981 = vld [vmem:[%s2930 + $0xc8] sm:$0xf]
    %v2982 = vld [vmem:[%s2930 + $0xcc] sm:$0xf]
    %v2983 = vld [vmem:[%s2930 + $0xd0] sm:$0xf]
    %v2984 = vld [vmem:[%s2930 + $0xd4] sm:$0xf]
    %v2985 = vld [vmem:[%s2930 + $0xd8] sm:$0xf]
    %v2986 = vld [vmem:[%s2930 + $0xdc] sm:$0xf]
    %v2987 = vld [vmem:[%s2930 + $0xe0] sm:$0xf]
    %v2988 = vld [vmem:[%s2930 + $0xe4] sm:$0xf]
    %v2989 = vld [vmem:[%s2930 + $0xe8] sm:$0xf]
    %v2990 = vld [vmem:[%s2930 + $0xec] sm:$0xf]
    %v2991 = vld [vmem:[%s2930 + $0xf0] sm:$0xf]
    %v2992 = vld [vmem:[%s2930 + $0xf4] sm:$0xf]
    %v2993 = vld [vmem:[%s2930 + $0xf8] sm:$0xf]
    %v2994 = vld [vmem:[%s2930 + $0xfc] sm:$0xf]
    %s2995 = scalar_lea.vmem %s9, 2
    %v2996 = vld [vmem:[%s2995] sm:$0x1]
    %v2998 = vlaneseq
    %v2999 = vshrl.u32 %v2998, 7
    %v3000 = vsub.s32 0, %v2999
    %v3001 = vrot.slane %v2996, %v3000
    %v3067 = vunpack.c.l.b16 %v2931
    %v3068 = vunpack.c.l.b16 %v2932
    %v3069 = vunpack.c.l.b16 %v2933
    %v3070 = vunpack.c.l.b16 %v2934
    %v3071 = vunpack.c.l.b16 %v2935
    %v3072 = vunpack.c.l.b16 %v2936
    %v3073 = vunpack.c.l.b16 %v2937
    %v3074 = vunpack.c.l.b16 %v2938
    %v3075 = vunpack.c.l.b16 %v2939
    %v3076 = vunpack.c.l.b16 %v2940
    %v3077 = vunpack.c.l.b16 %v2941
    %v3078 = vunpack.c.l.b16 %v2942
    %v3079 = vunpack.c.l.b16 %v2943
    %v3080 = vunpack.c.l.b16 %v2944
    %v3081 = vunpack.c.l.b16 %v2945
    %v3082 = vunpack.c.l.b16 %v2946
    %v3083 = vunpack.c.l.b16 %v2947
    %v3084 = vunpack.c.l.b16 %v2948
    %v3085 = vunpack.c.l.b16 %v2949
    %v3086 = vunpack.c.l.b16 %v2950
    %v3087 = vunpack.c.l.b16 %v2951
    %v3088 = vunpack.c.l.b16 %v2952
    %v3089 = vunpack.c.l.b16 %v2953
    %v3090 = vunpack.c.l.b16 %v2954
    %v3091 = vunpack.c.l.b16 %v2955
    %v3092 = vunpack.c.l.b16 %v2956
    %v3093 = vunpack.c.l.b16 %v2957
    %v3094 = vunpack.c.l.b16 %v2958
    %v3095 = vunpack.c.l.b16 %v2959
    %v3096 = vunpack.c.l.b16 %v2960
    %v3097 = vunpack.c.l.b16 %v2961
    %v3098 = vunpack.c.l.b16 %v2962
    %v3099 = vunpack.c.l.b16 %v2963
    %v3100 = vunpack.c.l.b16 %v2964
    %v3101 = vunpack.c.l.b16 %v2965
    %v3102 = vunpack.c.l.b16 %v2966
    %v3103 = vunpack.c.l.b16 %v2967
    %v3104 = vunpack.c.l.b16 %v2968
    %v3105 = vunpack.c.l.b16 %v2969
    %v3106 = vunpack.c.l.b16 %v2970
    %v3107 = vunpack.c.l.b16 %v2971
    %v3108 = vunpack.c.l.b16 %v2972
    %v3109 = vunpack.c.l.b16 %v2973
    %v3110 = vunpack.c.l.b16 %v2974
    %v3111 = vunpack.c.l.b16 %v2975
    %v3112 = vunpack.c.l.b16 %v2976
    %v3113 = vunpack.c.l.b16 %v2977
    %v3114 = vunpack.c.l.b16 %v2978
    %v3115 = vunpack.c.l.b16 %v2979
    %v3116 = vunpack.c.l.b16 %v2980
    %v3117 = vunpack.c.l.b16 %v2981
    %v3118 = vunpack.c.l.b16 %v2982
    %v3119 = vunpack.c.l.b16 %v2983
    %v3120 = vunpack.c.l.b16 %v2984
    %v3121 = vunpack.c.l.b16 %v2985
    %v3122 = vunpack.c.l.b16 %v2986
    %v3123 = vunpack.c.l.b16 %v2987
    %v3124 = vunpack.c.l.b16 %v2988
    %v3125 = vunpack.c.l.b16 %v2989
    %v3126 = vunpack.c.l.b16 %v2990
    %v3127 = vunpack.c.l.b16 %v2991
    %v3128 = vunpack.c.l.b16 %v2992
    %v3129 = vunpack.c.l.b16 %v2993
    %v3130 = vunpack.c.l.b16 %v2994
    %v3131 = vpack.c.b16 %v3068, %v3067
    %v3132 = vpack.c.b16 %v3070, %v3069
    %v3133 = vpack.c.b16 %v3072, %v3071
    %v3134 = vpack.c.b16 %v3074, %v3073
    %v3135 = vpack.c.b16 %v3076, %v3075
    %v3136 = vpack.c.b16 %v3078, %v3077
    %v3137 = vpack.c.b16 %v3080, %v3079
    %v3138 = vpack.c.b16 %v3082, %v3081
    %v3139 = vpack.c.b16 %v3084, %v3083
    %v3140 = vpack.c.b16 %v3086, %v3085
    %v3141 = vpack.c.b16 %v3088, %v3087
    %v3142 = vpack.c.b16 %v3090, %v3089
    %v3143 = vpack.c.b16 %v3092, %v3091
    %v3144 = vpack.c.b16 %v3094, %v3093
    %v3145 = vpack.c.b16 %v3096, %v3095
    %v3146 = vpack.c.b16 %v3098, %v3097
    %v3147 = vpack.c.b16 %v3100, %v3099
    %v3148 = vpack.c.b16 %v3102, %v3101
    %v3149 = vpack.c.b16 %v3104, %v3103
    %v3150 = vpack.c.b16 %v3106, %v3105
    %v3151 = vpack.c.b16 %v3108, %v3107
    %v3152 = vpack.c.b16 %v3110, %v3109
    %v3153 = vpack.c.b16 %v3112, %v3111
    %v3154 = vpack.c.b16 %v3114, %v3113
    %v3155 = vpack.c.b16 %v3116, %v3115
    %v3156 = vpack.c.b16 %v3118, %v3117
    %v3157 = vpack.c.b16 %v3120, %v3119
    %v3158 = vpack.c.b16 %v3122, %v3121
    %v3159 = vpack.c.b16 %v3124, %v3123
    %v3160 = vpack.c.b16 %v3126, %v3125
    %v3161 = vpack.c.b16 %v3128, %v3127
    %v3162 = vpack.c.b16 %v3130, %v3129
    %3195 = vmatprep.subr.bf16.mxu0 0
    %3196 = vmatpush1.bf16.msra.mxu0 %v3131
    %3197 = vmatprep.subr.bf16.mxu0 0
    %3198 = vmatpush1.bf16.msra.mxu0 %v3132
    %3199 = vmatprep.subr.bf16.mxu0 0
    %3200 = vmatpush1.bf16.msra.mxu0 %v3133
    %3201 = vmatprep.subr.bf16.mxu0 0
    %3202 = vmatpush1.bf16.msra.mxu0 %v3134
    %3203 = vmatprep.subr.bf16.mxu0 0
    %3204 = vmatpush1.bf16.msra.mxu0 %v3135
    %3205 = vmatprep.subr.bf16.mxu0 0
    %3206 = vmatpush1.bf16.msra.mxu0 %v3136
    %3207 = vmatprep.subr.bf16.mxu0 0
    %3208 = vmatpush1.bf16.msra.mxu0 %v3137
    %3209 = vmatprep.subr.bf16.mxu0 0
    %3210 = vmatpush1.bf16.msra.mxu0 %v3138
    %3211 = vmatprep.subr.bf16.mxu0 0
    %3212 = vmatpush1.bf16.msra.mxu0 %v3139
    %3213 = vmatprep.subr.bf16.mxu0 0
    %3214 = vmatpush1.bf16.msra.mxu0 %v3140
    %3215 = vmatprep.subr.bf16.mxu0 0
    %3216 = vmatpush1.bf16.msra.mxu0 %v3141
    %3217 = vmatprep.subr.bf16.mxu0 0
    %3218 = vmatpush1.bf16.msra.mxu0 %v3142
    %3219 = vmatprep.subr.bf16.mxu0 0
    %3220 = vmatpush1.bf16.msra.mxu0 %v3143
    %3221 = vmatprep.subr.bf16.mxu0 0
    %3222 = vmatpush1.bf16.msra.mxu0 %v3144
    %3223 = vmatprep.subr.bf16.mxu0 0
    %3224 = vmatpush1.bf16.msra.mxu0 %v3145
    %3225 = vmatprep.subr.bf16.mxu0 0
    %3226 = vmatpush1.bf16.msra.mxu0 %v3146
    %3227 = vmatprep.mubr.bf16.mxu0 %v2927
    %3228 = vmatmul.mubr.bf16.gmra.mrb[0].mxu0 %v2926
    %v3229 = vpop.f32.mrb[0].mxu0
    %v3230 = vadd.f32 %v3001, %v3229
    %v3231 = vpop.f32.mrb[0].mxu0
    %v3232 = vpop.f32.mrb[0].mxu0
    %v3233 = vadd.f32 %v3001, %v3232
    %v3234 = vpop.f32.mrb[0].mxu0
    %3235 = vdwg.mxu0
    %3236 = vmatprep.subr.bf16.mxu0 0
    %3237 = vmatpush1.bf16.msra.mxu0 %v3147
    %3238 = vmatprep.subr.bf16.mxu0 0
    %3239 = vmatpush1.bf16.msra.mxu0 %v3148
    %3240 = vmatprep.subr.bf16.mxu0 0
    %3241 = vmatpush1.bf16.msra.mxu0 %v3149
    %3242 = vmatprep.subr.bf16.mxu0 0
    %3243 = vmatpush1.bf16.msra.mxu0 %v3150
    %3244 = vmatprep.subr.bf16.mxu0 0
    %3245 = vmatpush1.bf16.msra.mxu0 %v3151
    %3246 = vmatprep.subr.bf16.mxu0 0
    %3247 = vmatpush1.bf16.msra.mxu0 %v3152
    %3248 = vmatprep.subr.bf16.mxu0 0
    %3249 = vmatpush1.bf16.msra.mxu0 %v3153
    %3250 = vmatprep.subr.bf16.mxu0 0
    %3251 = vmatpush1.bf16.msra.mxu0 %v3154
    %3252 = vmatprep.subr.bf16.mxu0 0
    %3253 = vmatpush1.bf16.msra.mxu0 %v3155
    %3254 = vmatprep.subr.bf16.mxu0 0
    %3255 = vmatpush1.bf16.msra.mxu0 %v3156
    %3256 = vmatprep.subr.bf16.mxu0 0
    %3257 = vmatpush1.bf16.msra.mxu0 %v3157
    %3258 = vmatprep.subr.bf16.mxu0 0
    %3259 = vmatpush1.bf16.msra.mxu0 %v3158
    %3260 = vmatprep.subr.bf16.mxu0 0
    %3261 = vmatpush1.bf16.msra.mxu0 %v3159
    %3262 = vmatprep.subr.bf16.mxu0 0
    %3263 = vmatpush1.bf16.msra.mxu0 %v3160
    %3264 = vmatprep.subr.bf16.mxu0 0
    %3265 = vmatpush1.bf16.msra.mxu0 %v3161
    %3266 = vmatprep.subr.bf16.mxu0 0
    %3267 = vmatpush1.bf16.msra.mxu0 %v3162
    %3268 = vmatprep.mubr.bf16.mxu0 %v2929
    %3269 = vmatmul.mubr.bf16.gmra.mrb[0].mxu0 %v2928
    %v3270 = vpop.f32.mrb[0].mxu0
    %v3271 = vadd.f32 %v3230, %v3270
    %v3272 = vpop.f32.mrb[0].mxu0
    %v3273 = vpop.f32.mrb[0].mxu0
    %v3274 = vadd.f32 %v3233, %v3273
    %v3275 = vpop.f32.mrb[0].mxu0
    %3276 = vdwg.mxu0
    %v3277 = vadd.f32 %v3271, %v3274
    %v3278 = vrot.slane %v3277, 4
    %v3279 = vadd.f32 %v3277, %v3278
    %v3280 = vrot.slane %v3279, 2
    %v3281 = vadd.f32 %v3279, %v3280
    %v3282 = vrot.slane %v3281, 1
    %v3283 = vadd.f32 %v3281, %v3282
    %v3284 = vmul.f32 %v3271, %v3271
    %v3285 = vmul.f32 %v3274, %v3274
    %v3286 = vadd.f32 %v3284, %v3285
    %v3287 = vrot.slane %v3286, 4
    %v3288 = vadd.f32 %v3286, %v3287
    %v3289 = vrot.slane %v3288, 2
    %v3290 = vadd.f32 %v3288, %v3289
    %v3291 = vrot.slane %v3290, 1
    %v3292 = vadd.f32 %v3290, %v3291
    %v3293 = vsel %vm2032, %v3283, %v3292
    %3295 = vrot.lane.b32.xlu0 %v3293, 127
    %v3296 = vpop.permute.xlu0 %3295
    %3298 = vrot.lane.b32.xlu0 %v3293, 1
    %v3299 = vpop.permute.xlu0 %3298
    %v3301 = vsel %vm2042, %v3296, %v3299
    %v3302 = vadd.f32 %v3293, %v3301
    %3304 = vrot.lane.b32.xlu0 %v3302, 126
    %v3305 = vpop.permute.xlu0 %3304
    %3307 = vrot.lane.b32.xlu0 %v3302, 2
    %v3308 = vpop.permute.xlu0 %3307
    %v3310 = vsel %vm2053, %v3305, %v3308
    %v3311 = vadd.f32 %v3302, %v3310
    %3313 = vrot.lane.b32.xlu0 %v3311, 124
    %v3314 = vpop.permute.xlu0 %3313
    %3316 = vrot.lane.b32.xlu0 %v3311, 4
    %v3317 = vpop.permute.xlu0 %3316
    %v3319 = vsel %vm2065, %v3314, %v3317
    %v3320 = vadd.f32 %v3311, %v3319
    %v3321 = vrcp.pop 128.0
    %v3322 = vmul.f32 %v3320, %v3321
    %v3323 = vmul.f32 %v3322, %v3322
    %v3325 = vrot.slane %v3323, 7
    %v3327 = vsub.f32 %v3322, %v3325
    %v3328 = vmax.f32 %v3327, 0.0
    %v3329 = vadd.f32 %v3328, 1e-05
    %v3330 = vrsqrt.pop %v3329
    %s3331 = scalar_lea.vmem [#allocation9], 2
    %v3332 = vld [vmem:[%s3331] sm:$0x1]
    %v3335 = vunpack.c.l.s4 1966171168
    %v3336 = vunpack.c.0.s8 %v3335
    %v3337 = vlaneseq
    %v3338 = vshrl.u32 %v3337, 7
    %v3339 = vsub.s32 %v3336, %v3338
    %v3340 = vrot.slane %v3330, %v3339
    %v3341 = vcombine.high %v3340, %v3340
    %v3343 = vunpack.c.l.s4 1966171168
    %v3344 = vunpack.c.0.s8 %v3343
    %v3345 = vlaneseq
    %v3346 = vshrl.u32 %v3345, 7
    %v3347 = vsub.s32 %v3344, %v3346
    %v3348 = vrot.slane %v3341, %v3347
    %v3350 = vmul.f32 %v3332, %v3348
    %s3351 = scalar_lea.vmem [#allocation10], 2
    %v3352 = vld [vmem:[%s3351] sm:$0x1]
    %v3353 = vmul.f32 %v3322, %v3350
    %v3354 = vsub.f32 %v3352, %v3353
    %v3356 = vlaneseq
    %v3357 = vshrl.u32 %v3356, 7
    %v3358 = vsub.s32 0, %v3357
    %v3359 = vrot.slane %v3350, %v3358
    %v3361 = vmul.f32 %v3271, %v3359
    %v3362 = vmul.f32 %v3274, %v3359
    %v3364 = vlaneseq
    %v3365 = vshrl.u32 %v3364, 7
    %v3366 = vsub.s32 0, %v3365
    %v3367 = vrot.slane %v3354, %v3366
    %v3369 = vadd.f32 %v3361, %v3367
    %v3370 = vadd.f32 %v3362, %v3367
    %v3371 = vpack.c.bf16 %v3370, %v3369
    %v3372 = vld [vmem:[%s5] sm:$0xf]
    %v3373 = vld [vmem:[%s5 + $0x4] sm:$0xf]
    %v3374 = vld [vmem:[%s5 + $0x8] sm:$0xf]
    %v3375 = vld [vmem:[%s5 + $0xc] sm:$0xf]
    %v3380 = vunpack.c.l.b16 %v3372
    %v3381 = vunpack.c.l.b16 %v3373
    %v3382 = vunpack.c.l.b16 %v3374
    %v3383 = vunpack.c.l.b16 %v3375
    %v3384 = vpack.c.b16 %v3381, %v3380
    %v3385 = vpack.c.b16 %v3383, %v3382
    %v3387 = vsel %vm2087, %v3384, 0
    %v3390 = vsel %vm2087, %v3385, 0
    %3392 = vmatprep.subr.bf16.mxu0 0
    %3393 = vmatpush1.bf16.msra.mxu0 %v3371
    %3394 = vmatprep.subr.bf16.mxu0 0
    %3395 = vmatpush1.bf16.msra.mxu0 0
    %3396 = vmatprep.subr.bf16.mxu0 0
    %3397 = vmatpush1.bf16.msra.mxu0 0
    %3398 = vmatprep.subr.bf16.mxu0 0
    %3399 = vmatpush1.bf16.msra.mxu0 0
    %3400 = vmatprep.subr.bf16.mxu0 0
    %3401 = vmatpush1.bf16.msra.mxu0 0
    %3402 = vmatprep.subr.bf16.mxu0 0
    %3403 = vmatpush1.bf16.msra.mxu0 0
    %3404 = vmatprep.subr.bf16.mxu0 0
    %3405 = vmatpush1.bf16.msra.mxu0 0
    %3406 = vmatprep.subr.bf16.mxu0 0
    %3407 = vmatpush1.bf16.msra.mxu0 0
    %3408 = vmatprep.subr.bf16.mxu0 0
    %3409 = vmatpush1.bf16.msra.mxu0 0
    %3410 = vmatprep.subr.bf16.mxu0 0
    %3411 = vmatpush1.bf16.msra.mxu0 0
    %3412 = vmatprep.subr.bf16.mxu0 0
    %3413 = vmatpush1.bf16.msra.mxu0 0
    %3414 = vmatprep.subr.bf16.mxu0 0
    %3415 = vmatpush1.bf16.msra.mxu0 0
    %3416 = vmatprep.subr.bf16.mxu0 0
    %3417 = vmatpush1.bf16.msra.mxu0 0
    %3418 = vmatprep.subr.bf16.mxu0 0
    %3419 = vmatpush1.bf16.msra.mxu0 0
    %3420 = vmatprep.subr.bf16.mxu0 0
    %3421 = vmatpush1.bf16.msra.mxu0 0
    %3422 = vmatprep.subr.bf16.mxu0 0
    %3423 = vmatpush1.bf16.msra.mxu0 0
    %3424 = vmatprep.mubr.bf16.mxu0 0
    %3425 = vmatmul.mubr.bf16.gmra.mrb[0].mxu0 %v3387
    %v3426 = vpop.f32.mrb[0].mxu0
    %v3427 = vadd.f32 0.0, %v3426
    %v3428 = vpop.f32.mrb[0].mxu0
    %v3429 = vpop.f32.mrb[0].mxu0
    %v3430 = vadd.f32 0.0, %v3429
    %v3431 = vpop.f32.mrb[0].mxu0
    %3432 = vmatprep.mubr.bf16.mxu0 0
    %3433 = vmatmul.mubr.bf16.gmra.mrb[0].mxu0 %v3390
    %v3434 = vpop.f32.mrb[0].mxu0
    %v3435 = vadd.f32 0.0, %v3434
    %v3436 = vpop.f32.mrb[0].mxu0
    %v3437 = vpop.f32.mrb[0].mxu0
    %v3438 = vadd.f32 0.0, %v3437
    %v3439 = vpop.f32.mrb[0].mxu0
    %3440 = vdwg.mxu0
    %v3441 = vpack.c.bf16 %v3430, %v3427
    %v3442 = vpack.c.bf16 %v3438, %v3435
    %v3444 = vrot.slane %v3441, 4
    %v3447 = vrot.slane %v3442, 4
    %s3449 = scalar_lea.vmem [#allocation7], 768
    %v3450 = vld [vmem:[%s3449] sm:$0xf]
    %v3451 = vld [vmem:[%s3449 + $0x4] sm:$0xf]
    %v3452 = vld [vmem:[%s3449 + $0x8] sm:$0xf]
    %v3453 = vld [vmem:[%s3449 + $0xc] sm:$0xf]
    %v3454 = vld [vmem:[%s3449 + $0x10] sm:$0xf]
    %v3455 = vld [vmem:[%s3449 + $0x14] sm:$0xf]
    %v3456 = vld [vmem:[%s3449 + $0x18] sm:$0xf]
    %v3457 = vld [vmem:[%s3449 + $0x1c] sm:$0xf]
    %v3458 = vld [vmem:[%s3449 + $0x20] sm:$0xf]
    %v3459 = vld [vmem:[%s3449 + $0x24] sm:$0xf]
    %v3460 = vld [vmem:[%s3449 + $0x28] sm:$0xf]
    %v3461 = vld [vmem:[%s3449 + $0x2c] sm:$0xf]
    %v3462 = vld [vmem:[%s3449 + $0x30] sm:$0xf]
    %v3463 = vld [vmem:[%s3449 + $0x34] sm:$0xf]
    %v3464 = vld [vmem:[%s3449 + $0x38] sm:$0xf]
    %v3465 = vld [vmem:[%s3449 + $0x3c] sm:$0xf]
    %v3466 = vld [vmem:[%s3449 + $0x40] sm:$0xf]
    %v3467 = vld [vmem:[%s3449 + $0x44] sm:$0xf]
    %v3468 = vld [vmem:[%s3449 + $0x48] sm:$0xf]
    %v3469 = vld [vmem:[%s3449 + $0x4c] sm:$0xf]
    %v3470 = vld [vmem:[%s3449 + $0x50] sm:$0xf]
    %v3471 = vld [vmem:[%s3449 + $0x54] sm:$0xf]
    %v3472 = vld [vmem:[%s3449 + $0x58] sm:$0xf]
    %v3473 = vld [vmem:[%s3449 + $0x5c] sm:$0xf]
    %v3474 = vld [vmem:[%s3449 + $0x60] sm:$0xf]
    %v3475 = vld [vmem:[%s3449 + $0x64] sm:$0xf]
    %v3476 = vld [vmem:[%s3449 + $0x68] sm:$0xf]
    %v3477 = vld [vmem:[%s3449 + $0x6c] sm:$0xf]
    %v3478 = vld [vmem:[%s3449 + $0x70] sm:$0xf]
    %v3479 = vld [vmem:[%s3449 + $0x74] sm:$0xf]
    %v3480 = vld [vmem:[%s3449 + $0x78] sm:$0xf]
    %v3481 = vld [vmem:[%s3449 + $0x7c] sm:$0xf]
    %v3482 = vld [vmem:[%s3449 + $0x80] sm:$0xf]
    %v3483 = vld [vmem:[%s3449 + $0x84] sm:$0xf]
    %v3484 = vld [vmem:[%s3449 + $0x88] sm:$0xf]
    %v3485 = vld [vmem:[%s3449 + $0x8c] sm:$0xf]
    %v3486 = vld [vmem:[%s3449 + $0x90] sm:$0xf]
    %v3487 = vld [vmem:[%s3449 + $0x94] sm:$0xf]
    %v3488 = vld [vmem:[%s3449 + $0x98] sm:$0xf]
    %v3489 = vld [vmem:[%s3449 + $0x9c] sm:$0xf]
    %v3490 = vld [vmem:[%s3449 + $0xa0] sm:$0xf]
    %v3491 = vld [vmem:[%s3449 + $0xa4] sm:$0xf]
    %v3492 = vld [vmem:[%s3449 + $0xa8] sm:$0xf]
    %v3493 = vld [vmem:[%s3449 + $0xac] sm:$0xf]
    %v3494 = vld [vmem:[%s3449 + $0xb0] sm:$0xf]
    %v3495 = vld [vmem:[%s3449 + $0xb4] sm:$0xf]
    %v3496 = vld [vmem:[%s3449 + $0xb8] sm:$0xf]
    %v3497 = vld [vmem:[%s3449 + $0xbc] sm:$0xf]
    %v3498 = vld [vmem:[%s3449 + $0xc0] sm:$0xf]
    %v3499 = vld [vmem:[%s3449 + $0xc4] sm:$0xf]
    %v3500 = vld [vmem:[%s3449 + $0xc8] sm:$0xf]
    %v3501 = vld [vmem:[%s3449 + $0xcc] sm:$0xf]
    %v3502 = vld [vmem:[%s3449 + $0xd0] sm:$0xf]
    %v3503 = vld [vmem:[%s3449 + $0xd4] sm:$0xf]
    %v3504 = vld [vmem:[%s3449 + $0xd8] sm:$0xf]
    %v3505 = vld [vmem:[%s3449 + $0xdc] sm:$0xf]
    %v3506 = vld [vmem:[%s3449 + $0xe0] sm:$0xf]
    %v3507 = vld [vmem:[%s3449 + $0xe4] sm:$0xf]
    %v3508 = vld [vmem:[%s3449 + $0xe8] sm:$0xf]
    %v3509 = vld [vmem:[%s3449 + $0xec] sm:$0xf]
    %v3510 = vld [vmem:[%s3449 + $0xf0] sm:$0xf]
    %v3511 = vld [vmem:[%s3449 + $0xf4] sm:$0xf]
    %v3512 = vld [vmem:[%s3449 + $0xf8] sm:$0xf]
    %v3513 = vld [vmem:[%s3449 + $0xfc] sm:$0xf]
    %s3514 = scalar_lea.vmem %s9, 3
    %v3515 = vld [vmem:[%s3514] sm:$0x1]
    %v3517 = vlaneseq
    %v3518 = vshrl.u32 %v3517, 7
    %v3519 = vsub.s32 0, %v3518
    %v3520 = vrot.slane %v3515, %v3519
    %v3586 = vunpack.c.l.b16 %v3450
    %v3587 = vunpack.c.l.b16 %v3451
    %v3588 = vunpack.c.l.b16 %v3452
    %v3589 = vunpack.c.l.b16 %v3453
    %v3590 = vunpack.c.l.b16 %v3454
    %v3591 = vunpack.c.l.b16 %v3455
    %v3592 = vunpack.c.l.b16 %v3456
    %v3593 = vunpack.c.l.b16 %v3457
    %v3594 = vunpack.c.l.b16 %v3458
    %v3595 = vunpack.c.l.b16 %v3459
    %v3596 = vunpack.c.l.b16 %v3460
    %v3597 = vunpack.c.l.b16 %v3461
    %v3598 = vunpack.c.l.b16 %v3462
    %v3599 = vunpack.c.l.b16 %v3463
    %v3600 = vunpack.c.l.b16 %v3464
    %v3601 = vunpack.c.l.b16 %v3465
    %v3602 = vunpack.c.l.b16 %v3466
    %v3603 = vunpack.c.l.b16 %v3467
    %v3604 = vunpack.c.l.b16 %v3468
    %v3605 = vunpack.c.l.b16 %v3469
    %v3606 = vunpack.c.l.b16 %v3470
    %v3607 = vunpack.c.l.b16 %v3471
    %v3608 = vunpack.c.l.b16 %v3472
    %v3609 = vunpack.c.l.b16 %v3473
    %v3610 = vunpack.c.l.b16 %v3474
    %v3611 = vunpack.c.l.b16 %v3475
    %v3612 = vunpack.c.l.b16 %v3476
    %v3613 = vunpack.c.l.b16 %v3477
    %v3614 = vunpack.c.l.b16 %v3478
    %v3615 = vunpack.c.l.b16 %v3479
    %v3616 = vunpack.c.l.b16 %v3480
    %v3617 = vunpack.c.l.b16 %v3481
    %v3618 = vunpack.c.l.b16 %v3482
    %v3619 = vunpack.c.l.b16 %v3483
    %v3620 = vunpack.c.l.b16 %v3484
    %v3621 = vunpack.c.l.b16 %v3485
    %v3622 = vunpack.c.l.b16 %v3486
    %v3623 = vunpack.c.l.b16 %v3487
    %v3624 = vunpack.c.l.b16 %v3488
    %v3625 = vunpack.c.l.b16 %v3489
    %v3626 = vunpack.c.l.b16 %v3490
    %v3627 = vunpack.c.l.b16 %v3491
    %v3628 = vunpack.c.l.b16 %v3492
    %v3629 = vunpack.c.l.b16 %v3493
    %v3630 = vunpack.c.l.b16 %v3494
    %v3631 = vunpack.c.l.b16 %v3495
    %v3632 = vunpack.c.l.b16 %v3496
    %v3633 = vunpack.c.l.b16 %v3497
    %v3634 = vunpack.c.l.b16 %v3498
    %v3635 = vunpack.c.l.b16 %v3499
    %v3636 = vunpack.c.l.b16 %v3500
    %v3637 = vunpack.c.l.b16 %v3501
    %v3638 = vunpack.c.l.b16 %v3502
    %v3639 = vunpack.c.l.b16 %v3503
    %v3640 = vunpack.c.l.b16 %v3504
    %v3641 = vunpack.c.l.b16 %v3505
    %v3642 = vunpack.c.l.b16 %v3506
    %v3643 = vunpack.c.l.b16 %v3507
    %v3644 = vunpack.c.l.b16 %v3508
    %v3645 = vunpack.c.l.b16 %v3509
    %v3646 = vunpack.c.l.b16 %v3510
    %v3647 = vunpack.c.l.b16 %v3511
    %v3648 = vunpack.c.l.b16 %v3512
    %v3649 = vunpack.c.l.b16 %v3513
    %v3650 = vpack.c.b16 %v3587, %v3586
    %v3651 = vpack.c.b16 %v3589, %v3588
    %v3652 = vpack.c.b16 %v3591, %v3590
    %v3653 = vpack.c.b16 %v3593, %v3592
    %v3654 = vpack.c.b16 %v3595, %v3594
    %v3655 = vpack.c.b16 %v3597, %v3596
    %v3656 = vpack.c.b16 %v3599, %v3598
    %v3657 = vpack.c.b16 %v3601, %v3600
    %v3658 = vpack.c.b16 %v3603, %v3602
    %v3659 = vpack.c.b16 %v3605, %v3604
    %v3660 = vpack.c.b16 %v3607, %v3606
    %v3661 = vpack.c.b16 %v3609, %v3608
    %v3662 = vpack.c.b16 %v3611, %v3610
    %v3663 = vpack.c.b16 %v3613, %v3612
    %v3664 = vpack.c.b16 %v3615, %v3614
    %v3665 = vpack.c.b16 %v3617, %v3616
    %v3666 = vpack.c.b16 %v3619, %v3618
    %v3667 = vpack.c.b16 %v3621, %v3620
    %v3668 = vpack.c.b16 %v3623, %v3622
    %v3669 = vpack.c.b16 %v3625, %v3624
    %v3670 = vpack.c.b16 %v3627, %v3626
    %v3671 = vpack.c.b16 %v3629, %v3628
    %v3672 = vpack.c.b16 %v3631, %v3630
    %v3673 = vpack.c.b16 %v3633, %v3632
    %v3674 = vpack.c.b16 %v3635, %v3634
    %v3675 = vpack.c.b16 %v3637, %v3636
    %v3676 = vpack.c.b16 %v3639, %v3638
    %v3677 = vpack.c.b16 %v3641, %v3640
    %v3678 = vpack.c.b16 %v3643, %v3642
    %v3679 = vpack.c.b16 %v3645, %v3644
    %v3680 = vpack.c.b16 %v3647, %v3646
    %v3681 = vpack.c.b16 %v3649, %v3648
    %3714 = vmatprep.subr.bf16.mxu0 0
    %3715 = vmatpush1.bf16.msra.mxu0 %v3650
    %3716 = vmatprep.subr.bf16.mxu0 0
    %3717 = vmatpush1.bf16.msra.mxu0 %v3651
    %3718 = vmatprep.subr.bf16.mxu0 0
    %3719 = vmatpush1.bf16.msra.mxu0 %v3652
    %3720 = vmatprep.subr.bf16.mxu0 0
    %3721 = vmatpush1.bf16.msra.mxu0 %v3653
    %3722 = vmatprep.subr.bf16.mxu0 0
    %3723 = vmatpush1.bf16.msra.mxu0 %v3654
    %3724 = vmatprep.subr.bf16.mxu0 0
    %3725 = vmatpush1.bf16.msra.mxu0 %v3655
    %3726 = vmatprep.subr.bf16.mxu0 0
    %3727 = vmatpush1.bf16.msra.mxu0 %v3656
    %3728 = vmatprep.subr.bf16.mxu0 0
    %3729 = vmatpush1.bf16.msra.mxu0 %v3657
    %3730 = vmatprep.subr.bf16.mxu0 0
    %3731 = vmatpush1.bf16.msra.mxu0 %v3658
    %3732 = vmatprep.subr.bf16.mxu0 0
    %3733 = vmatpush1.bf16.msra.mxu0 %v3659
    %3734 = vmatprep.subr.bf16.mxu0 0
    %3735 = vmatpush1.bf16.msra.mxu0 %v3660
    %3736 = vmatprep.subr.bf16.mxu0 0
    %3737 = vmatpush1.bf16.msra.mxu0 %v3661
    %3738 = vmatprep.subr.bf16.mxu0 0
    %3739 = vmatpush1.bf16.msra.mxu0 %v3662
    %3740 = vmatprep.subr.bf16.mxu0 0
    %3741 = vmatpush1.bf16.msra.mxu0 %v3663
    %3742 = vmatprep.subr.bf16.mxu0 0
    %3743 = vmatpush1.bf16.msra.mxu0 %v3664
    %3744 = vmatprep.subr.bf16.mxu0 0
    %3745 = vmatpush1.bf16.msra.mxu0 %v3665
    %3746 = vmatprep.mubr.bf16.mxu0 %v3444
    %3747 = vmatmul.mubr.bf16.gmra.mrb[0].mxu0 %v3441
    %v3748 = vpop.f32.mrb[0].mxu0
    %v3749 = vadd.f32 %v3520, %v3748
    %v3750 = vpop.f32.mrb[0].mxu0
    %v3751 = vpop.f32.mrb[0].mxu0
    %v3752 = vpop.f32.mrb[0].mxu0
    %3753 = vdwg.mxu0
    %3754 = vmatprep.subr.bf16.mxu0 0
    %3755 = vmatpush1.bf16.msra.mxu0 %v3666
    %3756 = vmatprep.subr.bf16.mxu0 0
    %3757 = vmatpush1.bf16.msra.mxu0 %v3667
    %3758 = vmatprep.subr.bf16.mxu0 0
    %3759 = vmatpush1.bf16.msra.mxu0 %v3668
    %3760 = vmatprep.subr.bf16.mxu0 0
    %3761 = vmatpush1.bf16.msra.mxu0 %v3669
    %3762 = vmatprep.subr.bf16.mxu0 0
    %3763 = vmatpush1.bf16.msra.mxu0 %v3670
    %3764 = vmatprep.subr.bf16.mxu0 0
    %3765 = vmatpush1.bf16.msra.mxu0 %v3671
    %3766 = vmatprep.subr.bf16.mxu0 0
    %3767 = vmatpush1.bf16.msra.mxu0 %v3672
    %3768 = vmatprep.subr.bf16.mxu0 0
    %3769 = vmatpush1.bf16.msra.mxu0 %v3673
    %3770 = vmatprep.subr.bf16.mxu0 0
    %3771 = vmatpush1.bf16.msra.mxu0 %v3674
    %3772 = vmatprep.subr.bf16.mxu0 0
    %3773 = vmatpush1.bf16.msra.mxu0 %v3675
    %3774 = vmatprep.subr.bf16.mxu0 0
    %3775 = vmatpush1.bf16.msra.mxu0 %v3676
    %3776 = vmatprep.subr.bf16.mxu0 0
    %3777 = vmatpush1.bf16.msra.mxu0 %v3677
    %3778 = vmatprep.subr.bf16.mxu0 0
    %3779 = vmatpush1.bf16.msra.mxu0 %v3678
    %3780 = vmatprep.subr.bf16.mxu0 0
    %3781 = vmatpush1.bf16.msra.mxu0 %v3679
    %3782 = vmatprep.subr.bf16.mxu0 0
    %3783 = vmatpush1.bf16.msra.mxu0 %v3680
    %3784 = vmatprep.subr.bf16.mxu0 0
    %3785 = vmatpush1.bf16.msra.mxu0 %v3681
    %3786 = vmatprep.mubr.bf16.mxu0 %v3447
    %3787 = vmatmul.mubr.bf16.gmra.mrb[0].mxu0 %v3442
    %v3788 = vpop.f32.mrb[0].mxu0
    %v3789 = vadd.f32 %v3749, %v3788
    %v3790 = vpop.f32.mrb[0].mxu0
    %v3791 = vpop.f32.mrb[0].mxu0
    %v3792 = vpop.f32.mrb[0].mxu0
    %3793 = vdwg.mxu0
    %v3794 = vrot.slane %v3789, 4
    %v3795 = vadd.f32 %v3789, %v3794
    %v3796 = vrot.slane %v3795, 2
    %v3797 = vadd.f32 %v3795, %v3796
    %v3798 = vrot.slane %v3797, 1
    %v3799 = vadd.f32 %v3797, %v3798
    %v3800 = vmul.f32 %v3789, %v3789
    %v3801 = vrot.slane %v3800, 4
    %v3802 = vadd.f32 %v3800, %v3801
    %v3803 = vrot.slane %v3802, 2
    %v3804 = vadd.f32 %v3802, %v3803
    %v3805 = vrot.slane %v3804, 1
    %v3806 = vadd.f32 %v3804, %v3805
    %v3807 = vsel %vm2032, %v3799, %v3806
    %3809 = vrot.lane.b32.xlu0 %v3807, 127
    %v3810 = vpop.permute.xlu0 %3809
    %3812 = vrot.lane.b32.xlu0 %v3807, 1
    %v3813 = vpop.permute.xlu0 %3812
    %v3815 = vsel %vm2042, %v3810, %v3813
    %v3816 = vadd.f32 %v3807, %v3815
    %3818 = vrot.lane.b32.xlu0 %v3816, 126
    %v3819 = vpop.permute.xlu0 %3818
    %3821 = vrot.lane.b32.xlu0 %v3816, 2
    %v3822 = vpop.permute.xlu0 %3821
    %v3824 = vsel %vm2053, %v3819, %v3822
    %v3825 = vadd.f32 %v3816, %v3824
    %v3826 = vrcp.pop 32.0
    %v3827 = vmul.f32 %v3825, %v3826
    %v3828 = vmul.f32 %v3827, %v3827
    %v3830 = vrot.slane %v3828, 7
    %v3832 = vsub.f32 %v3827, %v3830
    %v3833 = vmax.f32 %v3832, 0.0
    %v3834 = vadd.f32 %v3833, 1e-05
    %v3835 = vrsqrt.pop %v3834
    %s3836 = scalar_lea.vmem [#allocation9], 3
    %v3837 = vld [vmem:[%s3836] sm:$0x1]
    %v3840 = vunpack.c.l.s4 1966171168
    %v3841 = vunpack.c.0.s8 %v3840
    %v3842 = vlaneseq
    %v3843 = vshrl.u32 %v3842, 7
    %v3844 = vsub.s32 %v3841, %v3843
    %v3845 = vrot.slane %v3835, %v3844
    %v3846 = vcombine.high %v3845, %v3845
    %v3848 = vunpack.c.l.s4 1966171168
    %v3849 = vunpack.c.0.s8 %v3848
    %v3850 = vlaneseq
    %v3851 = vshrl.u32 %v3850, 7
    %v3852 = vsub.s32 %v3849, %v3851
    %v3853 = vrot.slane %v3846, %v3852
    %v3855 = vmul.f32 %v3837, %v3853
    %s3856 = scalar_lea.vmem [#allocation10], 3
    %v3857 = vld [vmem:[%s3856] sm:$0x1]
    %v3858 = vmul.f32 %v3827, %v3855
    %v3859 = vsub.f32 %v3857, %v3858
    %v3861 = vlaneseq
    %v3862 = vshrl.u32 %v3861, 7
    %v3863 = vsub.s32 0, %v3862
    %v3864 = vrot.slane %v3855, %v3863
    %v3866 = vmul.f32 %v3789, %v3864
    %v3868 = vlaneseq
    %v3869 = vshrl.u32 %v3868, 7
    %v3870 = vsub.s32 0, %v3869
    %v3871 = vrot.slane %v3859, %v3870
    %v3873 = vadd.f32 %v3866, %v3871
    %v3874 = vpack.c.bf16 %v3873, %v3873
    %v3875 = vld [vmem:[%s6] sm:$0xf]
    %v3876 = vld [vmem:[%s6 + $0x4] sm:$0xf]
    %v3879 = vunpack.c.l.b16 %v3875
    %v3880 = vunpack.c.l.b16 %v3876
    %v3881 = vpack.c.b16 %v3880, %v3879
    %v3883 = vsel %vm2075, %v3881, 0
    %vm3885 = vcmask 1043456
    %v3887 = vsel %vm3885, %v3874, 0
    %3889 = vmatprep.subr.bf16.mxu0 0
    %3890 = vmatpush1.bf16.msra.mxu0 %v3887
    %3891 = vmatprep.subr.bf16.mxu0 0
    %3892 = vmatpush1.bf16.msra.mxu0 0
    %3893 = vmatprep.subr.bf16.mxu0 0
    %3894 = vmatpush1.bf16.msra.mxu0 0
    %3895 = vmatprep.subr.bf16.mxu0 0
    %3896 = vmatpush1.bf16.msra.mxu0 0
    %3897 = vmatprep.subr.bf16.mxu0 0
    %3898 = vmatpush1.bf16.msra.mxu0 0
    %3899 = vmatprep.subr.bf16.mxu0 0
    %3900 = vmatpush1.bf16.msra.mxu0 0
    %3901 = vmatprep.subr.bf16.mxu0 0
    %3902 = vmatpush1.bf16.msra.mxu0 0
    %3903 = vmatprep.subr.bf16.mxu0 0
    %3904 = vmatpush1.bf16.msra.mxu0 0
    %3905 = vmatprep.subr.bf16.mxu0 0
    %3906 = vmatpush1.bf16.msra.mxu0 0
    %3907 = vmatprep.subr.bf16.mxu0 0
    %3908 = vmatpush1.bf16.msra.mxu0 0
    %3909 = vmatprep.subr.bf16.mxu0 0
    %3910 = vmatpush1.bf16.msra.mxu0 0
    %3911 = vmatprep.subr.bf16.mxu0 0
    %3912 = vmatpush1.bf16.msra.mxu0 0
    %3913 = vmatprep.subr.bf16.mxu0 0
    %3914 = vmatpush1.bf16.msra.mxu0 0
    %3915 = vmatprep.subr.bf16.mxu0 0
    %3916 = vmatpush1.bf16.msra.mxu0 0
    %3917 = vmatprep.subr.bf16.mxu0 0
    %3918 = vmatpush1.bf16.msra.mxu0 0
    %3919 = vmatprep.subr.bf16.mxu0 0
    %3920 = vmatpush1.bf16.msra.mxu0 0
    %3921 = vmatprep.mubr.bf16.mxu0 0
    %3922 = vmatmul.mubr.bf16.gmra.mrb[0].mxu0 %v3883
    %v3923 = vpop.f32.mrb[0].mxu0
    %v3924 = vadd.f32 0.0, %v3923
    %v3925 = vpop.f32.mrb[0].mxu0
    %v3926 = vpop.f32.mrb[0].mxu0
    %v3927 = vadd.f32 0.0, %v3926
    %v3928 = vpop.f32.mrb[0].mxu0
    %3929 = vdwg.mxu0
    %v3930 = vpack.c.bf16 %v3927, %v3924
    %v3932 = vrot.slane %v3930, 2
    %v3934 = vrot.slane %v3930, 4
    %v3936 = vrot.slane %v3930, 6
    %s3938 = scalar_lea.vmem [#allocation7], 1024
    %v3939 = vld [vmem:[%s3938] sm:$0xf]
    %v3940 = vld [vmem:[%s3938 + $0x4] sm:$0xf]
    %v3941 = vld [vmem:[%s3938 + $0x8] sm:$0xf]
    %v3942 = vld [vmem:[%s3938 + $0xc] sm:$0xf]
    %v3943 = vld [vmem:[%s3938 + $0x10] sm:$0xf]
    %v3944 = vld [vmem:[%s3938 + $0x14] sm:$0xf]
    %v3945 = vld [vmem:[%s3938 + $0x18] sm:$0xf]
    %v3946 = vld [vmem:[%s3938 + $0x1c] sm:$0xf]
    %v3947 = vld [vmem:[%s3938 + $0x20] sm:$0xf]
    %v3948 = vld [vmem:[%s3938 + $0x24] sm:$0xf]
    %v3949 = vld [vmem:[%s3938 + $0x28] sm:$0xf]
    %v3950 = vld [vmem:[%s3938 + $0x2c] sm:$0xf]
    %v3951 = vld [vmem:[%s3938 + $0x30] sm:$0xf]
    %v3952 = vld [vmem:[%s3938 + $0x34] sm:$0xf]
    %v3953 = vld [vmem:[%s3938 + $0x38] sm:$0xf]
    %v3954 = vld [vmem:[%s3938 + $0x3c] sm:$0xf]
    %v3955 = vld [vmem:[%s3938 + $0x40] sm:$0xf]
    %v3956 = vld [vmem:[%s3938 + $0x44] sm:$0xf]
    %v3957 = vld [vmem:[%s3938 + $0x48] sm:$0xf]
    %v3958 = vld [vmem:[%s3938 + $0x4c] sm:$0xf]
    %v3959 = vld [vmem:[%s3938 + $0x50] sm:$0xf]
    %v3960 = vld [vmem:[%s3938 + $0x54] sm:$0xf]
    %v3961 = vld [vmem:[%s3938 + $0x58] sm:$0xf]
    %v3962 = vld [vmem:[%s3938 + $0x5c] sm:$0xf]
    %v3963 = vld [vmem:[%s3938 + $0x60] sm:$0xf]
    %v3964 = vld [vmem:[%s3938 + $0x64] sm:$0xf]
    %v3965 = vld [vmem:[%s3938 + $0x68] sm:$0xf]
    %v3966 = vld [vmem:[%s3938 + $0x6c] sm:$0xf]
    %v3967 = vld [vmem:[%s3938 + $0x70] sm:$0xf]
    %v3968 = vld [vmem:[%s3938 + $0x74] sm:$0xf]
    %v3969 = vld [vmem:[%s3938 + $0x78] sm:$0xf]
    %v3970 = vld [vmem:[%s3938 + $0x7c] sm:$0xf]
    %v3971 = vld [vmem:[%s3938 + $0x80] sm:$0xf]
    %v3972 = vld [vmem:[%s3938 + $0x84] sm:$0xf]
    %v3973 = vld [vmem:[%s3938 + $0x88] sm:$0xf]
    %v3974 = vld [vmem:[%s3938 + $0x8c] sm:$0xf]
    %v3975 = vld [vmem:[%s3938 + $0x90] sm:$0xf]
    %v3976 = vld [vmem:[%s3938 + $0x94] sm:$0xf]
    %v3977 = vld [vmem:[%s3938 + $0x98] sm:$0xf]
    %v3978 = vld [vmem:[%s3938 + $0x9c] sm:$0xf]
    %v3979 = vld [vmem:[%s3938 + $0xa0] sm:$0xf]
    %v3980 = vld [vmem:[%s3938 + $0xa4] sm:$0xf]
    %v3981 = vld [vmem:[%s3938 + $0xa8] sm:$0xf]
    %v3982 = vld [vmem:[%s3938 + $0xac] sm:$0xf]
    %v3983 = vld [vmem:[%s3938 + $0xb0] sm:$0xf]
    %v3984 = vld [vmem:[%s3938 + $0xb4] sm:$0xf]
    %v3985 = vld [vmem:[%s3938 + $0xb8] sm:$0xf]
    %v3986 = vld [vmem:[%s3938 + $0xbc] sm:$0xf]
    %v3987 = vld [vmem:[%s3938 + $0xc0] sm:$0xf]
    %v3988 = vld [vmem:[%s3938 + $0xc4] sm:$0xf]
    %v3989 = vld [vmem:[%s3938 + $0xc8] sm:$0xf]
    %v3990 = vld [vmem:[%s3938 + $0xcc] sm:$0xf]
    %v3991 = vld [vmem:[%s3938 + $0xd0] sm:$0xf]
    %v3992 = vld [vmem:[%s3938 + $0xd4] sm:$0xf]
    %v3993 = vld [vmem:[%s3938 + $0xd8] sm:$0xf]
    %v3994 = vld [vmem:[%s3938 + $0xdc] sm:$0xf]
    %v3995 = vld [vmem:[%s3938 + $0xe0] sm:$0xf]
    %v3996 = vld [vmem:[%s3938 + $0xe4] sm:$0xf]
    %v3997 = vld [vmem:[%s3938 + $0xe8] sm:$0xf]
    %v3998 = vld [vmem:[%s3938 + $0xec] sm:$0xf]
    %v3999 = vld [vmem:[%s3938 + $0xf0] sm:$0xf]
    %v4000 = vld [vmem:[%s3938 + $0xf4] sm:$0xf]
    %v4001 = vld [vmem:[%s3938 + $0xf8] sm:$0xf]
    %v4002 = vld [vmem:[%s3938 + $0xfc] sm:$0xf]
    %s4003 = scalar_lea.vmem %s9, 4
    %v4004 = vld [vmem:[%s4003] sm:$0x1]
    %v4006 = vlaneseq
    %v4007 = vshrl.u32 %v4006, 7
    %v4008 = vsub.s32 0, %v4007
    %v4009 = vrot.slane %v4004, %v4008
    %v4075 = vunpack.c.l.b16 %v3939
    %v4076 = vunpack.c.l.b16 %v3940
    %v4077 = vunpack.c.l.b16 %v3941
    %v4078 = vunpack.c.l.b16 %v3942
    %v4079 = vunpack.c.l.b16 %v3943
    %v4080 = vunpack.c.l.b16 %v3944
    %v4081 = vunpack.c.l.b16 %v3945
    %v4082 = vunpack.c.l.b16 %v3946
    %v4083 = vunpack.c.l.b16 %v3947
    %v4084 = vunpack.c.l.b16 %v3948
    %v4085 = vunpack.c.l.b16 %v3949
    %v4086 = vunpack.c.l.b16 %v3950
    %v4087 = vunpack.c.l.b16 %v3951
    %v4088 = vunpack.c.l.b16 %v3952
    %v4089 = vunpack.c.l.b16 %v3953
    %v4090 = vunpack.c.l.b16 %v3954
    %v4091 = vunpack.c.l.b16 %v3955
    %v4092 = vunpack.c.l.b16 %v3956
    %v4093 = vunpack.c.l.b16 %v3957
    %v4094 = vunpack.c.l.b16 %v3958
    %v4095 = vunpack.c.l.b16 %v3959
    %v4096 = vunpack.c.l.b16 %v3960
    %v4097 = vunpack.c.l.b16 %v3961
    %v4098 = vunpack.c.l.b16 %v3962
    %v4099 = vunpack.c.l.b16 %v3963
    %v4100 = vunpack.c.l.b16 %v3964
    %v4101 = vunpack.c.l.b16 %v3965
    %v4102 = vunpack.c.l.b16 %v3966
    %v4103 = vunpack.c.l.b16 %v3967
    %v4104 = vunpack.c.l.b16 %v3968
    %v4105 = vunpack.c.l.b16 %v3969
    %v4106 = vunpack.c.l.b16 %v3970
    %v4107 = vunpack.c.l.b16 %v3971
    %v4108 = vunpack.c.l.b16 %v3972
    %v4109 = vunpack.c.l.b16 %v3973
    %v4110 = vunpack.c.l.b16 %v3974
    %v4111 = vunpack.c.l.b16 %v3975
    %v4112 = vunpack.c.l.b16 %v3976
    %v4113 = vunpack.c.l.b16 %v3977
    %v4114 = vunpack.c.l.b16 %v3978
    %v4115 = vunpack.c.l.b16 %v3979
    %v4116 = vunpack.c.l.b16 %v3980
    %v4117 = vunpack.c.l.b16 %v3981
    %v4118 = vunpack.c.l.b16 %v3982
    %v4119 = vunpack.c.l.b16 %v3983
    %v4120 = vunpack.c.l.b16 %v3984
    %v4121 = vunpack.c.l.b16 %v3985
    %v4122 = vunpack.c.l.b16 %v3986
    %v4123 = vunpack.c.l.b16 %v3987
    %v4124 = vunpack.c.l.b16 %v3988
    %v4125 = vunpack.c.l.b16 %v3989
    %v4126 = vunpack.c.l.b16 %v3990
    %v4127 = vunpack.c.l.b16 %v3991
    %v4128 = vunpack.c.l.b16 %v3992
    %v4129 = vunpack.c.l.b16 %v3993
    %v4130 = vunpack.c.l.b16 %v3994
    %v4131 = vunpack.c.l.b16 %v3995
    %v4132 = vunpack.c.l.b16 %v3996
    %v4133 = vunpack.c.l.b16 %v3997
    %v4134 = vunpack.c.l.b16 %v3998
    %v4135 = vunpack.c.l.b16 %v3999
    %v4136 = vunpack.c.l.b16 %v4000
    %v4137 = vunpack.c.l.b16 %v4001
    %v4138 = vunpack.c.l.b16 %v4002
    %v4139 = vpack.c.b16 %v4076, %v4075
    %v4140 = vpack.c.b16 %v4078, %v4077
    %v4141 = vpack.c.b16 %v4080, %v4079
    %v4142 = vpack.c.b16 %v4082, %v4081
    %v4143 = vpack.c.b16 %v4084, %v4083
    %v4144 = vpack.c.b16 %v4086, %v4085
    %v4145 = vpack.c.b16 %v4088, %v4087
    %v4146 = vpack.c.b16 %v4090, %v4089
    %v4147 = vpack.c.b16 %v4092, %v4091
    %v4148 = vpack.c.b16 %v4094, %v4093
    %v4149 = vpack.c.b16 %v4096, %v4095
    %v4150 = vpack.c.b16 %v4098, %v4097
    %v4151 = vpack.c.b16 %v4100, %v4099
    %v4152 = vpack.c.b16 %v4102, %v4101
    %v4153 = vpack.c.b16 %v4104, %v4103
    %v4154 = vpack.c.b16 %v4106, %v4105
    %v4155 = vpack.c.b16 %v4108, %v4107
    %v4156 = vpack.c.b16 %v4110, %v4109
    %v4157 = vpack.c.b16 %v4112, %v4111
    %v4158 = vpack.c.b16 %v4114, %v4113
    %v4159 = vpack.c.b16 %v4116, %v4115
    %v4160 = vpack.c.b16 %v4118, %v4117
    %v4161 = vpack.c.b16 %v4120, %v4119
    %v4162 = vpack.c.b16 %v4122, %v4121
    %v4163 = vpack.c.b16 %v4124, %v4123
    %v4164 = vpack.c.b16 %v4126, %v4125
    %v4165 = vpack.c.b16 %v4128, %v4127
    %v4166 = vpack.c.b16 %v4130, %v4129
    %v4167 = vpack.c.b16 %v4132, %v4131
    %v4168 = vpack.c.b16 %v4134, %v4133
    %v4169 = vpack.c.b16 %v4136, %v4135
    %v4170 = vpack.c.b16 %v4138, %v4137
    %4203 = vmatprep.subr.bf16.mxu0 0
    %4204 = vmatpush1.bf16.msra.mxu0 %v4139
    %4205 = vmatprep.subr.bf16.mxu0 0
    %4206 = vmatpush1.bf16.msra.mxu0 %v4140
    %4207 = vmatprep.subr.bf16.mxu0 0
    %4208 = vmatpush1.bf16.msra.mxu0 %v4141
    %4209 = vmatprep.subr.bf16.mxu0 0
    %4210 = vmatpush1.bf16.msra.mxu0 %v4142
    %4211 = vmatprep.subr.bf16.mxu0 0
    %4212 = vmatpush1.bf16.msra.mxu0 %v4143
    %4213 = vmatprep.subr.bf16.mxu0 0
    %4214 = vmatpush1.bf16.msra.mxu0 %v4144
    %4215 = vmatprep.subr.bf16.mxu0 0
    %4216 = vmatpush1.bf16.msra.mxu0 %v4145
    %4217 = vmatprep.subr.bf16.mxu0 0
    %4218 = vmatpush1.bf16.msra.mxu0 %v4146
    %4219 = vmatprep.subr.bf16.mxu0 0
    %4220 = vmatpush1.bf16.msra.mxu0 %v4147
    %4221 = vmatprep.subr.bf16.mxu0 0
    %4222 = vmatpush1.bf16.msra.mxu0 %v4148
    %4223 = vmatprep.subr.bf16.mxu0 0
    %4224 = vmatpush1.bf16.msra.mxu0 %v4149
    %4225 = vmatprep.subr.bf16.mxu0 0
    %4226 = vmatpush1.bf16.msra.mxu0 %v4150
    %4227 = vmatprep.subr.bf16.mxu0 0
    %4228 = vmatpush1.bf16.msra.mxu0 %v4151
    %4229 = vmatprep.subr.bf16.mxu0 0
    %4230 = vmatpush1.bf16.msra.mxu0 %v4152
    %4231 = vmatprep.subr.bf16.mxu0 0
    %4232 = vmatpush1.bf16.msra.mxu0 %v4153
    %4233 = vmatprep.subr.bf16.mxu0 0
    %4234 = vmatpush1.bf16.msra.mxu0 %v4154
    %4235 = vmatprep.mubr.bf16.mxu0 %v3932
    %4236 = vmatmul.mubr.bf16.gmra.mrb[0].mxu0 %v3930
    %v4237 = vpop.f32.mrb[0].mxu0
    %v4238 = vadd.f32 %v4009, %v4237
    %v4239 = vpop.f32.mrb[0].mxu0
    %v4240 = vpop.f32.mrb[0].mxu0
    %v4241 = vpop.f32.mrb[0].mxu0
    %4242 = vdwg.mxu0
    %4243 = vmatprep.subr.bf16.mxu0 0
    %4244 = vmatpush1.bf16.msra.mxu0 %v4155
    %4245 = vmatprep.subr.bf16.mxu0 0
    %4246 = vmatpush1.bf16.msra.mxu0 %v4156
    %4247 = vmatprep.subr.bf16.mxu0 0
    %4248 = vmatpush1.bf16.msra.mxu0 %v4157
    %4249 = vmatprep.subr.bf16.mxu0 0
    %4250 = vmatpush1.bf16.msra.mxu0 %v4158
    %4251 = vmatprep.subr.bf16.mxu0 0
    %4252 = vmatpush1.bf16.msra.mxu0 %v4159
    %4253 = vmatprep.subr.bf16.mxu0 0
    %4254 = vmatpush1.bf16.msra.mxu0 %v4160
    %4255 = vmatprep.subr.bf16.mxu0 0
    %4256 = vmatpush1.bf16.msra.mxu0 %v4161
    %4257 = vmatprep.subr.bf16.mxu0 0
    %4258 = vmatpush1.bf16.msra.mxu0 %v4162
    %4259 = vmatprep.subr.bf16.mxu0 0
    %4260 = vmatpush1.bf16.msra.mxu0 %v4163
    %4261 = vmatprep.subr.bf16.mxu0 0
    %4262 = vmatpush1.bf16.msra.mxu0 %v4164
    %4263 = vmatprep.subr.bf16.mxu0 0
    %4264 = vmatpush1.bf16.msra.mxu0 %v4165
    %4265 = vmatprep.subr.bf16.mxu0 0
    %4266 = vmatpush1.bf16.msra.mxu0 %v4166
    %4267 = vmatprep.subr.bf16.mxu0 0
    %4268 = vmatpush1.bf16.msra.mxu0 %v4167
    %4269 = vmatprep.subr.bf16.mxu0 0
    %4270 = vmatpush1.bf16.msra.mxu0 %v4168
    %4271 = vmatprep.subr.bf16.mxu0 0
    %4272 = vmatpush1.bf16.msra.mxu0 %v4169
    %4273 = vmatprep.subr.bf16.mxu0 0
    %4274 = vmatpush1.bf16.msra.mxu0 %v4170
    %4275 = vmatprep.mubr.bf16.mxu0 %v3936
    %4276 = vmatmul.mubr.bf16.gmra.mrb[0].mxu0 %v3934
    %v4277 = vpop.f32.mrb[0].mxu0
    %v4278 = vadd.f32 %v4238, %v4277
    %v4279 = vpop.f32.mrb[0].mxu0
    %v4280 = vpop.f32.mrb[0].mxu0
    %v4281 = vpop.f32.mrb[0].mxu0
    %4282 = vdwg.mxu0
    %v4283 = vsel %vm3885, %v4278, 0.0
    %v4284 = vrot.slane %v4283, 4
    %v4285 = vadd.f32 %v4283, %v4284
    %v4286 = vrot.slane %v4285, 2
    %v4287 = vadd.f32 %v4285, %v4286
    %v4288 = vrot.slane %v4287, 1
    %v4289 = vadd.f32 %v4287, %v4288
    %v4290 = vmul.f32 %v4278, %v4278
    %v4291 = vsel %vm3885, %v4290, 0.0
    %v4292 = vrot.slane %v4291, 4
    %v4293 = vadd.f32 %v4291, %v4292
    %v4294 = vrot.slane %v4293, 2
    %v4295 = vadd.f32 %v4293, %v4294
    %v4296 = vrot.slane %v4295, 1
    %v4297 = vadd.f32 %v4295, %v4296
    %v4298 = vsel %vm2032, %v4289, %v4297
    %4300 = vrot.lane.b32.xlu0 %v4298, 127
    %v4301 = vpop.permute.xlu0 %4300
    %4303 = vrot.lane.b32.xlu0 %v4298, 1
    %v4304 = vpop.permute.xlu0 %4303
    %v4306 = vsel %vm2042, %v4301, %v4304
    %v4307 = vadd.f32 %v4298, %v4306
    %v4308 = vrcp.pop 8.0
    %v4309 = vmul.f32 %v4307, %v4308
    %v4310 = vmul.f32 %v4309, %v4309
    %v4312 = vrot.slane %v4310, 7
    %v4314 = vsub.f32 %v4309, %v4312
    %v4315 = vmax.f32 %v4314, 0.0
    %v4316 = vadd.f32 %v4315, 1e-05
    %v4317 = vrsqrt.pop %v4316
    %s4318 = scalar_lea.vmem [#allocation9], 4
    %v4319 = vld [vmem:[%s4318] sm:$0x1]
    %v4322 = vunpack.c.l.s4 1966171168
    %v4323 = vunpack.c.0.s8 %v4322
    %v4324 = vlaneseq
    %v4325 = vshrl.u32 %v4324, 7
    %v4326 = vsub.s32 %v4323, %v4325
    %v4327 = vrot.slane %v4317, %v4326
    %v4328 = vcombine.high %v4327, %v4327
    %v4330 = vunpack.c.l.s4 1966171168
    %v4331 = vunpack.c.0.s8 %v4330
    %v4332 = vlaneseq
    %v4333 = vshrl.u32 %v4332, 7
    %v4334 = vsub.s32 %v4331, %v4333
    %v4335 = vrot.slane %v4328, %v4334
    %v4337 = vmul.f32 %v4319, %v4335
    %s4338 = scalar_lea.vmem [#allocation10], 4
    %v4339 = vld [vmem:[%s4338] sm:$0x1]
    %v4340 = vmul.f32 %v4309, %v4337
    %v4341 = vsub.f32 %v4339, %v4340
    %v4343 = vlaneseq
    %v4344 = vshrl.u32 %v4343, 7
    %v4345 = vsub.s32 0, %v4344
    %v4346 = vrot.slane %v4337, %v4345
    %v4348 = vmul.f32 %v4278, %v4346
    %v4350 = vlaneseq
    %v4351 = vshrl.u32 %v4350, 7
    %v4352 = vsub.s32 0, %v4351
    %v4353 = vrot.slane %v4341, %v4352
    %v4355 = vadd.f32 %v4348, %v4353
    %v4356 = vpack.c.bf16 %v4355, %v4355
    %v4357 = vld [vmem:[%s7] sm:$0xf]
    %v4359 = vsel %vm2063, %v4357, 0
    %vm4361 = vcmask 1041408
    %v4363 = vsel %vm4361, %v4356, 0
    %4365 = vmatprep.subr.bf16.mxu0 0
    %4366 = vmatpush1.bf16.msra.mxu0 %v4363
    %4367 = vmatprep.subr.bf16.mxu0 0
    %4368 = vmatpush1.bf16.msra.mxu0 0
    %4369 = vmatprep.subr.bf16.mxu0 0
    %4370 = vmatpush1.bf16.msra.mxu0 0
    %4371 = vmatprep.subr.bf16.mxu0 0
    %4372 = vmatpush1.bf16.msra.mxu0 0
    %4373 = vmatprep.subr.bf16.mxu0 0
    %4374 = vmatpush1.bf16.msra.mxu0 0
    %4375 = vmatprep.subr.bf16.mxu0 0
    %4376 = vmatpush1.bf16.msra.mxu0 0
    %4377 = vmatprep.subr.bf16.mxu0 0
    %4378 = vmatpush1.bf16.msra.mxu0 0
    %4379 = vmatprep.subr.bf16.mxu0 0
    %4380 = vmatpush1.bf16.msra.mxu0 0
    %4381 = vmatprep.subr.bf16.mxu0 0
    %4382 = vmatpush1.bf16.msra.mxu0 0
    %4383 = vmatprep.subr.bf16.mxu0 0
    %4384 = vmatpush1.bf16.msra.mxu0 0
    %4385 = vmatprep.subr.bf16.mxu0 0
    %4386 = vmatpush1.bf16.msra.mxu0 0
    %4387 = vmatprep.subr.bf16.mxu0 0
    %4388 = vmatpush1.bf16.msra.mxu0 0
    %4389 = vmatprep.subr.bf16.mxu0 0
    %4390 = vmatpush1.bf16.msra.mxu0 0
    %4391 = vmatprep.subr.bf16.mxu0 0
    %4392 = vmatpush1.bf16.msra.mxu0 0
    %4393 = vmatprep.subr.bf16.mxu0 0
    %4394 = vmatpush1.bf16.msra.mxu0 0
    %4395 = vmatprep.subr.bf16.mxu0 0
    %4396 = vmatpush1.bf16.msra.mxu0 0
    %4397 = vmatprep.mubr.bf16.mxu0 0
    %4398 = vmatmul.mubr.bf16.gmra.mrb[0].mxu0 %v4359
    %v4399 = vpop.f32.mrb[0].mxu0
    %v4400 = vadd.f32 0.0, %v4399
    %v4401 = vpop.f32.mrb[0].mxu0
    %v4402 = vpop.f32.mrb[0].mxu0
    %v4403 = vpop.f32.mrb[0].mxu0
    %4404 = vdwg.mxu0
    %v4405 = vpack.c.bf16 %v4400, %v4400
    %v4407 = vrot.slane %v4405, 1
    %v4409 = vrot.slane %v4405, 2
    %v4411 = vrot.slane %v4405, 3
    %s4413 = scalar_lea.vmem [#allocation7], 1280
    %v4414 = vld [vmem:[%s4413] sm:$0xf]
    %v4415 = vld [vmem:[%s4413 + $0x4] sm:$0xf]
    %v4416 = vld [vmem:[%s4413 + $0x8] sm:$0xf]
    %v4417 = vld [vmem:[%s4413 + $0xc] sm:$0xf]
    %v4418 = vld [vmem:[%s4413 + $0x10] sm:$0xf]
    %v4419 = vld [vmem:[%s4413 + $0x14] sm:$0xf]
    %v4420 = vld [vmem:[%s4413 + $0x18] sm:$0xf]
    %v4421 = vld [vmem:[%s4413 + $0x1c] sm:$0xf]
    %v4422 = vld [vmem:[%s4413 + $0x20] sm:$0xf]
    %v4423 = vld [vmem:[%s4413 + $0x24] sm:$0xf]
    %v4424 = vld [vmem:[%s4413 + $0x28] sm:$0xf]
    %v4425 = vld [vmem:[%s4413 + $0x2c] sm:$0xf]
    %v4426 = vld [vmem:[%s4413 + $0x30] sm:$0xf]
    %v4427 = vld [vmem:[%s4413 + $0x34] sm:$0xf]
    %v4428 = vld [vmem:[%s4413 + $0x38] sm:$0xf]
    %v4429 = vld [vmem:[%s4413 + $0x3c] sm:$0xf]
    %v4430 = vld [vmem:[%s4413 + $0x40] sm:$0xf]
    %v4431 = vld [vmem:[%s4413 + $0x44] sm:$0xf]
    %v4432 = vld [vmem:[%s4413 + $0x48] sm:$0xf]
    %v4433 = vld [vmem:[%s4413 + $0x4c] sm:$0xf]
    %v4434 = vld [vmem:[%s4413 + $0x50] sm:$0xf]
    %v4435 = vld [vmem:[%s4413 + $0x54] sm:$0xf]
    %v4436 = vld [vmem:[%s4413 + $0x58] sm:$0xf]
    %v4437 = vld [vmem:[%s4413 + $0x5c] sm:$0xf]
    %v4438 = vld [vmem:[%s4413 + $0x60] sm:$0xf]
    %v4439 = vld [vmem:[%s4413 + $0x64] sm:$0xf]
    %v4440 = vld [vmem:[%s4413 + $0x68] sm:$0xf]
    %v4441 = vld [vmem:[%s4413 + $0x6c] sm:$0xf]
    %v4442 = vld [vmem:[%s4413 + $0x70] sm:$0xf]
    %v4443 = vld [vmem:[%s4413 + $0x74] sm:$0xf]
    %v4444 = vld [vmem:[%s4413 + $0x78] sm:$0xf]
    %v4445 = vld [vmem:[%s4413 + $0x7c] sm:$0xf]
    %v4446 = vld [vmem:[%s4413 + $0x80] sm:$0xf]
    %v4447 = vld [vmem:[%s4413 + $0x84] sm:$0xf]
    %v4448 = vld [vmem:[%s4413 + $0x88] sm:$0xf]
    %v4449 = vld [vmem:[%s4413 + $0x8c] sm:$0xf]
    %v4450 = vld [vmem:[%s4413 + $0x90] sm:$0xf]
    %v4451 = vld [vmem:[%s4413 + $0x94] sm:$0xf]
    %v4452 = vld [vmem:[%s4413 + $0x98] sm:$0xf]
    %v4453 = vld [vmem:[%s4413 + $0x9c] sm:$0xf]
    %v4454 = vld [vmem:[%s4413 + $0xa0] sm:$0xf]
    %v4455 = vld [vmem:[%s4413 + $0xa4] sm:$0xf]
    %v4456 = vld [vmem:[%s4413 + $0xa8] sm:$0xf]
    %v4457 = vld [vmem:[%s4413 + $0xac] sm:$0xf]
    %v4458 = vld [vmem:[%s4413 + $0xb0] sm:$0xf]
    %v4459 = vld [vmem:[%s4413 + $0xb4] sm:$0xf]
    %v4460 = vld [vmem:[%s4413 + $0xb8] sm:$0xf]
    %v4461 = vld [vmem:[%s4413 + $0xbc] sm:$0xf]
    %v4462 = vld [vmem:[%s4413 + $0xc0] sm:$0xf]
    %v4463 = vld [vmem:[%s4413 + $0xc4] sm:$0xf]
    %v4464 = vld [vmem:[%s4413 + $0xc8] sm:$0xf]
    %v4465 = vld [vmem:[%s4413 + $0xcc] sm:$0xf]
    %v4466 = vld [vmem:[%s4413 + $0xd0] sm:$0xf]
    %v4467 = vld [vmem:[%s4413 + $0xd4] sm:$0xf]
    %v4468 = vld [vmem:[%s4413 + $0xd8] sm:$0xf]
    %v4469 = vld [vmem:[%s4413 + $0xdc] sm:$0xf]
    %v4470 = vld [vmem:[%s4413 + $0xe0] sm:$0xf]
    %v4471 = vld [vmem:[%s4413 + $0xe4] sm:$0xf]
    %v4472 = vld [vmem:[%s4413 + $0xe8] sm:$0xf]
    %v4473 = vld [vmem:[%s4413 + $0xec] sm:$0xf]
    %v4474 = vld [vmem:[%s4413 + $0xf0] sm:$0xf]
    %v4475 = vld [vmem:[%s4413 + $0xf4] sm:$0xf]
    %v4476 = vld [vmem:[%s4413 + $0xf8] sm:$0xf]
    %v4477 = vld [vmem:[%s4413 + $0xfc] sm:$0xf]
    %s4478 = scalar_lea.vmem %s9, 5
    %v4479 = vld [vmem:[%s4478] sm:$0x1]
    %v4481 = vlaneseq
    %v4482 = vshrl.u32 %v4481, 7
    %v4483 = vsub.s32 0, %v4482
    %v4484 = vrot.slane %v4479, %v4483
    %v4550 = vunpack.c.l.b16 %v4414
    %v4551 = vunpack.c.l.b16 %v4415
    %v4552 = vunpack.c.l.b16 %v4416
    %v4553 = vunpack.c.l.b16 %v4417
    %v4554 = vunpack.c.l.b16 %v4418
    %v4555 = vunpack.c.l.b16 %v4419
    %v4556 = vunpack.c.l.b16 %v4420
    %v4557 = vunpack.c.l.b16 %v4421
    %v4558 = vunpack.c.l.b16 %v4422
    %v4559 = vunpack.c.l.b16 %v4423
    %v4560 = vunpack.c.l.b16 %v4424
    %v4561 = vunpack.c.l.b16 %v4425
    %v4562 = vunpack.c.l.b16 %v4426
    %v4563 = vunpack.c.l.b16 %v4427
    %v4564 = vunpack.c.l.b16 %v4428
    %v4565 = vunpack.c.l.b16 %v4429
    %v4566 = vunpack.c.l.b16 %v4430
    %v4567 = vunpack.c.l.b16 %v4431
    %v4568 = vunpack.c.l.b16 %v4432
    %v4569 = vunpack.c.l.b16 %v4433
    %v4570 = vunpack.c.l.b16 %v4434
    %v4571 = vunpack.c.l.b16 %v4435
    %v4572 = vunpack.c.l.b16 %v4436
    %v4573 = vunpack.c.l.b16 %v4437
    %v4574 = vunpack.c.l.b16 %v4438
    %v4575 = vunpack.c.l.b16 %v4439
    %v4576 = vunpack.c.l.b16 %v4440
    %v4577 = vunpack.c.l.b16 %v4441
    %v4578 = vunpack.c.l.b16 %v4442
    %v4579 = vunpack.c.l.b16 %v4443
    %v4580 = vunpack.c.l.b16 %v4444
    %v4581 = vunpack.c.l.b16 %v4445
    %v4582 = vunpack.c.l.b16 %v4446
    %v4583 = vunpack.c.l.b16 %v4447
    %v4584 = vunpack.c.l.b16 %v4448
    %v4585 = vunpack.c.l.b16 %v4449
    %v4586 = vunpack.c.l.b16 %v4450
    %v4587 = vunpack.c.l.b16 %v4451
    %v4588 = vunpack.c.l.b16 %v4452
    %v4589 = vunpack.c.l.b16 %v4453
    %v4590 = vunpack.c.l.b16 %v4454
    %v4591 = vunpack.c.l.b16 %v4455
    %v4592 = vunpack.c.l.b16 %v4456
    %v4593 = vunpack.c.l.b16 %v4457
    %v4594 = vunpack.c.l.b16 %v4458
    %v4595 = vunpack.c.l.b16 %v4459
    %v4596 = vunpack.c.l.b16 %v4460
    %v4597 = vunpack.c.l.b16 %v4461
    %v4598 = vunpack.c.l.b16 %v4462
    %v4599 = vunpack.c.l.b16 %v4463
    %v4600 = vunpack.c.l.b16 %v4464
    %v4601 = vunpack.c.l.b16 %v4465
    %v4602 = vunpack.c.l.b16 %v4466
    %v4603 = vunpack.c.l.b16 %v4467
    %v4604 = vunpack.c.l.b16 %v4468
    %v4605 = vunpack.c.l.b16 %v4469
    %v4606 = vunpack.c.l.b16 %v4470
    %v4607 = vunpack.c.l.b16 %v4471
    %v4608 = vunpack.c.l.b16 %v4472
    %v4609 = vunpack.c.l.b16 %v4473
    %v4610 = vunpack.c.l.b16 %v4474
    %v4611 = vunpack.c.l.b16 %v4475
    %v4612 = vunpack.c.l.b16 %v4476
    %v4613 = vunpack.c.l.b16 %v4477
    %v4614 = vpack.c.b16 %v4551, %v4550
    %v4615 = vpack.c.b16 %v4553, %v4552
    %v4616 = vpack.c.b16 %v4555, %v4554
    %v4617 = vpack.c.b16 %v4557, %v4556
    %v4618 = vpack.c.b16 %v4559, %v4558
    %v4619 = vpack.c.b16 %v4561, %v4560
    %v4620 = vpack.c.b16 %v4563, %v4562
    %v4621 = vpack.c.b16 %v4565, %v4564
    %v4622 = vpack.c.b16 %v4567, %v4566
    %v4623 = vpack.c.b16 %v4569, %v4568
    %v4624 = vpack.c.b16 %v4571, %v4570
    %v4625 = vpack.c.b16 %v4573, %v4572
    %v4626 = vpack.c.b16 %v4575, %v4574
    %v4627 = vpack.c.b16 %v4577, %v4576
    %v4628 = vpack.c.b16 %v4579, %v4578
    %v4629 = vpack.c.b16 %v4581, %v4580
    %v4630 = vpack.c.b16 %v4583, %v4582
    %v4631 = vpack.c.b16 %v4585, %v4584
    %v4632 = vpack.c.b16 %v4587, %v4586
    %v4633 = vpack.c.b16 %v4589, %v4588
    %v4634 = vpack.c.b16 %v4591, %v4590
    %v4635 = vpack.c.b16 %v4593, %v4592
    %v4636 = vpack.c.b16 %v4595, %v4594
    %v4637 = vpack.c.b16 %v4597, %v4596
    %v4638 = vpack.c.b16 %v4599, %v4598
    %v4639 = vpack.c.b16 %v4601, %v4600
    %v4640 = vpack.c.b16 %v4603, %v4602
    %v4641 = vpack.c.b16 %v4605, %v4604
    %v4642 = vpack.c.b16 %v4607, %v4606
    %v4643 = vpack.c.b16 %v4609, %v4608
    %v4644 = vpack.c.b16 %v4611, %v4610
    %v4645 = vpack.c.b16 %v4613, %v4612
    %4678 = vmatprep.subr.bf16.mxu0 0
    %4679 = vmatpush1.bf16.msra.mxu0 %v4614
    %4680 = vmatprep.subr.bf16.mxu0 0
    %4681 = vmatpush1.bf16.msra.mxu0 %v4615
    %4682 = vmatprep.subr.bf16.mxu0 0
    %4683 = vmatpush1.bf16.msra.mxu0 %v4616
    %4684 = vmatprep.subr.bf16.mxu0 0
    %4685 = vmatpush1.bf16.msra.mxu0 %v4617
    %4686 = vmatprep.subr.bf16.mxu0 0
    %4687 = vmatpush1.bf16.msra.mxu0 %v4618
    %4688 = vmatprep.subr.bf16.mxu0 0
    %4689 = vmatpush1.bf16.msra.mxu0 %v4619
    %4690 = vmatprep.subr.bf16.mxu0 0
    %4691 = vmatpush1.bf16.msra.mxu0 %v4620
    %4692 = vmatprep.subr.bf16.mxu0 0
    %4693 = vmatpush1.bf16.msra.mxu0 %v4621
    %4694 = vmatprep.subr.bf16.mxu0 0
    %4695 = vmatpush1.bf16.msra.mxu0 %v4622
    %4696 = vmatprep.subr.bf16.mxu0 0
    %4697 = vmatpush1.bf16.msra.mxu0 %v4623
    %4698 = vmatprep.subr.bf16.mxu0 0
    %4699 = vmatpush1.bf16.msra.mxu0 %v4624
    %4700 = vmatprep.subr.bf16.mxu0 0
    %4701 = vmatpush1.bf16.msra.mxu0 %v4625
    %4702 = vmatprep.subr.bf16.mxu0 0
    %4703 = vmatpush1.bf16.msra.mxu0 %v4626
    %4704 = vmatprep.subr.bf16.mxu0 0
    %4705 = vmatpush1.bf16.msra.mxu0 %v4627
    %4706 = vmatprep.subr.bf16.mxu0 0
    %4707 = vmatpush1.bf16.msra.mxu0 %v4628
    %4708 = vmatprep.subr.bf16.mxu0 0
    %4709 = vmatpush1.bf16.msra.mxu0 %v4629
    %4710 = vmatprep.mubr.bf16.mxu0 %v4407
    %4711 = vmatmul.mubr.bf16.gmra.mrb[0].mxu0 %v4405
    %v4712 = vpop.f32.mrb[0].mxu0
    %v4713 = vadd.f32 %v4484, %v4712
    %v4714 = vpop.f32.mrb[0].mxu0
    %v4715 = vpop.f32.mrb[0].mxu0
    %v4716 = vpop.f32.mrb[0].mxu0
    %4717 = vdwg.mxu0
    %4718 = vmatprep.subr.bf16.mxu0 0
    %4719 = vmatpush1.bf16.msra.mxu0 %v4630
    %4720 = vmatprep.subr.bf16.mxu0 0
    %4721 = vmatpush1.bf16.msra.mxu0 %v4631
    %4722 = vmatprep.subr.bf16.mxu0 0
    %4723 = vmatpush1.bf16.msra.mxu0 %v4632
    %4724 = vmatprep.subr.bf16.mxu0 0
    %4725 = vmatpush1.bf16.msra.mxu0 %v4633
    %4726 = vmatprep.subr.bf16.mxu0 0
    %4727 = vmatpush1.bf16.msra.mxu0 %v4634
    %4728 = vmatprep.subr.bf16.mxu0 0
    %4729 = vmatpush1.bf16.msra.mxu0 %v4635
    %4730 = vmatprep.subr.bf16.mxu0 0
    %4731 = vmatpush1.bf16.msra.mxu0 %v4636
    %4732 = vmatprep.subr.bf16.mxu0 0
    %4733 = vmatpush1.bf16.msra.mxu0 %v4637
    %4734 = vmatprep.subr.bf16.mxu0 0
    %4735 = vmatpush1.bf16.msra.mxu0 %v4638
    %4736 = vmatprep.subr.bf16.mxu0 0
    %4737 = vmatpush1.bf16.msra.mxu0 %v4639
    %4738 = vmatprep.subr.bf16.mxu0 0
    %4739 = vmatpush1.bf16.msra.mxu0 %v4640
    %4740 = vmatprep.subr.bf16.mxu0 0
    %4741 = vmatpush1.bf16.msra.mxu0 %v4641
    %4742 = vmatprep.subr.bf16.mxu0 0
    %4743 = vmatpush1.bf16.msra.mxu0 %v4642
    %4744 = vmatprep.subr.bf16.mxu0 0
    %4745 = vmatpush1.bf16.msra.mxu0 %v4643
    %4746 = vmatprep.subr.bf16.mxu0 0
    %4747 = vmatpush1.bf16.msra.mxu0 %v4644
    %4748 = vmatprep.subr.bf16.mxu0 0
    %4749 = vmatpush1.bf16.msra.mxu0 %v4645
    %4750 = vmatprep.mubr.bf16.mxu0 %v4411
    %4751 = vmatmul.mubr.bf16.gmra.mrb[0].mxu0 %v4409
    %v4752 = vpop.f32.mrb[0].mxu0
    %v4753 = vadd.f32 %v4713, %v4752
    %v4754 = vpop.f32.mrb[0].mxu0
    %v4755 = vpop.f32.mrb[0].mxu0
    %v4756 = vpop.f32.mrb[0].mxu0
    %4757 = vdwg.mxu0
    %v4758 = vpack.c.bf16 %v4753, %v4753
    %v4759 = vld [vmem:[#allocation4] sm:$0x3]
    %v4760 = vld [vmem:[%s12] sm:$0xf]
    %v4761 = vld [vmem:[%s12 + $0x4] sm:$0xf]
    %v4762 = vld [vmem:[%s12 + $0x8] sm:$0xf]
    %v4763 = vld [vmem:[%s12 + $0xc] sm:$0xf]
    %v4764 = vld [vmem:[%s12 + $0x10] sm:$0xf]
    %v4765 = vld [vmem:[%s12 + $0x14] sm:$0xf]
    %v4766 = vld [vmem:[%s12 + $0x18] sm:$0xf]
    %v4767 = vld [vmem:[%s12 + $0x1c] sm:$0xf]
    %v4768 = vld [vmem:[%s12 + $0x20] sm:$0xf]
    %v4769 = vld [vmem:[%s12 + $0x24] sm:$0xf]
    %v4770 = vld [vmem:[%s12 + $0x28] sm:$0xf]
    %v4771 = vld [vmem:[%s12 + $0x2c] sm:$0xf]
    %v4772 = vld [vmem:[%s12 + $0x30] sm:$0xf]
    %v4773 = vld [vmem:[%s12 + $0x34] sm:$0xf]
    %v4774 = vld [vmem:[%s12 + $0x38] sm:$0xf]
    %v4775 = vld [vmem:[%s12 + $0x3c] sm:$0xf]
    %v4776 = vld [vmem:[#allocation13] sm:$0x1]
    %v4778 = vlaneseq
    %v4779 = vshrl.u32 %v4778, 7
    %v4780 = vsub.s32 0, %v4779
    %v4781 = vrot.slane %v4776, %v4780
    %v4799 = vunpack.c.l.b16 %v4760
    %v4800 = vunpack.c.l.b16 %v4761
    %v4801 = vunpack.c.l.b16 %v4762
    %v4802 = vunpack.c.l.b16 %v4763
    %v4803 = vunpack.c.l.b16 %v4764
    %v4804 = vunpack.c.l.b16 %v4765
    %v4805 = vunpack.c.l.b16 %v4766
    %v4806 = vunpack.c.l.b16 %v4767
    %v4807 = vunpack.c.l.b16 %v4768
    %v4808 = vunpack.c.l.b16 %v4769
    %v4809 = vunpack.c.l.b16 %v4770
    %v4810 = vunpack.c.l.b16 %v4771
    %v4811 = vunpack.c.l.b16 %v4772
    %v4812 = vunpack.c.l.b16 %v4773
    %v4813 = vunpack.c.l.b16 %v4774
    %v4814 = vunpack.c.l.b16 %v4775
    %v4815 = vpack.c.b16 %v4800, %v4799
    %v4816 = vpack.c.b16 %v4802, %v4801
    %v4817 = vpack.c.b16 %v4804, %v4803
    %v4818 = vpack.c.b16 %v4806, %v4805
    %v4819 = vpack.c.b16 %v4808, %v4807
    %v4820 = vpack.c.b16 %v4810, %v4809
    %v4821 = vpack.c.b16 %v4812, %v4811
    %v4822 = vpack.c.b16 %v4814, %v4813
    %4831 = vmatprep.subr.bf16.mxu0 0
    %4832 = vmatpush1.bf16.msra.mxu0 %v4815
    %4833 = vmatprep.subr.bf16.mxu0 0
    %4834 = vmatpush1.bf16.msra.mxu0 %v4816
    %4835 = vmatprep.subr.bf16.mxu0 0
    %4836 = vmatpush1.bf16.msra.mxu0 %v4817
    %4837 = vmatprep.subr.bf16.mxu0 0
    %4838 = vmatpush1.bf16.msra.mxu0 %v4818
    %4839 = vmatprep.subr.bf16.mxu0 0
    %4840 = vmatpush1.bf16.msra.mxu0 %v4819
    %4841 = vmatprep.subr.bf16.mxu0 0
    %4842 = vmatpush1.bf16.msra.mxu0 %v4820
    %4843 = vmatprep.subr.bf16.mxu0 0
    %4844 = vmatpush1.bf16.msra.mxu0 %v4821
    %4845 = vmatprep.subr.bf16.mxu0 0
    %4846 = vmatpush1.bf16.msra.mxu0 %v4822
    %4847 = vmatprep.subr.bf16.mxu0 0
    %4848 = vmatpush1.bf16.msra.mxu0 0
    %4849 = vmatprep.subr.bf16.mxu0 0
    %4850 = vmatpush1.bf16.msra.mxu0 0
    %4851 = vmatprep.subr.bf16.mxu0 0
    %4852 = vmatpush1.bf16.msra.mxu0 0
    %4853 = vmatprep.subr.bf16.mxu0 0
    %4854 = vmatpush1.bf16.msra.mxu0 0
    %4855 = vmatprep.subr.bf16.mxu0 0
    %4856 = vmatpush1.bf16.msra.mxu0 0
    %4857 = vmatprep.subr.bf16.mxu0 0
    %4858 = vmatpush1.bf16.msra.mxu0 0
    %4859 = vmatprep.subr.bf16.mxu0 0
    %4860 = vmatpush1.bf16.msra.mxu0 0
    %4861 = vmatprep.subr.bf16.mxu0 0
    %4862 = vmatpush1.bf16.msra.mxu0 0
    %4863 = vmatprep.mubr.bf16.mxu0 0
    %4864 = vmatmul.mubr.bf16.gmra.mrb[0].mxu0 %v4758
    %v4865 = vpop.f32.mrb[0].mxu0
    %v4866 = vadd.f32 %v4781, %v4865
    %v4867 = vpop.f32.mrb[0].mxu0
    %v4868 = vpop.f32.mrb[0].mxu0
    %v4869 = vpop.f32.mrb[0].mxu0
    %4870 = vdwg.mxu0
    %v4871 = vpack.c.bf16 %v4759, %v4759
    %v4872 = vld [vmem:[#allocation12] sm:$0xf]
    %v4873 = vld [vmem:[#allocation12 + $0x4] sm:$0xf]
    %v4874 = vld [vmem:[#allocation12 + $0x8] sm:$0xf]
    %v4875 = vld [vmem:[#allocation12 + $0xc] sm:$0xf]
    %v4876 = vld [vmem:[#allocation15] sm:$0x1]
    %v4878 = vlaneseq
    %v4879 = vshrl.u32 %v4878, 7
    %v4880 = vsub.s32 0, %v4879
    %v4881 = vrot.slane %v4876, %v4880
    %v4887 = vunpack.c.l.b16 %v4872
    %v4888 = vunpack.c.l.b16 %v4873
    %v4889 = vunpack.c.l.b16 %v4874
    %v4890 = vunpack.c.l.b16 %v4875
    %v4891 = vpack.c.b16 %v4888, %v4887
    %v4892 = vpack.c.b16 %v4890, %v4889
    %v4896 = vsel %vm2848, %v4871, 0
    %4898 = vmatprep.subr.bf16.mxu0 0
    %4899 = vmatpush1.bf16.msra.mxu0 %v4891
    %4900 = vmatprep.subr.bf16.mxu0 0
    %4901 = vmatpush1.bf16.msra.mxu0 %v4892
    %4902 = vmatprep.subr.bf16.mxu0 0
    %4903 = vmatpush1.bf16.msra.mxu0 0
    %4904 = vmatprep.subr.bf16.mxu0 0
    %4905 = vmatpush1.bf16.msra.mxu0 0
    %4906 = vmatprep.subr.bf16.mxu0 0
    %4907 = vmatpush1.bf16.msra.mxu0 0
    %4908 = vmatprep.subr.bf16.mxu0 0
    %4909 = vmatpush1.bf16.msra.mxu0 0
    %4910 = vmatprep.subr.bf16.mxu0 0
    %4911 = vmatpush1.bf16.msra.mxu0 0
    %4912 = vmatprep.subr.bf16.mxu0 0
    %4913 = vmatpush1.bf16.msra.mxu0 0
    %4914 = vmatprep.subr.bf16.mxu0 0
    %4915 = vmatpush1.bf16.msra.mxu0 0
    %4916 = vmatprep.subr.bf16.mxu0 0
    %4917 = vmatpush1.bf16.msra.mxu0 0
    %4918 = vmatprep.subr.bf16.mxu0 0
    %4919 = vmatpush1.bf16.msra.mxu0 0
    %4920 = vmatprep.subr.bf16.mxu0 0
    %4921 = vmatpush1.bf16.msra.mxu0 0
    %4922 = vmatprep.subr.bf16.mxu0 0
    %4923 = vmatpush1.bf16.msra.mxu0 0
    %4924 = vmatprep.subr.bf16.mxu0 0
    %4925 = vmatpush1.bf16.msra.mxu0 0
    %4926 = vmatprep.subr.bf16.mxu0 0
    %4927 = vmatpush1.bf16.msra.mxu0 0
    %4928 = vmatprep.subr.bf16.mxu0 0
    %4929 = vmatpush1.bf16.msra.mxu0 0
    %4930 = vmatprep.mubr.bf16.mxu0 0
    %4931 = vmatmul.mubr.bf16.gmra.mrb[0].mxu0 %v4896
    %v4932 = vpop.f32.mrb[0].mxu0
    %v4933 = vadd.f32 %v4881, %v4932
    %v4934 = vpop.f32.mrb[0].mxu0
    %v4935 = vpop.f32.mrb[0].mxu0
    %v4936 = vpop.f32.mrb[0].mxu0
    %4937 = vdwg.mxu0
    %v4938 = vadd.f32 %v4866, %v4933
    %v4939 = vxor.u32 %v4938, 2147483648
    %v4940 = vmul.f32 %v4939, 1.442695
    %v4941 = vpow.pop %v4940
    %v4942 = vadd.f32 %v4941, 1.0
    %v4943 = vrcp.pop %v4942
    %v4944 = vmul.f32 1.0, %v4943
    %4946 = vrot.lane.b32.xlu0 %v4933, 64
    %v4947 = vpop.permute.xlu0 %4946
    %v4949 = vmul.f32 %v4944, %v4947
    %4951 = vrot.lane.b32.xlu0 %v4949, 64
    %v4952 = vpop.permute.xlu0 %4951
    %v4954 = vadd.f32 %v4866, %v4952
    %v4955 = vtanh.pop %v4954
    %v4956 = vsub.f32 1.0, %v4944
    %4958 = vrot.lane.b32.xlu0 %v4955, 96
    %v4959 = vpop.permute.xlu0 %4958
    %v4961 = vmul.f32 %v4956, %v4959
    %4963 = vrot.lane.b32.xlu0 %v4759, 32
    %v4964 = vpop.permute.xlu0 %4963
    %v4966 = vmul.f32 %v4944, %v4964
    %v4967 = vadd.f32 %v4961, %v4966
    %4969 = vrot.lane.b32.xlu0 %v4967, 96
    %v4970 = vpop.permute.xlu0 %4969
    %vm4972 = vcmask 254976
    %4973 = vst.msk [vmem:[#allocation18] sm:$0x3] %vm4972, %v4970
    %s4974 = smul.u32 4, 4
    %s4975 = smul.u32 %s4974, 64
    %s4976 = sshll.u32 %s4975, 4
    %4977 = dma.done [#allocation3], %s4976
    %v4978 = vpack.c.bf16 %v4967, %v4967
    %v4979 = vld [vmem:[#allocation2] sm:$0xff]
    %v4980 = vld [vmem:[#allocation2 + $0x8] sm:$0xff]
    %v4981 = vld [vmem:[#allocation2 + $0x10] sm:$0xff]
    %v4982 = vld [vmem:[#allocation2 + $0x18] sm:$0xff]
    %v4983 = vld [vmem:[#allocation2 + $0x20] sm:$0xff]
    %v4984 = vld [vmem:[#allocation2 + $0x28] sm:$0xff]
    %v4985 = vld [vmem:[#allocation2 + $0x30] sm:$0xff]
    %v4986 = vld [vmem:[#allocation2 + $0x38] sm:$0xff]
    %v4987 = vld [vmem:[#allocation2 + $0x40] sm:$0xff]
    %v4988 = vld [vmem:[#allocation2 + $0x48] sm:$0xff]
    %v4989 = vld [vmem:[#allocation2 + $0x50] sm:$0xff]
    %v4990 = vld [vmem:[#allocation2 + $0x58] sm:$0xff]
    %v4991 = vld [vmem:[#allocation2 + $0x60] sm:$0xff]
    %v4992 = vld [vmem:[#allocation2 + $0x68] sm:$0xff]
    %v4993 = vld [vmem:[#allocation2 + $0x70] sm:$0xff]
    %v4994 = vld [vmem:[#allocation2 + $0x78] sm:$0xff]
    %v4995 = vld [vmem:[#allocation2 + $0x80] sm:$0xff]
    %v4996 = vld [vmem:[#allocation2 + $0x88] sm:$0xff]
    %v4997 = vld [vmem:[#allocation2 + $0x90] sm:$0xff]
    %v4998 = vld [vmem:[#allocation2 + $0x98] sm:$0xff]
    %v4999 = vld [vmem:[#allocation2 + $0xa0] sm:$0xff]
    %v5000 = vld [vmem:[#allocation2 + $0xa8] sm:$0xff]
    %v5001 = vld [vmem:[#allocation2 + $0xb0] sm:$0xff]
    %v5002 = vld [vmem:[#allocation2 + $0xb8] sm:$0xff]
    %v5003 = vld [vmem:[#allocation2 + $0xc0] sm:$0xff]
    %v5004 = vld [vmem:[#allocation2 + $0xc8] sm:$0xff]
    %v5005 = vld [vmem:[#allocation2 + $0xd0] sm:$0xff]
    %v5006 = vld [vmem:[#allocation2 + $0xd8] sm:$0xff]
    %v5007 = vld [vmem:[#allocation2 + $0xe0] sm:$0xff]
    %v5008 = vld [vmem:[#allocation2 + $0xe8] sm:$0xff]
    %v5009 = vld [vmem:[#allocation2 + $0xf0] sm:$0xff]
    %v5010 = vld [vmem:[#allocation2 + $0xf8] sm:$0xff]
    %v5011 = vld [vmem:[#allocation2 + $0x100] sm:$0xff]
    %v5012 = vld [vmem:[#allocation2 + $0x108] sm:$0xff]
    %v5013 = vld [vmem:[#allocation2 + $0x110] sm:$0xff]
    %v5014 = vld [vmem:[#allocation2 + $0x118] sm:$0xff]
    %v5015 = vld [vmem:[#allocation2 + $0x120] sm:$0xff]
    %v5016 = vld [vmem:[#allocation2 + $0x128] sm:$0xff]
    %v5017 = vld [vmem:[#allocation2 + $0x130] sm:$0xff]
    %v5018 = vld [vmem:[#allocation2 + $0x138] sm:$0xff]
    %v5019 = vld [vmem:[#allocation2 + $0x140] sm:$0xff]
    %v5020 = vld [vmem:[#allocation2 + $0x148] sm:$0xff]
    %v5021 = vld [vmem:[#allocation2 + $0x150] sm:$0xff]
    %v5022 = vld [vmem:[#allocation2 + $0x158] sm:$0xff]
    %v5023 = vld [vmem:[#allocation2 + $0x160] sm:$0xff]
    %v5024 = vld [vmem:[#allocation2 + $0x168] sm:$0xff]
    %v5025 = vld [vmem:[#allocation2 + $0x170] sm:$0xff]
    %v5026 = vld [vmem:[#allocation2 + $0x178] sm:$0xff]
    %v5027 = vld [vmem:[#allocation2 + $0x180] sm:$0xff]
    %v5028 = vld [vmem:[#allocation2 + $0x188] sm:$0xff]
    %v5029 = vld [vmem:[#allocation2 + $0x190] sm:$0xff]
    %v5030 = vld [vmem:[#allocation2 + $0x198] sm:$0xff]
    %v5031 = vld [vmem:[#allocation2 + $0x1a0] sm:$0xff]
    %v5032 = vld [vmem:[#allocation2 + $0x1a8] sm:$0xff]
    %v5033 = vld [vmem:[#allocation2 + $0x1b0] sm:$0xff]
    %v5034 = vld [vmem:[#allocation2 + $0x1b8] sm:$0xff]
    %v5035 = vld [vmem:[#allocation2 + $0x1c0] sm:$0xff]
    %v5036 = vld [vmem:[#allocation2 + $0x1c8] sm:$0xff]
    %v5037 = vld [vmem:[#allocation2 + $0x1d0] sm:$0xff]
    %v5038 = vld [vmem:[#allocation2 + $0x1d8] sm:$0xff]
    %v5039 = vld [vmem:[#allocation2 + $0x1e0] sm:$0xff]
    %v5040 = vld [vmem:[#allocation2 + $0x1e8] sm:$0xff]
    %v5041 = vld [vmem:[#allocation2 + $0x1f0] sm:$0xff]
    %v5042 = vld [vmem:[#allocation2 + $0x1f8] sm:$0xff]
    %v5043 = vld [vmem:[#allocation2 + $0x200] sm:$0xff]
    %v5044 = vld [vmem:[#allocation2 + $0x208] sm:$0xff]
    %v5045 = vld [vmem:[#allocation2 + $0x210] sm:$0xff]
    %v5046 = vld [vmem:[#allocation2 + $0x218] sm:$0xff]
    %v5047 = vld [vmem:[#allocation2 + $0x220] sm:$0xff]
    %v5048 = vld [vmem:[#allocation2 + $0x228] sm:$0xff]
    %v5049 = vld [vmem:[#allocation2 + $0x230] sm:$0xff]
    %v5050 = vld [vmem:[#allocation2 + $0x238] sm:$0xff]
    %v5051 = vld [vmem:[#allocation2 + $0x240] sm:$0xff]
    %v5052 = vld [vmem:[#allocation2 + $0x248] sm:$0xff]
    %v5053 = vld [vmem:[#allocation2 + $0x250] sm:$0xff]
    %v5054 = vld [vmem:[#allocation2 + $0x258] sm:$0xff]
    %v5055 = vld [vmem:[#allocation2 + $0x260] sm:$0xff]
    %v5056 = vld [vmem:[#allocation2 + $0x268] sm:$0xff]
    %v5057 = vld [vmem:[#allocation2 + $0x270] sm:$0xff]
    %v5058 = vld [vmem:[#allocation2 + $0x278] sm:$0xff]
    %v5059 = vld [vmem:[#allocation2 + $0x280] sm:$0xff]
    %v5060 = vld [vmem:[#allocation2 + $0x288] sm:$0xff]
    %v5061 = vld [vmem:[#allocation2 + $0x290] sm:$0xff]
    %v5062 = vld [vmem:[#allocation2 + $0x298] sm:$0xff]
    %v5063 = vld [vmem:[#allocation2 + $0x2a0] sm:$0xff]
    %v5064 = vld [vmem:[#allocation2 + $0x2a8] sm:$0xff]
    %v5065 = vld [vmem:[#allocation2 + $0x2b0] sm:$0xff]
    %v5066 = vld [vmem:[#allocation2 + $0x2b8] sm:$0xff]
    %v5067 = vld [vmem:[#allocation2 + $0x2c0] sm:$0xff]
    %v5068 = vld [vmem:[#allocation2 + $0x2c8] sm:$0xff]
    %v5069 = vld [vmem:[#allocation2 + $0x2d0] sm:$0xff]
    %v5070 = vld [vmem:[#allocation2 + $0x2d8] sm:$0xff]
    %v5071 = vld [vmem:[#allocation2 + $0x2e0] sm:$0xff]
    %v5072 = vld [vmem:[#allocation2 + $0x2e8] sm:$0xff]
    %v5073 = vld [vmem:[#allocation2 + $0x2f0] sm:$0xff]
    %v5074 = vld [vmem:[#allocation2 + $0x2f8] sm:$0xff]
    %v5075 = vld [vmem:[#allocation2 + $0x300] sm:$0xff]
    %v5076 = vld [vmem:[#allocation2 + $0x308] sm:$0xff]
    %v5077 = vld [vmem:[#allocation2 + $0x310] sm:$0xff]
    %v5078 = vld [vmem:[#allocation2 + $0x318] sm:$0xff]
    %v5079 = vld [vmem:[#allocation2 + $0x320] sm:$0xff]
    %v5080 = vld [vmem:[#allocation2 + $0x328] sm:$0xff]
    %v5081 = vld [vmem:[#allocation2 + $0x330] sm:$0xff]
    %v5082 = vld [vmem:[#allocation2 + $0x338] sm:$0xff]
    %v5083 = vld [vmem:[#allocation2 + $0x340] sm:$0xff]
    %v5084 = vld [vmem:[#allocation2 + $0x348] sm:$0xff]
    %v5085 = vld [vmem:[#allocation2 + $0x350] sm:$0xff]
    %v5086 = vld [vmem:[#allocation2 + $0x358] sm:$0xff]
    %v5087 = vld [vmem:[#allocation2 + $0x360] sm:$0xff]
    %v5088 = vld [vmem:[#allocation2 + $0x368] sm:$0xff]
    %v5089 = vld [vmem:[#allocation2 + $0x370] sm:$0xff]
    %v5090 = vld [vmem:[#allocation2 + $0x378] sm:$0xff]
    %v5091 = vld [vmem:[#allocation2 + $0x380] sm:$0xff]
    %v5092 = vld [vmem:[#allocation2 + $0x388] sm:$0xff]
    %v5093 = vld [vmem:[#allocation2 + $0x390] sm:$0xff]
    %v5094 = vld [vmem:[#allocation2 + $0x398] sm:$0xff]
    %v5095 = vld [vmem:[#allocation2 + $0x3a0] sm:$0xff]
    %v5096 = vld [vmem:[#allocation2 + $0x3a8] sm:$0xff]
    %v5097 = vld [vmem:[#allocation2 + $0x3b0] sm:$0xff]
    %v5098 = vld [vmem:[#allocation2 + $0x3b8] sm:$0xff]
    %v5099 = vld [vmem:[#allocation2 + $0x3c0] sm:$0xff]
    %v5100 = vld [vmem:[#allocation2 + $0x3c8] sm:$0xff]
    %v5101 = vld [vmem:[#allocation2 + $0x3d0] sm:$0xff]
    %v5102 = vld [vmem:[#allocation2 + $0x3d8] sm:$0xff]
    %v5103 = vld [vmem:[#allocation2 + $0x3e0] sm:$0xff]
    %v5104 = vld [vmem:[#allocation2 + $0x3e8] sm:$0xff]
    %v5105 = vld [vmem:[#allocation2 + $0x3f0] sm:$0xff]
    %v5106 = vld [vmem:[#allocation2 + $0x3f8] sm:$0xff]
    %v5107 = vld [vmem:[#allocation16] sm:$0xff]
    %v5108 = vld [vmem:[#allocation16 + $0x8] sm:$0xff]
    %v5109 = vld [vmem:[#allocation16 + $0x10] sm:$0xff]
    %v5110 = vld [vmem:[#allocation16 + $0x18] sm:$0xff]
    %v5111 = vld [vmem:[#allocation16 + $0x20] sm:$0xff]
    %v5112 = vld [vmem:[#allocation16 + $0x28] sm:$0xff]
    %v5113 = vld [vmem:[#allocation16 + $0x30] sm:$0xff]
    %v5114 = vld [vmem:[#allocation16 + $0x38] sm:$0xff]
    %v5123 = vlaneseq
    %v5124 = vshrl.u32 %v5123, 7
    %v5125 = vsub.s32 0, %v5124
    %v5126 = vrot.slane %v5107, %v5125
    %v5127 = vlaneseq
    %v5128 = vshrl.u32 %v5127, 7
    %v5129 = vsub.s32 1, %v5128
    %v5130 = vrot.slane %v5107, %v5129
    %v5131 = vlaneseq
    %v5132 = vshrl.u32 %v5131, 7
    %v5133 = vsub.s32 2, %v5132
    %v5134 = vrot.slane %v5107, %v5133
    %v5135 = vlaneseq
    %v5136 = vshrl.u32 %v5135, 7
    %v5137 = vsub.s32 3, %v5136
    %v5138 = vrot.slane %v5107, %v5137
    %v5139 = vlaneseq
    %v5140 = vshrl.u32 %v5139, 7
    %v5141 = vsub.s32 4, %v5140
    %v5142 = vrot.slane %v5107, %v5141
    %v5143 = vlaneseq
    %v5144 = vshrl.u32 %v5143, 7
    %v5145 = vsub.s32 5, %v5144
    %v5146 = vrot.slane %v5107, %v5145
    %v5147 = vlaneseq
    %v5148 = vshrl.u32 %v5147, 7
    %v5149 = vsub.s32 6, %v5148
    %v5150 = vrot.slane %v5107, %v5149
    %v5151 = vlaneseq
    %v5152 = vshrl.u32 %v5151, 7
    %v5153 = vsub.s32 7, %v5152
    %v5154 = vrot.slane %v5107, %v5153
    %v5155 = vlaneseq
    %v5156 = vshrl.u32 %v5155, 7
    %v5157 = vsub.s32 0, %v5156
    %v5158 = vrot.slane %v5108, %v5157
    %v5159 = vlaneseq
    %v5160 = vshrl.u32 %v5159, 7
    %v5161 = vsub.s32 1, %v5160
    %v5162 = vrot.slane %v5108, %v5161
    %v5163 = vlaneseq
    %v5164 = vshrl.u32 %v5163, 7
    %v5165 = vsub.s32 2, %v5164
    %v5166 = vrot.slane %v5108, %v5165
    %v5167 = vlaneseq
    %v5168 = vshrl.u32 %v5167, 7
    %v5169 = vsub.s32 3, %v5168
    %v5170 = vrot.slane %v5108, %v5169
    %v5171 = vlaneseq
    %v5172 = vshrl.u32 %v5171, 7
    %v5173 = vsub.s32 4, %v5172
    %v5174 = vrot.slane %v5108, %v5173
    %v5175 = vlaneseq
    %v5176 = vshrl.u32 %v5175, 7
    %v5177 = vsub.s32 5, %v5176
    %v5178 = vrot.slane %v5108, %v5177
    %v5179 = vlaneseq
    %v5180 = vshrl.u32 %v5179, 7
    %v5181 = vsub.s32 6, %v5180
    %v5182 = vrot.slane %v5108, %v5181
    %v5183 = vlaneseq
    %v5184 = vshrl.u32 %v5183, 7
    %v5185 = vsub.s32 7, %v5184
    %v5186 = vrot.slane %v5108, %v5185
    %v5187 = vlaneseq
    %v5188 = vshrl.u32 %v5187, 7
    %v5189 = vsub.s32 0, %v5188
    %v5190 = vrot.slane %v5109, %v5189
    %v5191 = vlaneseq
    %v5192 = vshrl.u32 %v5191, 7
    %v5193 = vsub.s32 1, %v5192
    %v5194 = vrot.slane %v5109, %v5193
    %v5195 = vlaneseq
    %v5196 = vshrl.u32 %v5195, 7
    %v5197 = vsub.s32 2, %v5196
    %v5198 = vrot.slane %v5109, %v5197
    %v5199 = vlaneseq
    %v5200 = vshrl.u32 %v5199, 7
    %v5201 = vsub.s32 3, %v5200
    %v5202 = vrot.slane %v5109, %v5201
    %v5203 = vlaneseq
    %v5204 = vshrl.u32 %v5203, 7
    %v5205 = vsub.s32 4, %v5204
    %v5206 = vrot.slane %v5109, %v5205
    %v5207 = vlaneseq
    %v5208 = vshrl.u32 %v5207, 7
    %v5209 = vsub.s32 5, %v5208
    %v5210 = vrot.slane %v5109, %v5209
    %v5211 = vlaneseq
    %v5212 = vshrl.u32 %v5211, 7
    %v5213 = vsub.s32 6, %v5212
    %v5214 = vrot.slane %v5109, %v5213
    %v5215 = vlaneseq
    %v5216 = vshrl.u32 %v5215, 7
    %v5217 = vsub.s32 7, %v5216
    %v5218 = vrot.slane %v5109, %v5217
    %v5219 = vlaneseq
    %v5220 = vshrl.u32 %v5219, 7
    %v5221 = vsub.s32 0, %v5220
    %v5222 = vrot.slane %v5110, %v5221
    %v5223 = vlaneseq
    %v5224 = vshrl.u32 %v5223, 7
    %v5225 = vsub.s32 1, %v5224
    %v5226 = vrot.slane %v5110, %v5225
    %v5227 = vlaneseq
    %v5228 = vshrl.u32 %v5227, 7
    %v5229 = vsub.s32 2, %v5228
    %v5230 = vrot.slane %v5110, %v5229
    %v5231 = vlaneseq
    %v5232 = vshrl.u32 %v5231, 7
    %v5233 = vsub.s32 3, %v5232
    %v5234 = vrot.slane %v5110, %v5233
    %v5235 = vlaneseq
    %v5236 = vshrl.u32 %v5235, 7
    %v5237 = vsub.s32 4, %v5236
    %v5238 = vrot.slane %v5110, %v5237
    %v5239 = vlaneseq
    %v5240 = vshrl.u32 %v5239, 7
    %v5241 = vsub.s32 5, %v5240
    %v5242 = vrot.slane %v5110, %v5241
    %v5243 = vlaneseq
    %v5244 = vshrl.u32 %v5243, 7
    %v5245 = vsub.s32 6, %v5244
    %v5246 = vrot.slane %v5110, %v5245
    %v5247 = vlaneseq
    %v5248 = vshrl.u32 %v5247, 7
    %v5249 = vsub.s32 7, %v5248
    %v5250 = vrot.slane %v5110, %v5249
    %v5251 = vlaneseq
    %v5252 = vshrl.u32 %v5251, 7
    %v5253 = vsub.s32 0, %v5252
    %v5254 = vrot.slane %v5111, %v5253
    %v5255 = vlaneseq
    %v5256 = vshrl.u32 %v5255, 7
    %v5257 = vsub.s32 1, %v5256
    %v5258 = vrot.slane %v5111, %v5257
    %v5259 = vlaneseq
    %v5260 = vshrl.u32 %v5259, 7
    %v5261 = vsub.s32 2, %v5260
    %v5262 = vrot.slane %v5111, %v5261
    %v5263 = vlaneseq
    %v5264 = vshrl.u32 %v5263, 7
    %v5265 = vsub.s32 3, %v5264
    %v5266 = vrot.slane %v5111, %v5265
    %v5267 = vlaneseq
    %v5268 = vshrl.u32 %v5267, 7
    %v5269 = vsub.s32 4, %v5268
    %v5270 = vrot.slane %v5111, %v5269
    %v5271 = vlaneseq
    %v5272 = vshrl.u32 %v5271, 7
    %v5273 = vsub.s32 5, %v5272
    %v5274 = vrot.slane %v5111, %v5273
    %v5275 = vlaneseq
    %v5276 = vshrl.u32 %v5275, 7
    %v5277 = vsub.s32 6, %v5276
    %v5278 = vrot.slane %v5111, %v5277
    %v5279 = vlaneseq
    %v5280 = vshrl.u32 %v5279, 7
    %v5281 = vsub.s32 7, %v5280
    %v5282 = vrot.slane %v5111, %v5281
    %v5283 = vlaneseq
    %v5284 = vshrl.u32 %v5283, 7
    %v5285 = vsub.s32 0, %v5284
    %v5286 = vrot.slane %v5112, %v5285
    %v5287 = vlaneseq
    %v5288 = vshrl.u32 %v5287, 7
    %v5289 = vsub.s32 1, %v5288
    %v5290 = vrot.slane %v5112, %v5289
    %v5291 = vlaneseq
    %v5292 = vshrl.u32 %v5291, 7
    %v5293 = vsub.s32 2, %v5292
    %v5294 = vrot.slane %v5112, %v5293
    %v5295 = vlaneseq
    %v5296 = vshrl.u32 %v5295, 7
    %v5297 = vsub.s32 3, %v5296
    %v5298 = vrot.slane %v5112, %v5297
    %v5299 = vlaneseq
    %v5300 = vshrl.u32 %v5299, 7
    %v5301 = vsub.s32 4, %v5300
    %v5302 = vrot.slane %v5112, %v5301
    %v5303 = vlaneseq
    %v5304 = vshrl.u32 %v5303, 7
    %v5305 = vsub.s32 5, %v5304
    %v5306 = vrot.slane %v5112, %v5305
    %v5307 = vlaneseq
    %v5308 = vshrl.u32 %v5307, 7
    %v5309 = vsub.s32 6, %v5308
    %v5310 = vrot.slane %v5112, %v5309
    %v5311 = vlaneseq
    %v5312 = vshrl.u32 %v5311, 7
    %v5313 = vsub.s32 7, %v5312
    %v5314 = vrot.slane %v5112, %v5313
    %v5315 = vlaneseq
    %v5316 = vshrl.u32 %v5315, 7
    %v5317 = vsub.s32 0, %v5316
    %v5318 = vrot.slane %v5113, %v5317
    %v5319 = vlaneseq
    %v5320 = vshrl.u32 %v5319, 7
    %v5321 = vsub.s32 1, %v5320
    %v5322 = vrot.slane %v5113, %v5321
    %v5323 = vlaneseq
    %v5324 = vshrl.u32 %v5323, 7
    %v5325 = vsub.s32 2, %v5324
    %v5326 = vrot.slane %v5113, %v5325
    %v5327 = vlaneseq
    %v5328 = vshrl.u32 %v5327, 7
    %v5329 = vsub.s32 3, %v5328
    %v5330 = vrot.slane %v5113, %v5329
    %v5331 = vlaneseq
    %v5332 = vshrl.u32 %v5331, 7
    %v5333 = vsub.s32 4, %v5332
    %v5334 = vrot.slane %v5113, %v5333
    %v5335 = vlaneseq
    %v5336 = vshrl.u32 %v5335, 7
    %v5337 = vsub.s32 5, %v5336
    %v5338 = vrot.slane %v5113, %v5337
    %v5339 = vlaneseq
    %v5340 = vshrl.u32 %v5339, 7
    %v5341 = vsub.s32 6, %v5340
    %v5342 = vrot.slane %v5113, %v5341
    %v5343 = vlaneseq
    %v5344 = vshrl.u32 %v5343, 7
    %v5345 = vsub.s32 7, %v5344
    %v5346 = vrot.slane %v5113, %v5345
    %v5347 = vlaneseq
    %v5348 = vshrl.u32 %v5347, 7
    %v5349 = vsub.s32 0, %v5348
    %v5350 = vrot.slane %v5114, %v5349
    %v5351 = vlaneseq
    %v5352 = vshrl.u32 %v5351, 7
    %v5353 = vsub.s32 1, %v5352
    %v5354 = vrot.slane %v5114, %v5353
    %v5355 = vlaneseq
    %v5356 = vshrl.u32 %v5355, 7
    %v5357 = vsub.s32 2, %v5356
    %v5358 = vrot.slane %v5114, %v5357
    %v5359 = vlaneseq
    %v5360 = vshrl.u32 %v5359, 7
    %v5361 = vsub.s32 3, %v5360
    %v5362 = vrot.slane %v5114, %v5361
    %v5363 = vlaneseq
    %v5364 = vshrl.u32 %v5363, 7
    %v5365 = vsub.s32 4, %v5364
    %v5366 = vrot.slane %v5114, %v5365
    %v5367 = vlaneseq
    %v5368 = vshrl.u32 %v5367, 7
    %v5369 = vsub.s32 5, %v5368
    %v5370 = vrot.slane %v5114, %v5369
    %v5371 = vlaneseq
    %v5372 = vshrl.u32 %v5371, 7
    %v5373 = vsub.s32 6, %v5372
    %v5374 = vrot.slane %v5114, %v5373
    %v5375 = vlaneseq
    %v5376 = vshrl.u32 %v5375, 7
    %v5377 = vsub.s32 7, %v5376
    %v5378 = vrot.slane %v5114, %v5377
    %5444 = vrot.lane.b32.xlu0 %v4978, 96
    %v5445 = vpop.permute.xlu0 %5444
    %v5447 = vsel %vm2848, %v5445, 0
    %5449 = vmatprep.subr.bf16.mxu0 %v4980
    %5450 = vmatpush1.bf16.msra.mxu0 %v4979
    %5451 = vmatprep.subr.bf16.mxu0 %v5044
    %5452 = vmatpush1.bf16.msra.mxu0 %v5043
    %5453 = vmatprep.subr.bf16.mxu0 0
    %5454 = vmatpush1.bf16.msra.mxu0 0
    %5455 = vmatprep.subr.bf16.mxu0 0
    %5456 = vmatpush1.bf16.msra.mxu0 0
    %5457 = vmatprep.subr.bf16.mxu0 0
    %5458 = vmatpush1.bf16.msra.mxu0 0
    %5459 = vmatprep.subr.bf16.mxu0 0
    %5460 = vmatpush1.bf16.msra.mxu0 0
    %5461 = vmatprep.subr.bf16.mxu0 0
    %5462 = vmatpush1.bf16.msra.mxu0 0
    %5463 = vmatprep.subr.bf16.mxu0 0
    %5464 = vmatpush1.bf16.msra.mxu0 0
    %5465 = vmatprep.subr.bf16.mxu0 0
    %5466 = vmatpush1.bf16.msra.mxu0 0
    %5467 = vmatprep.subr.bf16.mxu0 0
    %5468 = vmatpush1.bf16.msra.mxu0 0
    %5469 = vmatprep.subr.bf16.mxu0 0
    %5470 = vmatpush1.bf16.msra.mxu0 0
    %5471 = vmatprep.subr.bf16.mxu0 0
    %5472 = vmatpush1.bf16.msra.mxu0 0
    %5473 = vmatprep.subr.bf16.mxu0 0
    %5474 = vmatpush1.bf16.msra.mxu0 0
    %5475 = vmatprep.subr.bf16.mxu0 0
    %5476 = vmatpush1.bf16.msra.mxu0 0
    %5477 = vmatprep.subr.bf16.mxu0 0
    %5478 = vmatpush1.bf16.msra.mxu0 0
    %5479 = vmatprep.subr.bf16.mxu0 0
    %5480 = vmatpush1.bf16.msra.mxu0 0
    %5481 = vmatprep.mubr.bf16.mxu0 0
    %5482 = vmatmul.mubr.bf16.gmra.mrb[0].mxu0 %v5447
    %v5483 = vpop.f32.mrb[0].mxu0
    %v5484 = vadd.f32 %v5126, %v5483
    %v5485 = vpop.f32.mrb[0].mxu0
    %v5486 = vadd.f32 %v5130, %v5485
    %v5487 = vpop.f32.mrb[0].mxu0
    %v5488 = vpop.f32.mrb[0].mxu0
    %5489 = vdwg.mxu0
    %5490 = vmatprep.subr.bf16.mxu0 %v4982
    %5491 = vmatpush1.bf16.msra.mxu0 %v4981
    %5492 = vmatprep.subr.bf16.mxu0 %v5046
    %5493 = vmatpush1.bf16.msra.mxu0 %v5045
    %5494 = vmatprep.subr.bf16.mxu0 0
    %5495 = vmatpush1.bf16.msra.mxu0 0
    %5496 = vmatprep.subr.bf16.mxu0 0
    %5497 = vmatpush1.bf16.msra.mxu0 0
    %5498 = vmatprep.subr.bf16.mxu0 0
    %5499 = vmatpush1.bf16.msra.mxu0 0
    %5500 = vmatprep.subr.bf16.mxu0 0
    %5501 = vmatpush1.bf16.msra.mxu0 0
    %5502 = vmatprep.subr.bf16.mxu0 0
    %5503 = vmatpush1.bf16.msra.mxu0 0
    %5504 = vmatprep.subr.bf16.mxu0 0
    %5505 = vmatpush1.bf16.msra.mxu0 0
    %5506 = vmatprep.subr.bf16.mxu0 0
    %5507 = vmatpush1.bf16.msra.mxu0 0
    %5508 = vmatprep.subr.bf16.mxu0 0
    %5509 = vmatpush1.bf16.msra.mxu0 0
    %5510 = vmatprep.subr.bf16.mxu0 0
    %5511 = vmatpush1.bf16.msra.mxu0 0
    %5512 = vmatprep.subr.bf16.mxu0 0
    %5513 = vmatpush1.bf16.msra.mxu0 0
    %5514 = vmatprep.subr.bf16.mxu0 0
    %5515 = vmatpush1.bf16.msra.mxu0 0
    %5516 = vmatprep.subr.bf16.mxu0 0
    %5517 = vmatpush1.bf16.msra.mxu0 0
    %5518 = vmatprep.subr.bf16.mxu0 0
    %5519 = vmatpush1.bf16.msra.mxu0 0
    %5520 = vmatprep.subr.bf16.mxu0 0
    %5521 = vmatpush1.bf16.msra.mxu0 0
    %5522 = vmatprep.mubr.bf16.mxu0 0
    %5523 = vmatmul.mubr.bf16.gmra.mrb[0].mxu0 %v5447
    %v5524 = vpop.f32.mrb[0].mxu0
    %v5525 = vadd.f32 %v5134, %v5524
    %v5526 = vpop.f32.mrb[0].mxu0
    %v5527 = vadd.f32 %v5138, %v5526
    %v5528 = vpop.f32.mrb[0].mxu0
    %v5529 = vpop.f32.mrb[0].mxu0
    %5530 = vdwg.mxu0
    %5531 = vmatprep.subr.bf16.mxu0 %v4984
    %5532 = vmatpush1.bf16.msra.mxu0 %v4983
    %5533 = vmatprep.subr.bf16.mxu0 %v5048
    %5534 = vmatpush1.bf16.msra.mxu0 %v5047
    %5535 = vmatprep.subr.bf16.mxu0 0
    %5536 = vmatpush1.bf16.msra.mxu0 0
    %5537 = vmatprep.subr.bf16.mxu0 0
    %5538 = vmatpush1.bf16.msra.mxu0 0
    %5539 = vmatprep.subr.bf16.mxu0 0
    %5540 = vmatpush1.bf16.msra.mxu0 0
    %5541 = vmatprep.subr.bf16.mxu0 0
    %5542 = vmatpush1.bf16.msra.mxu0 0
    %5543 = vmatprep.subr.bf16.mxu0 0
    %5544 = vmatpush1.bf16.msra.mxu0 0
    %5545 = vmatprep.subr.bf16.mxu0 0
    %5546 = vmatpush1.bf16.msra.mxu0 0
    %5547 = vmatprep.subr.bf16.mxu0 0
    %5548 = vmatpush1.bf16.msra.mxu0 0
    %5549 = vmatprep.subr.bf16.mxu0 0
    %5550 = vmatpush1.bf16.msra.mxu0 0
    %5551 = vmatprep.subr.bf16.mxu0 0
    %5552 = vmatpush1.bf16.msra.mxu0 0
    %5553 = vmatprep.subr.bf16.mxu0 0
    %5554 = vmatpush1.bf16.msra.mxu0 0
    %5555 = vmatprep.subr.bf16.mxu0 0
    %5556 = vmatpush1.bf16.msra.mxu0 0
    %5557 = vmatprep.subr.bf16.mxu0 0
    %5558 = vmatpush1.bf16.msra.mxu0 0
    %5559 = vmatprep.subr.bf16.mxu0 0
    %5560 = vmatpush1.bf16.msra.mxu0 0
    %5561 = vmatprep.subr.bf16.mxu0 0
    %5562 = vmatpush1.bf16.msra.mxu0 0
    %5563 = vmatprep.mubr.bf16.mxu0 0
    %5564 = vmatmul.mubr.bf16.gmra.mrb[0].mxu0 %v5447
    %v5565 = vpop.f32.mrb[0].mxu0
    %v5566 = vadd.f32 %v5142, %v5565
    %v5567 = vpop.f32.mrb[0].mxu0
    %v5568 = vadd.f32 %v5146, %v5567
    %v5569 = vpop.f32.mrb[0].mxu0
    %v5570 = vpop.f32.mrb[0].mxu0
    %5571 = vdwg.mxu0
    %5572 = vmatprep.subr.bf16.mxu0 %v4986
    %5573 = vmatpush1.bf16.msra.mxu0 %v4985
    %5574 = vmatprep.subr.bf16.mxu0 %v5050
    %5575 = vmatpush1.bf16.msra.mxu0 %v5049
    %5576 = vmatprep.subr.bf16.mxu0 0
    %5577 = vmatpush1.bf16.msra.mxu0 0
    %5578 = vmatprep.subr.bf16.mxu0 0
    %5579 = vmatpush1.bf16.msra.mxu0 0
    %5580 = vmatprep.subr.bf16.mxu0 0
    %5581 = vmatpush1.bf16.msra.mxu0 0
    %5582 = vmatprep.subr.bf16.mxu0 0
    %5583 = vmatpush1.bf16.msra.mxu0 0
    %5584 = vmatprep.subr.bf16.mxu0 0
    %5585 = vmatpush1.bf16.msra.mxu0 0
    %5586 = vmatprep.subr.bf16.mxu0 0
    %5587 = vmatpush1.bf16.msra.mxu0 0
    %5588 = vmatprep.subr.bf16.mxu0 0
    %5589 = vmatpush1.bf16.msra.mxu0 0
    %5590 = vmatprep.subr.bf16.mxu0 0
    %5591 = vmatpush1.bf16.msra.mxu0 0
    %5592 = vmatprep.subr.bf16.mxu0 0
    %5593 = vmatpush1.bf16.msra.mxu0 0
    %5594 = vmatprep.subr.bf16.mxu0 0
    %5595 = vmatpush1.bf16.msra.mxu0 0
    %5596 = vmatprep.subr.bf16.mxu0 0
    %5597 = vmatpush1.bf16.msra.mxu0 0
    %5598 = vmatprep.subr.bf16.mxu0 0
    %5599 = vmatpush1.bf16.msra.mxu0 0
    %5600 = vmatprep.subr.bf16.mxu0 0
    %5601 = vmatpush1.bf16.msra.mxu0 0
    %5602 = vmatprep.subr.bf16.mxu0 0
    %5603 = vmatpush1.bf16.msra.mxu0 0
    %5604 = vmatprep.mubr.bf16.mxu0 0
    %5605 = vmatmul.mubr.bf16.gmra.mrb[0].mxu0 %v5447
    %v5606 = vpop.f32.mrb[0].mxu0
    %v5607 = vadd.f32 %v5150, %v5606
    %v5608 = vpop.f32.mrb[0].mxu0
    %v5609 = vadd.f32 %v5154, %v5608
    %v5610 = vpop.f32.mrb[0].mxu0
    %v5611 = vpop.f32.mrb[0].mxu0
    %5612 = vdwg.mxu0
    %5613 = vmatprep.subr.bf16.mxu0 %v4988
    %5614 = vmatpush1.bf16.msra.mxu0 %v4987
    %5615 = vmatprep.subr.bf16.mxu0 %v5052
    %5616 = vmatpush1.bf16.msra.mxu0 %v5051
    %5617 = vmatprep.subr.bf16.mxu0 0
    %5618 = vmatpush1.bf16.msra.mxu0 0
    %5619 = vmatprep.subr.bf16.mxu0 0
    %5620 = vmatpush1.bf16.msra.mxu0 0
    %5621 = vmatprep.subr.bf16.mxu0 0
    %5622 = vmatpush1.bf16.msra.mxu0 0
    %5623 = vmatprep.subr.bf16.mxu0 0
    %5624 = vmatpush1.bf16.msra.mxu0 0
    %5625 = vmatprep.subr.bf16.mxu0 0
    %5626 = vmatpush1.bf16.msra.mxu0 0
    %5627 = vmatprep.subr.bf16.mxu0 0
    %5628 = vmatpush1.bf16.msra.mxu0 0
    %5629 = vmatprep.subr.bf16.mxu0 0
    %5630 = vmatpush1.bf16.msra.mxu0 0
    %5631 = vmatprep.subr.bf16.mxu0 0
    %5632 = vmatpush1.bf16.msra.mxu0 0
    %5633 = vmatprep.subr.bf16.mxu0 0
    %5634 = vmatpush1.bf16.msra.mxu0 0
    %5635 = vmatprep.subr.bf16.mxu0 0
    %5636 = vmatpush1.bf16.msra.mxu0 0
    %5637 = vmatprep.subr.bf16.mxu0 0
    %5638 = vmatpush1.bf16.msra.mxu0 0
    %5639 = vmatprep.subr.bf16.mxu0 0
    %5640 = vmatpush1.bf16.msra.mxu0 0
    %5641 = vmatprep.subr.bf16.mxu0 0
    %5642 = vmatpush1.bf16.msra.mxu0 0
    %5643 = vmatprep.subr.bf16.mxu0 0
    %5644 = vmatpush1.bf16.msra.mxu0 0
    %5645 = vmatprep.mubr.bf16.mxu0 0
    %5646 = vmatmul.mubr.bf16.gmra.mrb[0].mxu0 %v5447
    %v5647 = vpop.f32.mrb[0].mxu0
    %v5648 = vadd.f32 %v5158, %v5647
    %v5649 = vpop.f32.mrb[0].mxu0
    %v5650 = vadd.f32 %v5162, %v5649
    %v5651 = vpop.f32.mrb[0].mxu0
    %v5652 = vpop.f32.mrb[0].mxu0
    %5653 = vdwg.mxu0
    %5654 = vmatprep.subr.bf16.mxu0 %v4990
    %5655 = vmatpush1.bf16.msra.mxu0 %v4989
    %5656 = vmatprep.subr.bf16.mxu0 %v5054
    %5657 = vmatpush1.bf16.msra.mxu0 %v5053
    %5658 = vmatprep.subr.bf16.mxu0 0
    %5659 = vmatpush1.bf16.msra.mxu0 0
    %5660 = vmatprep.subr.bf16.mxu0 0
    %5661 = vmatpush1.bf16.msra.mxu0 0
    %5662 = vmatprep.subr.bf16.mxu0 0
    %5663 = vmatpush1.bf16.msra.mxu0 0
    %5664 = vmatprep.subr.bf16.mxu0 0
    %5665 = vmatpush1.bf16.msra.mxu0 0
    %5666 = vmatprep.subr.bf16.mxu0 0
    %5667 = vmatpush1.bf16.msra.mxu0 0
    %5668 = vmatprep.subr.bf16.mxu0 0
    %5669 = vmatpush1.bf16.msra.mxu0 0
    %5670 = vmatprep.subr.bf16.mxu0 0
    %5671 = vmatpush1.bf16.msra.mxu0 0
    %5672 = vmatprep.subr.bf16.mxu0 0
    %5673 = vmatpush1.bf16.msra.mxu0 0
    %5674 = vmatprep.subr.bf16.mxu0 0
    %5675 = vmatpush1.bf16.msra.mxu0 0
    %5676 = vmatprep.subr.bf16.mxu0 0
    %5677 = vmatpush1.bf16.msra.mxu0 0
    %5678 = vmatprep.subr.bf16.mxu0 0
    %5679 = vmatpush1.bf16.msra.mxu0 0
    %5680 = vmatprep.subr.bf16.mxu0 0
    %5681 = vmatpush1.bf16.msra.mxu0 0
    %5682 = vmatprep.subr.bf16.mxu0 0
    %5683 = vmatpush1.bf16.msra.mxu0 0
    %5684 = vmatprep.subr.bf16.mxu0 0
    %5685 = vmatpush1.bf16.msra.mxu0 0
    %5686 = vmatprep.mubr.bf16.mxu0 0
    %5687 = vmatmul.mubr.bf16.gmra.mrb[0].mxu0 %v5447
    %v5688 = vpop.f32.mrb[0].mxu0
    %v5689 = vadd.f32 %v5166, %v5688
    %v5690 = vpop.f32.mrb[0].mxu0
    %v5691 = vadd.f32 %v5170, %v5690
    %v5692 = vpop.f32.mrb[0].mxu0
    %v5693 = vpop.f32.mrb[0].mxu0
    %5694 = vdwg.mxu0
    %5695 = vmatprep.subr.bf16.mxu0 %v4992
    %5696 = vmatpush1.bf16.msra.mxu0 %v4991
    %5697 = vmatprep.subr.bf16.mxu0 %v5056
    %5698 = vmatpush1.bf16.msra.mxu0 %v5055
    %5699 = vmatprep.subr.bf16.mxu0 0
    %5700 = vmatpush1.bf16.msra.mxu0 0
    %5701 = vmatprep.subr.bf16.mxu0 0
    %5702 = vmatpush1.bf16.msra.mxu0 0
    %5703 = vmatprep.subr.bf16.mxu0 0
    %5704 = vmatpush1.bf16.msra.mxu0 0
    %5705 = vmatprep.subr.bf16.mxu0 0
    %5706 = vmatpush1.bf16.msra.mxu0 0
    %5707 = vmatprep.subr.bf16.mxu0 0
    %5708 = vmatpush1.bf16.msra.mxu0 0
    %5709 = vmatprep.subr.bf16.mxu0 0
    %5710 = vmatpush1.bf16.msra.mxu0 0
    %5711 = vmatprep.subr.bf16.mxu0 0
    %5712 = vmatpush1.bf16.msra.mxu0 0
    %5713 = vmatprep.subr.bf16.mxu0 0
    %5714 = vmatpush1.bf16.msra.mxu0 0
    %5715 = vmatprep.subr.bf16.mxu0 0
    %5716 = vmatpush1.bf16.msra.mxu0 0
    %5717 = vmatprep.subr.bf16.mxu0 0
    %5718 = vmatpush1.bf16.msra.mxu0 0
    %5719 = vmatprep.subr.bf16.mxu0 0
    %5720 = vmatpush1.bf16.msra.mxu0 0
    %5721 = vmatprep.subr.bf16.mxu0 0
    %5722 = vmatpush1.bf16.msra.mxu0 0
    %5723 = vmatprep.subr.bf16.mxu0 0
    %5724 = vmatpush1.bf16.msra.mxu0 0
    %5725 = vmatprep.subr.bf16.mxu0 0
    %5726 = vmatpush1.bf16.msra.mxu0 0
    %5727 = vmatprep.mubr.bf16.mxu0 0
    %5728 = vmatmul.mubr.bf16.gmra.mrb[0].mxu0 %v5447
    %v5729 = vpop.f32.mrb[0].mxu0
    %v5730 = vadd.f32 %v5174, %v5729
    %v5731 = vpop.f32.mrb[0].mxu0
    %v5732 = vadd.f32 %v5178, %v5731
    %v5733 = vpop.f32.mrb[0].mxu0
    %v5734 = vpop.f32.mrb[0].mxu0
    %5735 = vdwg.mxu0
    %5736 = vmatprep.subr.bf16.mxu0 %v4994
    %5737 = vmatpush1.bf16.msra.mxu0 %v4993
    %5738 = vmatprep.subr.bf16.mxu0 %v5058
    %5739 = vmatpush1.bf16.msra.mxu0 %v5057
    %5740 = vmatprep.subr.bf16.mxu0 0
    %5741 = vmatpush1.bf16.msra.mxu0 0
    %5742 = vmatprep.subr.bf16.mxu0 0
    %5743 = vmatpush1.bf16.msra.mxu0 0
    %5744 = vmatprep.subr.bf16.mxu0 0
    %5745 = vmatpush1.bf16.msra.mxu0 0
    %5746 = vmatprep.subr.bf16.mxu0 0
    %5747 = vmatpush1.bf16.msra.mxu0 0
    %5748 = vmatprep.subr.bf16.mxu0 0
    %5749 = vmatpush1.bf16.msra.mxu0 0
    %5750 = vmatprep.subr.bf16.mxu0 0
    %5751 = vmatpush1.bf16.msra.mxu0 0
    %5752 = vmatprep.subr.bf16.mxu0 0
    %5753 = vmatpush1.bf16.msra.mxu0 0
    %5754 = vmatprep.subr.bf16.mxu0 0
    %5755 = vmatpush1.bf16.msra.mxu0 0
    %5756 = vmatprep.subr.bf16.mxu0 0
    %5757 = vmatpush1.bf16.msra.mxu0 0
    %5758 = vmatprep.subr.bf16.mxu0 0
    %5759 = vmatpush1.bf16.msra.mxu0 0
    %5760 = vmatprep.subr.bf16.mxu0 0
    %5761 = vmatpush1.bf16.msra.mxu0 0
    %5762 = vmatprep.subr.bf16.mxu0 0
    %5763 = vmatpush1.bf16.msra.mxu0 0
    %5764 = vmatprep.subr.bf16.mxu0 0
    %5765 = vmatpush1.bf16.msra.mxu0 0
    %5766 = vmatprep.subr.bf16.mxu0 0
    %5767 = vmatpush1.bf16.msra.mxu0 0
    %5768 = vmatprep.mubr.bf16.mxu0 0
    %5769 = vmatmul.mubr.bf16.gmra.mrb[0].mxu0 %v5447
    %v5770 = vpop.f32.mrb[0].mxu0
    %v5771 = vadd.f32 %v5182, %v5770
    %v5772 = vpop.f32.mrb[0].mxu0
    %v5773 = vadd.f32 %v5186, %v5772
    %v5774 = vpop.f32.mrb[0].mxu0
    %v5775 = vpop.f32.mrb[0].mxu0
    %5776 = vdwg.mxu0
    %5777 = vmatprep.subr.bf16.mxu0 %v4996
    %5778 = vmatpush1.bf16.msra.mxu0 %v4995
    %5779 = vmatprep.subr.bf16.mxu0 %v5060
    %5780 = vmatpush1.bf16.msra.mxu0 %v5059
    %5781 = vmatprep.subr.bf16.mxu0 0
    %5782 = vmatpush1.bf16.msra.mxu0 0
    %5783 = vmatprep.subr.bf16.mxu0 0
    %5784 = vmatpush1.bf16.msra.mxu0 0
    %5785 = vmatprep.subr.bf16.mxu0 0
    %5786 = vmatpush1.bf16.msra.mxu0 0
    %5787 = vmatprep.subr.bf16.mxu0 0
    %5788 = vmatpush1.bf16.msra.mxu0 0
    %5789 = vmatprep.subr.bf16.mxu0 0
    %5790 = vmatpush1.bf16.msra.mxu0 0
    %5791 = vmatprep.subr.bf16.mxu0 0
    %5792 = vmatpush1.bf16.msra.mxu0 0
    %5793 = vmatprep.subr.bf16.mxu0 0
    %5794 = vmatpush1.bf16.msra.mxu0 0
    %5795 = vmatprep.subr.bf16.mxu0 0
    %5796 = vmatpush1.bf16.msra.mxu0 0
    %5797 = vmatprep.subr.bf16.mxu0 0
    %5798 = vmatpush1.bf16.msra.mxu0 0
    %5799 = vmatprep.subr.bf16.mxu0 0
    %5800 = vmatpush1.bf16.msra.mxu0 0
    %5801 = vmatprep.subr.bf16.mxu0 0
    %5802 = vmatpush1.bf16.msra.mxu0 0
    %5803 = vmatprep.subr.bf16.mxu0 0
    %5804 = vmatpush1.bf16.msra.mxu0 0
    %5805 = vmatprep.subr.bf16.mxu0 0
    %5806 = vmatpush1.bf16.msra.mxu0 0
    %5807 = vmatprep.subr.bf16.mxu0 0
    %5808 = vmatpush1.bf16.msra.mxu0 0
    %5809 = vmatprep.mubr.bf16.mxu0 0
    %5810 = vmatmul.mubr.bf16.gmra.mrb[0].mxu0 %v5447
    %v5811 = vpop.f32.mrb[0].mxu0
    %v5812 = vadd.f32 %v5190, %v5811
    %v5813 = vpop.f32.mrb[0].mxu0
    %v5814 = vadd.f32 %v5194, %v5813
    %v5815 = vpop.f32.mrb[0].mxu0
    %v5816 = vpop.f32.mrb[0].mxu0
    %5817 = vdwg.mxu0
    %5818 = vmatprep.subr.bf16.mxu0 %v4998
    %5819 = vmatpush1.bf16.msra.mxu0 %v4997
    %5820 = vmatprep.subr.bf16.mxu0 %v5062
    %5821 = vmatpush1.bf16.msra.mxu0 %v5061
    %5822 = vmatprep.subr.bf16.mxu0 0
    %5823 = vmatpush1.bf16.msra.mxu0 0
    %5824 = vmatprep.subr.bf16.mxu0 0
    %5825 = vmatpush1.bf16.msra.mxu0 0
    %5826 = vmatprep.subr.bf16.mxu0 0
    %5827 = vmatpush1.bf16.msra.mxu0 0
    %5828 = vmatprep.subr.bf16.mxu0 0
    %5829 = vmatpush1.bf16.msra.mxu0 0
    %5830 = vmatprep.subr.bf16.mxu0 0
    %5831 = vmatpush1.bf16.msra.mxu0 0
    %5832 = vmatprep.subr.bf16.mxu0 0
    %5833 = vmatpush1.bf16.msra.mxu0 0
    %5834 = vmatprep.subr.bf16.mxu0 0
    %5835 = vmatpush1.bf16.msra.mxu0 0
    %5836 = vmatprep.subr.bf16.mxu0 0
    %5837 = vmatpush1.bf16.msra.mxu0 0
    %5838 = vmatprep.subr.bf16.mxu0 0
    %5839 = vmatpush1.bf16.msra.mxu0 0
    %5840 = vmatprep.subr.bf16.mxu0 0
    %5841 = vmatpush1.bf16.msra.mxu0 0
    %5842 = vmatprep.subr.bf16.mxu0 0
    %5843 = vmatpush1.bf16.msra.mxu0 0
    %5844 = vmatprep.subr.bf16.mxu0 0
    %5845 = vmatpush1.bf16.msra.mxu0 0
    %5846 = vmatprep.subr.bf16.mxu0 0
    %5847 = vmatpush1.bf16.msra.mxu0 0
    %5848 = vmatprep.subr.bf16.mxu0 0
    %5849 = vmatpush1.bf16.msra.mxu0 0
    %5850 = vmatprep.mubr.bf16.mxu0 0
    %5851 = vmatmul.mubr.bf16.gmra.mrb[0].mxu0 %v5447
    %v5852 = vpop.f32.mrb[0].mxu0
    %v5853 = vadd.f32 %v5198, %v5852
    %v5854 = vpop.f32.mrb[0].mxu0
    %v5855 = vadd.f32 %v5202, %v5854
    %v5856 = vpop.f32.mrb[0].mxu0
    %v5857 = vpop.f32.mrb[0].mxu0
    %5858 = vdwg.mxu0
    %5859 = vmatprep.subr.bf16.mxu0 %v5000
    %5860 = vmatpush1.bf16.msra.mxu0 %v4999
    %5861 = vmatprep.subr.bf16.mxu0 %v5064
    %5862 = vmatpush1.bf16.msra.mxu0 %v5063
    %5863 = vmatprep.subr.bf16.mxu0 0
    %5864 = vmatpush1.bf16.msra.mxu0 0
    %5865 = vmatprep.subr.bf16.mxu0 0
    %5866 = vmatpush1.bf16.msra.mxu0 0
    %5867 = vmatprep.subr.bf16.mxu0 0
    %5868 = vmatpush1.bf16.msra.mxu0 0
    %5869 = vmatprep.subr.bf16.mxu0 0
    %5870 = vmatpush1.bf16.msra.mxu0 0
    %5871 = vmatprep.subr.bf16.mxu0 0
    %5872 = vmatpush1.bf16.msra.mxu0 0
    %5873 = vmatprep.subr.bf16.mxu0 0
    %5874 = vmatpush1.bf16.msra.mxu0 0
    %5875 = vmatprep.subr.bf16.mxu0 0
    %5876 = vmatpush1.bf16.msra.mxu0 0
    %5877 = vmatprep.subr.bf16.mxu0 0
    %5878 = vmatpush1.bf16.msra.mxu0 0
    %5879 = vmatprep.subr.bf16.mxu0 0
    %5880 = vmatpush1.bf16.msra.mxu0 0
    %5881 = vmatprep.subr.bf16.mxu0 0
    %5882 = vmatpush1.bf16.msra.mxu0 0
    %5883 = vmatprep.subr.bf16.mxu0 0
    %5884 = vmatpush1.bf16.msra.mxu0 0
    %5885 = vmatprep.subr.bf16.mxu0 0
    %5886 = vmatpush1.bf16.msra.mxu0 0
    %5887 = vmatprep.subr.bf16.mxu0 0
    %5888 = vmatpush1.bf16.msra.mxu0 0
    %5889 = vmatprep.subr.bf16.mxu0 0
    %5890 = vmatpush1.bf16.msra.mxu0 0
    %5891 = vmatprep.mubr.bf16.mxu0 0
    %5892 = vmatmul.mubr.bf16.gmra.mrb[0].mxu0 %v5447
    %v5893 = vpop.f32.mrb[0].mxu0
    %v5894 = vadd.f32 %v5206, %v5893
    %v5895 = vpop.f32.mrb[0].mxu0
    %v5896 = vadd.f32 %v5210, %v5895
    %v5897 = vpop.f32.mrb[0].mxu0
    %v5898 = vpop.f32.mrb[0].mxu0
    %5899 = vdwg.mxu0
    %5900 = vmatprep.subr.bf16.mxu0 %v5002
    %5901 = vmatpush1.bf16.msra.mxu0 %v5001
    %5902 = vmatprep.subr.bf16.mxu0 %v5066
    %5903 = vmatpush1.bf16.msra.mxu0 %v5065
    %5904 = vmatprep.subr.bf16.mxu0 0
    %5905 = vmatpush1.bf16.msra.mxu0 0
    %5906 = vmatprep.subr.bf16.mxu0 0
    %5907 = vmatpush1.bf16.msra.mxu0 0
    %5908 = vmatprep.subr.bf16.mxu0 0
    %5909 = vmatpush1.bf16.msra.mxu0 0
    %5910 = vmatprep.subr.bf16.mxu0 0
    %5911 = vmatpush1.bf16.msra.mxu0 0
    %5912 = vmatprep.subr.bf16.mxu0 0
    %5913 = vmatpush1.bf16.msra.mxu0 0
    %5914 = vmatprep.subr.bf16.mxu0 0
    %5915 = vmatpush1.bf16.msra.mxu0 0
    %5916 = vmatprep.subr.bf16.mxu0 0
    %5917 = vmatpush1.bf16.msra.mxu0 0
    %5918 = vmatprep.subr.bf16.mxu0 0
    %5919 = vmatpush1.bf16.msra.mxu0 0
    %5920 = vmatprep.subr.bf16.mxu0 0
    %5921 = vmatpush1.bf16.msra.mxu0 0
    %5922 = vmatprep.subr.bf16.mxu0 0
    %5923 = vmatpush1.bf16.msra.mxu0 0
    %5924 = vmatprep.subr.bf16.mxu0 0
    %5925 = vmatpush1.bf16.msra.mxu0 0
    %5926 = vmatprep.subr.bf16.mxu0 0
    %5927 = vmatpush1.bf16.msra.mxu0 0
    %5928 = vmatprep.subr.bf16.mxu0 0
    %5929 = vmatpush1.bf16.msra.mxu0 0
    %5930 = vmatprep.subr.bf16.mxu0 0
    %5931 = vmatpush1.bf16.msra.mxu0 0
    %5932 = vmatprep.mubr.bf16.mxu0 0
    %5933 = vmatmul.mubr.bf16.gmra.mrb[0].mxu0 %v5447
    %v5934 = vpop.f32.mrb[0].mxu0
    %v5935 = vadd.f32 %v5214, %v5934
    %v5936 = vpop.f32.mrb[0].mxu0
    %v5937 = vadd.f32 %v5218, %v5936
    %v5938 = vpop.f32.mrb[0].mxu0
    %v5939 = vpop.f32.mrb[0].mxu0
    %5940 = vdwg.mxu0
    %5941 = vmatprep.subr.bf16.mxu0 %v5004
    %5942 = vmatpush1.bf16.msra.mxu0 %v5003
    %5943 = vmatprep.subr.bf16.mxu0 %v5068
    %5944 = vmatpush1.bf16.msra.mxu0 %v5067
    %5945 = vmatprep.subr.bf16.mxu0 0
    %5946 = vmatpush1.bf16.msra.mxu0 0
    %5947 = vmatprep.subr.bf16.mxu0 0
    %5948 = vmatpush1.bf16.msra.mxu0 0
    %5949 = vmatprep.subr.bf16.mxu0 0
    %5950 = vmatpush1.bf16.msra.mxu0 0
    %5951 = vmatprep.subr.bf16.mxu0 0
    %5952 = vmatpush1.bf16.msra.mxu0 0
    %5953 = vmatprep.subr.bf16.mxu0 0
    %5954 = vmatpush1.bf16.msra.mxu0 0
    %5955 = vmatprep.subr.bf16.mxu0 0
    %5956 = vmatpush1.bf16.msra.mxu0 0
    %5957 = vmatprep.subr.bf16.mxu0 0
    %5958 = vmatpush1.bf16.msra.mxu0 0
    %5959 = vmatprep.subr.bf16.mxu0 0
    %5960 = vmatpush1.bf16.msra.mxu0 0
    %5961 = vmatprep.subr.bf16.mxu0 0
    %5962 = vmatpush1.bf16.msra.mxu0 0
    %5963 = vmatprep.subr.bf16.mxu0 0
    %5964 = vmatpush1.bf16.msra.mxu0 0
    %5965 = vmatprep.subr.bf16.mxu0 0
    %5966 = vmatpush1.bf16.msra.mxu0 0
    %5967 = vmatprep.subr.bf16.mxu0 0
    %5968 = vmatpush1.bf16.msra.mxu0 0
    %5969 = vmatprep.subr.bf16.mxu0 0
    %5970 = vmatpush1.bf16.msra.mxu0 0
    %5971 = vmatprep.subr.bf16.mxu0 0
    %5972 = vmatpush1.bf16.msra.mxu0 0
    %5973 = vmatprep.mubr.bf16.mxu0 0
    %5974 = vmatmul.mubr.bf16.gmra.mrb[0].mxu0 %v5447
    %v5975 = vpop.f32.mrb[0].mxu0
    %v5976 = vadd.f32 %v5222, %v5975
    %v5977 = vpop.f32.mrb[0].mxu0
    %v5978 = vadd.f32 %v5226, %v5977
    %v5979 = vpop.f32.mrb[0].mxu0
    %v5980 = vpop.f32.mrb[0].mxu0
    %5981 = vdwg.mxu0
    %5982 = vmatprep.subr.bf16.mxu0 %v5006
    %5983 = vmatpush1.bf16.msra.mxu0 %v5005
    %5984 = vmatprep.subr.bf16.mxu0 %v5070
    %5985 = vmatpush1.bf16.msra.mxu0 %v5069
    %5986 = vmatprep.subr.bf16.mxu0 0
    %5987 = vmatpush1.bf16.msra.mxu0 0
    %5988 = vmatprep.subr.bf16.mxu0 0
    %5989 = vmatpush1.bf16.msra.mxu0 0
    %5990 = vmatprep.subr.bf16.mxu0 0
    %5991 = vmatpush1.bf16.msra.mxu0 0
    %5992 = vmatprep.subr.bf16.mxu0 0
    %5993 = vmatpush1.bf16.msra.mxu0 0
    %5994 = vmatprep.subr.bf16.mxu0 0
    %5995 = vmatpush1.bf16.msra.mxu0 0
    %5996 = vmatprep.subr.bf16.mxu0 0
    %5997 = vmatpush1.bf16.msra.mxu0 0
    %5998 = vmatprep.subr.bf16.mxu0 0
    %5999 = vmatpush1.bf16.msra.mxu0 0
    %6000 = vmatprep.subr.bf16.mxu0 0
    %6001 = vmatpush1.bf16.msra.mxu0 0
    %6002 = vmatprep.subr.bf16.mxu0 0
    %6003 = vmatpush1.bf16.msra.mxu0 0
    %6004 = vmatprep.subr.bf16.mxu0 0
    %6005 = vmatpush1.bf16.msra.mxu0 0
    %6006 = vmatprep.subr.bf16.mxu0 0
    %6007 = vmatpush1.bf16.msra.mxu0 0
    %6008 = vmatprep.subr.bf16.mxu0 0
    %6009 = vmatpush1.bf16.msra.mxu0 0
    %6010 = vmatprep.subr.bf16.mxu0 0
    %6011 = vmatpush1.bf16.msra.mxu0 0
    %6012 = vmatprep.subr.bf16.mxu0 0
    %6013 = vmatpush1.bf16.msra.mxu0 0
    %6014 = vmatprep.mubr.bf16.mxu0 0
    %6015 = vmatmul.mubr.bf16.gmra.mrb[0].mxu0 %v5447
    %v6016 = vpop.f32.mrb[0].mxu0
    %v6017 = vadd.f32 %v5230, %v6016
    %v6018 = vpop.f32.mrb[0].mxu0
    %v6019 = vadd.f32 %v5234, %v6018
    %v6020 = vpop.f32.mrb[0].mxu0
    %v6021 = vpop.f32.mrb[0].mxu0
    %6022 = vdwg.mxu0
    %6023 = vmatprep.subr.bf16.mxu0 %v5008
    %6024 = vmatpush1.bf16.msra.mxu0 %v5007
    %6025 = vmatprep.subr.bf16.mxu0 %v5072
    %6026 = vmatpush1.bf16.msra.mxu0 %v5071
    %6027 = vmatprep.subr.bf16.mxu0 0
    %6028 = vmatpush1.bf16.msra.mxu0 0
    %6029 = vmatprep.subr.bf16.mxu0 0
    %6030 = vmatpush1.bf16.msra.mxu0 0
    %6031 = vmatprep.subr.bf16.mxu0 0
    %6032 = vmatpush1.bf16.msra.mxu0 0
    %6033 = vmatprep.subr.bf16.mxu0 0
    %6034 = vmatpush1.bf16.msra.mxu0 0
    %6035 = vmatprep.subr.bf16.mxu0 0
    %6036 = vmatpush1.bf16.msra.mxu0 0
    %6037 = vmatprep.subr.bf16.mxu0 0
    %6038 = vmatpush1.bf16.msra.mxu0 0
    %6039 = vmatprep.subr.bf16.mxu0 0
    %6040 = vmatpush1.bf16.msra.mxu0 0
    %6041 = vmatprep.subr.bf16.mxu0 0
    %6042 = vmatpush1.bf16.msra.mxu0 0
    %6043 = vmatprep.subr.bf16.mxu0 0
    %6044 = vmatpush1.bf16.msra.mxu0 0
    %6045 = vmatprep.subr.bf16.mxu0 0
    %6046 = vmatpush1.bf16.msra.mxu0 0
    %6047 = vmatprep.subr.bf16.mxu0 0
    %6048 = vmatpush1.bf16.msra.mxu0 0
    %6049 = vmatprep.subr.bf16.mxu0 0
    %6050 = vmatpush1.bf16.msra.mxu0 0
    %6051 = vmatprep.subr.bf16.mxu0 0
    %6052 = vmatpush1.bf16.msra.mxu0 0
    %6053 = vmatprep.subr.bf16.mxu0 0
    %6054 = vmatpush1.bf16.msra.mxu0 0
    %6055 = vmatprep.mubr.bf16.mxu0 0
    %6056 = vmatmul.mubr.bf16.gmra.mrb[0].mxu0 %v5447
    %v6057 = vpop.f32.mrb[0].mxu0
    %v6058 = vadd.f32 %v5238, %v6057
    %v6059 = vpop.f32.mrb[0].mxu0
    %v6060 = vadd.f32 %v5242, %v6059
    %v6061 = vpop.f32.mrb[0].mxu0
    %v6062 = vpop.f32.mrb[0].mxu0
    %6063 = vdwg.mxu0
    %6064 = vmatprep.subr.bf16.mxu0 %v5010
    %6065 = vmatpush1.bf16.msra.mxu0 %v5009
    %6066 = vmatprep.subr.bf16.mxu0 %v5074
    %6067 = vmatpush1.bf16.msra.mxu0 %v5073
    %6068 = vmatprep.subr.bf16.mxu0 0
    %6069 = vmatpush1.bf16.msra.mxu0 0
    %6070 = vmatprep.subr.bf16.mxu0 0
    %6071 = vmatpush1.bf16.msra.mxu0 0
    %6072 = vmatprep.subr.bf16.mxu0 0
    %6073 = vmatpush1.bf16.msra.mxu0 0
    %6074 = vmatprep.subr.bf16.mxu0 0
    %6075 = vmatpush1.bf16.msra.mxu0 0
    %6076 = vmatprep.subr.bf16.mxu0 0
    %6077 = vmatpush1.bf16.msra.mxu0 0
    %6078 = vmatprep.subr.bf16.mxu0 0
    %6079 = vmatpush1.bf16.msra.mxu0 0
    %6080 = vmatprep.subr.bf16.mxu0 0
    %6081 = vmatpush1.bf16.msra.mxu0 0
    %6082 = vmatprep.subr.bf16.mxu0 0
    %6083 = vmatpush1.bf16.msra.mxu0 0
    %6084 = vmatprep.subr.bf16.mxu0 0
    %6085 = vmatpush1.bf16.msra.mxu0 0
    %6086 = vmatprep.subr.bf16.mxu0 0
    %6087 = vmatpush1.bf16.msra.mxu0 0
    %6088 = vmatprep.subr.bf16.mxu0 0
    %6089 = vmatpush1.bf16.msra.mxu0 0
    %6090 = vmatprep.subr.bf16.mxu0 0
    %6091 = vmatpush1.bf16.msra.mxu0 0
    %6092 = vmatprep.subr.bf16.mxu0 0
    %6093 = vmatpush1.bf16.msra.mxu0 0
    %6094 = vmatprep.subr.bf16.mxu0 0
    %6095 = vmatpush1.bf16.msra.mxu0 0
    %6096 = vmatprep.mubr.bf16.mxu0 0
    %6097 = vmatmul.mubr.bf16.gmra.mrb[0].mxu0 %v5447
    %v6098 = vpop.f32.mrb[0].mxu0
    %v6099 = vadd.f32 %v5246, %v6098
    %v6100 = vpop.f32.mrb[0].mxu0
    %v6101 = vadd.f32 %v5250, %v6100
    %v6102 = vpop.f32.mrb[0].mxu0
    %v6103 = vpop.f32.mrb[0].mxu0
    %6104 = vdwg.mxu0
    %6105 = vmatprep.subr.bf16.mxu0 %v5012
    %6106 = vmatpush1.bf16.msra.mxu0 %v5011
    %6107 = vmatprep.subr.bf16.mxu0 %v5076
    %6108 = vmatpush1.bf16.msra.mxu0 %v5075
    %6109 = vmatprep.subr.bf16.mxu0 0
    %6110 = vmatpush1.bf16.msra.mxu0 0
    %6111 = vmatprep.subr.bf16.mxu0 0
    %6112 = vmatpush1.bf16.msra.mxu0 0
    %6113 = vmatprep.subr.bf16.mxu0 0
    %6114 = vmatpush1.bf16.msra.mxu0 0
    %6115 = vmatprep.subr.bf16.mxu0 0
    %6116 = vmatpush1.bf16.msra.mxu0 0
    %6117 = vmatprep.subr.bf16.mxu0 0
    %6118 = vmatpush1.bf16.msra.mxu0 0
    %6119 = vmatprep.subr.bf16.mxu0 0
    %6120 = vmatpush1.bf16.msra.mxu0 0
    %6121 = vmatprep.subr.bf16.mxu0 0
    %6122 = vmatpush1.bf16.msra.mxu0 0
    %6123 = vmatprep.subr.bf16.mxu0 0
    %6124 = vmatpush1.bf16.msra.mxu0 0
    %6125 = vmatprep.subr.bf16.mxu0 0
    %6126 = vmatpush1.bf16.msra.mxu0 0
    %6127 = vmatprep.subr.bf16.mxu0 0
    %6128 = vmatpush1.bf16.msra.mxu0 0
    %6129 = vmatprep.subr.bf16.mxu0 0
    %6130 = vmatpush1.bf16.msra.mxu0 0
    %6131 = vmatprep.subr.bf16.mxu0 0
    %6132 = vmatpush1.bf16.msra.mxu0 0
    %6133 = vmatprep.subr.bf16.mxu0 0
    %6134 = vmatpush1.bf16.msra.mxu0 0
    %6135 = vmatprep.subr.bf16.mxu0 0
    %6136 = vmatpush1.bf16.msra.mxu0 0
    %6137 = vmatprep.mubr.bf16.mxu0 0
    %6138 = vmatmul.mubr.bf16.gmra.mrb[0].mxu0 %v5447
    %v6139 = vpop.f32.mrb[0].mxu0
    %v6140 = vadd.f32 %v5254, %v6139
    %v6141 = vpop.f32.mrb[0].mxu0
    %v6142 = vadd.f32 %v5258, %v6141
    %v6143 = vpop.f32.mrb[0].mxu0
    %v6144 = vpop.f32.mrb[0].mxu0
    %6145 = vdwg.mxu0
    %6146 = vmatprep.subr.bf16.mxu0 %v5014
    %6147 = vmatpush1.bf16.msra.mxu0 %v5013
    %6148 = vmatprep.subr.bf16.mxu0 %v5078
    %6149 = vmatpush1.bf16.msra.mxu0 %v5077
    %6150 = vmatprep.subr.bf16.mxu0 0
    %6151 = vmatpush1.bf16.msra.mxu0 0
    %6152 = vmatprep.subr.bf16.mxu0 0
    %6153 = vmatpush1.bf16.msra.mxu0 0
    %6154 = vmatprep.subr.bf16.mxu0 0
    %6155 = vmatpush1.bf16.msra.mxu0 0
    %6156 = vmatprep.subr.bf16.mxu0 0
    %6157 = vmatpush1.bf16.msra.mxu0 0
    %6158 = vmatprep.subr.bf16.mxu0 0
    %6159 = vmatpush1.bf16.msra.mxu0 0
    %6160 = vmatprep.subr.bf16.mxu0 0
    %6161 = vmatpush1.bf16.msra.mxu0 0
    %6162 = vmatprep.subr.bf16.mxu0 0
    %6163 = vmatpush1.bf16.msra.mxu0 0
    %6164 = vmatprep.subr.bf16.mxu0 0
    %6165 = vmatpush1.bf16.msra.mxu0 0
    %6166 = vmatprep.subr.bf16.mxu0 0
    %6167 = vmatpush1.bf16.msra.mxu0 0
    %6168 = vmatprep.subr.bf16.mxu0 0
    %6169 = vmatpush1.bf16.msra.mxu0 0
    %6170 = vmatprep.subr.bf16.mxu0 0
    %6171 = vmatpush1.bf16.msra.mxu0 0
    %6172 = vmatprep.subr.bf16.mxu0 0
    %6173 = vmatpush1.bf16.msra.mxu0 0
    %6174 = vmatprep.subr.bf16.mxu0 0
    %6175 = vmatpush1.bf16.msra.mxu0 0
    %6176 = vmatprep.subr.bf16.mxu0 0
    %6177 = vmatpush1.bf16.msra.mxu0 0
    %6178 = vmatprep.mubr.bf16.mxu0 0
    %6179 = vmatmul.mubr.bf16.gmra.mrb[0].mxu0 %v5447
    %v6180 = vpop.f32.mrb[0].mxu0
    %v6181 = vadd.f32 %v5262, %v6180
    %v6182 = vpop.f32.mrb[0].mxu0
    %v6183 = vadd.f32 %v5266, %v6182
    %v6184 = vpop.f32.mrb[0].mxu0
    %v6185 = vpop.f32.mrb[0].mxu0
    %6186 = vdwg.mxu0
    %6187 = vmatprep.subr.bf16.mxu0 %v5016
    %6188 = vmatpush1.bf16.msra.mxu0 %v5015
    %6189 = vmatprep.subr.bf16.mxu0 %v5080
    %6190 = vmatpush1.bf16.msra.mxu0 %v5079
    %6191 = vmatprep.subr.bf16.mxu0 0
    %6192 = vmatpush1.bf16.msra.mxu0 0
    %6193 = vmatprep.subr.bf16.mxu0 0
    %6194 = vmatpush1.bf16.msra.mxu0 0
    %6195 = vmatprep.subr.bf16.mxu0 0
    %6196 = vmatpush1.bf16.msra.mxu0 0
    %6197 = vmatprep.subr.bf16.mxu0 0
    %6198 = vmatpush1.bf16.msra.mxu0 0
    %6199 = vmatprep.subr.bf16.mxu0 0
    %6200 = vmatpush1.bf16.msra.mxu0 0
    %6201 = vmatprep.subr.bf16.mxu0 0
    %6202 = vmatpush1.bf16.msra.mxu0 0
    %6203 = vmatprep.subr.bf16.mxu0 0
    %6204 = vmatpush1.bf16.msra.mxu0 0
    %6205 = vmatprep.subr.bf16.mxu0 0
    %6206 = vmatpush1.bf16.msra.mxu0 0
    %6207 = vmatprep.subr.bf16.mxu0 0
    %6208 = vmatpush1.bf16.msra.mxu0 0
    %6209 = vmatprep.subr.bf16.mxu0 0
    %6210 = vmatpush1.bf16.msra.mxu0 0
    %6211 = vmatprep.subr.bf16.mxu0 0
    %6212 = vmatpush1.bf16.msra.mxu0 0
    %6213 = vmatprep.subr.bf16.mxu0 0
    %6214 = vmatpush1.bf16.msra.mxu0 0
    %6215 = vmatprep.subr.bf16.mxu0 0
    %6216 = vmatpush1.bf16.msra.mxu0 0
    %6217 = vmatprep.subr.bf16.mxu0 0
    %6218 = vmatpush1.bf16.msra.mxu0 0
    %6219 = vmatprep.mubr.bf16.mxu0 0
    %6220 = vmatmul.mubr.bf16.gmra.mrb[0].mxu0 %v5447
    %v6221 = vpop.f32.mrb[0].mxu0
    %v6222 = vadd.f32 %v5270, %v6221
    %v6223 = vpop.f32.mrb[0].mxu0
    %v6224 = vadd.f32 %v5274, %v6223
    %v6225 = vpop.f32.mrb[0].mxu0
    %v6226 = vpop.f32.mrb[0].mxu0
    %6227 = vdwg.mxu0
    %6228 = vmatprep.subr.bf16.mxu0 %v5018
    %6229 = vmatpush1.bf16.msra.mxu0 %v5017
    %6230 = vmatprep.subr.bf16.mxu0 %v5082
    %6231 = vmatpush1.bf16.msra.mxu0 %v5081
    %6232 = vmatprep.subr.bf16.mxu0 0
    %6233 = vmatpush1.bf16.msra.mxu0 0
    %6234 = vmatprep.subr.bf16.mxu0 0
    %6235 = vmatpush1.bf16.msra.mxu0 0
    %6236 = vmatprep.subr.bf16.mxu0 0
    %6237 = vmatpush1.bf16.msra.mxu0 0
    %6238 = vmatprep.subr.bf16.mxu0 0
    %6239 = vmatpush1.bf16.msra.mxu0 0
    %6240 = vmatprep.subr.bf16.mxu0 0
    %6241 = vmatpush1.bf16.msra.mxu0 0
    %6242 = vmatprep.subr.bf16.mxu0 0
    %6243 = vmatpush1.bf16.msra.mxu0 0
    %6244 = vmatprep.subr.bf16.mxu0 0
    %6245 = vmatpush1.bf16.msra.mxu0 0
    %6246 = vmatprep.subr.bf16.mxu0 0
    %6247 = vmatpush1.bf16.msra.mxu0 0
    %6248 = vmatprep.subr.bf16.mxu0 0
    %6249 = vmatpush1.bf16.msra.mxu0 0
    %6250 = vmatprep.subr.bf16.mxu0 0
    %6251 = vmatpush1.bf16.msra.mxu0 0
    %6252 = vmatprep.subr.bf16.mxu0 0
    %6253 = vmatpush1.bf16.msra.mxu0 0
    %6254 = vmatprep.subr.bf16.mxu0 0
    %6255 = vmatpush1.bf16.msra.mxu0 0
    %6256 = vmatprep.subr.bf16.mxu0 0
    %6257 = vmatpush1.bf16.msra.mxu0 0
    %6258 = vmatprep.subr.bf16.mxu0 0
    %6259 = vmatpush1.bf16.msra.mxu0 0
    %6260 = vmatprep.mubr.bf16.mxu0 0
    %6261 = vmatmul.mubr.bf16.gmra.mrb[0].mxu0 %v5447
    %v6262 = vpop.f32.mrb[0].mxu0
    %v6263 = vadd.f32 %v5278, %v6262
    %v6264 = vpop.f32.mrb[0].mxu0
    %v6265 = vadd.f32 %v5282, %v6264
    %v6266 = vpop.f32.mrb[0].mxu0
    %v6267 = vpop.f32.mrb[0].mxu0
    %6268 = vdwg.mxu0
    %6269 = vmatprep.subr.bf16.mxu0 %v5020
    %6270 = vmatpush1.bf16.msra.mxu0 %v5019
    %6271 = vmatprep.subr.bf16.mxu0 %v5084
    %6272 = vmatpush1.bf16.msra.mxu0 %v5083
    %6273 = vmatprep.subr.bf16.mxu0 0
    %6274 = vmatpush1.bf16.msra.mxu0 0
    %6275 = vmatprep.subr.bf16.mxu0 0
    %6276 = vmatpush1.bf16.msra.mxu0 0
    %6277 = vmatprep.subr.bf16.mxu0 0
    %6278 = vmatpush1.bf16.msra.mxu0 0
    %6279 = vmatprep.subr.bf16.mxu0 0
    %6280 = vmatpush1.bf16.msra.mxu0 0
    %6281 = vmatprep.subr.bf16.mxu0 0
    %6282 = vmatpush1.bf16.msra.mxu0 0
    %6283 = vmatprep.subr.bf16.mxu0 0
    %6284 = vmatpush1.bf16.msra.mxu0 0
    %6285 = vmatprep.subr.bf16.mxu0 0
    %6286 = vmatpush1.bf16.msra.mxu0 0
    %6287 = vmatprep.subr.bf16.mxu0 0
    %6288 = vmatpush1.bf16.msra.mxu0 0
    %6289 = vmatprep.subr.bf16.mxu0 0
    %6290 = vmatpush1.bf16.msra.mxu0 0
    %6291 = vmatprep.subr.bf16.mxu0 0
    %6292 = vmatpush1.bf16.msra.mxu0 0
    %6293 = vmatprep.subr.bf16.mxu0 0
    %6294 = vmatpush1.bf16.msra.mxu0 0
    %6295 = vmatprep.subr.bf16.mxu0 0
    %6296 = vmatpush1.bf16.msra.mxu0 0
    %6297 = vmatprep.subr.bf16.mxu0 0
    %6298 = vmatpush1.bf16.msra.mxu0 0
    %6299 = vmatprep.subr.bf16.mxu0 0
    %6300 = vmatpush1.bf16.msra.mxu0 0
    %6301 = vmatprep.mubr.bf16.mxu0 0
    %6302 = vmatmul.mubr.bf16.gmra.mrb[0].mxu0 %v5447
    %v6303 = vpop.f32.mrb[0].mxu0
    %v6304 = vadd.f32 %v5286, %v6303
    %v6305 = vpop.f32.mrb[0].mxu0
    %v6306 = vadd.f32 %v5290, %v6305
    %v6307 = vpop.f32.mrb[0].mxu0
    %v6308 = vpop.f32.mrb[0].mxu0
    %6309 = vdwg.mxu0
    %6310 = vmatprep.subr.bf16.mxu0 %v5022
    %6311 = vmatpush1.bf16.msra.mxu0 %v5021
    %6312 = vmatprep.subr.bf16.mxu0 %v5086
    %6313 = vmatpush1.bf16.msra.mxu0 %v5085
    %6314 = vmatprep.subr.bf16.mxu0 0
    %6315 = vmatpush1.bf16.msra.mxu0 0
    %6316 = vmatprep.subr.bf16.mxu0 0
    %6317 = vmatpush1.bf16.msra.mxu0 0
    %6318 = vmatprep.subr.bf16.mxu0 0
    %6319 = vmatpush1.bf16.msra.mxu0 0
    %6320 = vmatprep.subr.bf16.mxu0 0
    %6321 = vmatpush1.bf16.msra.mxu0 0
    %6322 = vmatprep.subr.bf16.mxu0 0
    %6323 = vmatpush1.bf16.msra.mxu0 0
    %6324 = vmatprep.subr.bf16.mxu0 0
    %6325 = vmatpush1.bf16.msra.mxu0 0
    %6326 = vmatprep.subr.bf16.mxu0 0
    %6327 = vmatpush1.bf16.msra.mxu0 0
    %6328 = vmatprep.subr.bf16.mxu0 0
    %6329 = vmatpush1.bf16.msra.mxu0 0
    %6330 = vmatprep.subr.bf16.mxu0 0
    %6331 = vmatpush1.bf16.msra.mxu0 0
    %6332 = vmatprep.subr.bf16.mxu0 0
    %6333 = vmatpush1.bf16.msra.mxu0 0
    %6334 = vmatprep.subr.bf16.mxu0 0
    %6335 = vmatpush1.bf16.msra.mxu0 0
    %6336 = vmatprep.subr.bf16.mxu0 0
    %6337 = vmatpush1.bf16.msra.mxu0 0
    %6338 = vmatprep.subr.bf16.mxu0 0
    %6339 = vmatpush1.bf16.msra.mxu0 0
    %6340 = vmatprep.subr.bf16.mxu0 0
    %6341 = vmatpush1.bf16.msra.mxu0 0
    %6342 = vmatprep.mubr.bf16.mxu0 0
    %6343 = vmatmul.mubr.bf16.gmra.mrb[0].mxu0 %v5447
    %v6344 = vpop.f32.mrb[0].mxu0
    %v6345 = vadd.f32 %v5294, %v6344
    %v6346 = vpop.f32.mrb[0].mxu0
    %v6347 = vadd.f32 %v5298, %v6346
    %v6348 = vpop.f32.mrb[0].mxu0
    %v6349 = vpop.f32.mrb[0].mxu0
    %6350 = vdwg.mxu0
    %6351 = vmatprep.subr.bf16.mxu0 %v5024
    %6352 = vmatpush1.bf16.msra.mxu0 %v5023
    %6353 = vmatprep.subr.bf16.mxu0 %v5088
    %6354 = vmatpush1.bf16.msra.mxu0 %v5087
    %6355 = vmatprep.subr.bf16.mxu0 0
    %6356 = vmatpush1.bf16.msra.mxu0 0
    %6357 = vmatprep.subr.bf16.mxu0 0
    %6358 = vmatpush1.bf16.msra.mxu0 0
    %6359 = vmatprep.subr.bf16.mxu0 0
    %6360 = vmatpush1.bf16.msra.mxu0 0
    %6361 = vmatprep.subr.bf16.mxu0 0
    %6362 = vmatpush1.bf16.msra.mxu0 0
    %6363 = vmatprep.subr.bf16.mxu0 0
    %6364 = vmatpush1.bf16.msra.mxu0 0
    %6365 = vmatprep.subr.bf16.mxu0 0
    %6366 = vmatpush1.bf16.msra.mxu0 0
    %6367 = vmatprep.subr.bf16.mxu0 0
    %6368 = vmatpush1.bf16.msra.mxu0 0
    %6369 = vmatprep.subr.bf16.mxu0 0
    %6370 = vmatpush1.bf16.msra.mxu0 0
    %6371 = vmatprep.subr.bf16.mxu0 0
    %6372 = vmatpush1.bf16.msra.mxu0 0
    %6373 = vmatprep.subr.bf16.mxu0 0
    %6374 = vmatpush1.bf16.msra.mxu0 0
    %6375 = vmatprep.subr.bf16.mxu0 0
    %6376 = vmatpush1.bf16.msra.mxu0 0
    %6377 = vmatprep.subr.bf16.mxu0 0
    %6378 = vmatpush1.bf16.msra.mxu0 0
    %6379 = vmatprep.subr.bf16.mxu0 0
    %6380 = vmatpush1.bf16.msra.mxu0 0
    %6381 = vmatprep.subr.bf16.mxu0 0
    %6382 = vmatpush1.bf16.msra.mxu0 0
    %6383 = vmatprep.mubr.bf16.mxu0 0
    %6384 = vmatmul.mubr.bf16.gmra.mrb[0].mxu0 %v5447
    %v6385 = vpop.f32.mrb[0].mxu0
    %v6386 = vadd.f32 %v5302, %v6385
    %v6387 = vpop.f32.mrb[0].mxu0
    %v6388 = vadd.f32 %v5306, %v6387
    %v6389 = vpop.f32.mrb[0].mxu0
    %v6390 = vpop.f32.mrb[0].mxu0
    %6391 = vdwg.mxu0
    %6392 = vmatprep.subr.bf16.mxu0 %v5026
    %6393 = vmatpush1.bf16.msra.mxu0 %v5025
    %6394 = vmatprep.subr.bf16.mxu0 %v5090
    %6395 = vmatpush1.bf16.msra.mxu0 %v5089
    %6396 = vmatprep.subr.bf16.mxu0 0
    %6397 = vmatpush1.bf16.msra.mxu0 0
    %6398 = vmatprep.subr.bf16.mxu0 0
    %6399 = vmatpush1.bf16.msra.mxu0 0
    %6400 = vmatprep.subr.bf16.mxu0 0
    %6401 = vmatpush1.bf16.msra.mxu0 0
    %6402 = vmatprep.subr.bf16.mxu0 0
    %6403 = vmatpush1.bf16.msra.mxu0 0
    %6404 = vmatprep.subr.bf16.mxu0 0
    %6405 = vmatpush1.bf16.msra.mxu0 0
    %6406 = vmatprep.subr.bf16.mxu0 0
    %6407 = vmatpush1.bf16.msra.mxu0 0
    %6408 = vmatprep.subr.bf16.mxu0 0
    %6409 = vmatpush1.bf16.msra.mxu0 0
    %6410 = vmatprep.subr.bf16.mxu0 0
    %6411 = vmatpush1.bf16.msra.mxu0 0
    %6412 = vmatprep.subr.bf16.mxu0 0
    %6413 = vmatpush1.bf16.msra.mxu0 0
    %6414 = vmatprep.subr.bf16.mxu0 0
    %6415 = vmatpush1.bf16.msra.mxu0 0
    %6416 = vmatprep.subr.bf16.mxu0 0
    %6417 = vmatpush1.bf16.msra.mxu0 0
    %6418 = vmatprep.subr.bf16.mxu0 0
    %6419 = vmatpush1.bf16.msra.mxu0 0
    %6420 = vmatprep.subr.bf16.mxu0 0
    %6421 = vmatpush1.bf16.msra.mxu0 0
    %6422 = vmatprep.subr.bf16.mxu0 0
    %6423 = vmatpush1.bf16.msra.mxu0 0
    %6424 = vmatprep.mubr.bf16.mxu0 0
    %6425 = vmatmul.mubr.bf16.gmra.mrb[0].mxu0 %v5447
    %v6426 = vpop.f32.mrb[0].mxu0
    %v6427 = vadd.f32 %v5310, %v6426
    %v6428 = vpop.f32.mrb[0].mxu0
    %v6429 = vadd.f32 %v5314, %v6428
    %v6430 = vpop.f32.mrb[0].mxu0
    %v6431 = vpop.f32.mrb[0].mxu0
    %6432 = vdwg.mxu0
    %6433 = vmatprep.subr.bf16.mxu0 %v5028
    %6434 = vmatpush1.bf16.msra.mxu0 %v5027
    %6435 = vmatprep.subr.bf16.mxu0 %v5092
    %6436 = vmatpush1.bf16.msra.mxu0 %v5091
    %6437 = vmatprep.subr.bf16.mxu0 0
    %6438 = vmatpush1.bf16.msra.mxu0 0
    %6439 = vmatprep.subr.bf16.mxu0 0
    %6440 = vmatpush1.bf16.msra.mxu0 0
    %6441 = vmatprep.subr.bf16.mxu0 0
    %6442 = vmatpush1.bf16.msra.mxu0 0
    %6443 = vmatprep.subr.bf16.mxu0 0
    %6444 = vmatpush1.bf16.msra.mxu0 0
    %6445 = vmatprep.subr.bf16.mxu0 0
    %6446 = vmatpush1.bf16.msra.mxu0 0
    %6447 = vmatprep.subr.bf16.mxu0 0
    %6448 = vmatpush1.bf16.msra.mxu0 0
    %6449 = vmatprep.subr.bf16.mxu0 0
    %6450 = vmatpush1.bf16.msra.mxu0 0
    %6451 = vmatprep.subr.bf16.mxu0 0
    %6452 = vmatpush1.bf16.msra.mxu0 0
    %6453 = vmatprep.subr.bf16.mxu0 0
    %6454 = vmatpush1.bf16.msra.mxu0 0
    %6455 = vmatprep.subr.bf16.mxu0 0
    %6456 = vmatpush1.bf16.msra.mxu0 0
    %6457 = vmatprep.subr.bf16.mxu0 0
    %6458 = vmatpush1.bf16.msra.mxu0 0
    %6459 = vmatprep.subr.bf16.mxu0 0
    %6460 = vmatpush1.bf16.msra.mxu0 0
    %6461 = vmatprep.subr.bf16.mxu0 0
    %6462 = vmatpush1.bf16.msra.mxu0 0
    %6463 = vmatprep.subr.bf16.mxu0 0
    %6464 = vmatpush1.bf16.msra.mxu0 0
    %6465 = vmatprep.mubr.bf16.mxu0 0
    %6466 = vmatmul.mubr.bf16.gmra.mrb[0].mxu0 %v5447
    %v6467 = vpop.f32.mrb[0].mxu0
    %v6468 = vadd.f32 %v5318, %v6467
    %v6469 = vpop.f32.mrb[0].mxu0
    %v6470 = vadd.f32 %v5322, %v6469
    %v6471 = vpop.f32.mrb[0].mxu0
    %v6472 = vpop.f32.mrb[0].mxu0
    %6473 = vdwg.mxu0
    %6474 = vmatprep.subr.bf16.mxu0 %v5030
    %6475 = vmatpush1.bf16.msra.mxu0 %v5029
    %6476 = vmatprep.subr.bf16.mxu0 %v5094
    %6477 = vmatpush1.bf16.msra.mxu0 %v5093
    %6478 = vmatprep.subr.bf16.mxu0 0
    %6479 = vmatpush1.bf16.msra.mxu0 0
    %6480 = vmatprep.subr.bf16.mxu0 0
    %6481 = vmatpush1.bf16.msra.mxu0 0
    %6482 = vmatprep.subr.bf16.mxu0 0
    %6483 = vmatpush1.bf16.msra.mxu0 0
    %6484 = vmatprep.subr.bf16.mxu0 0
    %6485 = vmatpush1.bf16.msra.mxu0 0
    %6486 = vmatprep.subr.bf16.mxu0 0
    %6487 = vmatpush1.bf16.msra.mxu0 0
    %6488 = vmatprep.subr.bf16.mxu0 0
    %6489 = vmatpush1.bf16.msra.mxu0 0
    %6490 = vmatprep.subr.bf16.mxu0 0
    %6491 = vmatpush1.bf16.msra.mxu0 0
    %6492 = vmatprep.subr.bf16.mxu0 0
    %6493 = vmatpush1.bf16.msra.mxu0 0
    %6494 = vmatprep.subr.bf16.mxu0 0
    %6495 = vmatpush1.bf16.msra.mxu0 0
    %6496 = vmatprep.subr.bf16.mxu0 0
    %6497 = vmatpush1.bf16.msra.mxu0 0
    %6498 = vmatprep.subr.bf16.mxu0 0
    %6499 = vmatpush1.bf16.msra.mxu0 0
    %6500 = vmatprep.subr.bf16.mxu0 0
    %6501 = vmatpush1.bf16.msra.mxu0 0
    %6502 = vmatprep.subr.bf16.mxu0 0
    %6503 = vmatpush1.bf16.msra.mxu0 0
    %6504 = vmatprep.subr.bf16.mxu0 0
    %6505 = vmatpush1.bf16.msra.mxu0 0
    %6506 = vmatprep.mubr.bf16.mxu0 0
    %6507 = vmatmul.mubr.bf16.gmra.mrb[0].mxu0 %v5447
    %v6508 = vpop.f32.mrb[0].mxu0
    %v6509 = vadd.f32 %v5326, %v6508
    %v6510 = vpop.f32.mrb[0].mxu0
    %v6511 = vadd.f32 %v5330, %v6510
    %v6512 = vpop.f32.mrb[0].mxu0
    %v6513 = vpop.f32.mrb[0].mxu0
    %6514 = vdwg.mxu0
    %6515 = vmatprep.subr.bf16.mxu0 %v5032
    %6516 = vmatpush1.bf16.msra.mxu0 %v5031
    %6517 = vmatprep.subr.bf16.mxu0 %v5096
    %6518 = vmatpush1.bf16.msra.mxu0 %v5095
    %6519 = vmatprep.subr.bf16.mxu0 0
    %6520 = vmatpush1.bf16.msra.mxu0 0
    %6521 = vmatprep.subr.bf16.mxu0 0
    %6522 = vmatpush1.bf16.msra.mxu0 0
    %6523 = vmatprep.subr.bf16.mxu0 0
    %6524 = vmatpush1.bf16.msra.mxu0 0
    %6525 = vmatprep.subr.bf16.mxu0 0
    %6526 = vmatpush1.bf16.msra.mxu0 0
    %6527 = vmatprep.subr.bf16.mxu0 0
    %6528 = vmatpush1.bf16.msra.mxu0 0
    %6529 = vmatprep.subr.bf16.mxu0 0
    %6530 = vmatpush1.bf16.msra.mxu0 0
    %6531 = vmatprep.subr.bf16.mxu0 0
    %6532 = vmatpush1.bf16.msra.mxu0 0
    %6533 = vmatprep.subr.bf16.mxu0 0
    %6534 = vmatpush1.bf16.msra.mxu0 0
    %6535 = vmatprep.subr.bf16.mxu0 0
    %6536 = vmatpush1.bf16.msra.mxu0 0
    %6537 = vmatprep.subr.bf16.mxu0 0
    %6538 = vmatpush1.bf16.msra.mxu0 0
    %6539 = vmatprep.subr.bf16.mxu0 0
    %6540 = vmatpush1.bf16.msra.mxu0 0
    %6541 = vmatprep.subr.bf16.mxu0 0
    %6542 = vmatpush1.bf16.msra.mxu0 0
    %6543 = vmatprep.subr.bf16.mxu0 0
    %6544 = vmatpush1.bf16.msra.mxu0 0
    %6545 = vmatprep.subr.bf16.mxu0 0
    %6546 = vmatpush1.bf16.msra.mxu0 0
    %6547 = vmatprep.mubr.bf16.mxu0 0
    %6548 = vmatmul.mubr.bf16.gmra.mrb[0].mxu0 %v5447
    %v6549 = vpop.f32.mrb[0].mxu0
    %v6550 = vadd.f32 %v5334, %v6549
    %v6551 = vpop.f32.mrb[0].mxu0
    %v6552 = vadd.f32 %v5338, %v6551
    %v6553 = vpop.f32.mrb[0].mxu0
    %v6554 = vpop.f32.mrb[0].mxu0
    %6555 = vdwg.mxu0
    %6556 = vmatprep.subr.bf16.mxu0 %v5034
    %6557 = vmatpush1.bf16.msra.mxu0 %v5033
    %6558 = vmatprep.subr.bf16.mxu0 %v5098
    %6559 = vmatpush1.bf16.msra.mxu0 %v5097
    %6560 = vmatprep.subr.bf16.mxu0 0
    %6561 = vmatpush1.bf16.msra.mxu0 0
    %6562 = vmatprep.subr.bf16.mxu0 0
    %6563 = vmatpush1.bf16.msra.mxu0 0
    %6564 = vmatprep.subr.bf16.mxu0 0
    %6565 = vmatpush1.bf16.msra.mxu0 0
    %6566 = vmatprep.subr.bf16.mxu0 0
    %6567 = vmatpush1.bf16.msra.mxu0 0
    %6568 = vmatprep.subr.bf16.mxu0 0
    %6569 = vmatpush1.bf16.msra.mxu0 0
    %6570 = vmatprep.subr.bf16.mxu0 0
    %6571 = vmatpush1.bf16.msra.mxu0 0
    %6572 = vmatprep.subr.bf16.mxu0 0
    %6573 = vmatpush1.bf16.msra.mxu0 0
    %6574 = vmatprep.subr.bf16.mxu0 0
    %6575 = vmatpush1.bf16.msra.mxu0 0
    %6576 = vmatprep.subr.bf16.mxu0 0
    %6577 = vmatpush1.bf16.msra.mxu0 0
    %6578 = vmatprep.subr.bf16.mxu0 0
    %6579 = vmatpush1.bf16.msra.mxu0 0
    %6580 = vmatprep.subr.bf16.mxu0 0
    %6581 = vmatpush1.bf16.msra.mxu0 0
    %6582 = vmatprep.subr.bf16.mxu0 0
    %6583 = vmatpush1.bf16.msra.mxu0 0
    %6584 = vmatprep.subr.bf16.mxu0 0
    %6585 = vmatpush1.bf16.msra.mxu0 0
    %6586 = vmatprep.subr.bf16.mxu0 0
    %6587 = vmatpush1.bf16.msra.mxu0 0
    %6588 = vmatprep.mubr.bf16.mxu0 0
    %6589 = vmatmul.mubr.bf16.gmra.mrb[0].mxu0 %v5447
    %v6590 = vpop.f32.mrb[0].mxu0
    %v6591 = vadd.f32 %v5342, %v6590
    %v6592 = vpop.f32.mrb[0].mxu0
    %v6593 = vadd.f32 %v5346, %v6592
    %v6594 = vpop.f32.mrb[0].mxu0
    %v6595 = vpop.f32.mrb[0].mxu0
    %6596 = vdwg.mxu0
    %6597 = vmatprep.subr.bf16.mxu0 %v5036
    %6598 = vmatpush1.bf16.msra.mxu0 %v5035
    %6599 = vmatprep.subr.bf16.mxu0 %v5100
    %6600 = vmatpush1.bf16.msra.mxu0 %v5099
    %6601 = vmatprep.subr.bf16.mxu0 0
    %6602 = vmatpush1.bf16.msra.mxu0 0
    %6603 = vmatprep.subr.bf16.mxu0 0
    %6604 = vmatpush1.bf16.msra.mxu0 0
    %6605 = vmatprep.subr.bf16.mxu0 0
    %6606 = vmatpush1.bf16.msra.mxu0 0
    %6607 = vmatprep.subr.bf16.mxu0 0
    %6608 = vmatpush1.bf16.msra.mxu0 0
    %6609 = vmatprep.subr.bf16.mxu0 0
    %6610 = vmatpush1.bf16.msra.mxu0 0
    %6611 = vmatprep.subr.bf16.mxu0 0
    %6612 = vmatpush1.bf16.msra.mxu0 0
    %6613 = vmatprep.subr.bf16.mxu0 0
    %6614 = vmatpush1.bf16.msra.mxu0 0
    %6615 = vmatprep.subr.bf16.mxu0 0
    %6616 = vmatpush1.bf16.msra.mxu0 0
    %6617 = vmatprep.subr.bf16.mxu0 0
    %6618 = vmatpush1.bf16.msra.mxu0 0
    %6619 = vmatprep.subr.bf16.mxu0 0
    %6620 = vmatpush1.bf16.msra.mxu0 0
    %6621 = vmatprep.subr.bf16.mxu0 0
    %6622 = vmatpush1.bf16.msra.mxu0 0
    %6623 = vmatprep.subr.bf16.mxu0 0
    %6624 = vmatpush1.bf16.msra.mxu0 0
    %6625 = vmatprep.subr.bf16.mxu0 0
    %6626 = vmatpush1.bf16.msra.mxu0 0
    %6627 = vmatprep.subr.bf16.mxu0 0
    %6628 = vmatpush1.bf16.msra.mxu0 0
    %6629 = vmatprep.mubr.bf16.mxu0 0
    %6630 = vmatmul.mubr.bf16.gmra.mrb[0].mxu0 %v5447
    %v6631 = vpop.f32.mrb[0].mxu0
    %v6632 = vadd.f32 %v5350, %v6631
    %v6633 = vpop.f32.mrb[0].mxu0
    %v6634 = vadd.f32 %v5354, %v6633
    %v6635 = vpop.f32.mrb[0].mxu0
    %v6636 = vpop.f32.mrb[0].mxu0
    %6637 = vdwg.mxu0
    %6638 = vmatprep.subr.bf16.mxu0 %v5038
    %6639 = vmatpush1.bf16.msra.mxu0 %v5037
    %6640 = vmatprep.subr.bf16.mxu0 %v5102
    %6641 = vmatpush1.bf16.msra.mxu0 %v5101
    %6642 = vmatprep.subr.bf16.mxu0 0
    %6643 = vmatpush1.bf16.msra.mxu0 0
    %6644 = vmatprep.subr.bf16.mxu0 0
    %6645 = vmatpush1.bf16.msra.mxu0 0
    %6646 = vmatprep.subr.bf16.mxu0 0
    %6647 = vmatpush1.bf16.msra.mxu0 0
    %6648 = vmatprep.subr.bf16.mxu0 0
    %6649 = vmatpush1.bf16.msra.mxu0 0
    %6650 = vmatprep.subr.bf16.mxu0 0
    %6651 = vmatpush1.bf16.msra.mxu0 0
    %6652 = vmatprep.subr.bf16.mxu0 0
    %6653 = vmatpush1.bf16.msra.mxu0 0
    %6654 = vmatprep.subr.bf16.mxu0 0
    %6655 = vmatpush1.bf16.msra.mxu0 0
    %6656 = vmatprep.subr.bf16.mxu0 0
    %6657 = vmatpush1.bf16.msra.mxu0 0
    %6658 = vmatprep.subr.bf16.mxu0 0
    %6659 = vmatpush1.bf16.msra.mxu0 0
    %6660 = vmatprep.subr.bf16.mxu0 0
    %6661 = vmatpush1.bf16.msra.mxu0 0
    %6662 = vmatprep.subr.bf16.mxu0 0
    %6663 = vmatpush1.bf16.msra.mxu0 0
    %6664 = vmatprep.subr.bf16.mxu0 0
    %6665 = vmatpush1.bf16.msra.mxu0 0
    %6666 = vmatprep.subr.bf16.mxu0 0
    %6667 = vmatpush1.bf16.msra.mxu0 0
    %6668 = vmatprep.subr.bf16.mxu0 0
    %6669 = vmatpush1.bf16.msra.mxu0 0
    %6670 = vmatprep.mubr.bf16.mxu0 0
    %6671 = vmatmul.mubr.bf16.gmra.mrb[0].mxu0 %v5447
    %v6672 = vpop.f32.mrb[0].mxu0
    %v6673 = vadd.f32 %v5358, %v6672
    %v6674 = vpop.f32.mrb[0].mxu0
    %v6675 = vadd.f32 %v5362, %v6674
    %v6676 = vpop.f32.mrb[0].mxu0
    %v6677 = vpop.f32.mrb[0].mxu0
    %6678 = vdwg.mxu0
    %6679 = vmatprep.subr.bf16.mxu0 %v5040
    %6680 = vmatpush1.bf16.msra.mxu0 %v5039
    %6681 = vmatprep.subr.bf16.mxu0 %v5104
    %6682 = vmatpush1.bf16.msra.mxu0 %v5103
    %6683 = vmatprep.subr.bf16.mxu0 0
    %6684 = vmatpush1.bf16.msra.mxu0 0
    %6685 = vmatprep.subr.bf16.mxu0 0
    %6686 = vmatpush1.bf16.msra.mxu0 0
    %6687 = vmatprep.subr.bf16.mxu0 0
    %6688 = vmatpush1.bf16.msra.mxu0 0
    %6689 = vmatprep.subr.bf16.mxu0 0
    %6690 = vmatpush1.bf16.msra.mxu0 0
    %6691 = vmatprep.subr.bf16.mxu0 0
    %6692 = vmatpush1.bf16.msra.mxu0 0
    %6693 = vmatprep.subr.bf16.mxu0 0
    %6694 = vmatpush1.bf16.msra.mxu0 0
    %6695 = vmatprep.subr.bf16.mxu0 0
    %6696 = vmatpush1.bf16.msra.mxu0 0
    %6697 = vmatprep.subr.bf16.mxu0 0
    %6698 = vmatpush1.bf16.msra.mxu0 0
    %6699 = vmatprep.subr.bf16.mxu0 0
    %6700 = vmatpush1.bf16.msra.mxu0 0
    %6701 = vmatprep.subr.bf16.mxu0 0
    %6702 = vmatpush1.bf16.msra.mxu0 0
    %6703 = vmatprep.subr.bf16.mxu0 0
    %6704 = vmatpush1.bf16.msra.mxu0 0
    %6705 = vmatprep.subr.bf16.mxu0 0
    %6706 = vmatpush1.bf16.msra.mxu0 0
    %6707 = vmatprep.subr.bf16.mxu0 0
    %6708 = vmatpush1.bf16.msra.mxu0 0
    %6709 = vmatprep.subr.bf16.mxu0 0
    %6710 = vmatpush1.bf16.msra.mxu0 0
    %6711 = vmatprep.mubr.bf16.mxu0 0
    %6712 = vmatmul.mubr.bf16.gmra.mrb[0].mxu0 %v5447
    %v6713 = vpop.f32.mrb[0].mxu0
    %v6714 = vadd.f32 %v5366, %v6713
    %v6715 = vpop.f32.mrb[0].mxu0
    %v6716 = vadd.f32 %v5370, %v6715
    %v6717 = vpop.f32.mrb[0].mxu0
    %v6718 = vpop.f32.mrb[0].mxu0
    %6719 = vdwg.mxu0
    %6720 = vmatprep.subr.bf16.mxu0 %v5042
    %6721 = vmatpush1.bf16.msra.mxu0 %v5041
    %6722 = vmatprep.subr.bf16.mxu0 %v5106
    %6723 = vmatpush1.bf16.msra.mxu0 %v5105
    %6724 = vmatprep.subr.bf16.mxu0 0
    %6725 = vmatpush1.bf16.msra.mxu0 0
    %6726 = vmatprep.subr.bf16.mxu0 0
    %6727 = vmatpush1.bf16.msra.mxu0 0
    %6728 = vmatprep.subr.bf16.mxu0 0
    %6729 = vmatpush1.bf16.msra.mxu0 0
    %6730 = vmatprep.subr.bf16.mxu0 0
    %6731 = vmatpush1.bf16.msra.mxu0 0
    %6732 = vmatprep.subr.bf16.mxu0 0
    %6733 = vmatpush1.bf16.msra.mxu0 0
    %6734 = vmatprep.subr.bf16.mxu0 0
    %6735 = vmatpush1.bf16.msra.mxu0 0
    %6736 = vmatprep.subr.bf16.mxu0 0
    %6737 = vmatpush1.bf16.msra.mxu0 0
    %6738 = vmatprep.subr.bf16.mxu0 0
    %6739 = vmatpush1.bf16.msra.mxu0 0
    %6740 = vmatprep.subr.bf16.mxu0 0
    %6741 = vmatpush1.bf16.msra.mxu0 0
    %6742 = vmatprep.subr.bf16.mxu0 0
    %6743 = vmatpush1.bf16.msra.mxu0 0
    %6744 = vmatprep.subr.bf16.mxu0 0
    %6745 = vmatpush1.bf16.msra.mxu0 0
    %6746 = vmatprep.subr.bf16.mxu0 0
    %6747 = vmatpush1.bf16.msra.mxu0 0
    %6748 = vmatprep.subr.bf16.mxu0 0
    %6749 = vmatpush1.bf16.msra.mxu0 0
    %6750 = vmatprep.subr.bf16.mxu0 0
    %6751 = vmatpush1.bf16.msra.mxu0 0
    %6752 = vmatprep.mubr.bf16.mxu0 0
    %6753 = vmatmul.mubr.bf16.gmra.mrb[0].mxu0 %v5447
    %v6754 = vpop.f32.mrb[0].mxu0
    %v6755 = vadd.f32 %v5374, %v6754
    %v6756 = vpop.f32.mrb[0].mxu0
    %v6757 = vadd.f32 %v5378, %v6756
    %v6758 = vpop.f32.mrb[0].mxu0
    %v6759 = vpop.f32.mrb[0].mxu0
    %6760 = vdwg.mxu0
    %v6825 = vcombine.low %v5484, %v5486
    %v6826 = vcombine.low %v5525, %v5527
    %v6828 = vunpack.c.l.s4 1983009808
    %v6829 = vunpack.c.0.s8 %v6828
    %v6830 = vlaneseq
    %v6831 = vshrl.u32 %v6830, 7
    %v6832 = vsub.s32 %v6829, %v6831
    %v6833 = vrot.slane %v6825, %v6832
    %v6835 = vunpack.c.l.s4 1983009808
    %v6836 = vunpack.c.0.s8 %v6835
    %v6837 = vlaneseq
    %v6838 = vshrl.u32 %v6837, 7
    %v6839 = vsub.s32 %v6836, %v6838
    %v6840 = vrot.slane %v6826, %v6839
    %v6841 = vcombine.low %v6833, %v6840
    %v6842 = vcombine.low %v5566, %v5568
    %v6843 = vcombine.low %v5607, %v5609
    %v6845 = vunpack.c.l.s4 1983009808
    %v6846 = vunpack.c.0.s8 %v6845
    %v6847 = vlaneseq
    %v6848 = vshrl.u32 %v6847, 7
    %v6849 = vsub.s32 %v6846, %v6848
    %v6850 = vrot.slane %v6842, %v6849
    %v6852 = vunpack.c.l.s4 1983009808
    %v6853 = vunpack.c.0.s8 %v6852
    %v6854 = vlaneseq
    %v6855 = vshrl.u32 %v6854, 7
    %v6856 = vsub.s32 %v6853, %v6855
    %v6857 = vrot.slane %v6843, %v6856
    %v6858 = vcombine.low %v6850, %v6857
    %v6859 = vcombine.low %v5648, %v5650
    %v6860 = vcombine.low %v5689, %v5691
    %v6862 = vunpack.c.l.s4 1983009808
    %v6863 = vunpack.c.0.s8 %v6862
    %v6864 = vlaneseq
    %v6865 = vshrl.u32 %v6864, 7
    %v6866 = vsub.s32 %v6863, %v6865
    %v6867 = vrot.slane %v6859, %v6866
    %v6869 = vunpack.c.l.s4 1983009808
    %v6870 = vunpack.c.0.s8 %v6869
    %v6871 = vlaneseq
    %v6872 = vshrl.u32 %v6871, 7
    %v6873 = vsub.s32 %v6870, %v6872
    %v6874 = vrot.slane %v6860, %v6873
    %v6875 = vcombine.low %v6867, %v6874
    %v6876 = vcombine.low %v5730, %v5732
    %v6877 = vcombine.low %v5771, %v5773
    %v6879 = vunpack.c.l.s4 1983009808
    %v6880 = vunpack.c.0.s8 %v6879
    %v6881 = vlaneseq
    %v6882 = vshrl.u32 %v6881, 7
    %v6883 = vsub.s32 %v6880, %v6882
    %v6884 = vrot.slane %v6876, %v6883
    %v6886 = vunpack.c.l.s4 1983009808
    %v6887 = vunpack.c.0.s8 %v6886
    %v6888 = vlaneseq
    %v6889 = vshrl.u32 %v6888, 7
    %v6890 = vsub.s32 %v6887, %v6889
    %v6891 = vrot.slane %v6877, %v6890
    %v6892 = vcombine.low %v6884, %v6891
    %v6893 = vcombine.low %v5812, %v5814
    %v6894 = vcombine.low %v5853, %v5855
    %v6896 = vunpack.c.l.s4 1983009808
    %v6897 = vunpack.c.0.s8 %v6896
    %v6898 = vlaneseq
    %v6899 = vshrl.u32 %v6898, 7
    %v6900 = vsub.s32 %v6897, %v6899
    %v6901 = vrot.slane %v6893, %v6900
    %v6903 = vunpack.c.l.s4 1983009808
    %v6904 = vunpack.c.0.s8 %v6903
    %v6905 = vlaneseq
    %v6906 = vshrl.u32 %v6905, 7
    %v6907 = vsub.s32 %v6904, %v6906
    %v6908 = vrot.slane %v6894, %v6907
    %v6909 = vcombine.low %v6901, %v6908
    %v6910 = vcombine.low %v5894, %v5896
    %v6911 = vcombine.low %v5935, %v5937
    %v6913 = vunpack.c.l.s4 1983009808
    %v6914 = vunpack.c.0.s8 %v6913
    %v6915 = vlaneseq
    %v6916 = vshrl.u32 %v6915, 7
    %v6917 = vsub.s32 %v6914, %v6916
    %v6918 = vrot.slane %v6910, %v6917
    %v6920 = vunpack.c.l.s4 1983009808
    %v6921 = vunpack.c.0.s8 %v6920
    %v6922 = vlaneseq
    %v6923 = vshrl.u32 %v6922, 7
    %v6924 = vsub.s32 %v6921, %v6923
    %v6925 = vrot.slane %v6911, %v6924
    %v6926 = vcombine.low %v6918, %v6925
    %v6927 = vcombine.low %v5976, %v5978
    %v6928 = vcombine.low %v6017, %v6019
    %v6930 = vunpack.c.l.s4 1983009808
    %v6931 = vunpack.c.0.s8 %v6930
    %v6932 = vlaneseq
    %v6933 = vshrl.u32 %v6932, 7
    %v6934 = vsub.s32 %v6931, %v6933
    %v6935 = vrot.slane %v6927, %v6934
    %v6937 = vunpack.c.l.s4 1983009808
    %v6938 = vunpack.c.0.s8 %v6937
    %v6939 = vlaneseq
    %v6940 = vshrl.u32 %v6939, 7
    %v6941 = vsub.s32 %v6938, %v6940
    %v6942 = vrot.slane %v6928, %v6941
    %v6943 = vcombine.low %v6935, %v6942
    %v6944 = vcombine.low %v6058, %v6060
    %v6945 = vcombine.low %v6099, %v6101
    %v6947 = vunpack.c.l.s4 1983009808
    %v6948 = vunpack.c.0.s8 %v6947
    %v6949 = vlaneseq
    %v6950 = vshrl.u32 %v6949, 7
    %v6951 = vsub.s32 %v6948, %v6950
    %v6952 = vrot.slane %v6944, %v6951
    %v6954 = vunpack.c.l.s4 1983009808
    %v6955 = vunpack.c.0.s8 %v6954
    %v6956 = vlaneseq
    %v6957 = vshrl.u32 %v6956, 7
    %v6958 = vsub.s32 %v6955, %v6957
    %v6959 = vrot.slane %v6945, %v6958
    %v6960 = vcombine.low %v6952, %v6959
    %v6961 = vcombine.low %v6140, %v6142
    %v6962 = vcombine.low %v6181, %v6183
    %v6964 = vunpack.c.l.s4 1983009808
    %v6965 = vunpack.c.0.s8 %v6964
    %v6966 = vlaneseq
    %v6967 = vshrl.u32 %v6966, 7
    %v6968 = vsub.s32 %v6965, %v6967
    %v6969 = vrot.slane %v6961, %v6968
    %v6971 = vunpack.c.l.s4 1983009808
    %v6972 = vunpack.c.0.s8 %v6971
    %v6973 = vlaneseq
    %v6974 = vshrl.u32 %v6973, 7
    %v6975 = vsub.s32 %v6972, %v6974
    %v6976 = vrot.slane %v6962, %v6975
    %v6977 = vcombine.low %v6969, %v6976
    %v6978 = vcombine.low %v6222, %v6224
    %v6979 = vcombine.low %v6263, %v6265
    %v6981 = vunpack.c.l.s4 1983009808
    %v6982 = vunpack.c.0.s8 %v6981
    %v6983 = vlaneseq
    %v6984 = vshrl.u32 %v6983, 7
    %v6985 = vsub.s32 %v6982, %v6984
    %v6986 = vrot.slane %v6978, %v6985
    %v6988 = vunpack.c.l.s4 1983009808
    %v6989 = vunpack.c.0.s8 %v6988
    %v6990 = vlaneseq
    %v6991 = vshrl.u32 %v6990, 7
    %v6992 = vsub.s32 %v6989, %v6991
    %v6993 = vrot.slane %v6979, %v6992
    %v6994 = vcombine.low %v6986, %v6993
    %v6995 = vcombine.low %v6304, %v6306
    %v6996 = vcombine.low %v6345, %v6347
    %v6998 = vunpack.c.l.s4 1983009808
    %v6999 = vunpack.c.0.s8 %v6998
    %v7000 = vlaneseq
    %v7001 = vshrl.u32 %v7000, 7
    %v7002 = vsub.s32 %v6999, %v7001
    %v7003 = vrot.slane %v6995, %v7002
    %v7005 = vunpack.c.l.s4 1983009808
    %v7006 = vunpack.c.0.s8 %v7005
    %v7007 = vlaneseq
    %v7008 = vshrl.u32 %v7007, 7
    %v7009 = vsub.s32 %v7006, %v7008
    %v7010 = vrot.slane %v6996, %v7009
    %v7011 = vcombine.low %v7003, %v7010
    %v7012 = vcombine.low %v6386, %v6388
    %v7013 = vcombine.low %v6427, %v6429
    %v7015 = vunpack.c.l.s4 1983009808
    %v7016 = vunpack.c.0.s8 %v7015
    %v7017 = vlaneseq
    %v7018 = vshrl.u32 %v7017, 7
    %v7019 = vsub.s32 %v7016, %v7018
    %v7020 = vrot.slane %v7012, %v7019
    %v7022 = vunpack.c.l.s4 1983009808
    %v7023 = vunpack.c.0.s8 %v7022
    %v7024 = vlaneseq
    %v7025 = vshrl.u32 %v7024, 7
    %v7026 = vsub.s32 %v7023, %v7025
    %v7027 = vrot.slane %v7013, %v7026
    %v7028 = vcombine.low %v7020, %v7027
    %v7029 = vcombine.low %v6468, %v6470
    %v7030 = vcombine.low %v6509, %v6511
    %v7032 = vunpack.c.l.s4 1983009808
    %v7033 = vunpack.c.0.s8 %v7032
    %v7034 = vlaneseq
    %v7035 = vshrl.u32 %v7034, 7
    %v7036 = vsub.s32 %v7033, %v7035
    %v7037 = vrot.slane %v7029, %v7036
    %v7039 = vunpack.c.l.s4 1983009808
    %v7040 = vunpack.c.0.s8 %v7039
    %v7041 = vlaneseq
    %v7042 = vshrl.u32 %v7041, 7
    %v7043 = vsub.s32 %v7040, %v7042
    %v7044 = vrot.slane %v7030, %v7043
    %v7045 = vcombine.low %v7037, %v7044
    %v7046 = vcombine.low %v6550, %v6552
    %v7047 = vcombine.low %v6591, %v6593
    %v7049 = vunpack.c.l.s4 1983009808
    %v7050 = vunpack.c.0.s8 %v7049
    %v7051 = vlaneseq
    %v7052 = vshrl.u32 %v7051, 7
    %v7053 = vsub.s32 %v7050, %v7052
    %v7054 = vrot.slane %v7046, %v7053
    %v7056 = vunpack.c.l.s4 1983009808
    %v7057 = vunpack.c.0.s8 %v7056
    %v7058 = vlaneseq
    %v7059 = vshrl.u32 %v7058, 7
    %v7060 = vsub.s32 %v7057, %v7059
    %v7061 = vrot.slane %v7047, %v7060
    %v7062 = vcombine.low %v7054, %v7061
    %v7063 = vcombine.low %v6632, %v6634
    %v7064 = vcombine.low %v6673, %v6675
    %v7066 = vunpack.c.l.s4 1983009808
    %v7067 = vunpack.c.0.s8 %v7066
    %v7068 = vlaneseq
    %v7069 = vshrl.u32 %v7068, 7
    %v7070 = vsub.s32 %v7067, %v7069
    %v7071 = vrot.slane %v7063, %v7070
    %v7073 = vunpack.c.l.s4 1983009808
    %v7074 = vunpack.c.0.s8 %v7073
    %v7075 = vlaneseq
    %v7076 = vshrl.u32 %v7075, 7
    %v7077 = vsub.s32 %v7074, %v7076
    %v7078 = vrot.slane %v7064, %v7077
    %v7079 = vcombine.low %v7071, %v7078
    %v7080 = vcombine.low %v6714, %v6716
    %v7081 = vcombine.low %v6755, %v6757
    %v7083 = vunpack.c.l.s4 1983009808
    %v7084 = vunpack.c.0.s8 %v7083
    %v7085 = vlaneseq
    %v7086 = vshrl.u32 %v7085, 7
    %v7087 = vsub.s32 %v7084, %v7086
    %v7088 = vrot.slane %v7080, %v7087
    %v7090 = vunpack.c.l.s4 1983009808
    %v7091 = vunpack.c.0.s8 %v7090
    %v7092 = vlaneseq
    %v7093 = vshrl.u32 %v7092, 7
    %v7094 = vsub.s32 %v7091, %v7093
    %v7095 = vrot.slane %v7081, %v7094
    %v7096 = vcombine.low %v7088, %v7095
    %7113 = vst [vmem:[%s18] sm:$0xff] %v6841
    %7114 = vst [vmem:[%s18 + $0x8] sm:$0xff] %v6858
    %7115 = vst [vmem:[%s18 + $0x10] sm:$0xff] %v6875
    %7116 = vst [vmem:[%s18 + $0x18] sm:$0xff] %v6892
    %7117 = vst [vmem:[%s18 + $0x20] sm:$0xff] %v6909
    %7118 = vst [vmem:[%s18 + $0x28] sm:$0xff] %v6926
    %7119 = vst [vmem:[%s18 + $0x30] sm:$0xff] %v6943
    %7120 = vst [vmem:[%s18 + $0x38] sm:$0xff] %v6960
    %7121 = vst [vmem:[%s18 + $0x40] sm:$0xff] %v6977
    %7122 = vst [vmem:[%s18 + $0x48] sm:$0xff] %v6994
    %7123 = vst [vmem:[%s18 + $0x50] sm:$0xff] %v7011
    %7124 = vst [vmem:[%s18 + $0x58] sm:$0xff] %v7028
    %7125 = vst [vmem:[%s18 + $0x60] sm:$0xff] %v7045
    %7126 = vst [vmem:[%s18 + $0x68] sm:$0xff] %v7062
    %7127 = vst [vmem:[%s18 + $0x70] sm:$0xff] %v7079
    %7128 = vst [vmem:[%s18 + $0x78] sm:$0xff] %v7096
    // Predicated region
    $region139: #{decoder_crnn_pallas.1} parent=1 // pred_check
      _
    $region140: #{decoder_crnn_pallas.1} parent=1 // pred_check_branch
      %7130 = sbr.rel (0) target = $region142
    $region141: #{decoder_crnn_pallas.1} parent=1 // pred_region
      _
    $region142: #{decoder_crnn_pallas.1} parent=1 // pred_fallthru
      _
    // Predicated region
    $region143: #{decoder_crnn_pallas.1} parent=1 // pred_check
      _
    $region144: #{decoder_crnn_pallas.1} parent=1 // pred_check_branch
      %7132 = sbr.rel (0) target = $region146
    $region145: #{decoder_crnn_pallas.1} parent=1 // pred_region
      %s7134 = ssub.s32 32, 32
      %7135 = vsyncadd [#allocation6], %s7134
      %s7137 = sshll.u32 [#allocation18], 4
      %s7138 = int_to_ptr.vmem [resolvable:$true] %s7137
      %7140 = dma.vmem_to_hbm [thread:$0]  %s7138, 32, %s19, [#allocation6]
    $region146: #{decoder_crnn_pallas.1} parent=1 // pred_fallthru
      _
    // Predicated region
    $region147: #{decoder_crnn_pallas.1} parent=1 // pred_check
      _
    $region148: #{decoder_crnn_pallas.1} parent=1 // pred_check_branch
      %7142 = sbr.rel (0) target = $region150
    $region149: #{decoder_crnn_pallas.1} parent=1 // pred_region
      _
    $region150: #{decoder_crnn_pallas.1} parent=1 // pred_fallthru
      _
    // Predicated region
    $region151: #{decoder_crnn_pallas.1} parent=1 // pred_check
      _
    $region152: #{decoder_crnn_pallas.1} parent=1 // pred_check_branch
      %7144 = sbr.rel (0) target = $region154
    $region153: #{decoder_crnn_pallas.1} parent=1 // pred_region
      %7145 = dma.done [#allocation6], 32
    $region154: #{decoder_crnn_pallas.1} parent=1 // pred_fallthru
      _
    %7146 = vsyncpa [#allocation5], 1
    %7147 = vsyncpa [#allocation8], 1
    %7148 = vsyncpa [#allocation11], 1
    %7149 = vsyncpa [#allocation14], 1
    %7150 = vsyncpa [#allocation17], 1
    %7151 = vsyncpa [#allocation6], 1
  %7152 = vsyncmov [#allocation3]
  %s7153 = vpop.sfrf %7152
  %p7154 = scmp.eq.s32.totalorder %s7153, 0
  %p7155 = pneg %p7154
  %7157 = shalt.err (%p7155)

</llo_original>
